<compile_context>
chip_gen: v5e
topology: v5e:2x2
jax: 0.10.0
libtpu: 0.0.40
codegen_flags: <defaults>
</compile_context>

<pallas_src>
import functools

import numpy as np
import jax
import jax.numpy as jnp
from jax.experimental import pallas as pl
from jax.experimental.pallas import tpu as pltpu

KW = 4                                   # conv kernel size
PADW = int(np.ceil((KW - 1.0) / 2))      # = 2 (pix2pixHD padding)
NEG_SLOPE = 0.2
BN_EPS = 1e-5
LANE = 128
MAX_TM = 1024                            # row-tile cap (big tiles cut A/B re-streaming)
MAX_TN = 512                             # full 512-channel output per tile
VMEM_BUDGET = 24 * 1024 * 1024           # tile-plan budget (double buffers included)
VMEM_LIMIT = 32 * 1024 * 1024            # scoped VMEM limit (safe on v5e/v6e/v7x)


def _round_up(v, m):
    return (v + m - 1) // m * m


# --------------------------- Pallas conv-matmul kernel -----------------------

def _conv_mm_kernel(a_ref, b_ref, bias_ref, *refs,
                    leaky, want_stats, use_scratch, nk, m_true, tm):
    """One (TM, TN) output tile of A @ B + bias, accumulated over the K grid axis.

    Epilogue (last K step) fuses LeakyReLU(0.2) and, for BatchNorm layers, emits
    the per-channel partial sum / sum-of-squares (padded rows masked).
    f32 outputs accumulate directly into the resident output block (no scratch).
    """
    o_ref = refs[0]
    stats_ref = refs[1] if want_stats else None
    acc_ref = refs[1 + int(want_stats)] if use_scratch else o_ref

    # Grid indices are read here, OUTSIDE any pl.when branch (the CPU interpret
    # fallback cannot resolve program_id inside cond sub-jaxprs).
    k = pl.program_id(2)
    tile_row0 = pl.program_id(0) * tm

    @pl.when(k == 0)
    def _init():
        acc_ref[...] = jnp.zeros_like(acc_ref)

    acc_ref[...] += jnp.dot(a_ref[...], b_ref[...],
                            preferred_element_type=jnp.float32)

    @pl.when(k == nk - 1)
    def _finalize():
        y = acc_ref[...] + bias_ref[...]
        if leaky:
            y = jnp.where(y >= 0, y, NEG_SLOPE * y)        # f32 epilogue (v5e-safe)
        o_ref[...] = y.astype(o_ref.dtype)
        if want_stats:
            rows = jax.lax.broadcasted_iota(jnp.int32, (tm, 1), 0) + tile_row0
            ym = jnp.where(rows < m_true, y, 0.0)           # mask padded rows
            s = jnp.sum(ym, axis=0, keepdims=True)          # (1, TN)
            ss = jnp.sum(ym * ym, axis=0, keepdims=True)
            row_id = jax.lax.broadcasted_iota(jnp.int32, (8, s.shape[1]), 0)
            stats_ref[...] = (jnp.where(row_id == 0, s, 0.0)
                              + jnp.where(row_id == 1, ss, 0.0))


def _choose_tiles(M, Kp, Np):
    """Pick (TM, TN, TK, Mp): big lane-dense tiles under the VMEM budget, and
    >= 2 parallel output tiles whenever possible (v7x megacore)."""
    TN = min(Np, MAX_TN)
    TK = next(d for d in (2048, 1024, 512, 256, 128) if Kp % d == 0)
    TM = min(MAX_TM, _round_up(M, 16))

    def vmem_bytes(tm, tn, tk):
        a = 2 * tm * tk * 2              # double-buffered bf16 A tiles
        b = 2 * tk * tn * 2              # double-buffered bf16 B tiles
        out = 2 * tm * tn * 4            # output tile (f32 worst case)
        acc = tm * tn * 4                # f32 accumulator scratch
        small = 2 * (8 + 1) * tn * 4     # stats + bias tiles
        return a + b + out + acc + small

    while vmem_bytes(TM, TN, TK) > VMEM_BUDGET and TM > 128:
        TM = max(128, _round_up(TM // 2, 16))
    while vmem_bytes(TM, TN, TK) > VMEM_BUDGET and TK > 256:
        TK //= 2

    Mp = _round_up(M, TM)
    if (Mp // TM) * (Np // TN) < 2 and TM >= 32:   # avoid a (1,1,k) grid on v7x
        TM = max(16, _round_up(TM // 2, 16))
        Mp = _round_up(M, TM)
    return TM, TN, TK, Mp


def conv_matmul(a, wmat, bias, *, M, TM, TN, TK, leaky, want_stats, out_dtype):
    """y = a @ wmat + bias (+ fused LeakyReLU / BN partial statistics).

    a: (Mp, Kp) bf16 im2col patches, wmat: (Kp, Np) bf16, bias: (1, Np) f32.
    Returns (y, stats): y is (Mp, Np) out_dtype; stats is (num_m_tiles*8, Np) f32
    with rows 0/1 of each tile = per-channel sum / sum-of-squares (or None).
    """
    Mp, Kp = a.shape
    _, Np = wmat.shape
    grid = (Mp // TM, Np // TN, Kp // TK)
    nmt, nk = grid[0], grid[2]
    use_scratch = out_dtype == jnp.bfloat16      # f32 outputs accumulate in-place

    kernel = functools.partial(_conv_mm_kernel, leaky=leaky, want_stats=want_stats,
                               use_scratch=use_scratch, nk=nk, m_true=M, tm=TM)

    in_specs = [
        pl.BlockSpec((TM, TK), lambda i, j, k: (i, k)),
        pl.BlockSpec((TK, TN), lambda i, j, k: (k, j)),
        pl.BlockSpec((1, TN), lambda i, j, k: (0, j)),
    ]
    out_shape = [jax.ShapeDtypeStruct((Mp, Np), out_dtype)]
    out_specs = [pl.BlockSpec((TM, TN), lambda i, j, k: (i, j))]
    if want_stats:
        out_shape.append(jax.ShapeDtypeStruct((nmt * 8, Np), jnp.float32))
        out_specs.append(pl.BlockSpec((8, TN), lambda i, j, k: (i, j)))
    scratch_shapes = [pltpu.VMEM((TM, TN), jnp.float32)] if use_scratch else []

    res = pl.pallas_call(
        kernel,
        out_shape=tuple(out_shape),
        grid=grid,
        in_specs=in_specs,
        out_specs=tuple(out_specs),
        scratch_shapes=scratch_shapes,
        compiler_params=pltpu.CompilerParams(
            dimension_semantics=("parallel", "parallel", "arbitrary"),
            vmem_limit_bytes=VMEM_LIMIT),
    )(a, wmat, bias)

    if want_stats:
        return res[0], res[1]
    return res[0], None


# ------------------------- fused BN affine + LeakyReLU ------------------------

def _bn_leaky_kernel(x_ref, scale_ref, shift_ref, o_ref):
    y = x_ref[...] * scale_ref[...] + shift_ref[...]
    o_ref[...] = jnp.where(y >= 0, y, NEG_SLOPE * y).astype(o_ref.dtype)


def bn_leaky(x, scale, shift, tm):
    """Per-channel affine (precomputed scale/shift) + LeakyReLU(0.2) -> bf16."""
    Mp, Np = x.shape
    return pl.pallas_call(
        _bn_leaky_kernel,
        out_shape=jax.ShapeDtypeStruct((Mp, Np), jnp.bfloat16),
        grid=(Mp // tm,),
        in_specs=[pl.BlockSpec((tm, Np), lambda i: (i, 0)),
                  pl.BlockSpec((1, Np), lambda i: (0, 0)),
                  pl.BlockSpec((1, Np), lambda i: (0, 0))],
        out_specs=pl.BlockSpec((tm, Np), lambda i: (i, 0)),
        compiler_params=pltpu.CompilerParams(
            dimension_semantics=("parallel",),
            vmem_limit_bytes=VMEM_LIMIT),
    )(x, scale.reshape(1, Np).astype(jnp.float32),
      shift.reshape(1, Np).astype(jnp.float32))


# ------------------------------ conv lowering --------------------------------

def im2col(x_nhwc, stride, cp_in, Mp):
    """(N,H,W,C) -> (Mp, KW*KW*cp_in) bf16 patch matrix (K ordering: kh, kw, C).

    The channel pad to cp_in and the bf16 cast are folded into the (small)
    activation pad, so no extra full pass runs over the 16x-expanded matrix.
    """
    # TODO(synk): fold the 16 conv taps into the matmul's K grid axis (shifted
    # window reads of the spatially padded activation) so the expanded patch
    # matrix is never materialized in HBM; the conv layers are HBM-bound, so
    # this is the next big traffic lever.
    N, H, W, C = x_nhwc.shape
    xp = jnp.pad(x_nhwc.astype(jnp.bfloat16),
                 ((0, 0), (PADW, PADW), (PADW, PADW), (0, cp_in - C)))
    Ho = (H + 2 * PADW - KW) // stride + 1
    Wo = (W + 2 * PADW - KW) // stride + 1
    patches = []
    for i in range(KW):
        for j in range(KW):
            patches.append(jax.lax.slice(
                xp, (0, i, j, 0),
                (N, i + stride * (Ho - 1) + 1, j + stride * (Wo - 1) + 1, cp_in),
                (1, stride, stride, 1)))
    cols = jnp.stack(patches, axis=3)                    # (N, Ho, Wo, 16, cp_in)
    a = cols.reshape(N * Ho * Wo, KW * KW * cp_in)
    M = N * Ho * Wo
    if Mp > M:
        a = jnp.pad(a, ((0, Mp - M), (0, 0)))
    return a


def avg_pool_3x3_s2(x, h_axis, w_axis):
    """nn.AvgPool2d(3, stride=2, padding=1, count_include_pad=False)."""
    # TODO(synk): tiny input-resolution op left to XLA; negligible vs the convs.
    window = [1, 1, 1, 1]
    strides = [1, 1, 1, 1]
    pads = [(0, 0)] * 4
    window[h_axis] = window[w_axis] = 3
    strides[h_axis] = strides[w_axis] = 2
    pads[h_axis] = pads[w_axis] = (1, 1)
    summed = jax.lax.reduce_window(x, 0.0, jax.lax.add, tuple(window),
                                   tuple(strides), tuple(pads))
    counts = jax.lax.reduce_window(jnp.ones_like(x), 0.0, jax.lax.add,
                                   tuple(window), tuple(strides), tuple(pads))
    return summed / counts


# --------------------------- model parameters --------------------------------

def build_discriminator_cfg(input_nc, ndf, n_layers):
    cfg = [dict(cin=input_nc, cout=ndf, stride=2, bn=False, leaky=True)]
    nf = ndf
    for _ in range(1, n_layers):
        nf_prev, nf = nf, min(nf * 2, 512)
        cfg.append(dict(cin=nf_prev, cout=nf, stride=2, bn=True, leaky=True))
    nf_prev, nf = nf, min(nf * 2, 512)
    cfg.append(dict(cin=nf_prev, cout=nf, stride=1, bn=True, leaky=True))
    cfg.append(dict(cin=nf, cout=1, stride=1, bn=False, leaky=False))
    return cfg


def build_discriminator_weights(key, cfg):
    weights = []
    for c in cfg:
        key, kw_, kb_, kg_, kbt_ = jax.random.split(key, 5)
        w = {"w": 0.05 * jax.random.normal(kw_, (c["cout"], c["cin"], KW, KW),
                                           jnp.float32),      # OIHW (PyTorch layout)
             "b": 0.05 * jax.random.normal(kb_, (c["cout"],), jnp.float32)}
        if c["bn"]:
            w["gamma"] = 1.0 + 0.05 * jax.random.normal(kg_, (c["cout"],), jnp.float32)
            w["beta"] = 0.05 * jax.random.normal(kbt_, (c["cout"],), jnp.float32)
        weights.append(w)
    return weights


def build_multiscale_params(key, input_nc, ndf, n_layers, num_D):
    cfgs, raw = [], []
    for _ in range(num_D):
        key, sub = jax.random.split(key)
        cfg = build_discriminator_cfg(input_nc, ndf, n_layers)
        cfgs.append(cfg)
        raw.append(build_discriminator_weights(sub, cfg))
    return cfgs, raw


def prepare_discriminator_params(cfg, raw):
    """Hoisted weight transform: OIHW -> (kh*kw*Cin_pad, Cout_pad) bf16 + padded bias."""
    prepped = []
    for c, w in zip(cfg, raw):
        cin, cout = c["cin"], c["cout"]
        cp_in = _round_up(cin, 8)              # K = 16*cp_in is a multiple of 128
        np_out = _round_up(cout, LANE)         # lane-dense output columns
        w_t = jnp.transpose(w["w"], (2, 3, 1, 0))                 # (kh, kw, cin, cout)
        w_t = jnp.pad(w_t, ((0, 0), (0, 0), (0, cp_in - cin), (0, np_out - cout)))
        p = {"wmat": w_t.reshape(KW * KW * cp_in, np_out).astype(jnp.bfloat16),
             "bias": jnp.pad(w["b"], (0, np_out - cout)).reshape(1, np_out)
                        .astype(jnp.float32)}
        if c["bn"]:
            p["gamma"] = jnp.pad(w["gamma"], (0, np_out - cout)).astype(jnp.float32)
            p["beta"] = jnp.pad(w["beta"], (0, np_out - cout)).astype(jnp.float32)
        prepped.append(p)
    return prepped


# ------------------------------- forward -------------------------------------

def conv_layer(x_nhwc, p, c):
    """Conv2d(+bias) [+BatchNorm] [+LeakyReLU] via im2col + tiled MXU matmul."""
    Nb, H, W, _ = x_nhwc.shape
    stride = c["stride"]
    Kp, Np = p["wmat"].shape
    cp_in = Kp // (KW * KW)
    Ho = (H + 2 * PADW - KW) // stride + 1
    Wo = (W + 2 * PADW - KW) // stride + 1
    M = Nb * Ho * Wo
    TM, TN, TK, Mp = _choose_tiles(M, Kp, Np)

    a = im2col(x_nhwc, stride, cp_in, Mp)
    fuse_leaky = c["leaky"] and not c["bn"]
    # bf16 activations between layers; keep pre-BN conv output and the final
    # 1-channel output in f32 (matches the reference's rounding points exactly).
    out_dtype = jnp.bfloat16 if fuse_leaky else jnp.float32
    y, stats = conv_matmul(a, p["wmat"], p["bias"], M=M, TM=TM, TN=TN, TK=TK,
                           leaky=fuse_leaky, want_stats=c["bn"], out_dtype=out_dtype)

    if c["bn"]:
        # Training-mode (biased) batch statistics from in-kernel partial sums.
        st = stats.reshape(-1, 8, Np)
        s = jnp.sum(st[:, 0, :], axis=0)
        ss = jnp.sum(st[:, 1, :], axis=0)
        mean = s / M
        var = jnp.maximum(ss / M - mean * mean, 0.0)
        inv = jax.lax.rsqrt(var + BN_EPS)
        scale = p["gamma"] * inv
        shift = p["beta"] - mean * scale
        # TODO(synk): fuse this affine+LeakyReLU into the next conv's A-tile load
        # (needs per-channel pad values -shift/scale so the spatial zero-padding
        # stays correct); for now it is a single fused bf16-output Pallas pass.
        y = bn_leaky(y, scale, shift, TM)

    cout = c["cout"]
    return y[:M, :cout].reshape(Nb, Ho, Wo, cout)


def nlayer_forward(x_nhwc, cfg, params):
    x = x_nhwc
    for c, p in zip(cfg, params):
        x = conv_layer(x, p, c)
    return x                                            # (N, Ho, Wo, 1) f32


def multiscale_forward(x_nchw, ms_params, *, ms_cfgs):
    """MultiscaleDiscriminator.forward: finest discriminator first, then downsample."""
    num_D = len(ms_cfgs)
    cur = jnp.transpose(x_nchw, (0, 2, 3, 1)).astype(jnp.float32)    # NHWC internally
    results = []
    for i in range(num_D):
        d = num_D - 1 - i
        out_nhwc = nlayer_forward(cur, ms_cfgs[d], ms_params[d])
        results.append([jnp.transpose(out_nhwc, (0, 3, 1, 2))])       # back to NCHW
        if i != num_D - 1:
            cur = avg_pool_3x3_s2(cur, h_axis=1, w_axis=2)
    return results


# ----------------------------- pure-JAX reference ----------------------------

def reference_nlayer(x_nchw, cfg, weights):
    # Operands rounded through bf16 to mirror the MXU path (bf16 in, f32 acc).
    y = x_nchw.astype(jnp.float32)
    for c, w in zip(cfg, weights):
        lhs = y.astype(jnp.bfloat16).astype(jnp.float32)
        rhs = w["w"].astype(jnp.bfloat16).astype(jnp.float32)
        y = jax.lax.conv_general_dilated(
            lhs, rhs, (c["stride"],) * 2, ((PADW, PADW), (PADW, PADW)),
            dimension_numbers=("NCHW", "OIHW", "NCHW"),
            precision=jax.lax.Precision.HIGHEST)
        y = y + w["b"].reshape(1, -1, 1, 1)
        if c["bn"]:
            mean = jnp.mean(y, axis=(0, 2, 3), keepdims=True)
            var = jnp.mean((y - mean) ** 2, axis=(0, 2, 3), keepdims=True)
            y = (y - mean) / jnp.sqrt(var + BN_EPS)
            y = y * w["gamma"].reshape(1, -1, 1, 1) + w["beta"].reshape(1, -1, 1, 1)
        if c["leaky"]:
            y = jnp.where(y >= 0, y, NEG_SLOPE * y)
    return y


def reference_multiscale(x_nchw, ms_weights, ms_cfgs):
    num_D = len(ms_cfgs)
    cur = x_nchw.astype(jnp.float32)
    results = []
    for i in range(num_D):
        d = num_D - 1 - i
        results.append([reference_nlayer(cur, ms_cfgs[d], ms_weights[d])])
        if i != num_D - 1:
            cur = avg_pool_3x3_s2(cur, h_axis=2, w_axis=3)
    return results


# --------------------------------- main ---------------------------------------

if __name__ == "__main__":
    key = jax.random.PRNGKey(0)
    k_in, k_par = jax.random.split(key)

    batch, input_nc, spatial = 2, 4, 16
    ndf, n_layers, num_D = 8, 3, 3

    x = jax.random.normal(k_in, (batch, input_nc, spatial, spatial), jnp.float32)
    ms_cfgs, ms_raw = build_multiscale_params(k_par, input_nc, ndf, n_layers, num_D)
    ms_params = [prepare_discriminator_params(cfg, raw)
                 for cfg, raw in zip(ms_cfgs, ms_raw)]

    fwd = jax.jit(functools.partial(multiscale_forward, ms_cfgs=ms_cfgs))
    outs = jax.block_until_ready(fwd(x, ms_params))

    refs = jax.block_until_ready(reference_multiscale(x, ms_raw, ms_cfgs))

    assert len(outs) == len(refs) == num_D
    for o_list, r_list in zip(outs, refs):
        o, r = o_list[0], r_list[0]
        assert o.shape == r.shape, (o.shape, r.shape)
        np.testing.assert_allclose(np.asarray(o, dtype=np.float32),
                                   np.asarray(r, dtype=np.float32),
                                   rtol=1e-2, atol=1e-2)

    print("KERNEL_OK")
</pallas_src>

<mosaic_0001>
module attributes {stable_mosaic.version = 11 : i64} {
  func.func @_conv_mm_kernel(%arg0: i32, %arg1: i32, %arg2: i32, %arg3: memref<96x128xbf16, #tpu.memory_space<vmem>>, %arg4: memref<128x128xbf16, #tpu.memory_space<vmem>>, %arg5: memref<1x128xf32, #tpu.memory_space<vmem>>, %arg6: memref<96x128xbf16, #tpu.memory_space<vmem>>, %arg7: memref<96x128xf32, #tpu.memory_space<vmem>>) attributes {dimension_semantics = [#tpu.dimension_semantics<parallel>, #tpu.dimension_semantics<parallel>, #tpu.dimension_semantics<arbitrary>], iteration_bounds = array<i64: 2, 1, 1>, scalar_prefetch = 0 : i64, scratch_operands = 1 : i64, tpu.core_type = #tpu.core_type<tc>, window_params = [{transform_indices = @transform_0, window_bounds = array<i64: 96, 128>}, {transform_indices = @transform_1, window_bounds = array<i64: 128, 128>}, {transform_indices = @transform_2, window_bounds = array<i64: 1, 128>}, {transform_indices = @transform_3, window_bounds = array<i64: 96, 128>}]} {
    %c0_i32 = arith.constant 0 : i32
    %0 = arith.cmpi eq, %arg2, %c0_i32 : i32
    %1 = arith.extui %0 : i1 to i32
    %c0_i32_0 = arith.constant 0 : i32
    %2 = arith.cmpi ne, %1, %c0_i32_0 : i32
    scf.if %2 {
      %cst_10 = arith.constant 0.000000e+00 : f32
      %12 = vector.broadcast %cst_10 : f32 to vector<96x128xf32>
      %c0_11 = arith.constant 0 : index
      %c0_12 = arith.constant 0 : index
      %13 = vector.load %arg7[%c0_11, %c0_12] : memref<96x128xf32, #tpu.memory_space<vmem>>, vector<96x128xf32>
      tpu.vector_store %arg7[%c0_11, %c0_12], %12 {strides = array<i32>} : memref<96x128xf32, #tpu.memory_space<vmem>>, vector<96x128xf32>,
    } else {
    }
    %c0 = arith.constant 0 : index
    %c0_1 = arith.constant 0 : index
    %3 = vector.load %arg7[%c0, %c0_1] : memref<96x128xf32, #tpu.memory_space<vmem>>, vector<96x128xf32>
    %c0_2 = arith.constant 0 : index
    %c0_3 = arith.constant 0 : index
    %4 = vector.load %arg3[%c0_2, %c0_3] : memref<96x128xbf16, #tpu.memory_space<vmem>>, vector<96x128xbf16>
    %c0_4 = arith.constant 0 : index
    %c0_5 = arith.constant 0 : index
    %5 = vector.load %arg4[%c0_4, %c0_5] : memref<128x128xbf16, #tpu.memory_space<vmem>>, vector<128x128xbf16>
    %cst = arith.constant dense<0.000000e+00> : vector<96x128xf32>
    %6 = tpu.matmul %4, %5, %cst {dimension_numbers = #tpu.dot_dimension_numbers<[1], [0], [0], [1], [0, 0, 1, 1], [], []>} : vector<96x128xbf16>, vector<128x128xbf16>, vector<96x128xf32> -> vector<96x128xf32>
    %7 = arith.addf %3, %6 : vector<96x128xf32>
    %c0_6 = arith.constant 0 : index
    %c0_7 = arith.constant 0 : index
    %8 = vector.load %arg7[%c0_6, %c0_7] : memref<96x128xf32, #tpu.memory_space<vmem>>, vector<96x128xf32>
    tpu.vector_store %arg7[%c0_6, %c0_7], %7 {strides = array<i32>} : memref<96x128xf32, #tpu.memory_space<vmem>>, vector<96x128xf32>,
    %c0_i32_8 = arith.constant 0 : i32
    %9 = arith.cmpi eq, %arg2, %c0_i32_8 : i32
    %10 = arith.extui %9 : i1 to i32
    %c0_i32_9 = arith.constant 0 : i32
    %11 = arith.cmpi ne, %10, %c0_i32_9 : i32
    scf.if %11 {
      %c0_10 = arith.constant 0 : index
      %c0_11 = arith.constant 0 : index
      %12 = vector.load %arg7[%c0_10, %c0_11] : memref<96x128xf32, #tpu.memory_space<vmem>>, vector<96x128xf32>
      %c0_12 = arith.constant 0 : index
      %c0_13 = arith.constant 0 : index
      %13 = vector.load %arg5[%c0_12, %c0_13] : memref<1x128xf32, #tpu.memory_space<vmem>>, vector<1x128xf32>
      %14 = vector.broadcast %13 : vector<1x128xf32> to vector<96x128xf32>
      %15 = arith.addf %12, %14 : vector<96x128xf32>
      %cst_14 = arith.constant 0.000000e+00 : f32
      %16 = vector.broadcast %cst_14 : f32 to vector<96x128xf32>
      %17 = arith.cmpf oge, %15, %16 : vector<96x128xf32>
      %cst_15 = arith.constant 2.000000e-01 : f32
      %18 = vector.broadcast %cst_15 : f32 to vector<96x128xf32>
      %19 = arith.mulf %18, %15 : vector<96x128xf32>
      %20 = arith.select %17, %15, %19 : vector<96x128xi1>, vector<96x128xf32>
      %21 = arith.truncf %20 : vector<96x128xf32> to vector<96x128xbf16>
      %c0_16 = arith.constant 0 : index
      %c0_17 = arith.constant 0 : index
      %22 = vector.load %arg6[%c0_16, %c0_17] : memref<96x128xbf16, #tpu.memory_space<vmem>>, vector<96x128xbf16>
      tpu.vector_store %arg6[%c0_16, %c0_17], %21 {strides = array<i32>} : memref<96x128xbf16, #tpu.memory_space<vmem>>, vector<96x128xbf16>,
    } else {
    }
    return
  }
  func.func @transform_0(%arg0: i32, %arg1: i32, %arg2: i32) -> (i32, i32) {
    %c0_i32 = arith.constant 0 : i32
    return %arg0, %arg2 : i32, i32
  }
  func.func @transform_1(%arg0: i32, %arg1: i32, %arg2: i32) -> (i32, i32) {
    %c0_i32 = arith.constant 0 : i32
    return %arg2, %arg1 : i32, i32
  }
  func.func @transform_2(%arg0: i32, %arg1: i32, %arg2: i32) -> (i32, i32) {
    %c0_i32 = arith.constant 0 : i32
    %c0_i32_0 = arith.constant 0 : i32
    return %c0_i32, %arg1 : i32, i32
  }
  func.func @transform_3(%arg0: i32, %arg1: i32, %arg2: i32) -> (i32, i32) {
    %c0_i32 = arith.constant 0 : i32
    return %arg0, %arg1 : i32, i32
  }
}

module attributes {stable_mosaic.version = 11 : i64} {
  func.func @_conv_mm_kernel(%arg0: i32, %arg1: i32, %arg2: i32, %arg3: memref<32x128xbf16, #tpu.memory_space<vmem>>, %arg4: memref<128x128xbf16, #tpu.memory_space<vmem>>, %arg5: memref<1x128xf32, #tpu.memory_space<vmem>>, %arg6: memref<32x128xf32, #tpu.memory_space<vmem>>, %arg7: memref<8x128xf32, #tpu.memory_space<vmem>>) attributes {dimension_semantics = [#tpu.dimension_semantics<parallel>, #tpu.dimension_semantics<parallel>, #tpu.dimension_semantics<arbitrary>], iteration_bounds = array<i64: 2, 1, 1>, scalar_prefetch = 0 : i64, scratch_operands = 0 : i64, tpu.core_type = #tpu.core_type<tc>, window_params = [{transform_indices = @transform_0, window_bounds = array<i64: 32, 128>}, {transform_indices = @transform_1, window_bounds = array<i64: 128, 128>}, {transform_indices = @transform_2, window_bounds = array<i64: 1, 128>}, {transform_indices = @transform_3, window_bounds = array<i64: 32, 128>}, {transform_indices = @transform_4, window_bounds = array<i64: 8, 128>}]} {
    %c32_i32 = arith.constant 32 : i32
    %0 = arith.muli %arg0, %c32_i32 : i32
    %c0_i32 = arith.constant 0 : i32
    %1 = arith.cmpi eq, %arg2, %c0_i32 : i32
    %2 = arith.extui %1 : i1 to i32
    %c0_i32_0 = arith.constant 0 : i32
    %3 = arith.cmpi ne, %2, %c0_i32_0 : i32
    scf.if %3 {
      %cst_10 = arith.constant 0.000000e+00 : f32
      %13 = vector.broadcast %cst_10 : f32 to vector<32x128xf32>
      %c0_11 = arith.constant 0 : index
      %c0_12 = arith.constant 0 : index
      %14 = vector.load %arg6[%c0_11, %c0_12] : memref<32x128xf32, #tpu.memory_space<vmem>>, vector<32x128xf32>
      tpu.vector_store %arg6[%c0_11, %c0_12], %13 {strides = array<i32>} : memref<32x128xf32, #tpu.memory_space<vmem>>, vector<32x128xf32>,
    } else {
    }
    %c0 = arith.constant 0 : index
    %c0_1 = arith.constant 0 : index
    %4 = vector.load %arg6[%c0, %c0_1] : memref<32x128xf32, #tpu.memory_space<vmem>>, vector<32x128xf32>
    %c0_2 = arith.constant 0 : index
    %c0_3 = arith.constant 0 : index
    %5 = vector.load %arg3[%c0_2, %c0_3] : memref<32x128xbf16, #tpu.memory_space<vmem>>, vector<32x128xbf16>
    %c0_4 = arith.constant 0 : index
    %c0_5 = arith.constant 0 : index
    %6 = vector.load %arg4[%c0_4, %c0_5] : memref<128x128xbf16, #tpu.memory_space<vmem>>, vector<128x128xbf16>
    %cst = arith.constant dense<0.000000e+00> : vector<32x128xf32>
    %7 = tpu.matmul %5, %6, %cst {dimension_numbers = #tpu.dot_dimension_numbers<[1], [0], [0], [1], [0, 0, 1, 1], [], []>} : vector<32x128xbf16>, vector<128x128xbf16>, vector<32x128xf32> -> vector<32x128xf32>
    %8 = arith.addf %4, %7 : vector<32x128xf32>
    %c0_6 = arith.constant 0 : index
    %c0_7 = arith.constant 0 : index
    %9 = vector.load %arg6[%c0_6, %c0_7] : memref<32x128xf32, #tpu.memory_space<vmem>>, vector<32x128xf32>
    tpu.vector_store %arg6[%c0_6, %c0_7], %8 {strides = array<i32>} : memref<32x128xf32, #tpu.memory_space<vmem>>, vector<32x128xf32>,
    %c0_i32_8 = arith.constant 0 : i32
    %10 = arith.cmpi eq, %arg2, %c0_i32_8 : i32
    %11 = arith.extui %10 : i1 to i32
    %c0_i32_9 = arith.constant 0 : i32
    %12 = arith.cmpi ne, %11, %c0_i32_9 : i32
    scf.if %12 {
      %c0_10 = arith.constant 0 : index
      %c0_11 = arith.constant 0 : index
      %13 = vector.load %arg6[%c0_10, %c0_11] : memref<32x128xf32, #tpu.memory_space<vmem>>, vector<32x128xf32>
      %c0_12 = arith.constant 0 : index
      %c0_13 = arith.constant 0 : index
      %14 = vector.load %arg5[%c0_12, %c0_13] : memref<1x128xf32, #tpu.memory_space<vmem>>, vector<1x128xf32>
      %15 = vector.broadcast %14 : vector<1x128xf32> to vector<32x128xf32>
      %16 = arith.addf %13, %15 : vector<32x128xf32>
      %c0_14 = arith.constant 0 : index
      %c0_15 = arith.constant 0 : index
      %17 = vector.load %arg6[%c0_14, %c0_15] : memref<32x128xf32, #tpu.memory_space<vmem>>, vector<32x128xf32>
      tpu.vector_store %arg6[%c0_14, %c0_15], %16 {strides = array<i32>} : memref<32x128xf32, #tpu.memory_space<vmem>>, vector<32x128xf32>,
      %18 = tpu.iota {dimensions = array<i32: 0>} : vector<32x1xi32>
      %19 = vector.broadcast %0 : i32 to vector<32x1xi32>
      %20 = arith.addi %18, %19 : vector<32x1xi32>
      %c50_i32 = arith.constant 50 : i32
      %21 = vector.broadcast %c50_i32 : i32 to vector<32x1xi32>
      %22 = arith.cmpi slt, %20, %21 : vector<32x1xi32>
      %cst_16 = arith.constant 0.000000e+00 : f32
      %23 = vector.shape_cast %22 : vector<32x1xi1> to vector<32x1xi1>
      %24 = vector.broadcast %23 : vector<32x1xi1> to vector<32x128xi1>
      %25 = vector.broadcast %cst_16 : f32 to vector<32x128xf32>
      %26 = arith.select %24, %16, %25 : vector<32x128xi1>, vector<32x128xf32>
      %cst_17 = arith.constant dense<0.000000e+00> : vector<128xf32>
      %27 = vector.multi_reduction <add>, %26, %cst_17 [0] : vector<32x128xf32> to vector<128xf32>
      %28 = vector.shape_cast %27 : vector<128xf32> to vector<1x128xf32>
      %29 = arith.mulf %26, %26 : vector<32x128xf32>
      %cst_18 = arith.constant dense<0.000000e+00> : vector<128xf32>
      %30 = vector.multi_reduction <add>, %29, %cst_18 [0] : vector<32x128xf32> to vector<128xf32>
      %31 = vector.shape_cast %30 : vector<128xf32> to vector<1x128xf32>
      %32 = tpu.iota {dimensions = array<i32: 0>} : vector<8x128xi32>
      %c0_i32_19 = arith.constant 0 : i32
      %33 = vector.broadcast %c0_i32_19 : i32 to vector<8x128xi32>
      %34 = arith.cmpi eq, %32, %33 : vector<8x128xi32>
      %cst_20 = arith.constant 0.000000e+00 : f32
      %35 = vector.shape_cast %28 : vector<1x128xf32> to vector<1x128xf32>
      %36 = vector.broadcast %35 : vector<1x128xf32> to vector<8x128xf32>
      %37 = vector.broadcast %cst_20 : f32 to vector<8x128xf32>
      %38 = arith.select %34, %36, %37 : vector<8x128xi1>, vector<8x128xf32>
      %c1_i32 = arith.constant 1 : i32
      %39 = vector.broadcast %c1_i32 : i32 to vector<8x128xi32>
      %40 = arith.cmpi eq, %32, %39 : vector<8x128xi32>
      %cst_21 = arith.constant 0.000000e+00 : f32
      %41 = vector.shape_cast %31 : vector<1x128xf32> to vector<1x128xf32>
      %42 = vector.broadcast %41 : vector<1x128xf32> to vector<8x128xf32>
      %43 = vector.broadcast %cst_21 : f32 to vector<8x128xf32>
      %44 = arith.select %40, %42, %43 : vector<8x128xi1>, vector<8x128xf32>
      %45 = arith.addf %38, %44 : vector<8x128xf32>
      %c0_22 = arith.constant 0 : index
      %c0_23 = arith.constant 0 : index
      %46 = vector.load %arg7[%c0_22, %c0_23] : memref<8x128xf32, #tpu.memory_space<vmem>>, vector<8x128xf32>
      tpu.vector_store %arg7[%c0_22, %c0_23], %45 {strides = array<i32>} : memref<8x128xf32, #tpu.memory_space<vmem>>, vector<8x128xf32>,
    } else {
    }
    return
  }
  func.func @transform_0(%arg0: i32, %arg1: i32, %arg2: i32) -> (i32, i32) {
    %c0_i32 = arith.constant 0 : i32
    return %arg0, %arg2 : i32, i32
  }
  func.func @transform_1(%arg0: i32, %arg1: i32, %arg2: i32) -> (i32, i32) {
    %c0_i32 = arith.constant 0 : i32
    return %arg2, %arg1 : i32, i32
  }
  func.func @transform_2(%arg0: i32, %arg1: i32, %arg2: i32) -> (i32, i32) {
    %c0_i32 = arith.constant 0 : i32
    %c0_i32_0 = arith.constant 0 : i32
    return %c0_i32, %arg1 : i32, i32
  }
  func.func @transform_3(%arg0: i32, %arg1: i32, %arg2: i32) -> (i32, i32) {
    %c0_i32 = arith.constant 0 : i32
    return %arg0, %arg1 : i32, i32
  }
  func.func @transform_4(%arg0: i32, %arg1: i32, %arg2: i32) -> (i32, i32) {
    %c0_i32 = arith.constant 0 : i32
    return %arg0, %arg1 : i32, i32
  }
}

module attributes {stable_mosaic.version = 11 : i64} {
  func.func @_bn_leaky_kernel(%arg0: i32, %arg1: memref<32x128xf32, #tpu.memory_space<vmem>>, %arg2: memref<1x128xf32, #tpu.memory_space<vmem>>, %arg3: memref<1x128xf32, #tpu.memory_space<vmem>>, %arg4: memref<32x128xbf16, #tpu.memory_space<vmem>>) attributes {dimension_semantics = [#tpu.dimension_semantics<parallel>], iteration_bounds = array<i64: 2>, scalar_prefetch = 0 : i64, scratch_operands = 0 : i64, tpu.core_type = #tpu.core_type<tc>, window_params = [{transform_indices = @transform_0, window_bounds = array<i64: 32, 128>}, {pipeline_mode = #tpu.pipeline_mode<synchronous>, transform_indices = @transform_1, window_bounds = array<i64: 1, 128>}, {pipeline_mode = #tpu.pipeline_mode<synchronous>, transform_indices = @transform_2, window_bounds = array<i64: 1, 128>}, {transform_indices = @transform_3, window_bounds = array<i64: 32, 128>}]} {
    %c0 = arith.constant 0 : index
    %c0_0 = arith.constant 0 : index
    %0 = vector.load %arg1[%c0, %c0_0] : memref<32x128xf32, #tpu.memory_space<vmem>>, vector<32x128xf32>
    %c0_1 = arith.constant 0 : index
    %c0_2 = arith.constant 0 : index
    %1 = vector.load %arg2[%c0_1, %c0_2] : memref<1x128xf32, #tpu.memory_space<vmem>>, vector<1x128xf32>
    %2 = vector.broadcast %1 : vector<1x128xf32> to vector<32x128xf32>
    %3 = arith.mulf %0, %2 : vector<32x128xf32>
    %c0_3 = arith.constant 0 : index
    %c0_4 = arith.constant 0 : index
    %4 = vector.load %arg3[%c0_3, %c0_4] : memref<1x128xf32, #tpu.memory_space<vmem>>, vector<1x128xf32>
    %5 = vector.broadcast %4 : vector<1x128xf32> to vector<32x128xf32>
    %6 = arith.addf %3, %5 : vector<32x128xf32>
    %cst = arith.constant 0.000000e+00 : f32
    %7 = vector.broadcast %cst : f32 to vector<32x128xf32>
    %8 = arith.cmpf oge, %6, %7 : vector<32x128xf32>
    %cst_5 = arith.constant 2.000000e-01 : f32
    %9 = vector.broadcast %cst_5 : f32 to vector<32x128xf32>
    %10 = arith.mulf %9, %6 : vector<32x128xf32>
    %11 = arith.select %8, %6, %10 : vector<32x128xi1>, vector<32x128xf32>
    %12 = arith.truncf %11 : vector<32x128xf32> to vector<32x128xbf16>
    %c0_6 = arith.constant 0 : index
    %c0_7 = arith.constant 0 : index
    %13 = vector.load %arg4[%c0_6, %c0_7] : memref<32x128xbf16, #tpu.memory_space<vmem>>, vector<32x128xbf16>
    tpu.vector_store %arg4[%c0_6, %c0_7], %12 {strides = array<i32>} : memref<32x128xbf16, #tpu.memory_space<vmem>>, vector<32x128xbf16>,
    return
  }
  func.func @transform_0(%arg0: i32) -> (i32, i32) {
    %c0_i32 = arith.constant 0 : i32
    %c0_i32_0 = arith.constant 0 : i32
    return %arg0, %c0_i32 : i32, i32
  }
  func.func @transform_1(%arg0: i32) -> (i32, i32) {
    %c0_i32 = arith.constant 0 : i32
    %c0_i32_0 = arith.constant 0 : i32
    %c0_i32_1 = arith.constant 0 : i32
    return %c0_i32, %c0_i32_0 : i32, i32
  }
  func.func @transform_2(%arg0: i32) -> (i32, i32) {
    %c0_i32 = arith.constant 0 : i32
    %c0_i32_0 = arith.constant 0 : i32
    %c0_i32_1 = arith.constant 0 : i32
    return %c0_i32, %c0_i32_0 : i32, i32
  }
  func.func @transform_3(%arg0: i32) -> (i32, i32) {
    %c0_i32 = arith.constant 0 : i32
    %c0_i32_0 = arith.constant 0 : i32
    return %arg0, %c0_i32 : i32, i32
  }
}

module attributes {stable_mosaic.version = 11 : i64} {
  func.func @_conv_mm_kernel(%arg0: i32, %arg1: i32, %arg2: i32, %arg3: memref<16x256xbf16, #tpu.memory_space<vmem>>, %arg4: memref<256x128xbf16, #tpu.memory_space<vmem>>, %arg5: memref<1x128xf32, #tpu.memory_space<vmem>>, %arg6: memref<16x128xf32, #tpu.memory_space<vmem>>, %arg7: memref<8x128xf32, #tpu.memory_space<vmem>>) attributes {dimension_semantics = [#tpu.dimension_semantics<parallel>, #tpu.dimension_semantics<parallel>, #tpu.dimension_semantics<arbitrary>], iteration_bounds = array<i64: 2, 1, 1>, scalar_prefetch = 0 : i64, scratch_operands = 0 : i64, tpu.core_type = #tpu.core_type<tc>, window_params = [{transform_indices = @transform_0, window_bounds = array<i64: 16, 256>}, {transform_indices = @transform_1, window_bounds = array<i64: 256, 128>}, {transform_indices = @transform_2, window_bounds = array<i64: 1, 128>}, {transform_indices = @transform_3, window_bounds = array<i64: 16, 128>}, {transform_indices = @transform_4, window_bounds = array<i64: 8, 128>}]} {
    %c16_i32 = arith.constant 16 : i32
    %0 = arith.muli %arg0, %c16_i32 : i32
    %c0_i32 = arith.constant 0 : i32
    %1 = arith.cmpi eq, %arg2, %c0_i32 : i32
    %2 = arith.extui %1 : i1 to i32
    %c0_i32_0 = arith.constant 0 : i32
    %3 = arith.cmpi ne, %2, %c0_i32_0 : i32
    scf.if %3 {
      %cst_10 = arith.constant 0.000000e+00 : f32
      %13 = vector.broadcast %cst_10 : f32 to vector<16x128xf32>
      %c0_11 = arith.constant 0 : index
      %c0_12 = arith.constant 0 : index
      %14 = vector.load %arg6[%c0_11, %c0_12] : memref<16x128xf32, #tpu.memory_space<vmem>>, vector<16x128xf32>
      tpu.vector_store %arg6[%c0_11, %c0_12], %13 {strides = array<i32>} : memref<16x128xf32, #tpu.memory_space<vmem>>, vector<16x128xf32>,
    } else {
    }
    %c0 = arith.constant 0 : index
    %c0_1 = arith.constant 0 : index
    %4 = vector.load %arg6[%c0, %c0_1] : memref<16x128xf32, #tpu.memory_space<vmem>>, vector<16x128xf32>
    %c0_2 = arith.constant 0 : index
    %c0_3 = arith.constant 0 : index
    %5 = vector.load %arg3[%c0_2, %c0_3] : memref<16x256xbf16, #tpu.memory_space<vmem>>, vector<16x256xbf16>
    %c0_4 = arith.constant 0 : index
    %c0_5 = arith.constant 0 : index
    %6 = vector.load %arg4[%c0_4, %c0_5] : memref<256x128xbf16, #tpu.memory_space<vmem>>, vector<256x128xbf16>
    %cst = arith.constant dense<0.000000e+00> : vector<16x128xf32>
    %7 = tpu.matmul %5, %6, %cst {dimension_numbers = #tpu.dot_dimension_numbers<[1], [0], [0], [1], [0, 0, 1, 1], [], []>} : vector<16x256xbf16>, vector<256x128xbf16>, vector<16x128xf32> -> vector<16x128xf32>
    %8 = arith.addf %4, %7 : vector<16x128xf32>
    %c0_6 = arith.constant 0 : index
    %c0_7 = arith.constant 0 : index
    %9 = vector.load %arg6[%c0_6, %c0_7] : memref<16x128xf32, #tpu.memory_space<vmem>>, vector<16x128xf32>
    tpu.vector_store %arg6[%c0_6, %c0_7], %8 {strides = array<i32>} : memref<16x128xf32, #tpu.memory_space<vmem>>, vector<16x128xf32>,
    %c0_i32_8 = arith.constant 0 : i32
    %10 = arith.cmpi eq, %arg2, %c0_i32_8 : i32
    %11 = arith.extui %10 : i1 to i32
    %c0_i32_9 = arith.constant 0 : i32
    %12 = arith.cmpi ne, %11, %c0_i32_9 : i32
    scf.if %12 {
      %c0_10 = arith.constant 0 : index
      %c0_11 = arith.constant 0 : index
      %13 = vector.load %arg6[%c0_10, %c0_11] : memref<16x128xf32, #tpu.memory_space<vmem>>, vector<16x128xf32>
      %c0_12 = arith.constant 0 : index
      %c0_13 = arith.constant 0 : index
      %14 = vector.load %arg5[%c0_12, %c0_13] : memref<1x128xf32, #tpu.memory_space<vmem>>, vector<1x128xf32>
      %15 = vector.broadcast %14 : vector<1x128xf32> to vector<16x128xf32>
      %16 = arith.addf %13, %15 : vector<16x128xf32>
      %c0_14 = arith.constant 0 : index
      %c0_15 = arith.constant 0 : index
      %17 = vector.load %arg6[%c0_14, %c0_15] : memref<16x128xf32, #tpu.memory_space<vmem>>, vector<16x128xf32>
      tpu.vector_store %arg6[%c0_14, %c0_15], %16 {strides = array<i32>} : memref<16x128xf32, #tpu.memory_space<vmem>>, vector<16x128xf32>,
      %18 = tpu.iota {dimensions = array<i32: 0>} : vector<16x1xi32>
      %19 = vector.broadcast %0 : i32 to vector<16x1xi32>
      %20 = arith.addi %18, %19 : vector<16x1xi32>
      %c18_i32 = arith.constant 18 : i32
      %21 = vector.broadcast %c18_i32 : i32 to vector<16x1xi32>
      %22 = arith.cmpi slt, %20, %21 : vector<16x1xi32>
      %cst_16 = arith.constant 0.000000e+00 : f32
      %23 = vector.shape_cast %22 : vector<16x1xi1> to vector<16x1xi1>
      %24 = vector.broadcast %23 : vector<16x1xi1> to vector<16x128xi1>
      %25 = vector.broadcast %cst_16 : f32 to vector<16x128xf32>
      %26 = arith.select %24, %16, %25 : vector<16x128xi1>, vector<16x128xf32>
      %cst_17 = arith.constant dense<0.000000e+00> : vector<128xf32>
      %27 = vector.multi_reduction <add>, %26, %cst_17 [0] : vector<16x128xf32> to vector<128xf32>
      %28 = vector.shape_cast %27 : vector<128xf32> to vector<1x128xf32>
      %29 = arith.mulf %26, %26 : vector<16x128xf32>
      %cst_18 = arith.constant dense<0.000000e+00> : vector<128xf32>
      %30 = vector.multi_reduction <add>, %29, %cst_18 [0] : vector<16x128xf32> to vector<128xf32>
      %31 = vector.shape_cast %30 : vector<128xf32> to vector<1x128xf32>
      %32 = tpu.iota {dimensions = array<i32: 0>} : vector<8x128xi32>
      %c0_i32_19 = arith.constant 0 : i32
      %33 = vector.broadcast %c0_i32_19 : i32 to vector<8x128xi32>
      %34 = arith.cmpi eq, %32, %33 : vector<8x128xi32>
      %cst_20 = arith.constant 0.000000e+00 : f32
      %35 = vector.shape_cast %28 : vector<1x128xf32> to vector<1x128xf32>
      %36 = vector.broadcast %35 : vector<1x128xf32> to vector<8x128xf32>
      %37 = vector.broadcast %cst_20 : f32 to vector<8x128xf32>
      %38 = arith.select %34, %36, %37 : vector<8x128xi1>, vector<8x128xf32>
      %c1_i32 = arith.constant 1 : i32
      %39 = vector.broadcast %c1_i32 : i32 to vector<8x128xi32>
      %40 = arith.cmpi eq, %32, %39 : vector<8x128xi32>
      %cst_21 = arith.constant 0.000000e+00 : f32
      %41 = vector.shape_cast %31 : vector<1x128xf32> to vector<1x128xf32>
      %42 = vector.broadcast %41 : vector<1x128xf32> to vector<8x128xf32>
      %43 = vector.broadcast %cst_21 : f32 to vector<8x128xf32>
      %44 = arith.select %40, %42, %43 : vector<8x128xi1>, vector<8x128xf32>
      %45 = arith.addf %38, %44 : vector<8x128xf32>
      %c0_22 = arith.constant 0 : index
      %c0_23 = arith.constant 0 : index
      %46 = vector.load %arg7[%c0_22, %c0_23] : memref<8x128xf32, #tpu.memory_space<vmem>>, vector<8x128xf32>
      tpu.vector_store %arg7[%c0_22, %c0_23], %45 {strides = array<i32>} : memref<8x128xf32, #tpu.memory_space<vmem>>, vector<8x128xf32>,
    } else {
    }
    return
  }
  func.func @transform_0(%arg0: i32, %arg1: i32, %arg2: i32) -> (i32, i32) {
    %c0_i32 = arith.constant 0 : i32
    return %arg0, %arg2 : i32, i32
  }
  func.func @transform_1(%arg0: i32, %arg1: i32, %arg2: i32) -> (i32, i32) {
    %c0_i32 = arith.constant 0 : i32
    return %arg2, %arg1 : i32, i32
  }
  func.func @transform_2(%arg0: i32, %arg1: i32, %arg2: i32) -> (i32, i32) {
    %c0_i32 = arith.constant 0 : i32
    %c0_i32_0 = arith.constant 0 : i32
    return %c0_i32, %arg1 : i32, i32
  }
  func.func @transform_3(%arg0: i32, %arg1: i32, %arg2: i32) -> (i32, i32) {
    %c0_i32 = arith.constant 0 : i32
    return %arg0, %arg1 : i32, i32
  }
  func.func @transform_4(%arg0: i32, %arg1: i32, %arg2: i32) -> (i32, i32) {
    %c0_i32 = arith.constant 0 : i32
    return %arg0, %arg1 : i32, i32
  }
}

module attributes {stable_mosaic.version = 11 : i64} {
  func.func @_bn_leaky_kernel(%arg0: i32, %arg1: memref<16x128xf32, #tpu.memory_space<vmem>>, %arg2: memref<1x128xf32, #tpu.memory_space<vmem>>, %arg3: memref<1x128xf32, #tpu.memory_space<vmem>>, %arg4: memref<16x128xbf16, #tpu.memory_space<vmem>>) attributes {dimension_semantics = [#tpu.dimension_semantics<parallel>], iteration_bounds = array<i64: 2>, scalar_prefetch = 0 : i64, scratch_operands = 0 : i64, tpu.core_type = #tpu.core_type<tc>, window_params = [{transform_indices = @transform_0, window_bounds = array<i64: 16, 128>}, {pipeline_mode = #tpu.pipeline_mode<synchronous>, transform_indices = @transform_1, window_bounds = array<i64: 1, 128>}, {pipeline_mode = #tpu.pipeline_mode<synchronous>, transform_indices = @transform_2, window_bounds = array<i64: 1, 128>}, {transform_indices = @transform_3, window_bounds = array<i64: 16, 128>}]} {
    %c0 = arith.constant 0 : index
    %c0_0 = arith.constant 0 : index
    %0 = vector.load %arg1[%c0, %c0_0] : memref<16x128xf32, #tpu.memory_space<vmem>>, vector<16x128xf32>
    %c0_1 = arith.constant 0 : index
    %c0_2 = arith.constant 0 : index
    %1 = vector.load %arg2[%c0_1, %c0_2] : memref<1x128xf32, #tpu.memory_space<vmem>>, vector<1x128xf32>
    %2 = vector.broadcast %1 : vector<1x128xf32> to vector<16x128xf32>
    %3 = arith.mulf %0, %2 : vector<16x128xf32>
    %c0_3 = arith.constant 0 : index
    %c0_4 = arith.constant 0 : index
    %4 = vector.load %arg3[%c0_3, %c0_4] : memref<1x128xf32, #tpu.memory_space<vmem>>, vector<1x128xf32>
    %5 = vector.broadcast %4 : vector<1x128xf32> to vector<16x128xf32>
    %6 = arith.addf %3, %5 : vector<16x128xf32>
    %cst = arith.constant 0.000000e+00 : f32
    %7 = vector.broadcast %cst : f32 to vector<16x128xf32>
    %8 = arith.cmpf oge, %6, %7 : vector<16x128xf32>
    %cst_5 = arith.constant 2.000000e-01 : f32
    %9 = vector.broadcast %cst_5 : f32 to vector<16x128xf32>
    %10 = arith.mulf %9, %6 : vector<16x128xf32>
    %11 = arith.select %8, %6, %10 : vector<16x128xi1>, vector<16x128xf32>
    %12 = arith.truncf %11 : vector<16x128xf32> to vector<16x128xbf16>
    %c0_6 = arith.constant 0 : index
    %c0_7 = arith.constant 0 : index
    %13 = vector.load %arg4[%c0_6, %c0_7] : memref<16x128xbf16, #tpu.memory_space<vmem>>, vector<16x128xbf16>
    tpu.vector_store %arg4[%c0_6, %c0_7], %12 {strides = array<i32>} : memref<16x128xbf16, #tpu.memory_space<vmem>>, vector<16x128xbf16>,
    return
  }
  func.func @transform_0(%arg0: i32) -> (i32, i32) {
    %c0_i32 = arith.constant 0 : i32
    %c0_i32_0 = arith.constant 0 : i32
    return %arg0, %c0_i32 : i32, i32
  }
  func.func @transform_1(%arg0: i32) -> (i32, i32) {
    %c0_i32 = arith.constant 0 : i32
    %c0_i32_0 = arith.constant 0 : i32
    %c0_i32_1 = arith.constant 0 : i32
    return %c0_i32, %c0_i32_0 : i32, i32
  }
  func.func @transform_2(%arg0: i32) -> (i32, i32) {
    %c0_i32 = arith.constant 0 : i32
    %c0_i32_0 = arith.constant 0 : i32
    %c0_i32_1 = arith.constant 0 : i32
    return %c0_i32, %c0_i32_0 : i32, i32
  }
  func.func @transform_3(%arg0: i32) -> (i32, i32) {
    %c0_i32 = arith.constant 0 : i32
    %c0_i32_0 = arith.constant 0 : i32
    return %arg0, %c0_i32 : i32, i32
  }
}

module attributes {stable_mosaic.version = 11 : i64} {
  func.func @_conv_mm_kernel(%arg0: i32, %arg1: i32, %arg2: i32, %arg3: memref<16x512xbf16, #tpu.memory_space<vmem>>, %arg4: memref<512x128xbf16, #tpu.memory_space<vmem>>, %arg5: memref<1x128xf32, #tpu.memory_space<vmem>>, %arg6: memref<16x128xf32, #tpu.memory_space<vmem>>, %arg7: memref<8x128xf32, #tpu.memory_space<vmem>>) attributes {dimension_semantics = [#tpu.dimension_semantics<parallel>, #tpu.dimension_semantics<parallel>, #tpu.dimension_semantics<arbitrary>], iteration_bounds = array<i64: 2, 1, 1>, scalar_prefetch = 0 : i64, scratch_operands = 0 : i64, tpu.core_type = #tpu.core_type<tc>, window_params = [{transform_indices = @transform_0, window_bounds = array<i64: 16, 512>}, {transform_indices = @transform_1, window_bounds = array<i64: 512, 128>}, {transform_indices = @transform_2, window_bounds = array<i64: 1, 128>}, {transform_indices = @transform_3, window_bounds = array<i64: 16, 128>}, {transform_indices = @transform_4, window_bounds = array<i64: 8, 128>}]} {
    %c16_i32 = arith.constant 16 : i32
    %0 = arith.muli %arg0, %c16_i32 : i32
    %c0_i32 = arith.constant 0 : i32
    %1 = arith.cmpi eq, %arg2, %c0_i32 : i32
    %2 = arith.extui %1 : i1 to i32
    %c0_i32_0 = arith.constant 0 : i32
    %3 = arith.cmpi ne, %2, %c0_i32_0 : i32
    scf.if %3 {
      %cst_10 = arith.constant 0.000000e+00 : f32
      %13 = vector.broadcast %cst_10 : f32 to vector<16x128xf32>
      %c0_11 = arith.constant 0 : index
      %c0_12 = arith.constant 0 : index
      %14 = vector.load %arg6[%c0_11, %c0_12] : memref<16x128xf32, #tpu.memory_space<vmem>>, vector<16x128xf32>
      tpu.vector_store %arg6[%c0_11, %c0_12], %13 {strides = array<i32>} : memref<16x128xf32, #tpu.memory_space<vmem>>, vector<16x128xf32>,
    } else {
    }
    %c0 = arith.constant 0 : index
    %c0_1 = arith.constant 0 : index
    %4 = vector.load %arg6[%c0, %c0_1] : memref<16x128xf32, #tpu.memory_space<vmem>>, vector<16x128xf32>
    %c0_2 = arith.constant 0 : index
    %c0_3 = arith.constant 0 : index
    %5 = vector.load %arg3[%c0_2, %c0_3] : memref<16x512xbf16, #tpu.memory_space<vmem>>, vector<16x512xbf16>
    %c0_4 = arith.constant 0 : index
    %c0_5 = arith.constant 0 : index
    %6 = vector.load %arg4[%c0_4, %c0_5] : memref<512x128xbf16, #tpu.memory_space<vmem>>, vector<512x128xbf16>
    %cst = arith.constant dense<0.000000e+00> : vector<16x128xf32>
    %7 = tpu.matmul %5, %6, %cst {dimension_numbers = #tpu.dot_dimension_numbers<[1], [0], [0], [1], [0, 0, 1, 1], [], []>} : vector<16x512xbf16>, vector<512x128xbf16>, vector<16x128xf32> -> vector<16x128xf32>
    %8 = arith.addf %4, %7 : vector<16x128xf32>
    %c0_6 = arith.constant 0 : index
    %c0_7 = arith.constant 0 : index
    %9 = vector.load %arg6[%c0_6, %c0_7] : memref<16x128xf32, #tpu.memory_space<vmem>>, vector<16x128xf32>
    tpu.vector_store %arg6[%c0_6, %c0_7], %8 {strides = array<i32>} : memref<16x128xf32, #tpu.memory_space<vmem>>, vector<16x128xf32>,
    %c0_i32_8 = arith.constant 0 : i32
    %10 = arith.cmpi eq, %arg2, %c0_i32_8 : i32
    %11 = arith.extui %10 : i1 to i32
    %c0_i32_9 = arith.constant 0 : i32
    %12 = arith.cmpi ne, %11, %c0_i32_9 : i32
    scf.if %12 {
      %c0_10 = arith.constant 0 : index
      %c0_11 = arith.constant 0 : index
      %13 = vector.load %arg6[%c0_10, %c0_11] : memref<16x128xf32, #tpu.memory_space<vmem>>, vector<16x128xf32>
      %c0_12 = arith.constant 0 : index
      %c0_13 = arith.constant 0 : index
      %14 = vector.load %arg5[%c0_12, %c0_13] : memref<1x128xf32, #tpu.memory_space<vmem>>, vector<1x128xf32>
      %15 = vector.broadcast %14 : vector<1x128xf32> to vector<16x128xf32>
      %16 = arith.addf %13, %15 : vector<16x128xf32>
      %c0_14 = arith.constant 0 : index
      %c0_15 = arith.constant 0 : index
      %17 = vector.load %arg6[%c0_14, %c0_15] : memref<16x128xf32, #tpu.memory_space<vmem>>, vector<16x128xf32>
      tpu.vector_store %arg6[%c0_14, %c0_15], %16 {strides = array<i32>} : memref<16x128xf32, #tpu.memory_space<vmem>>, vector<16x128xf32>,
      %18 = tpu.iota {dimensions = array<i32: 0>} : vector<16x1xi32>
      %19 = vector.broadcast %0 : i32 to vector<16x1xi32>
      %20 = arith.addi %18, %19 : vector<16x1xi32>
      %c32_i32 = arith.constant 32 : i32
      %21 = vector.broadcast %c32_i32 : i32 to vector<16x1xi32>
      %22 = arith.cmpi slt, %20, %21 : vector<16x1xi32>
      %cst_16 = arith.constant 0.000000e+00 : f32
      %23 = vector.shape_cast %22 : vector<16x1xi1> to vector<16x1xi1>
      %24 = vector.broadcast %23 : vector<16x1xi1> to vector<16x128xi1>
      %25 = vector.broadcast %cst_16 : f32 to vector<16x128xf32>
      %26 = arith.select %24, %16, %25 : vector<16x128xi1>, vector<16x128xf32>
      %cst_17 = arith.constant dense<0.000000e+00> : vector<128xf32>
      %27 = vector.multi_reduction <add>, %26, %cst_17 [0] : vector<16x128xf32> to vector<128xf32>
      %28 = vector.shape_cast %27 : vector<128xf32> to vector<1x128xf32>
      %29 = arith.mulf %26, %26 : vector<16x128xf32>
      %cst_18 = arith.constant dense<0.000000e+00> : vector<128xf32>
      %30 = vector.multi_reduction <add>, %29, %cst_18 [0] : vector<16x128xf32> to vector<128xf32>
      %31 = vector.shape_cast %30 : vector<128xf32> to vector<1x128xf32>
      %32 = tpu.iota {dimensions = array<i32: 0>} : vector<8x128xi32>
      %c0_i32_19 = arith.constant 0 : i32
      %33 = vector.broadcast %c0_i32_19 : i32 to vector<8x128xi32>
      %34 = arith.cmpi eq, %32, %33 : vector<8x128xi32>
      %cst_20 = arith.constant 0.000000e+00 : f32
      %35 = vector.shape_cast %28 : vector<1x128xf32> to vector<1x128xf32>
      %36 = vector.broadcast %35 : vector<1x128xf32> to vector<8x128xf32>
      %37 = vector.broadcast %cst_20 : f32 to vector<8x128xf32>
      %38 = arith.select %34, %36, %37 : vector<8x128xi1>, vector<8x128xf32>
      %c1_i32 = arith.constant 1 : i32
      %39 = vector.broadcast %c1_i32 : i32 to vector<8x128xi32>
      %40 = arith.cmpi eq, %32, %39 : vector<8x128xi32>
      %cst_21 = arith.constant 0.000000e+00 : f32
      %41 = vector.shape_cast %31 : vector<1x128xf32> to vector<1x128xf32>
      %42 = vector.broadcast %41 : vector<1x128xf32> to vector<8x128xf32>
      %43 = vector.broadcast %cst_21 : f32 to vector<8x128xf32>
      %44 = arith.select %40, %42, %43 : vector<8x128xi1>, vector<8x128xf32>
      %45 = arith.addf %38, %44 : vector<8x128xf32>
      %c0_22 = arith.constant 0 : index
      %c0_23 = arith.constant 0 : index
      %46 = vector.load %arg7[%c0_22, %c0_23] : memref<8x128xf32, #tpu.memory_space<vmem>>, vector<8x128xf32>
      tpu.vector_store %arg7[%c0_22, %c0_23], %45 {strides = array<i32>} : memref<8x128xf32, #tpu.memory_space<vmem>>, vector<8x128xf32>,
    } else {
    }
    return
  }
  func.func @transform_0(%arg0: i32, %arg1: i32, %arg2: i32) -> (i32, i32) {
    %c0_i32 = arith.constant 0 : i32
    return %arg0, %arg2 : i32, i32
  }
  func.func @transform_1(%arg0: i32, %arg1: i32, %arg2: i32) -> (i32, i32) {
    %c0_i32 = arith.constant 0 : i32
    return %arg2, %arg1 : i32, i32
  }
  func.func @transform_2(%arg0: i32, %arg1: i32, %arg2: i32) -> (i32, i32) {
    %c0_i32 = arith.constant 0 : i32
    %c0_i32_0 = arith.constant 0 : i32
    return %c0_i32, %arg1 : i32, i32
  }
  func.func @transform_3(%arg0: i32, %arg1: i32, %arg2: i32) -> (i32, i32) {
    %c0_i32 = arith.constant 0 : i32
    return %arg0, %arg1 : i32, i32
  }
  func.func @transform_4(%arg0: i32, %arg1: i32, %arg2: i32) -> (i32, i32) {
    %c0_i32 = arith.constant 0 : i32
    return %arg0, %arg1 : i32, i32
  }
}

module attributes {stable_mosaic.version = 11 : i64} {
  func.func @_conv_mm_kernel(%arg0: i32, %arg1: i32, %arg2: i32, %arg3: memref<32x1024xbf16, #tpu.memory_space<vmem>>, %arg4: memref<1024x128xbf16, #tpu.memory_space<vmem>>, %arg5: memref<1x128xf32, #tpu.memory_space<vmem>>, %arg6: memref<32x128xf32, #tpu.memory_space<vmem>>) attributes {dimension_semantics = [#tpu.dimension_semantics<parallel>, #tpu.dimension_semantics<parallel>, #tpu.dimension_semantics<arbitrary>], iteration_bounds = array<i64: 2, 1, 1>, scalar_prefetch = 0 : i64, scratch_operands = 0 : i64, tpu.core_type = #tpu.core_type<tc>, window_params = [{transform_indices = @transform_0, window_bounds = array<i64: 32, 1024>}, {transform_indices = @transform_1, window_bounds = array<i64: 1024, 128>}, {transform_indices = @transform_2, window_bounds = array<i64: 1, 128>}, {transform_indices = @transform_3, window_bounds = array<i64: 32, 128>}]} {
    %c0_i32 = arith.constant 0 : i32
    %0 = arith.cmpi eq, %arg2, %c0_i32 : i32
    %1 = arith.extui %0 : i1 to i32
    %c0_i32_0 = arith.constant 0 : i32
    %2 = arith.cmpi ne, %1, %c0_i32_0 : i32
    scf.if %2 {
      %cst_10 = arith.constant 0.000000e+00 : f32
      %12 = vector.broadcast %cst_10 : f32 to vector<32x128xf32>
      %c0_11 = arith.constant 0 : index
      %c0_12 = arith.constant 0 : index
      %13 = vector.load %arg6[%c0_11, %c0_12] : memref<32x128xf32, #tpu.memory_space<vmem>>, vector<32x128xf32>
      tpu.vector_store %arg6[%c0_11, %c0_12], %12 {strides = array<i32>} : memref<32x128xf32, #tpu.memory_space<vmem>>, vector<32x128xf32>,
    } else {
    }
    %c0 = arith.constant 0 : index
    %c0_1 = arith.constant 0 : index
    %3 = vector.load %arg6[%c0, %c0_1] : memref<32x128xf32, #tpu.memory_space<vmem>>, vector<32x128xf32>
    %c0_2 = arith.constant 0 : index
    %c0_3 = arith.constant 0 : index
    %4 = vector.load %arg3[%c0_2, %c0_3] : memref<32x1024xbf16, #tpu.memory_space<vmem>>, vector<32x1024xbf16>
    %c0_4 = arith.constant 0 : index
    %c0_5 = arith.constant 0 : index
    %5 = vector.load %arg4[%c0_4, %c0_5] : memref<1024x128xbf16, #tpu.memory_space<vmem>>, vector<1024x128xbf16>
    %cst = arith.constant dense<0.000000e+00> : vector<32x128xf32>
    %6 = tpu.matmul %4, %5, %cst {dimension_numbers = #tpu.dot_dimension_numbers<[1], [0], [0], [1], [0, 0, 1, 1], [], []>} : vector<32x1024xbf16>, vector<1024x128xbf16>, vector<32x128xf32> -> vector<32x128xf32>
    %7 = arith.addf %3, %6 : vector<32x128xf32>
    %c0_6 = arith.constant 0 : index
    %c0_7 = arith.constant 0 : index
    %8 = vector.load %arg6[%c0_6, %c0_7] : memref<32x128xf32, #tpu.memory_space<vmem>>, vector<32x128xf32>
    tpu.vector_store %arg6[%c0_6, %c0_7], %7 {strides = array<i32>} : memref<32x128xf32, #tpu.memory_space<vmem>>, vector<32x128xf32>,
    %c0_i32_8 = arith.constant 0 : i32
    %9 = arith.cmpi eq, %arg2, %c0_i32_8 : i32
    %10 = arith.extui %9 : i1 to i32
    %c0_i32_9 = arith.constant 0 : i32
    %11 = arith.cmpi ne, %10, %c0_i32_9 : i32
    scf.if %11 {
      %c0_10 = arith.constant 0 : index
      %c0_11 = arith.constant 0 : index
      %12 = vector.load %arg6[%c0_10, %c0_11] : memref<32x128xf32, #tpu.memory_space<vmem>>, vector<32x128xf32>
      %c0_12 = arith.constant 0 : index
      %c0_13 = arith.constant 0 : index
      %13 = vector.load %arg5[%c0_12, %c0_13] : memref<1x128xf32, #tpu.memory_space<vmem>>, vector<1x128xf32>
      %14 = vector.broadcast %13 : vector<1x128xf32> to vector<32x128xf32>
      %15 = arith.addf %12, %14 : vector<32x128xf32>
      %c0_14 = arith.constant 0 : index
      %c0_15 = arith.constant 0 : index
      %16 = vector.load %arg6[%c0_14, %c0_15] : memref<32x128xf32, #tpu.memory_space<vmem>>, vector<32x128xf32>
      tpu.vector_store %arg6[%c0_14, %c0_15], %15 {strides = array<i32>} : memref<32x128xf32, #tpu.memory_space<vmem>>, vector<32x128xf32>,
    } else {
    }
    return
  }
  func.func @transform_0(%arg0: i32, %arg1: i32, %arg2: i32) -> (i32, i32) {
    %c0_i32 = arith.constant 0 : i32
    return %arg0, %arg2 : i32, i32
  }
  func.func @transform_1(%arg0: i32, %arg1: i32, %arg2: i32) -> (i32, i32) {
    %c0_i32 = arith.constant 0 : i32
    return %arg2, %arg1 : i32, i32
  }
  func.func @transform_2(%arg0: i32, %arg1: i32, %arg2: i32) -> (i32, i32) {
    %c0_i32 = arith.constant 0 : i32
    %c0_i32_0 = arith.constant 0 : i32
    return %c0_i32, %arg1 : i32, i32
  }
  func.func @transform_3(%arg0: i32, %arg1: i32, %arg2: i32) -> (i32, i32) {
    %c0_i32 = arith.constant 0 : i32
    return %arg0, %arg1 : i32, i32
  }
}

module attributes {stable_mosaic.version = 11 : i64} {
  func.func @_conv_mm_kernel(%arg0: i32, %arg1: i32, %arg2: i32, %arg3: memref<32x128xbf16, #tpu.memory_space<vmem>>, %arg4: memref<128x128xbf16, #tpu.memory_space<vmem>>, %arg5: memref<1x128xf32, #tpu.memory_space<vmem>>, %arg6: memref<32x128xbf16, #tpu.memory_space<vmem>>, %arg7: memref<32x128xf32, #tpu.memory_space<vmem>>) attributes {dimension_semantics = [#tpu.dimension_semantics<parallel>, #tpu.dimension_semantics<parallel>, #tpu.dimension_semantics<arbitrary>], iteration_bounds = array<i64: 2, 1, 1>, scalar_prefetch = 0 : i64, scratch_operands = 1 : i64, tpu.core_type = #tpu.core_type<tc>, window_params = [{transform_indices = @transform_0, window_bounds = array<i64: 32, 128>}, {transform_indices = @transform_1, window_bounds = array<i64: 128, 128>}, {transform_indices = @transform_2, window_bounds = array<i64: 1, 128>}, {transform_indices = @transform_3, window_bounds = array<i64: 32, 128>}]} {
    %c0_i32 = arith.constant 0 : i32
    %0 = arith.cmpi eq, %arg2, %c0_i32 : i32
    %1 = arith.extui %0 : i1 to i32
    %c0_i32_0 = arith.constant 0 : i32
    %2 = arith.cmpi ne, %1, %c0_i32_0 : i32
    scf.if %2 {
      %cst_10 = arith.constant 0.000000e+00 : f32
      %12 = vector.broadcast %cst_10 : f32 to vector<32x128xf32>
      %c0_11 = arith.constant 0 : index
      %c0_12 = arith.constant 0 : index
      %13 = vector.load %arg7[%c0_11, %c0_12] : memref<32x128xf32, #tpu.memory_space<vmem>>, vector<32x128xf32>
      tpu.vector_store %arg7[%c0_11, %c0_12], %12 {strides = array<i32>} : memref<32x128xf32, #tpu.memory_space<vmem>>, vector<32x128xf32>,
    } else {
    }
    %c0 = arith.constant 0 : index
    %c0_1 = arith.constant 0 : index
    %3 = vector.load %arg7[%c0, %c0_1] : memref<32x128xf32, #tpu.memory_space<vmem>>, vector<32x128xf32>
    %c0_2 = arith.constant 0 : index
    %c0_3 = arith.constant 0 : index
    %4 = vector.load %arg3[%c0_2, %c0_3] : memref<32x128xbf16, #tpu.memory_space<vmem>>, vector<32x128xbf16>
    %c0_4 = arith.constant 0 : index
    %c0_5 = arith.constant 0 : index
    %5 = vector.load %arg4[%c0_4, %c0_5] : memref<128x128xbf16, #tpu.memory_space<vmem>>, vector<128x128xbf16>
    %cst = arith.constant dense<0.000000e+00> : vector<32x128xf32>
    %6 = tpu.matmul %4, %5, %cst {dimension_numbers = #tpu.dot_dimension_numbers<[1], [0], [0], [1], [0, 0, 1, 1], [], []>} : vector<32x128xbf16>, vector<128x128xbf16>, vector<32x128xf32> -> vector<32x128xf32>
    %7 = arith.addf %3, %6 : vector<32x128xf32>
    %c0_6 = arith.constant 0 : index
    %c0_7 = arith.constant 0 : index
    %8 = vector.load %arg7[%c0_6, %c0_7] : memref<32x128xf32, #tpu.memory_space<vmem>>, vector<32x128xf32>
    tpu.vector_store %arg7[%c0_6, %c0_7], %7 {strides = array<i32>} : memref<32x128xf32, #tpu.memory_space<vmem>>, vector<32x128xf32>,
    %c0_i32_8 = arith.constant 0 : i32
    %9 = arith.cmpi eq, %arg2, %c0_i32_8 : i32
    %10 = arith.extui %9 : i1 to i32
    %c0_i32_9 = arith.constant 0 : i32
    %11 = arith.cmpi ne, %10, %c0_i32_9 : i32
    scf.if %11 {
      %c0_10 = arith.constant 0 : index
      %c0_11 = arith.constant 0 : index
      %12 = vector.load %arg7[%c0_10, %c0_11] : memref<32x128xf32, #tpu.memory_space<vmem>>, vector<32x128xf32>
      %c0_12 = arith.constant 0 : index
      %c0_13 = arith.constant 0 : index
      %13 = vector.load %arg5[%c0_12, %c0_13] : memref<1x128xf32, #tpu.memory_space<vmem>>, vector<1x128xf32>
      %14 = vector.broadcast %13 : vector<1x128xf32> to vector<32x128xf32>
      %15 = arith.addf %12, %14 : vector<32x128xf32>
      %cst_14 = arith.constant 0.000000e+00 : f32
      %16 = vector.broadcast %cst_14 : f32 to vector<32x128xf32>
      %17 = arith.cmpf oge, %15, %16 : vector<32x128xf32>
      %cst_15 = arith.constant 2.000000e-01 : f32
      %18 = vector.broadcast %cst_15 : f32 to vector<32x128xf32>
      %19 = arith.mulf %18, %15 : vector<32x128xf32>
      %20 = arith.select %17, %15, %19 : vector<32x128xi1>, vector<32x128xf32>
      %21 = arith.truncf %20 : vector<32x128xf32> to vector<32x128xbf16>
      %c0_16 = arith.constant 0 : index
      %c0_17 = arith.constant 0 : index
      %22 = vector.load %arg6[%c0_16, %c0_17] : memref<32x128xbf16, #tpu.memory_space<vmem>>, vector<32x128xbf16>
      tpu.vector_store %arg6[%c0_16, %c0_17], %21 {strides = array<i32>} : memref<32x128xbf16, #tpu.memory_space<vmem>>, vector<32x128xbf16>,
    } else {
    }
    return
  }
  func.func @transform_0(%arg0: i32, %arg1: i32, %arg2: i32) -> (i32, i32) {
    %c0_i32 = arith.constant 0 : i32
    return %arg0, %arg2 : i32, i32
  }
  func.func @transform_1(%arg0: i32, %arg1: i32, %arg2: i32) -> (i32, i32) {
    %c0_i32 = arith.constant 0 : i32
    return %arg2, %arg1 : i32, i32
  }
  func.func @transform_2(%arg0: i32, %arg1: i32, %arg2: i32) -> (i32, i32) {
    %c0_i32 = arith.constant 0 : i32
    %c0_i32_0 = arith.constant 0 : i32
    return %c0_i32, %arg1 : i32, i32
  }
  func.func @transform_3(%arg0: i32, %arg1: i32, %arg2: i32) -> (i32, i32) {
    %c0_i32 = arith.constant 0 : i32
    return %arg0, %arg1 : i32, i32
  }
}

module attributes {stable_mosaic.version = 11 : i64} {
  func.func @_conv_mm_kernel(%arg0: i32, %arg1: i32, %arg2: i32, %arg3: memref<16x128xbf16, #tpu.memory_space<vmem>>, %arg4: memref<128x128xbf16, #tpu.memory_space<vmem>>, %arg5: memref<1x128xf32, #tpu.memory_space<vmem>>, %arg6: memref<16x128xf32, #tpu.memory_space<vmem>>, %arg7: memref<8x128xf32, #tpu.memory_space<vmem>>) attributes {dimension_semantics = [#tpu.dimension_semantics<parallel>, #tpu.dimension_semantics<parallel>, #tpu.dimension_semantics<arbitrary>], iteration_bounds = array<i64: 2, 1, 1>, scalar_prefetch = 0 : i64, scratch_operands = 0 : i64, tpu.core_type = #tpu.core_type<tc>, window_params = [{transform_indices = @transform_0, window_bounds = array<i64: 16, 128>}, {transform_indices = @transform_1, window_bounds = array<i64: 128, 128>}, {transform_indices = @transform_2, window_bounds = array<i64: 1, 128>}, {transform_indices = @transform_3, window_bounds = array<i64: 16, 128>}, {transform_indices = @transform_4, window_bounds = array<i64: 8, 128>}]} {
    %c16_i32 = arith.constant 16 : i32
    %0 = arith.muli %arg0, %c16_i32 : i32
    %c0_i32 = arith.constant 0 : i32
    %1 = arith.cmpi eq, %arg2, %c0_i32 : i32
    %2 = arith.extui %1 : i1 to i32
    %c0_i32_0 = arith.constant 0 : i32
    %3 = arith.cmpi ne, %2, %c0_i32_0 : i32
    scf.if %3 {
      %cst_10 = arith.constant 0.000000e+00 : f32
      %13 = vector.broadcast %cst_10 : f32 to vector<16x128xf32>
      %c0_11 = arith.constant 0 : index
      %c0_12 = arith.constant 0 : index
      %14 = vector.load %arg6[%c0_11, %c0_12] : memref<16x128xf32, #tpu.memory_space<vmem>>, vector<16x128xf32>
      tpu.vector_store %arg6[%c0_11, %c0_12], %13 {strides = array<i32>} : memref<16x128xf32, #tpu.memory_space<vmem>>, vector<16x128xf32>,
    } else {
    }
    %c0 = arith.constant 0 : index
    %c0_1 = arith.constant 0 : index
    %4 = vector.load %arg6[%c0, %c0_1] : memref<16x128xf32, #tpu.memory_space<vmem>>, vector<16x128xf32>
    %c0_2 = arith.constant 0 : index
    %c0_3 = arith.constant 0 : index
    %5 = vector.load %arg3[%c0_2, %c0_3] : memref<16x128xbf16, #tpu.memory_space<vmem>>, vector<16x128xbf16>
    %c0_4 = arith.constant 0 : index
    %c0_5 = arith.constant 0 : index
    %6 = vector.load %arg4[%c0_4, %c0_5] : memref<128x128xbf16, #tpu.memory_space<vmem>>, vector<128x128xbf16>
    %cst = arith.constant dense<0.000000e+00> : vector<16x128xf32>
    %7 = tpu.matmul %5, %6, %cst {dimension_numbers = #tpu.dot_dimension_numbers<[1], [0], [0], [1], [0, 0, 1, 1], [], []>} : vector<16x128xbf16>, vector<128x128xbf16>, vector<16x128xf32> -> vector<16x128xf32>
    %8 = arith.addf %4, %7 : vector<16x128xf32>
    %c0_6 = arith.constant 0 : index
    %c0_7 = arith.constant 0 : index
    %9 = vector.load %arg6[%c0_6, %c0_7] : memref<16x128xf32, #tpu.memory_space<vmem>>, vector<16x128xf32>
    tpu.vector_store %arg6[%c0_6, %c0_7], %8 {strides = array<i32>} : memref<16x128xf32, #tpu.memory_space<vmem>>, vector<16x128xf32>,
    %c0_i32_8 = arith.constant 0 : i32
    %10 = arith.cmpi eq, %arg2, %c0_i32_8 : i32
    %11 = arith.extui %10 : i1 to i32
    %c0_i32_9 = arith.constant 0 : i32
    %12 = arith.cmpi ne, %11, %c0_i32_9 : i32
    scf.if %12 {
      %c0_10 = arith.constant 0 : index
      %c0_11 = arith.constant 0 : index
      %13 = vector.load %arg6[%c0_10, %c0_11] : memref<16x128xf32, #tpu.memory_space<vmem>>, vector<16x128xf32>
      %c0_12 = arith.constant 0 : index
      %c0_13 = arith.constant 0 : index
      %14 = vector.load %arg5[%c0_12, %c0_13] : memref<1x128xf32, #tpu.memory_space<vmem>>, vector<1x128xf32>
      %15 = vector.broadcast %14 : vector<1x128xf32> to vector<16x128xf32>
      %16 = arith.addf %13, %15 : vector<16x128xf32>
      %c0_14 = arith.constant 0 : index
      %c0_15 = arith.constant 0 : index
      %17 = vector.load %arg6[%c0_14, %c0_15] : memref<16x128xf32, #tpu.memory_space<vmem>>, vector<16x128xf32>
      tpu.vector_store %arg6[%c0_14, %c0_15], %16 {strides = array<i32>} : memref<16x128xf32, #tpu.memory_space<vmem>>, vector<16x128xf32>,
      %18 = tpu.iota {dimensions = array<i32: 0>} : vector<16x1xi32>
      %19 = vector.broadcast %0 : i32 to vector<16x1xi32>
      %20 = arith.addi %18, %19 : vector<16x1xi32>
      %c18_i32 = arith.constant 18 : i32
      %21 = vector.broadcast %c18_i32 : i32 to vector<16x1xi32>
      %22 = arith.cmpi slt, %20, %21 : vector<16x1xi32>
      %cst_16 = arith.constant 0.000000e+00 : f32
      %23 = vector.shape_cast %22 : vector<16x1xi1> to vector<16x1xi1>
      %24 = vector.broadcast %23 : vector<16x1xi1> to vector<16x128xi1>
      %25 = vector.broadcast %cst_16 : f32 to vector<16x128xf32>
      %26 = arith.select %24, %16, %25 : vector<16x128xi1>, vector<16x128xf32>
      %cst_17 = arith.constant dense<0.000000e+00> : vector<128xf32>
      %27 = vector.multi_reduction <add>, %26, %cst_17 [0] : vector<16x128xf32> to vector<128xf32>
      %28 = vector.shape_cast %27 : vector<128xf32> to vector<1x128xf32>
      %29 = arith.mulf %26, %26 : vector<16x128xf32>
      %cst_18 = arith.constant dense<0.000000e+00> : vector<128xf32>
      %30 = vector.multi_reduction <add>, %29, %cst_18 [0] : vector<16x128xf32> to vector<128xf32>
      %31 = vector.shape_cast %30 : vector<128xf32> to vector<1x128xf32>
      %32 = tpu.iota {dimensions = array<i32: 0>} : vector<8x128xi32>
      %c0_i32_19 = arith.constant 0 : i32
      %33 = vector.broadcast %c0_i32_19 : i32 to vector<8x128xi32>
      %34 = arith.cmpi eq, %32, %33 : vector<8x128xi32>
      %cst_20 = arith.constant 0.000000e+00 : f32
      %35 = vector.shape_cast %28 : vector<1x128xf32> to vector<1x128xf32>
      %36 = vector.broadcast %35 : vector<1x128xf32> to vector<8x128xf32>
      %37 = vector.broadcast %cst_20 : f32 to vector<8x128xf32>
      %38 = arith.select %34, %36, %37 : vector<8x128xi1>, vector<8x128xf32>
      %c1_i32 = arith.constant 1 : i32
      %39 = vector.broadcast %c1_i32 : i32 to vector<8x128xi32>
      %40 = arith.cmpi eq, %32, %39 : vector<8x128xi32>
      %cst_21 = arith.constant 0.000000e+00 : f32
      %41 = vector.shape_cast %31 : vector<1x128xf32> to vector<1x128xf32>
      %42 = vector.broadcast %41 : vector<1x128xf32> to vector<8x128xf32>
      %43 = vector.broadcast %cst_21 : f32 to vector<8x128xf32>
      %44 = arith.select %40, %42, %43 : vector<8x128xi1>, vector<8x128xf32>
      %45 = arith.addf %38, %44 : vector<8x128xf32>
      %c0_22 = arith.constant 0 : index
      %c0_23 = arith.constant 0 : index
      %46 = vector.load %arg7[%c0_22, %c0_23] : memref<8x128xf32, #tpu.memory_space<vmem>>, vector<8x128xf32>
      tpu.vector_store %arg7[%c0_22, %c0_23], %45 {strides = array<i32>} : memref<8x128xf32, #tpu.memory_space<vmem>>, vector<8x128xf32>,
    } else {
    }
    return
  }
  func.func @transform_0(%arg0: i32, %arg1: i32, %arg2: i32) -> (i32, i32) {
    %c0_i32 = arith.constant 0 : i32
    return %arg0, %arg2 : i32, i32
  }
  func.func @transform_1(%arg0: i32, %arg1: i32, %arg2: i32) -> (i32, i32) {
    %c0_i32 = arith.constant 0 : i32
    return %arg2, %arg1 : i32, i32
  }
  func.func @transform_2(%arg0: i32, %arg1: i32, %arg2: i32) -> (i32, i32) {
    %c0_i32 = arith.constant 0 : i32
    %c0_i32_0 = arith.constant 0 : i32
    return %c0_i32, %arg1 : i32, i32
  }
  func.func @transform_3(%arg0: i32, %arg1: i32, %arg2: i32) -> (i32, i32) {
    %c0_i32 = arith.constant 0 : i32
    return %arg0, %arg1 : i32, i32
  }
  func.func @transform_4(%arg0: i32, %arg1: i32, %arg2: i32) -> (i32, i32) {
    %c0_i32 = arith.constant 0 : i32
    return %arg0, %arg1 : i32, i32
  }
}

module attributes {stable_mosaic.version = 11 : i64} {
  func.func @_conv_mm_kernel(%arg0: i32, %arg1: i32, %arg2: i32, %arg3: memref<16x256xbf16, #tpu.memory_space<vmem>>, %arg4: memref<256x128xbf16, #tpu.memory_space<vmem>>, %arg5: memref<1x128xf32, #tpu.memory_space<vmem>>, %arg6: memref<16x128xf32, #tpu.memory_space<vmem>>, %arg7: memref<8x128xf32, #tpu.memory_space<vmem>>) attributes {dimension_semantics = [#tpu.dimension_semantics<parallel>, #tpu.dimension_semantics<parallel>, #tpu.dimension_semantics<arbitrary>], iteration_bounds = array<i64: 1, 1, 1>, scalar_prefetch = 0 : i64, scratch_operands = 0 : i64, tpu.core_type = #tpu.core_type<tc>, window_params = [{transform_indices = @transform_0, window_bounds = array<i64: 16, 256>}, {transform_indices = @transform_1, window_bounds = array<i64: 256, 128>}, {transform_indices = @transform_2, window_bounds = array<i64: 1, 128>}, {transform_indices = @transform_3, window_bounds = array<i64: 16, 128>}, {transform_indices = @transform_4, window_bounds = array<i64: 8, 128>}]} {
    %c16_i32 = arith.constant 16 : i32
    %0 = arith.muli %arg0, %c16_i32 : i32
    %c0_i32 = arith.constant 0 : i32
    %1 = arith.cmpi eq, %arg2, %c0_i32 : i32
    %2 = arith.extui %1 : i1 to i32
    %c0_i32_0 = arith.constant 0 : i32
    %3 = arith.cmpi ne, %2, %c0_i32_0 : i32
    scf.if %3 {
      %cst_10 = arith.constant 0.000000e+00 : f32
      %13 = vector.broadcast %cst_10 : f32 to vector<16x128xf32>
      %c0_11 = arith.constant 0 : index
      %c0_12 = arith.constant 0 : index
      %14 = vector.load %arg6[%c0_11, %c0_12] : memref<16x128xf32, #tpu.memory_space<vmem>>, vector<16x128xf32>
      tpu.vector_store %arg6[%c0_11, %c0_12], %13 {strides = array<i32>} : memref<16x128xf32, #tpu.memory_space<vmem>>, vector<16x128xf32>,
    } else {
    }
    %c0 = arith.constant 0 : index
    %c0_1 = arith.constant 0 : index
    %4 = vector.load %arg6[%c0, %c0_1] : memref<16x128xf32, #tpu.memory_space<vmem>>, vector<16x128xf32>
    %c0_2 = arith.constant 0 : index
    %c0_3 = arith.constant 0 : index
    %5 = vector.load %arg3[%c0_2, %c0_3] : memref<16x256xbf16, #tpu.memory_space<vmem>>, vector<16x256xbf16>
    %c0_4 = arith.constant 0 : index
    %c0_5 = arith.constant 0 : index
    %6 = vector.load %arg4[%c0_4, %c0_5] : memref<256x128xbf16, #tpu.memory_space<vmem>>, vector<256x128xbf16>
    %cst = arith.constant dense<0.000000e+00> : vector<16x128xf32>
    %7 = tpu.matmul %5, %6, %cst {dimension_numbers = #tpu.dot_dimension_numbers<[1], [0], [0], [1], [0, 0, 1, 1], [], []>} : vector<16x256xbf16>, vector<256x128xbf16>, vector<16x128xf32> -> vector<16x128xf32>
    %8 = arith.addf %4, %7 : vector<16x128xf32>
    %c0_6 = arith.constant 0 : index
    %c0_7 = arith.constant 0 : index
    %9 = vector.load %arg6[%c0_6, %c0_7] : memref<16x128xf32, #tpu.memory_space<vmem>>, vector<16x128xf32>
    tpu.vector_store %arg6[%c0_6, %c0_7], %8 {strides = array<i32>} : memref<16x128xf32, #tpu.memory_space<vmem>>, vector<16x128xf32>,
    %c0_i32_8 = arith.constant 0 : i32
    %10 = arith.cmpi eq, %arg2, %c0_i32_8 : i32
    %11 = arith.extui %10 : i1 to i32
    %c0_i32_9 = arith.constant 0 : i32
    %12 = arith.cmpi ne, %11, %c0_i32_9 : i32
    scf.if %12 {
      %c0_10 = arith.constant 0 : index
      %c0_11 = arith.constant 0 : index
      %13 = vector.load %arg6[%c0_10, %c0_11] : memref<16x128xf32, #tpu.memory_space<vmem>>, vector<16x128xf32>
      %c0_12 = arith.constant 0 : index
      %c0_13 = arith.constant 0 : index
      %14 = vector.load %arg5[%c0_12, %c0_13] : memref<1x128xf32, #tpu.memory_space<vmem>>, vector<1x128xf32>
      %15 = vector.broadcast %14 : vector<1x128xf32> to vector<16x128xf32>
      %16 = arith.addf %13, %15 : vector<16x128xf32>
      %c0_14 = arith.constant 0 : index
      %c0_15 = arith.constant 0 : index
      %17 = vector.load %arg6[%c0_14, %c0_15] : memref<16x128xf32, #tpu.memory_space<vmem>>, vector<16x128xf32>
      tpu.vector_store %arg6[%c0_14, %c0_15], %16 {strides = array<i32>} : memref<16x128xf32, #tpu.memory_space<vmem>>, vector<16x128xf32>,
      %18 = tpu.iota {dimensions = array<i32: 0>} : vector<16x1xi32>
      %19 = vector.broadcast %0 : i32 to vector<16x1xi32>
      %20 = arith.addi %18, %19 : vector<16x1xi32>
      %c8_i32 = arith.constant 8 : i32
      %21 = vector.broadcast %c8_i32 : i32 to vector<16x1xi32>
      %22 = arith.cmpi slt, %20, %21 : vector<16x1xi32>
      %cst_16 = arith.constant 0.000000e+00 : f32
      %23 = vector.shape_cast %22 : vector<16x1xi1> to vector<16x1xi1>
      %24 = vector.broadcast %23 : vector<16x1xi1> to vector<16x128xi1>
      %25 = vector.broadcast %cst_16 : f32 to vector<16x128xf32>
      %26 = arith.select %24, %16, %25 : vector<16x128xi1>, vector<16x128xf32>
      %cst_17 = arith.constant dense<0.000000e+00> : vector<128xf32>
      %27 = vector.multi_reduction <add>, %26, %cst_17 [0] : vector<16x128xf32> to vector<128xf32>
      %28 = vector.shape_cast %27 : vector<128xf32> to vector<1x128xf32>
      %29 = arith.mulf %26, %26 : vector<16x128xf32>
      %cst_18 = arith.constant dense<0.000000e+00> : vector<128xf32>
      %30 = vector.multi_reduction <add>, %29, %cst_18 [0] : vector<16x128xf32> to vector<128xf32>
      %31 = vector.shape_cast %30 : vector<128xf32> to vector<1x128xf32>
      %32 = tpu.iota {dimensions = array<i32: 0>} : vector<8x128xi32>
      %c0_i32_19 = arith.constant 0 : i32
      %33 = vector.broadcast %c0_i32_19 : i32 to vector<8x128xi32>
      %34 = arith.cmpi eq, %32, %33 : vector<8x128xi32>
      %cst_20 = arith.constant 0.000000e+00 : f32
      %35 = vector.shape_cast %28 : vector<1x128xf32> to vector<1x128xf32>
      %36 = vector.broadcast %35 : vector<1x128xf32> to vector<8x128xf32>
      %37 = vector.broadcast %cst_20 : f32 to vector<8x128xf32>
      %38 = arith.select %34, %36, %37 : vector<8x128xi1>, vector<8x128xf32>
      %c1_i32 = arith.constant 1 : i32
      %39 = vector.broadcast %c1_i32 : i32 to vector<8x128xi32>
      %40 = arith.cmpi eq, %32, %39 : vector<8x128xi32>
      %cst_21 = arith.constant 0.000000e+00 : f32
      %41 = vector.shape_cast %31 : vector<1x128xf32> to vector<1x128xf32>
      %42 = vector.broadcast %41 : vector<1x128xf32> to vector<8x128xf32>
      %43 = vector.broadcast %cst_21 : f32 to vector<8x128xf32>
      %44 = arith.select %40, %42, %43 : vector<8x128xi1>, vector<8x128xf32>
      %45 = arith.addf %38, %44 : vector<8x128xf32>
      %c0_22 = arith.constant 0 : index
      %c0_23 = arith.constant 0 : index
      %46 = vector.load %arg7[%c0_22, %c0_23] : memref<8x128xf32, #tpu.memory_space<vmem>>, vector<8x128xf32>
      tpu.vector_store %arg7[%c0_22, %c0_23], %45 {strides = array<i32>} : memref<8x128xf32, #tpu.memory_space<vmem>>, vector<8x128xf32>,
    } else {
    }
    return
  }
  func.func @transform_0(%arg0: i32, %arg1: i32, %arg2: i32) -> (i32, i32) {
    %c0_i32 = arith.constant 0 : i32
    return %arg0, %arg2 : i32, i32
  }
  func.func @transform_1(%arg0: i32, %arg1: i32, %arg2: i32) -> (i32, i32) {
    %c0_i32 = arith.constant 0 : i32
    return %arg2, %arg1 : i32, i32
  }
  func.func @transform_2(%arg0: i32, %arg1: i32, %arg2: i32) -> (i32, i32) {
    %c0_i32 = arith.constant 0 : i32
    %c0_i32_0 = arith.constant 0 : i32
    return %c0_i32, %arg1 : i32, i32
  }
  func.func @transform_3(%arg0: i32, %arg1: i32, %arg2: i32) -> (i32, i32) {
    %c0_i32 = arith.constant 0 : i32
    return %arg0, %arg1 : i32, i32
  }
  func.func @transform_4(%arg0: i32, %arg1: i32, %arg2: i32) -> (i32, i32) {
    %c0_i32 = arith.constant 0 : i32
    return %arg0, %arg1 : i32, i32
  }
}

module attributes {stable_mosaic.version = 11 : i64} {
  func.func @_bn_leaky_kernel(%arg0: i32, %arg1: memref<16x128xf32, #tpu.memory_space<vmem>>, %arg2: memref<1x128xf32, #tpu.memory_space<vmem>>, %arg3: memref<1x128xf32, #tpu.memory_space<vmem>>, %arg4: memref<16x128xbf16, #tpu.memory_space<vmem>>) attributes {dimension_semantics = [#tpu.dimension_semantics<parallel>], iteration_bounds = array<i64: 1>, scalar_prefetch = 0 : i64, scratch_operands = 0 : i64, tpu.core_type = #tpu.core_type<tc>, window_params = [{transform_indices = @transform_0, window_bounds = array<i64: 16, 128>}, {pipeline_mode = #tpu.pipeline_mode<synchronous>, transform_indices = @transform_1, window_bounds = array<i64: 1, 128>}, {pipeline_mode = #tpu.pipeline_mode<synchronous>, transform_indices = @transform_2, window_bounds = array<i64: 1, 128>}, {transform_indices = @transform_3, window_bounds = array<i64: 16, 128>}]} {
    %c0 = arith.constant 0 : index
    %c0_0 = arith.constant 0 : index
    %0 = vector.load %arg1[%c0, %c0_0] : memref<16x128xf32, #tpu.memory_space<vmem>>, vector<16x128xf32>
    %c0_1 = arith.constant 0 : index
    %c0_2 = arith.constant 0 : index
    %1 = vector.load %arg2[%c0_1, %c0_2] : memref<1x128xf32, #tpu.memory_space<vmem>>, vector<1x128xf32>
    %2 = vector.broadcast %1 : vector<1x128xf32> to vector<16x128xf32>
    %3 = arith.mulf %0, %2 : vector<16x128xf32>
    %c0_3 = arith.constant 0 : index
    %c0_4 = arith.constant 0 : index
    %4 = vector.load %arg3[%c0_3, %c0_4] : memref<1x128xf32, #tpu.memory_space<vmem>>, vector<1x128xf32>
    %5 = vector.broadcast %4 : vector<1x128xf32> to vector<16x128xf32>
    %6 = arith.addf %3, %5 : vector<16x128xf32>
    %cst = arith.constant 0.000000e+00 : f32
    %7 = vector.broadcast %cst : f32 to vector<16x128xf32>
    %8 = arith.cmpf oge, %6, %7 : vector<16x128xf32>
    %cst_5 = arith.constant 2.000000e-01 : f32
    %9 = vector.broadcast %cst_5 : f32 to vector<16x128xf32>
    %10 = arith.mulf %9, %6 : vector<16x128xf32>
    %11 = arith.select %8, %6, %10 : vector<16x128xi1>, vector<16x128xf32>
    %12 = arith.truncf %11 : vector<16x128xf32> to vector<16x128xbf16>
    %c0_6 = arith.constant 0 : index
    %c0_7 = arith.constant 0 : index
    %13 = vector.load %arg4[%c0_6, %c0_7] : memref<16x128xbf16, #tpu.memory_space<vmem>>, vector<16x128xbf16>
    tpu.vector_store %arg4[%c0_6, %c0_7], %12 {strides = array<i32>} : memref<16x128xbf16, #tpu.memory_space<vmem>>, vector<16x128xbf16>,
    return
  }
  func.func @transform_0(%arg0: i32) -> (i32, i32) {
    %c0_i32 = arith.constant 0 : i32
    %c0_i32_0 = arith.constant 0 : i32
    return %arg0, %c0_i32 : i32, i32
  }
  func.func @transform_1(%arg0: i32) -> (i32, i32) {
    %c0_i32 = arith.constant 0 : i32
    %c0_i32_0 = arith.constant 0 : i32
    %c0_i32_1 = arith.constant 0 : i32
    return %c0_i32, %c0_i32_0 : i32, i32
  }
  func.func @transform_2(%arg0: i32) -> (i32, i32) {
    %c0_i32 = arith.constant 0 : i32
    %c0_i32_0 = arith.constant 0 : i32
    %c0_i32_1 = arith.constant 0 : i32
    return %c0_i32, %c0_i32_0 : i32, i32
  }
  func.func @transform_3(%arg0: i32) -> (i32, i32) {
    %c0_i32 = arith.constant 0 : i32
    %c0_i32_0 = arith.constant 0 : i32
    return %arg0, %c0_i32 : i32, i32
  }
}

module attributes {stable_mosaic.version = 11 : i64} {
  func.func @_conv_mm_kernel(%arg0: i32, %arg1: i32, %arg2: i32, %arg3: memref<16x512xbf16, #tpu.memory_space<vmem>>, %arg4: memref<512x128xbf16, #tpu.memory_space<vmem>>, %arg5: memref<1x128xf32, #tpu.memory_space<vmem>>, %arg6: memref<16x128xf32, #tpu.memory_space<vmem>>, %arg7: memref<8x128xf32, #tpu.memory_space<vmem>>) attributes {dimension_semantics = [#tpu.dimension_semantics<parallel>, #tpu.dimension_semantics<parallel>, #tpu.dimension_semantics<arbitrary>], iteration_bounds = array<i64: 2, 1, 1>, scalar_prefetch = 0 : i64, scratch_operands = 0 : i64, tpu.core_type = #tpu.core_type<tc>, window_params = [{transform_indices = @transform_0, window_bounds = array<i64: 16, 512>}, {transform_indices = @transform_1, window_bounds = array<i64: 512, 128>}, {transform_indices = @transform_2, window_bounds = array<i64: 1, 128>}, {transform_indices = @transform_3, window_bounds = array<i64: 16, 128>}, {transform_indices = @transform_4, window_bounds = array<i64: 8, 128>}]} {
    %c16_i32 = arith.constant 16 : i32
    %0 = arith.muli %arg0, %c16_i32 : i32
    %c0_i32 = arith.constant 0 : i32
    %1 = arith.cmpi eq, %arg2, %c0_i32 : i32
    %2 = arith.extui %1 : i1 to i32
    %c0_i32_0 = arith.constant 0 : i32
    %3 = arith.cmpi ne, %2, %c0_i32_0 : i32
    scf.if %3 {
      %cst_10 = arith.constant 0.000000e+00 : f32
      %13 = vector.broadcast %cst_10 : f32 to vector<16x128xf32>
      %c0_11 = arith.constant 0 : index
      %c0_12 = arith.constant 0 : index
      %14 = vector.load %arg6[%c0_11, %c0_12] : memref<16x128xf32, #tpu.memory_space<vmem>>, vector<16x128xf32>
      tpu.vector_store %arg6[%c0_11, %c0_12], %13 {strides = array<i32>} : memref<16x128xf32, #tpu.memory_space<vmem>>, vector<16x128xf32>,
    } else {
    }
    %c0 = arith.constant 0 : index
    %c0_1 = arith.constant 0 : index
    %4 = vector.load %arg6[%c0, %c0_1] : memref<16x128xf32, #tpu.memory_space<vmem>>, vector<16x128xf32>
    %c0_2 = arith.constant 0 : index
    %c0_3 = arith.constant 0 : index
    %5 = vector.load %arg3[%c0_2, %c0_3] : memref<16x512xbf16, #tpu.memory_space<vmem>>, vector<16x512xbf16>
    %c0_4 = arith.constant 0 : index
    %c0_5 = arith.constant 0 : index
    %6 = vector.load %arg4[%c0_4, %c0_5] : memref<512x128xbf16, #tpu.memory_space<vmem>>, vector<512x128xbf16>
    %cst = arith.constant dense<0.000000e+00> : vector<16x128xf32>
    %7 = tpu.matmul %5, %6, %cst {dimension_numbers = #tpu.dot_dimension_numbers<[1], [0], [0], [1], [0, 0, 1, 1], [], []>} : vector<16x512xbf16>, vector<512x128xbf16>, vector<16x128xf32> -> vector<16x128xf32>
    %8 = arith.addf %4, %7 : vector<16x128xf32>
    %c0_6 = arith.constant 0 : index
    %c0_7 = arith.constant 0 : index
    %9 = vector.load %arg6[%c0_6, %c0_7] : memref<16x128xf32, #tpu.memory_space<vmem>>, vector<16x128xf32>
    tpu.vector_store %arg6[%c0_6, %c0_7], %8 {strides = array<i32>} : memref<16x128xf32, #tpu.memory_space<vmem>>, vector<16x128xf32>,
    %c0_i32_8 = arith.constant 0 : i32
    %10 = arith.cmpi eq, %arg2, %c0_i32_8 : i32
    %11 = arith.extui %10 : i1 to i32
    %c0_i32_9 = arith.constant 0 : i32
    %12 = arith.cmpi ne, %11, %c0_i32_9 : i32
    scf.if %12 {
      %c0_10 = arith.constant 0 : index
      %c0_11 = arith.constant 0 : index
      %13 = vector.load %arg6[%c0_10, %c0_11] : memref<16x128xf32, #tpu.memory_space<vmem>>, vector<16x128xf32>
      %c0_12 = arith.constant 0 : index
      %c0_13 = arith.constant 0 : index
      %14 = vector.load %arg5[%c0_12, %c0_13] : memref<1x128xf32, #tpu.memory_space<vmem>>, vector<1x128xf32>
      %15 = vector.broadcast %14 : vector<1x128xf32> to vector<16x128xf32>
      %16 = arith.addf %13, %15 : vector<16x128xf32>
      %c0_14 = arith.constant 0 : index
      %c0_15 = arith.constant 0 : index
      %17 = vector.load %arg6[%c0_14, %c0_15] : memref<16x128xf32, #tpu.memory_space<vmem>>, vector<16x128xf32>
      tpu.vector_store %arg6[%c0_14, %c0_15], %16 {strides = array<i32>} : memref<16x128xf32, #tpu.memory_space<vmem>>, vector<16x128xf32>,
      %18 = tpu.iota {dimensions = array<i32: 0>} : vector<16x1xi32>
      %19 = vector.broadcast %0 : i32 to vector<16x1xi32>
      %20 = arith.addi %18, %19 : vector<16x1xi32>
      %c18_i32 = arith.constant 18 : i32
      %21 = vector.broadcast %c18_i32 : i32 to vector<16x1xi32>
      %22 = arith.cmpi slt, %20, %21 : vector<16x1xi32>
      %cst_16 = arith.constant 0.000000e+00 : f32
      %23 = vector.shape_cast %22 : vector<16x1xi1> to vector<16x1xi1>
      %24 = vector.broadcast %23 : vector<16x1xi1> to vector<16x128xi1>
      %25 = vector.broadcast %cst_16 : f32 to vector<16x128xf32>
      %26 = arith.select %24, %16, %25 : vector<16x128xi1>, vector<16x128xf32>
      %cst_17 = arith.constant dense<0.000000e+00> : vector<128xf32>
      %27 = vector.multi_reduction <add>, %26, %cst_17 [0] : vector<16x128xf32> to vector<128xf32>
      %28 = vector.shape_cast %27 : vector<128xf32> to vector<1x128xf32>
      %29 = arith.mulf %26, %26 : vector<16x128xf32>
      %cst_18 = arith.constant dense<0.000000e+00> : vector<128xf32>
      %30 = vector.multi_reduction <add>, %29, %cst_18 [0] : vector<16x128xf32> to vector<128xf32>
      %31 = vector.shape_cast %30 : vector<128xf32> to vector<1x128xf32>
      %32 = tpu.iota {dimensions = array<i32: 0>} : vector<8x128xi32>
      %c0_i32_19 = arith.constant 0 : i32
      %33 = vector.broadcast %c0_i32_19 : i32 to vector<8x128xi32>
      %34 = arith.cmpi eq, %32, %33 : vector<8x128xi32>
      %cst_20 = arith.constant 0.000000e+00 : f32
      %35 = vector.shape_cast %28 : vector<1x128xf32> to vector<1x128xf32>
      %36 = vector.broadcast %35 : vector<1x128xf32> to vector<8x128xf32>
      %37 = vector.broadcast %cst_20 : f32 to vector<8x128xf32>
      %38 = arith.select %34, %36, %37 : vector<8x128xi1>, vector<8x128xf32>
      %c1_i32 = arith.constant 1 : i32
      %39 = vector.broadcast %c1_i32 : i32 to vector<8x128xi32>
      %40 = arith.cmpi eq, %32, %39 : vector<8x128xi32>
      %cst_21 = arith.constant 0.000000e+00 : f32
      %41 = vector.shape_cast %31 : vector<1x128xf32> to vector<1x128xf32>
      %42 = vector.broadcast %41 : vector<1x128xf32> to vector<8x128xf32>
      %43 = vector.broadcast %cst_21 : f32 to vector<8x128xf32>
      %44 = arith.select %40, %42, %43 : vector<8x128xi1>, vector<8x128xf32>
      %45 = arith.addf %38, %44 : vector<8x128xf32>
      %c0_22 = arith.constant 0 : index
      %c0_23 = arith.constant 0 : index
      %46 = vector.load %arg7[%c0_22, %c0_23] : memref<8x128xf32, #tpu.memory_space<vmem>>, vector<8x128xf32>
      tpu.vector_store %arg7[%c0_22, %c0_23], %45 {strides = array<i32>} : memref<8x128xf32, #tpu.memory_space<vmem>>, vector<8x128xf32>,
    } else {
    }
    return
  }
  func.func @transform_0(%arg0: i32, %arg1: i32, %arg2: i32) -> (i32, i32) {
    %c0_i32 = arith.constant 0 : i32
    return %arg0, %arg2 : i32, i32
  }
  func.func @transform_1(%arg0: i32, %arg1: i32, %arg2: i32) -> (i32, i32) {
    %c0_i32 = arith.constant 0 : i32
    return %arg2, %arg1 : i32, i32
  }
  func.func @transform_2(%arg0: i32, %arg1: i32, %arg2: i32) -> (i32, i32) {
    %c0_i32 = arith.constant 0 : i32
    %c0_i32_0 = arith.constant 0 : i32
    return %c0_i32, %arg1 : i32, i32
  }
  func.func @transform_3(%arg0: i32, %arg1: i32, %arg2: i32) -> (i32, i32) {
    %c0_i32 = arith.constant 0 : i32
    return %arg0, %arg1 : i32, i32
  }
  func.func @transform_4(%arg0: i32, %arg1: i32, %arg2: i32) -> (i32, i32) {
    %c0_i32 = arith.constant 0 : i32
    return %arg0, %arg1 : i32, i32
  }
}

module attributes {stable_mosaic.version = 11 : i64} {
  func.func @_conv_mm_kernel(%arg0: i32, %arg1: i32, %arg2: i32, %arg3: memref<16x1024xbf16, #tpu.memory_space<vmem>>, %arg4: memref<1024x128xbf16, #tpu.memory_space<vmem>>, %arg5: memref<1x128xf32, #tpu.memory_space<vmem>>, %arg6: memref<16x128xf32, #tpu.memory_space<vmem>>) attributes {dimension_semantics = [#tpu.dimension_semantics<parallel>, #tpu.dimension_semantics<parallel>, #tpu.dimension_semantics<arbitrary>], iteration_bounds = array<i64: 2, 1, 1>, scalar_prefetch = 0 : i64, scratch_operands = 0 : i64, tpu.core_type = #tpu.core_type<tc>, window_params = [{transform_indices = @transform_0, window_bounds = array<i64: 16, 1024>}, {transform_indices = @transform_1, window_bounds = array<i64: 1024, 128>}, {transform_indices = @transform_2, window_bounds = array<i64: 1, 128>}, {transform_indices = @transform_3, window_bounds = array<i64: 16, 128>}]} {
    %c0_i32 = arith.constant 0 : i32
    %0 = arith.cmpi eq, %arg2, %c0_i32 : i32
    %1 = arith.extui %0 : i1 to i32
    %c0_i32_0 = arith.constant 0 : i32
    %2 = arith.cmpi ne, %1, %c0_i32_0 : i32
    scf.if %2 {
      %cst_10 = arith.constant 0.000000e+00 : f32
      %12 = vector.broadcast %cst_10 : f32 to vector<16x128xf32>
      %c0_11 = arith.constant 0 : index
      %c0_12 = arith.constant 0 : index
      %13 = vector.load %arg6[%c0_11, %c0_12] : memref<16x128xf32, #tpu.memory_space<vmem>>, vector<16x128xf32>
      tpu.vector_store %arg6[%c0_11, %c0_12], %12 {strides = array<i32>} : memref<16x128xf32, #tpu.memory_space<vmem>>, vector<16x128xf32>,
    } else {
    }
    %c0 = arith.constant 0 : index
    %c0_1 = arith.constant 0 : index
    %3 = vector.load %arg6[%c0, %c0_1] : memref<16x128xf32, #tpu.memory_space<vmem>>, vector<16x128xf32>
    %c0_2 = arith.constant 0 : index
    %c0_3 = arith.constant 0 : index
    %4 = vector.load %arg3[%c0_2, %c0_3] : memref<16x1024xbf16, #tpu.memory_space<vmem>>, vector<16x1024xbf16>
    %c0_4 = arith.constant 0 : index
    %c0_5 = arith.constant 0 : index
    %5 = vector.load %arg4[%c0_4, %c0_5] : memref<1024x128xbf16, #tpu.memory_space<vmem>>, vector<1024x128xbf16>
    %cst = arith.constant dense<0.000000e+00> : vector<16x128xf32>
    %6 = tpu.matmul %4, %5, %cst {dimension_numbers = #tpu.dot_dimension_numbers<[1], [0], [0], [1], [0, 0, 1, 1], [], []>} : vector<16x1024xbf16>, vector<1024x128xbf16>, vector<16x128xf32> -> vector<16x128xf32>
    %7 = arith.addf %3, %6 : vector<16x128xf32>
    %c0_6 = arith.constant 0 : index
    %c0_7 = arith.constant 0 : index
    %8 = vector.load %arg6[%c0_6, %c0_7] : memref<16x128xf32, #tpu.memory_space<vmem>>, vector<16x128xf32>
    tpu.vector_store %arg6[%c0_6, %c0_7], %7 {strides = array<i32>} : memref<16x128xf32, #tpu.memory_space<vmem>>, vector<16x128xf32>,
    %c0_i32_8 = arith.constant 0 : i32
    %9 = arith.cmpi eq, %arg2, %c0_i32_8 : i32
    %10 = arith.extui %9 : i1 to i32
    %c0_i32_9 = arith.constant 0 : i32
    %11 = arith.cmpi ne, %10, %c0_i32_9 : i32
    scf.if %11 {
      %c0_10 = arith.constant 0 : index
      %c0_11 = arith.constant 0 : index
      %12 = vector.load %arg6[%c0_10, %c0_11] : memref<16x128xf32, #tpu.memory_space<vmem>>, vector<16x128xf32>
      %c0_12 = arith.constant 0 : index
      %c0_13 = arith.constant 0 : index
      %13 = vector.load %arg5[%c0_12, %c0_13] : memref<1x128xf32, #tpu.memory_space<vmem>>, vector<1x128xf32>
      %14 = vector.broadcast %13 : vector<1x128xf32> to vector<16x128xf32>
      %15 = arith.addf %12, %14 : vector<16x128xf32>
      %c0_14 = arith.constant 0 : index
      %c0_15 = arith.constant 0 : index
      %16 = vector.load %arg6[%c0_14, %c0_15] : memref<16x128xf32, #tpu.memory_space<vmem>>, vector<16x128xf32>
      tpu.vector_store %arg6[%c0_14, %c0_15], %15 {strides = array<i32>} : memref<16x128xf32, #tpu.memory_space<vmem>>, vector<16x128xf32>,
    } else {
    }
    return
  }
  func.func @transform_0(%arg0: i32, %arg1: i32, %arg2: i32) -> (i32, i32) {
    %c0_i32 = arith.constant 0 : i32
    return %arg0, %arg2 : i32, i32
  }
  func.func @transform_1(%arg0: i32, %arg1: i32, %arg2: i32) -> (i32, i32) {
    %c0_i32 = arith.constant 0 : i32
    return %arg2, %arg1 : i32, i32
  }
  func.func @transform_2(%arg0: i32, %arg1: i32, %arg2: i32) -> (i32, i32) {
    %c0_i32 = arith.constant 0 : i32
    %c0_i32_0 = arith.constant 0 : i32
    return %c0_i32, %arg1 : i32, i32
  }
  func.func @transform_3(%arg0: i32, %arg1: i32, %arg2: i32) -> (i32, i32) {
    %c0_i32 = arith.constant 0 : i32
    return %arg0, %arg1 : i32, i32
  }
}

module attributes {stable_mosaic.version = 11 : i64} {
  func.func @_conv_mm_kernel(%arg0: i32, %arg1: i32, %arg2: i32, %arg3: memref<16x128xbf16, #tpu.memory_space<vmem>>, %arg4: memref<128x128xbf16, #tpu.memory_space<vmem>>, %arg5: memref<1x128xf32, #tpu.memory_space<vmem>>, %arg6: memref<16x128xbf16, #tpu.memory_space<vmem>>, %arg7: memref<16x128xf32, #tpu.memory_space<vmem>>) attributes {dimension_semantics = [#tpu.dimension_semantics<parallel>, #tpu.dimension_semantics<parallel>, #tpu.dimension_semantics<arbitrary>], iteration_bounds = array<i64: 2, 1, 1>, scalar_prefetch = 0 : i64, scratch_operands = 1 : i64, tpu.core_type = #tpu.core_type<tc>, window_params = [{transform_indices = @transform_0, window_bounds = array<i64: 16, 128>}, {transform_indices = @transform_1, window_bounds = array<i64: 128, 128>}, {transform_indices = @transform_2, window_bounds = array<i64: 1, 128>}, {transform_indices = @transform_3, window_bounds = array<i64: 16, 128>}]} {
    %c0_i32 = arith.constant 0 : i32
    %0 = arith.cmpi eq, %arg2, %c0_i32 : i32
    %1 = arith.extui %0 : i1 to i32
    %c0_i32_0 = arith.constant 0 : i32
    %2 = arith.cmpi ne, %1, %c0_i32_0 : i32
    scf.if %2 {
      %cst_10 = arith.constant 0.000000e+00 : f32
      %12 = vector.broadcast %cst_10 : f32 to vector<16x128xf32>
      %c0_11 = arith.constant 0 : index
      %c0_12 = arith.constant 0 : index
      %13 = vector.load %arg7[%c0_11, %c0_12] : memref<16x128xf32, #tpu.memory_space<vmem>>, vector<16x128xf32>
      tpu.vector_store %arg7[%c0_11, %c0_12], %12 {strides = array<i32>} : memref<16x128xf32, #tpu.memory_space<vmem>>, vector<16x128xf32>,
    } else {
    }
    %c0 = arith.constant 0 : index
    %c0_1 = arith.constant 0 : index
    %3 = vector.load %arg7[%c0, %c0_1] : memref<16x128xf32, #tpu.memory_space<vmem>>, vector<16x128xf32>
    %c0_2 = arith.constant 0 : index
    %c0_3 = arith.constant 0 : index
    %4 = vector.load %arg3[%c0_2, %c0_3] : memref<16x128xbf16, #tpu.memory_space<vmem>>, vector<16x128xbf16>
    %c0_4 = arith.constant 0 : index
    %c0_5 = arith.constant 0 : index
    %5 = vector.load %arg4[%c0_4, %c0_5] : memref<128x128xbf16, #tpu.memory_space<vmem>>, vector<128x128xbf16>
    %cst = arith.constant dense<0.000000e+00> : vector<16x128xf32>
    %6 = tpu.matmul %4, %5, %cst {dimension_numbers = #tpu.dot_dimension_numbers<[1], [0], [0], [1], [0, 0, 1, 1], [], []>} : vector<16x128xbf16>, vector<128x128xbf16>, vector<16x128xf32> -> vector<16x128xf32>
    %7 = arith.addf %3, %6 : vector<16x128xf32>
    %c0_6 = arith.constant 0 : index
    %c0_7 = arith.constant 0 : index
    %8 = vector.load %arg7[%c0_6, %c0_7] : memref<16x128xf32, #tpu.memory_space<vmem>>, vector<16x128xf32>
    tpu.vector_store %arg7[%c0_6, %c0_7], %7 {strides = array<i32>} : memref<16x128xf32, #tpu.memory_space<vmem>>, vector<16x128xf32>,
    %c0_i32_8 = arith.constant 0 : i32
    %9 = arith.cmpi eq, %arg2, %c0_i32_8 : i32
    %10 = arith.extui %9 : i1 to i32
    %c0_i32_9 = arith.constant 0 : i32
    %11 = arith.cmpi ne, %10, %c0_i32_9 : i32
    scf.if %11 {
      %c0_10 = arith.constant 0 : index
      %c0_11 = arith.constant 0 : index
      %12 = vector.load %arg7[%c0_10, %c0_11] : memref<16x128xf32, #tpu.memory_space<vmem>>, vector<16x128xf32>
      %c0_12 = arith.constant 0 : index
      %c0_13 = arith.constant 0 : index
      %13 = vector.load %arg5[%c0_12, %c0_13] : memref<1x128xf32, #tpu.memory_space<vmem>>, vector<1x128xf32>
      %14 = vector.broadcast %13 : vector<1x128xf32> to vector<16x128xf32>
      %15 = arith.addf %12, %14 : vector<16x128xf32>
      %cst_14 = arith.constant 0.000000e+00 : f32
      %16 = vector.broadcast %cst_14 : f32 to vector<16x128xf32>
      %17 = arith.cmpf oge, %15, %16 : vector<16x128xf32>
      %cst_15 = arith.constant 2.000000e-01 : f32
      %18 = vector.broadcast %cst_15 : f32 to vector<16x128xf32>
      %19 = arith.mulf %18, %15 : vector<16x128xf32>
      %20 = arith.select %17, %15, %19 : vector<16x128xi1>, vector<16x128xf32>
      %21 = arith.truncf %20 : vector<16x128xf32> to vector<16x128xbf16>
      %c0_16 = arith.constant 0 : index
      %c0_17 = arith.constant 0 : index
      %22 = vector.load %arg6[%c0_16, %c0_17] : memref<16x128xbf16, #tpu.memory_space<vmem>>, vector<16x128xbf16>
      tpu.vector_store %arg6[%c0_16, %c0_17], %21 {strides = array<i32>} : memref<16x128xbf16, #tpu.memory_space<vmem>>, vector<16x128xbf16>,
    } else {
    }
    return
  }
  func.func @transform_0(%arg0: i32, %arg1: i32, %arg2: i32) -> (i32, i32) {
    %c0_i32 = arith.constant 0 : i32
    return %arg0, %arg2 : i32, i32
  }
  func.func @transform_1(%arg0: i32, %arg1: i32, %arg2: i32) -> (i32, i32) {
    %c0_i32 = arith.constant 0 : i32
    return %arg2, %arg1 : i32, i32
  }
  func.func @transform_2(%arg0: i32, %arg1: i32, %arg2: i32) -> (i32, i32) {
    %c0_i32 = arith.constant 0 : i32
    %c0_i32_0 = arith.constant 0 : i32
    return %c0_i32, %arg1 : i32, i32
  }
  func.func @transform_3(%arg0: i32, %arg1: i32, %arg2: i32) -> (i32, i32) {
    %c0_i32 = arith.constant 0 : i32
    return %arg0, %arg1 : i32, i32
  }
}

module attributes {stable_mosaic.version = 11 : i64} {
  func.func @_conv_mm_kernel(%arg0: i32, %arg1: i32, %arg2: i32, %arg3: memref<16x128xbf16, #tpu.memory_space<vmem>>, %arg4: memref<128x128xbf16, #tpu.memory_space<vmem>>, %arg5: memref<1x128xf32, #tpu.memory_space<vmem>>, %arg6: memref<16x128xf32, #tpu.memory_space<vmem>>, %arg7: memref<8x128xf32, #tpu.memory_space<vmem>>) attributes {dimension_semantics = [#tpu.dimension_semantics<parallel>, #tpu.dimension_semantics<parallel>, #tpu.dimension_semantics<arbitrary>], iteration_bounds = array<i64: 1, 1, 1>, scalar_prefetch = 0 : i64, scratch_operands = 0 : i64, tpu.core_type = #tpu.core_type<tc>, window_params = [{transform_indices = @transform_0, window_bounds = array<i64: 16, 128>}, {transform_indices = @transform_1, window_bounds = array<i64: 128, 128>}, {transform_indices = @transform_2, window_bounds = array<i64: 1, 128>}, {transform_indices = @transform_3, window_bounds = array<i64: 16, 128>}, {transform_indices = @transform_4, window_bounds = array<i64: 8, 128>}]} {
    %c16_i32 = arith.constant 16 : i32
    %0 = arith.muli %arg0, %c16_i32 : i32
    %c0_i32 = arith.constant 0 : i32
    %1 = arith.cmpi eq, %arg2, %c0_i32 : i32
    %2 = arith.extui %1 : i1 to i32
    %c0_i32_0 = arith.constant 0 : i32
    %3 = arith.cmpi ne, %2, %c0_i32_0 : i32
    scf.if %3 {
      %cst_10 = arith.constant 0.000000e+00 : f32
      %13 = vector.broadcast %cst_10 : f32 to vector<16x128xf32>
      %c0_11 = arith.constant 0 : index
      %c0_12 = arith.constant 0 : index
      %14 = vector.load %arg6[%c0_11, %c0_12] : memref<16x128xf32, #tpu.memory_space<vmem>>, vector<16x128xf32>
      tpu.vector_store %arg6[%c0_11, %c0_12], %13 {strides = array<i32>} : memref<16x128xf32, #tpu.memory_space<vmem>>, vector<16x128xf32>,
    } else {
    }
    %c0 = arith.constant 0 : index
    %c0_1 = arith.constant 0 : index
    %4 = vector.load %arg6[%c0, %c0_1] : memref<16x128xf32, #tpu.memory_space<vmem>>, vector<16x128xf32>
    %c0_2 = arith.constant 0 : index
    %c0_3 = arith.constant 0 : index
    %5 = vector.load %arg3[%c0_2, %c0_3] : memref<16x128xbf16, #tpu.memory_space<vmem>>, vector<16x128xbf16>
    %c0_4 = arith.constant 0 : index
    %c0_5 = arith.constant 0 : index
    %6 = vector.load %arg4[%c0_4, %c0_5] : memref<128x128xbf16, #tpu.memory_space<vmem>>, vector<128x128xbf16>
    %cst = arith.constant dense<0.000000e+00> : vector<16x128xf32>
    %7 = tpu.matmul %5, %6, %cst {dimension_numbers = #tpu.dot_dimension_numbers<[1], [0], [0], [1], [0, 0, 1, 1], [], []>} : vector<16x128xbf16>, vector<128x128xbf16>, vector<16x128xf32> -> vector<16x128xf32>
    %8 = arith.addf %4, %7 : vector<16x128xf32>
    %c0_6 = arith.constant 0 : index
    %c0_7 = arith.constant 0 : index
    %9 = vector.load %arg6[%c0_6, %c0_7] : memref<16x128xf32, #tpu.memory_space<vmem>>, vector<16x128xf32>
    tpu.vector_store %arg6[%c0_6, %c0_7], %8 {strides = array<i32>} : memref<16x128xf32, #tpu.memory_space<vmem>>, vector<16x128xf32>,
    %c0_i32_8 = arith.constant 0 : i32
    %10 = arith.cmpi eq, %arg2, %c0_i32_8 : i32
    %11 = arith.extui %10 : i1 to i32
    %c0_i32_9 = arith.constant 0 : i32
    %12 = arith.cmpi ne, %11, %c0_i32_9 : i32
    scf.if %12 {
      %c0_10 = arith.constant 0 : index
      %c0_11 = arith.constant 0 : index
      %13 = vector.load %arg6[%c0_10, %c0_11] : memref<16x128xf32, #tpu.memory_space<vmem>>, vector<16x128xf32>
      %c0_12 = arith.constant 0 : index
      %c0_13 = arith.constant 0 : index
      %14 = vector.load %arg5[%c0_12, %c0_13] : memref<1x128xf32, #tpu.memory_space<vmem>>, vector<1x128xf32>
      %15 = vector.broadcast %14 : vector<1x128xf32> to vector<16x128xf32>
      %16 = arith.addf %13, %15 : vector<16x128xf32>
      %c0_14 = arith.constant 0 : index
      %c0_15 = arith.constant 0 : index
      %17 = vector.load %arg6[%c0_14, %c0_15] : memref<16x128xf32, #tpu.memory_space<vmem>>, vector<16x128xf32>
      tpu.vector_store %arg6[%c0_14, %c0_15], %16 {strides = array<i32>} : memref<16x128xf32, #tpu.memory_space<vmem>>, vector<16x128xf32>,
      %18 = tpu.iota {dimensions = array<i32: 0>} : vector<16x1xi32>
      %19 = vector.broadcast %0 : i32 to vector<16x1xi32>
      %20 = arith.addi %18, %19 : vector<16x1xi32>
      %c8_i32 = arith.constant 8 : i32
      %21 = vector.broadcast %c8_i32 : i32 to vector<16x1xi32>
      %22 = arith.cmpi slt, %20, %21 : vector<16x1xi32>
      %cst_16 = arith.constant 0.000000e+00 : f32
      %23 = vector.shape_cast %22 : vector<16x1xi1> to vector<16x1xi1>
      %24 = vector.broadcast %23 : vector<16x1xi1> to vector<16x128xi1>
      %25 = vector.broadcast %cst_16 : f32 to vector<16x128xf32>
      %26 = arith.select %24, %16, %25 : vector<16x128xi1>, vector<16x128xf32>
      %cst_17 = arith.constant dense<0.000000e+00> : vector<128xf32>
      %27 = vector.multi_reduction <add>, %26, %cst_17 [0] : vector<16x128xf32> to vector<128xf32>
      %28 = vector.shape_cast %27 : vector<128xf32> to vector<1x128xf32>
      %29 = arith.mulf %26, %26 : vector<16x128xf32>
      %cst_18 = arith.constant dense<0.000000e+00> : vector<128xf32>
      %30 = vector.multi_reduction <add>, %29, %cst_18 [0] : vector<16x128xf32> to vector<128xf32>
      %31 = vector.shape_cast %30 : vector<128xf32> to vector<1x128xf32>
      %32 = tpu.iota {dimensions = array<i32: 0>} : vector<8x128xi32>
      %c0_i32_19 = arith.constant 0 : i32
      %33 = vector.broadcast %c0_i32_19 : i32 to vector<8x128xi32>
      %34 = arith.cmpi eq, %32, %33 : vector<8x128xi32>
      %cst_20 = arith.constant 0.000000e+00 : f32
      %35 = vector.shape_cast %28 : vector<1x128xf32> to vector<1x128xf32>
      %36 = vector.broadcast %35 : vector<1x128xf32> to vector<8x128xf32>
      %37 = vector.broadcast %cst_20 : f32 to vector<8x128xf32>
      %38 = arith.select %34, %36, %37 : vector<8x128xi1>, vector<8x128xf32>
      %c1_i32 = arith.constant 1 : i32
      %39 = vector.broadcast %c1_i32 : i32 to vector<8x128xi32>
      %40 = arith.cmpi eq, %32, %39 : vector<8x128xi32>
      %cst_21 = arith.constant 0.000000e+00 : f32
      %41 = vector.shape_cast %31 : vector<1x128xf32> to vector<1x128xf32>
      %42 = vector.broadcast %41 : vector<1x128xf32> to vector<8x128xf32>
      %43 = vector.broadcast %cst_21 : f32 to vector<8x128xf32>
      %44 = arith.select %40, %42, %43 : vector<8x128xi1>, vector<8x128xf32>
      %45 = arith.addf %38, %44 : vector<8x128xf32>
      %c0_22 = arith.constant 0 : index
      %c0_23 = arith.constant 0 : index
      %46 = vector.load %arg7[%c0_22, %c0_23] : memref<8x128xf32, #tpu.memory_space<vmem>>, vector<8x128xf32>
      tpu.vector_store %arg7[%c0_22, %c0_23], %45 {strides = array<i32>} : memref<8x128xf32, #tpu.memory_space<vmem>>, vector<8x128xf32>,
    } else {
    }
    return
  }
  func.func @transform_0(%arg0: i32, %arg1: i32, %arg2: i32) -> (i32, i32) {
    %c0_i32 = arith.constant 0 : i32
    return %arg0, %arg2 : i32, i32
  }
  func.func @transform_1(%arg0: i32, %arg1: i32, %arg2: i32) -> (i32, i32) {
    %c0_i32 = arith.constant 0 : i32
    return %arg2, %arg1 : i32, i32
  }
  func.func @transform_2(%arg0: i32, %arg1: i32, %arg2: i32) -> (i32, i32) {
    %c0_i32 = arith.constant 0 : i32
    %c0_i32_0 = arith.constant 0 : i32
    return %c0_i32, %arg1 : i32, i32
  }
  func.func @transform_3(%arg0: i32, %arg1: i32, %arg2: i32) -> (i32, i32) {
    %c0_i32 = arith.constant 0 : i32
    return %arg0, %arg1 : i32, i32
  }
  func.func @transform_4(%arg0: i32, %arg1: i32, %arg2: i32) -> (i32, i32) {
    %c0_i32 = arith.constant 0 : i32
    return %arg0, %arg1 : i32, i32
  }
}

</mosaic_0001>

<llo_original>
// kernel: multiscale_forward.24
$region0: #{multiscale_forward.24}
  #allocation0 [shape = 'u32[]', space=smem, size = 0x4, offset = 0x4, fixed_abs, tag = 'smem constant byte address 0x4 - core index']
  #allocation1 [shape = 'u32[72,128]{1,0:T(1,128)}', space=vmem, size = 0x9000, scoped, tag = 'internal scratch']
  #allocation2 [shape = 'f32[96,128]{1,0:T(8,128)}', space=vmem, size = 0xc000, scoped, tag = 'scratch operand']
  %s0 = inlined_call_operand.vmem [shape: bf16[192,128], index: 0, kind: input, shape index: {}]
  %s1 = inlined_call_operand.vmem [shape: bf16[128,128], index: 1, kind: input, shape index: {}]
  %s2 = inlined_call_operand.vmem [shape: f32[1,128], index: 2, kind: input, shape index: {}]
  %s3 = inlined_call_operand.vmem [shape: bf16[192,128], index: 3, kind: output, shape index: {}]
  %s4 = sld [smem:[#allocation0]]
  $region53: #{multiscale_forward.24} parent=0
    _
  %s6 = ssub.s32 1, %s4
  %s7 = scalar_select 0, %s6, %s4
  loop: start=0, step=1, limit=4
  $region2: #{multiscale_forward.24} parent=0 // loop_pre_header
    _
  $region3: #{multiscale_forward.24} parent=0 // loop_header
    %s9 = sphi 0, %s13
    %p10 = scmp.ge.s32.totalorder %s9, 4
    %s16 = sphi 0, %s35
    %s17 = sphi 0, %s31
    %s18 = sphi 0, %s27
    %s19 = sphi 0, %s16
    %s20 = sphi 0, %s17
    %s21 = sphi 0, %s18
    %s22 = sphi 0, %s19
    %s23 = sphi 0, %s20
    %s24 = sphi 0, %s21
    %s40 = sphi 0, %s42
    %s43 = sphi 0, %s40
    %s44 = sphi 0, %s43
    %s60 = sphi 0, %s44
    %s68 = sphi 0, %s70
    %s71 = sphi 0, %s68
    %s72 = sphi 0, %s71
    %s88 = sphi 0, %s72
    %s94 = sphi 0, %s96
    %s97 = sphi 0, %s94
    %s98 = sphi 0, %s97
    %s114 = sphi 0, %s98
    %s122 = sphi 0, %s124
    %s125 = sphi 0, %s122
    %s126 = sphi 0, %s125
    %s142 = sphi 0, %s126
  $region4: #{multiscale_forward.24} parent=0 // loop_header_branch
    %12 = sbr.rel (%p10) target = $region8
  $region5: #{multiscale_forward.24} parent=0 // loop_body
    %s14 = ssub.s32 %s9, 1
    %s15 = ssub.s32 %s9, 2
    %s25 = sadd.s32 1, %s18
    %p26 = scmp.ge.s32.totalorder %s25, 1
    %s27 = scalar_select %p26, 0, %s25
    %s28 = sadd.s32 1, %s17
    %s29 = scalar_select %p26, %s28, %s17
    %p30 = scmp.ge.s32.totalorder %s29, 1
    %s31 = scalar_select %p30, 0, %s29
    %s32 = sadd.s32 1, %s16
    %s33 = scalar_select %p30, %s32, %s16
    %p34 = scmp.ge.s32.totalorder %s33, 2
    %s35 = scalar_select %p34, 0, %s33
    %s36 = ssub.s32 %s16, %s35
    %s37 = ssub.s32 %s18, %s27
    %s38 = sor.u32 %s36, %s37
    %p39 = scmp.eq.s32.totalorder %s38, 0
    %s41 = sadd.s32 %s40, 1
    %s42 = scalar_select %p39, %s40, %s41
    %p45 = pneg %p39
    %p46 = scmp.eq.s32.totalorder %s9, 1
    %p47 = por %p45, %p46
    %p48 = scmp.ne.s32.totalorder %s40, %s43
    %p49 = scmp.eq.s32.totalorder %s9, 0
    %p50 = por %p48, %p49
    %p51 = scmp.ne.s32.totalorder %s40, %s43
    %p52 = scmp.eq.s32.totalorder %s14, 1
    %p53 = por %p51, %p52
    %p54 = scmp.ne.s32.totalorder %s43, %s44
    %p55 = scmp.eq.s32.totalorder %s14, 0
    %p56 = por %p54, %p55
    %p57 = scmp.ne.s32.totalorder %s43, %s44
    %p58 = scmp.eq.s32.totalorder %s15, 1
    %p59 = por %p57, %p58
    %p61 = scmp.ne.s32.totalorder %s44, %s60
    %p62 = scmp.eq.s32.totalorder %s15, 0
    %p63 = por %p61, %p62
    %s64 = ssub.s32 %s18, %s27
    %s65 = ssub.s32 %s17, %s31
    %s66 = sor.u32 %s64, %s65
    %p67 = scmp.eq.s32.totalorder %s66, 0
    %s69 = sadd.s32 %s68, 1
    %s70 = scalar_select %p67, %s68, %s69
    %p73 = pneg %p67
    %p74 = scmp.eq.s32.totalorder %s9, 1
    %p75 = por %p73, %p74
    %p76 = scmp.ne.s32.totalorder %s68, %s71
    %p77 = scmp.eq.s32.totalorder %s9, 0
    %p78 = por %p76, %p77
    %p79 = scmp.ne.s32.totalorder %s68, %s71
    %p80 = scmp.eq.s32.totalorder %s14, 1
    %p81 = por %p79, %p80
    %p82 = scmp.ne.s32.totalorder %s71, %s72
    %p83 = scmp.eq.s32.totalorder %s14, 0
    %p84 = por %p82, %p83
    %p85 = scmp.ne.s32.totalorder %s71, %s72
    %p86 = scmp.eq.s32.totalorder %s15, 1
    %p87 = por %p85, %p86
    %p89 = scmp.ne.s32.totalorder %s72, %s88
    %p90 = scmp.eq.s32.totalorder %s15, 0
    %p91 = por %p89, %p90
    %s92 = ssub.s32 %s17, %s31
    %p93 = scmp.eq.s32.totalorder %s92, 0
    %s95 = sadd.s32 %s94, 1
    %s96 = scalar_select %p93, %s94, %s95
    %p99 = pneg %p93
    %p100 = scmp.eq.s32.totalorder %s9, 1
    %p101 = por %p99, %p100
    %p102 = scmp.ne.s32.totalorder %s94, %s97
    %p103 = scmp.eq.s32.totalorder %s9, 0
    %p104 = por %p102, %p103
    %p105 = scmp.ne.s32.totalorder %s94, %s97
    %p106 = scmp.eq.s32.totalorder %s14, 1
    %p107 = por %p105, %p106
    %p108 = scmp.ne.s32.totalorder %s97, %s98
    %p109 = scmp.eq.s32.totalorder %s14, 0
    %p110 = por %p108, %p109
    %p111 = scmp.ne.s32.totalorder %s97, %s98
    %p112 = scmp.eq.s32.totalorder %s15, 1
    %p113 = por %p111, %p112
    %p115 = scmp.ne.s32.totalorder %s98, %s114
    %p116 = scmp.eq.s32.totalorder %s15, 0
    %p117 = por %p115, %p116
    %s118 = ssub.s32 %s16, %s35
    %s119 = ssub.s32 %s17, %s31
    %s120 = sor.u32 %s118, %s119
    %p121 = scmp.eq.s32.totalorder %s120, 0
    %s123 = sadd.s32 %s122, 1
    %s124 = scalar_select %p121, %s122, %s123
    %p127 = pneg %p121
    %p128 = scmp.eq.s32.totalorder %s9, 1
    %p129 = por %p127, %p128
    %p130 = scmp.ne.s32.totalorder %s122, %s125
    %p131 = scmp.eq.s32.totalorder %s9, 0
    %p132 = por %p130, %p131
    %p133 = scmp.ne.s32.totalorder %s122, %s125
    %p134 = scmp.eq.s32.totalorder %s14, 1
    %p135 = por %p133, %p134
    %p136 = scmp.ne.s32.totalorder %s125, %s126
    %p137 = scmp.eq.s32.totalorder %s14, 0
    %p138 = por %p136, %p137
    %p139 = scmp.ne.s32.totalorder %s125, %s126
    %p140 = scmp.eq.s32.totalorder %s15, 1
    %p141 = por %p139, %p140
    %p143 = scmp.ne.s32.totalorder %s126, %s142
    %p144 = scmp.eq.s32.totalorder %s15, 0
    %p145 = por %p143, %p144
    %p146 = scmp.le.s32.totalorder 1, %s9
    %p147 = scmp.lt.s32.totalorder %s9, 3
    %p148 = pnand %p146, %p147
    %p149 = pneg %p148
    // Predicated region
    $region9: #{multiscale_forward.24} parent=5 // pred_check
      _
    $region10: #{multiscale_forward.24} parent=5 // pred_check_branch
      %151 = sbr.rel (%p148) target = $region12
    $region11: #{multiscale_forward.24} parent=5 // pred_region
      %s152 = ssub.s32 %s9, 1
      // Predicated region
      $region13: #{multiscale_forward.24} parent=11 // pred_check
        %p153 = pneg %p84
      $region14: #{multiscale_forward.24} parent=11 // pred_check_branch
        %155 = sbr.rel (%p153) target = $region16
      $region15: #{multiscale_forward.24} parent=11 // pred_region
        %s156 = smul.u32 16, %s21
        %p157 = scmp.lt.s32.totalorder %s156, 15
        %s158 = scalar_select %p157, %s156, 15
        %p159 = scmp.lt.s32.totalorder %s20, 0
        %s160 = scalar_select %p159, %s20, 0
        %s161 = sadd.s32 %s160, %s158
        %s162 = smul.addr %s161, 4
        %s163 = scalar_lea.vmem %s1, %s162
        %s164 = smul.u32 16, %s21
      $region16: #{multiscale_forward.24} parent=11 // pred_fallthru
        _
      // Predicated region
      $region17: #{multiscale_forward.24} parent=11 // pred_check
        %p165 = pneg %p110
      $region18: #{multiscale_forward.24} parent=11 // pred_check_branch
        %167 = sbr.rel (%p165) target = $region20
      $region19: #{multiscale_forward.24} parent=11 // pred_region
        %p168 = scmp.lt.s32.totalorder %s20, 0
        %s169 = scalar_select %p168, %s20, 0
        %s170 = scalar_lea.vmem %s2, %s169
      $region20: #{multiscale_forward.24} parent=11 // pred_fallthru
        _
    $region12: #{multiscale_forward.24} parent=5 // pred_fallthru
      _
    %p171 = scmp.lt.s32.totalorder %s9, 2
    // Predicated region
    $region21: #{multiscale_forward.24} parent=5 // pred_check
      %p172 = pneg %p171
    $region22: #{multiscale_forward.24} parent=5 // pred_check_branch
      %174 = sbr.rel (%p172) target = $region24
    $region23: #{multiscale_forward.24} parent=5 // pred_region
      // Predicated region
      $region25: #{multiscale_forward.24} parent=23 // pred_check
        %p175 = pneg %p50
      $region26: #{multiscale_forward.24} parent=23 // pred_check_branch
        %177 = sbr.rel (%p175) target = $region28
      $region27: #{multiscale_forward.24} parent=23 // pred_region
        %s178 = smul.u32 12, %s16
        %p179 = scmp.lt.s32.totalorder %s178, 23
        %s180 = scalar_select %p179, %s178, 23
        %p181 = scmp.lt.s32.totalorder %s18, 0
        %s182 = scalar_select %p181, %s18, 0
        %s183 = sadd.s32 %s182, %s180
        %s184 = smul.addr %s183, 4
        %s185 = scalar_lea.vmem %s0, %s184
        %s186 = smul.u32 12, %s16
      $region28: #{multiscale_forward.24} parent=23 // pred_fallthru
        _
    $region24: #{multiscale_forward.24} parent=5 // pred_fallthru
      _
    %p187 = scmp.le.s32.totalorder 1, %s9
    %p188 = scmp.lt.s32.totalorder %s9, 3
    %p189 = pnand %p187, %p188
    %p190 = pneg %p189
    // Predicated region
    $region29: #{multiscale_forward.24} parent=5 // pred_check
      _
    $region30: #{multiscale_forward.24} parent=5 // pred_check_branch
      %192 = sbr.rel (%p189) target = $region32
    $region31: #{multiscale_forward.24} parent=5 // pred_region
      %s193 = ssub.s32 %s9, 1
      %s194 = smul.u32 12, %s19
      %p195 = scmp.lt.s32.totalorder %s194, 23
      %s196 = scalar_select %p195, %s194, 23
      %p197 = scmp.lt.s32.totalorder %s21, 0
      %s198 = scalar_select %p197, %s21, 0
      %s199 = sadd.s32 %s198, %s196
      %s200 = smul.addr %s199, 4
      %s201 = scalar_lea.vmem %s0, %s200
      %p202 = pneg %p56
      %p203 = pneg %p53
      %s204 = smul.u32 16, %s21
      %p205 = scmp.lt.s32.totalorder %s204, 15
      %s206 = scalar_select %p205, %s204, 15
      %p207 = scmp.lt.s32.totalorder %s20, 0
      %s208 = scalar_select %p207, %s20, 0
      %s209 = sadd.s32 %s208, %s206
      %s210 = smul.addr %s209, 4
      %s211 = scalar_lea.vmem %s1, %s210
      %p212 = pneg %p84
      %p213 = pneg %p81
      %p214 = scmp.lt.s32.totalorder %s20, 0
      %s215 = scalar_select %p214, %s20, 0
      %s216 = scalar_lea.vmem %s2, %s215
      %p217 = pneg %p110
      %p218 = pneg %p107
      %p219 = pneg %p138
      %p220 = pneg %p135
      %s221 = smul.u32 12, %s19
      %p222 = scmp.lt.s32.totalorder %s221, 23
      %s223 = scalar_select %p222, %s221, 23
      %p224 = scmp.lt.s32.totalorder %s20, 0
      %s225 = scalar_select %p224, %s20, 0
      %s226 = sadd.s32 %s225, %s223
      %s227 = smul.addr %s226, 4
      %s228 = scalar_lea.vmem %s3, %s227
      %s229 = smul.u32 12, %s19
      %p230 = scmp.lt.s32.totalorder %s229, 23
      %s231 = scalar_select %p230, %s229, 23
      %p232 = scmp.lt.s32.totalorder %s21, 0
      %s233 = scalar_select %p232, %s21, 0
      %s234 = sadd.s32 %s233, %s231
      %s235 = smul.addr %s234, 4
      %s236 = scalar_lea.vmem %s0, %s235
      %s237 = smul.u32 12, %s19
      %s238 = smul.u32 16, %s21
      %p239 = scmp.lt.s32.totalorder %s238, 15
      %s240 = scalar_select %p239, %s238, 15
      %p241 = scmp.lt.s32.totalorder %s20, 0
      %s242 = scalar_select %p241, %s20, 0
      %s243 = sadd.s32 %s242, %s240
      %s244 = smul.addr %s243, 4
      %s245 = scalar_lea.vmem %s1, %s244
      %s246 = smul.u32 16, %s21
      %p247 = scmp.lt.s32.totalorder %s20, 0
      %s248 = scalar_select %p247, %s20, 0
      %s249 = scalar_lea.vmem %s2, %s248
      %s250 = smul.u32 12, %s19
      %p251 = scmp.lt.s32.totalorder %s250, 23
      %s252 = scalar_select %p251, %s250, 23
      %p253 = scmp.lt.s32.totalorder %s20, 0
      %s254 = scalar_select %p253, %s20, 0
      %s255 = sadd.s32 %s254, %s252
      %s256 = smul.addr %s255, 4
      %s257 = scalar_lea.vmem %s3, %s256
      %s258 = smul.u32 12, %s19
      %p259 = scmp.eq.s32.totalorder %s21, 0
      // Predicated region
      $region33: #{multiscale_forward.24} parent=31 // pred_check
        %p260 = pneg %p259
      $region34: #{multiscale_forward.24} parent=31 // pred_check_branch
        %262 = sbr.rel (%p260) target = $region36
      $region35: #{multiscale_forward.24} parent=31 // pred_region
        %263 = vst [vmem:[#allocation2] sm:$0xff] 0.0
        %264 = vst [vmem:[#allocation2 + $0x8] sm:$0xff] 0.0
        %265 = vst [vmem:[#allocation2 + $0x10] sm:$0xff] 0.0
        %266 = vst [vmem:[#allocation2 + $0x18] sm:$0xff] 0.0
        %267 = vst [vmem:[#allocation2 + $0x20] sm:$0xff] 0.0
        %268 = vst [vmem:[#allocation2 + $0x28] sm:$0xff] 0.0
        %269 = vst [vmem:[#allocation2 + $0x30] sm:$0xff] 0.0
        %270 = vst [vmem:[#allocation2 + $0x38] sm:$0xff] 0.0
        %271 = vst [vmem:[#allocation2 + $0x40] sm:$0xff] 0.0
        %272 = vst [vmem:[#allocation2 + $0x48] sm:$0xff] 0.0
        %273 = vst [vmem:[#allocation2 + $0x50] sm:$0xff] 0.0
        %274 = vst [vmem:[#allocation2 + $0x58] sm:$0xff] 0.0
      $region36: #{multiscale_forward.24} parent=31 // pred_fallthru
        _
      %v275 = vld [vmem:[#allocation2] sm:$0xff]
      %v276 = vld [vmem:[#allocation2 + $0x8] sm:$0xff]
      %v277 = vld [vmem:[#allocation2 + $0x10] sm:$0xff]
      %v278 = vld [vmem:[#allocation2 + $0x18] sm:$0xff]
      %v279 = vld [vmem:[#allocation2 + $0x20] sm:$0xff]
      %v280 = vld [vmem:[#allocation2 + $0x28] sm:$0xff]
      %v281 = vld [vmem:[#allocation2 + $0x30] sm:$0xff]
      %v282 = vld [vmem:[#allocation2 + $0x38] sm:$0xff]
      %v283 = vld [vmem:[#allocation2 + $0x40] sm:$0xff]
      %v284 = vld [vmem:[#allocation2 + $0x48] sm:$0xff]
      %v285 = vld [vmem:[#allocation2 + $0x50] sm:$0xff]
      %v286 = vld [vmem:[#allocation2 + $0x58] sm:$0xff]
      %v287 = vld [vmem:[%s236] sm:$0xf]
      %v288 = vld [vmem:[%s236 + $0x4] sm:$0xf]
      %v289 = vld [vmem:[%s236 + $0x8] sm:$0xf]
      %v290 = vld [vmem:[%s236 + $0xc] sm:$0xf]
      %v291 = vld [vmem:[%s236 + $0x10] sm:$0xf]
      %v292 = vld [vmem:[%s236 + $0x14] sm:$0xf]
      %v293 = vld [vmem:[%s236 + $0x18] sm:$0xf]
      %v294 = vld [vmem:[%s236 + $0x1c] sm:$0xf]
      %v295 = vld [vmem:[%s236 + $0x20] sm:$0xf]
      %v296 = vld [vmem:[%s236 + $0x24] sm:$0xf]
      %v297 = vld [vmem:[%s236 + $0x28] sm:$0xf]
      %v298 = vld [vmem:[%s236 + $0x2c] sm:$0xf]
      %v299 = vld [vmem:[%s245] sm:$0xf]
      %v300 = vld [vmem:[%s245 + $0x4] sm:$0xf]
      %v301 = vld [vmem:[%s245 + $0x8] sm:$0xf]
      %v302 = vld [vmem:[%s245 + $0xc] sm:$0xf]
      %v303 = vld [vmem:[%s245 + $0x10] sm:$0xf]
      %v304 = vld [vmem:[%s245 + $0x14] sm:$0xf]
      %v305 = vld [vmem:[%s245 + $0x18] sm:$0xf]
      %v306 = vld [vmem:[%s245 + $0x1c] sm:$0xf]
      %v307 = vld [vmem:[%s245 + $0x20] sm:$0xf]
      %v308 = vld [vmem:[%s245 + $0x24] sm:$0xf]
      %v309 = vld [vmem:[%s245 + $0x28] sm:$0xf]
      %v310 = vld [vmem:[%s245 + $0x2c] sm:$0xf]
      %v311 = vld [vmem:[%s245 + $0x30] sm:$0xf]
      %v312 = vld [vmem:[%s245 + $0x34] sm:$0xf]
      %v313 = vld [vmem:[%s245 + $0x38] sm:$0xf]
      %v314 = vld [vmem:[%s245 + $0x3c] sm:$0xf]
      %v327 = vunpack.c.l.b16 %v287
      %v328 = vunpack.c.l.b16 %v288
      %v329 = vunpack.c.l.b16 %v289
      %v330 = vunpack.c.l.b16 %v290
      %v331 = vunpack.c.l.b16 %v291
      %v332 = vunpack.c.l.b16 %v292
      %v333 = vunpack.c.l.b16 %v293
      %v334 = vunpack.c.l.b16 %v294
      %v335 = vunpack.c.l.b16 %v295
      %v336 = vunpack.c.l.b16 %v296
      %v337 = vunpack.c.l.b16 %v297
      %v338 = vunpack.c.l.b16 %v298
      %v339 = vpack.c.b16 %v328, %v327
      %v340 = vpack.c.b16 %v330, %v329
      %v341 = vpack.c.b16 %v332, %v331
      %v342 = vpack.c.b16 %v334, %v333
      %v343 = vpack.c.b16 %v336, %v335
      %v344 = vpack.c.b16 %v338, %v337
      %v367 = vunpack.c.l.b16 %v299
      %v368 = vunpack.c.l.b16 %v300
      %v369 = vunpack.c.l.b16 %v301
      %v370 = vunpack.c.l.b16 %v302
      %v371 = vunpack.c.l.b16 %v303
      %v372 = vunpack.c.l.b16 %v304
      %v373 = vunpack.c.l.b16 %v305
      %v374 = vunpack.c.l.b16 %v306
      %v375 = vunpack.c.l.b16 %v307
      %v376 = vunpack.c.l.b16 %v308
      %v377 = vunpack.c.l.b16 %v309
      %v378 = vunpack.c.l.b16 %v310
      %v379 = vunpack.c.l.b16 %v311
      %v380 = vunpack.c.l.b16 %v312
      %v381 = vunpack.c.l.b16 %v313
      %v382 = vunpack.c.l.b16 %v314
      %v383 = vpack.c.b16 %v368, %v367
      %v384 = vpack.c.b16 %v370, %v369
      %v385 = vpack.c.b16 %v372, %v371
      %v386 = vpack.c.b16 %v374, %v373
      %v387 = vpack.c.b16 %v376, %v375
      %v388 = vpack.c.b16 %v378, %v377
      %v389 = vpack.c.b16 %v380, %v379
      %v390 = vpack.c.b16 %v382, %v381
      %399 = vmatpush.bf16.msra.mxu0 %v390
      %400 = vmatpush.bf16.msra.mxu0 %v389
      %401 = vmatpush.bf16.msra.mxu0 %v388
      %402 = vmatpush.bf16.msra.mxu0 %v387
      %403 = vmatpush.bf16.msra.mxu0 %v386
      %404 = vmatpush.bf16.msra.mxu0 %v385
      %405 = vmatpush.bf16.msra.mxu0 %v384
      %406 = vmatpush.bf16.msra.mxu0 %v383
      %407 = vmatmul.bf16.gmra.mxu0 %v339
      %v408 = vpop.f32.mrf.mxu0
      %v409 = vadd.f32 0.0, %v408
      %v410 = vpop.f32.mrf.mxu0
      %v411 = vadd.f32 0.0, %v410
      %412 = vmatmul.bf16.gmra.mxu0 %v340
      %v413 = vpop.f32.mrf.mxu0
      %v414 = vadd.f32 0.0, %v413
      %v415 = vpop.f32.mrf.mxu0
      %v416 = vadd.f32 0.0, %v415
      %417 = vmatmul.bf16.gmra.mxu0 %v341
      %v418 = vpop.f32.mrf.mxu0
      %v419 = vadd.f32 0.0, %v418
      %v420 = vpop.f32.mrf.mxu0
      %v421 = vadd.f32 0.0, %v420
      %422 = vmatmul.bf16.gmra.mxu0 %v342
      %v423 = vpop.f32.mrf.mxu0
      %v424 = vadd.f32 0.0, %v423
      %v425 = vpop.f32.mrf.mxu0
      %v426 = vadd.f32 0.0, %v425
      %427 = vmatmul.bf16.gmra.mxu0 %v343
      %v428 = vpop.f32.mrf.mxu0
      %v429 = vadd.f32 0.0, %v428
      %v430 = vpop.f32.mrf.mxu0
      %v431 = vadd.f32 0.0, %v430
      %432 = vmatmul.bf16.gmra.mxu0 %v344
      %v433 = vpop.f32.mrf.mxu0
      %v434 = vadd.f32 0.0, %v433
      %v435 = vpop.f32.mrf.mxu0
      %v436 = vadd.f32 0.0, %v435
      %437 = vdwg.mxu0
      %v438 = vadd.f32 %v275, %v409
      %v439 = vadd.f32 %v276, %v411
      %v440 = vadd.f32 %v277, %v414
      %v441 = vadd.f32 %v278, %v416
      %v442 = vadd.f32 %v279, %v419
      %v443 = vadd.f32 %v280, %v421
      %v444 = vadd.f32 %v281, %v424
      %v445 = vadd.f32 %v282, %v426
      %v446 = vadd.f32 %v283, %v429
      %v447 = vadd.f32 %v284, %v431
      %v448 = vadd.f32 %v285, %v434
      %v449 = vadd.f32 %v286, %v436
      %450 = vst [vmem:[#allocation2] sm:$0xff] %v438
      %451 = vst [vmem:[#allocation2 + $0x8] sm:$0xff] %v439
      %452 = vst [vmem:[#allocation2 + $0x10] sm:$0xff] %v440
      %453 = vst [vmem:[#allocation2 + $0x18] sm:$0xff] %v441
      %454 = vst [vmem:[#allocation2 + $0x20] sm:$0xff] %v442
      %455 = vst [vmem:[#allocation2 + $0x28] sm:$0xff] %v443
      %456 = vst [vmem:[#allocation2 + $0x30] sm:$0xff] %v444
      %457 = vst [vmem:[#allocation2 + $0x38] sm:$0xff] %v445
      %458 = vst [vmem:[#allocation2 + $0x40] sm:$0xff] %v446
      %459 = vst [vmem:[#allocation2 + $0x48] sm:$0xff] %v447
      %460 = vst [vmem:[#allocation2 + $0x50] sm:$0xff] %v448
      %461 = vst [vmem:[#allocation2 + $0x58] sm:$0xff] %v449
      // Predicated region
      $region37: #{multiscale_forward.24} parent=31 // pred_check
        %p462 = pneg %p259
      $region38: #{multiscale_forward.24} parent=31 // pred_check_branch
        %464 = sbr.rel (%p462) target = $region40
      $region39: #{multiscale_forward.24} parent=31 // pred_region
        %v465 = vld [vmem:[#allocation2] sm:$0xff]
        %v466 = vld [vmem:[#allocation2 + $0x8] sm:$0xff]
        %v467 = vld [vmem:[#allocation2 + $0x10] sm:$0xff]
        %v468 = vld [vmem:[#allocation2 + $0x18] sm:$0xff]
        %v469 = vld [vmem:[#allocation2 + $0x20] sm:$0xff]
        %v470 = vld [vmem:[#allocation2 + $0x28] sm:$0xff]
        %v471 = vld [vmem:[#allocation2 + $0x30] sm:$0xff]
        %v472 = vld [vmem:[#allocation2 + $0x38] sm:$0xff]
        %v473 = vld [vmem:[#allocation2 + $0x40] sm:$0xff]
        %v474 = vld [vmem:[#allocation2 + $0x48] sm:$0xff]
        %v475 = vld [vmem:[#allocation2 + $0x50] sm:$0xff]
        %v476 = vld [vmem:[#allocation2 + $0x58] sm:$0xff]
        %v477 = vld [vmem:[%s249] sm:$0x1]
        %v479 = vperm.slane %v477, 0
        %v481 = vadd.f32 %v465, %v479
        %v482 = vadd.f32 %v466, %v479
        %v483 = vadd.f32 %v467, %v479
        %v484 = vadd.f32 %v468, %v479
        %v485 = vadd.f32 %v469, %v479
        %v486 = vadd.f32 %v470, %v479
        %v487 = vadd.f32 %v471, %v479
        %v488 = vadd.f32 %v472, %v479
        %v489 = vadd.f32 %v473, %v479
        %v490 = vadd.f32 %v474, %v479
        %v491 = vadd.f32 %v475, %v479
        %v492 = vadd.f32 %v476, %v479
        %vm493 = vcmp.ge.f32.partialorder %v481, 0.0
        %vm494 = vcmp.ge.f32.partialorder %v482, 0.0
        %vm495 = vcmp.ge.f32.partialorder %v483, 0.0
        %vm496 = vcmp.ge.f32.partialorder %v484, 0.0
        %vm497 = vcmp.ge.f32.partialorder %v485, 0.0
        %vm498 = vcmp.ge.f32.partialorder %v486, 0.0
        %vm499 = vcmp.ge.f32.partialorder %v487, 0.0
        %vm500 = vcmp.ge.f32.partialorder %v488, 0.0
        %vm501 = vcmp.ge.f32.partialorder %v489, 0.0
        %vm502 = vcmp.ge.f32.partialorder %v490, 0.0
        %vm503 = vcmp.ge.f32.partialorder %v491, 0.0
        %vm504 = vcmp.ge.f32.partialorder %v492, 0.0
        %v505 = vmul.f32 %v481, 0.2
        %v506 = vmul.f32 %v482, 0.2
        %v507 = vmul.f32 %v483, 0.2
        %v508 = vmul.f32 %v484, 0.2
        %v509 = vmul.f32 %v485, 0.2
        %v510 = vmul.f32 %v486, 0.2
        %v511 = vmul.f32 %v487, 0.2
        %v512 = vmul.f32 %v488, 0.2
        %v513 = vmul.f32 %v489, 0.2
        %v514 = vmul.f32 %v490, 0.2
        %v515 = vmul.f32 %v491, 0.2
        %v516 = vmul.f32 %v492, 0.2
        %v517 = vsel %vm493, %v481, %v505
        %v518 = vsel %vm494, %v482, %v506
        %v519 = vsel %vm495, %v483, %v507
        %v520 = vsel %vm496, %v484, %v508
        %v521 = vsel %vm497, %v485, %v509
        %v522 = vsel %vm498, %v486, %v510
        %v523 = vsel %vm499, %v487, %v511
        %v524 = vsel %vm500, %v488, %v512
        %v525 = vsel %vm501, %v489, %v513
        %v526 = vsel %vm502, %v490, %v514
        %v527 = vsel %vm503, %v491, %v515
        %v528 = vsel %vm504, %v492, %v516
        %v529 = vpack.c.bf16 %v517, %v517
        %v530 = vpack.c.bf16 %v518, %v518
        %v531 = vpack.c.bf16 %v519, %v519
        %v532 = vpack.c.bf16 %v520, %v520
        %v533 = vpack.c.bf16 %v521, %v521
        %v534 = vpack.c.bf16 %v522, %v522
        %v535 = vpack.c.bf16 %v523, %v523
        %v536 = vpack.c.bf16 %v524, %v524
        %v537 = vpack.c.bf16 %v525, %v525
        %v538 = vpack.c.bf16 %v526, %v526
        %v539 = vpack.c.bf16 %v527, %v527
        %v540 = vpack.c.bf16 %v528, %v528
        %541 = vst [vmem:[%s257] sm:$0xf] %v529
        %542 = vst [vmem:[%s257 + $0x4] sm:$0xf] %v530
        %543 = vst [vmem:[%s257 + $0x8] sm:$0xf] %v531
        %544 = vst [vmem:[%s257 + $0xc] sm:$0xf] %v532
        %545 = vst [vmem:[%s257 + $0x10] sm:$0xf] %v533
        %546 = vst [vmem:[%s257 + $0x14] sm:$0xf] %v534
        %547 = vst [vmem:[%s257 + $0x18] sm:$0xf] %v535
        %548 = vst [vmem:[%s257 + $0x1c] sm:$0xf] %v536
        %549 = vst [vmem:[%s257 + $0x20] sm:$0xf] %v537
        %550 = vst [vmem:[%s257 + $0x24] sm:$0xf] %v538
        %551 = vst [vmem:[%s257 + $0x28] sm:$0xf] %v539
        %552 = vst [vmem:[%s257 + $0x2c] sm:$0xf] %v540
      $region40: #{multiscale_forward.24} parent=31 // pred_fallthru
        _
      %s553 = smul.u32 12, %s19
      %p554 = scmp.lt.s32.totalorder %s553, 23
      %s555 = scalar_select %p554, %s553, 23
      %p556 = scmp.lt.s32.totalorder %s20, 0
      %s557 = scalar_select %p556, %s20, 0
      %s558 = sadd.s32 %s557, %s555
      %s559 = smul.addr %s558, 4
      %s560 = scalar_lea.vmem %s3, %s559
      // Predicated region
      $region41: #{multiscale_forward.24} parent=31 // pred_check
        %p561 = pneg %p135
      $region42: #{multiscale_forward.24} parent=31 // pred_check_branch
        %563 = sbr.rel (%p561) target = $region44
      $region43: #{multiscale_forward.24} parent=31 // pred_region
        %s564 = smul.u32 12, %s19
      $region44: #{multiscale_forward.24} parent=31 // pred_fallthru
        _
    $region32: #{multiscale_forward.24} parent=5 // pred_fallthru
      _
    %p565 = scmp.le.s32.totalorder 2, %s9
    // Predicated region
    $region45: #{multiscale_forward.24} parent=5 // pred_check
      %p566 = pneg %p565
    $region46: #{multiscale_forward.24} parent=5 // pred_check_branch
      %568 = sbr.rel (%p566) target = $region48
    $region47: #{multiscale_forward.24} parent=5 // pred_region
      %s569 = ssub.s32 %s9, 2
      // Predicated region
      $region49: #{multiscale_forward.24} parent=47 // pred_check
        %p570 = pneg %p141
      $region50: #{multiscale_forward.24} parent=47 // pred_check_branch
        %572 = sbr.rel (%p570) target = $region52
      $region51: #{multiscale_forward.24} parent=47 // pred_region
        %s573 = smul.u32 12, %s22
        %p574 = scmp.lt.s32.totalorder %s573, 23
        %s575 = scalar_select %p574, %s573, 23
        %p576 = scmp.lt.s32.totalorder %s23, 0
        %s577 = scalar_select %p576, %s23, 0
        %s578 = sadd.s32 %s577, %s575
        %s579 = smul.addr %s578, 4
        %s580 = scalar_lea.vmem %s3, %s579
      $region52: #{multiscale_forward.24} parent=47 // pred_fallthru
        _
    $region48: #{multiscale_forward.24} parent=5 // pred_fallthru
      _
  $region6: #{multiscale_forward.24} parent=0 // loop_footer
    %s13 = sadd.s32 1, %s9
  $region7: #{multiscale_forward.24} parent=0 // loop_footer_branch
    %8 = sbr.rel target = $region3
  $region8: #{multiscale_forward.24} parent=0 // loop_exit
    _

// kernel: multiscale_forward.25
$region0: #{multiscale_forward.25}
  #allocation0 [shape = 'u32[]', space=smem, size = 0x4, offset = 0x4, fixed_abs, tag = 'smem constant byte address 0x4 - core index']
  #allocation1 [shape = 'u32[72,128]{1,0:T(1,128)}', space=vmem, size = 0x9000, scoped, tag = 'internal scratch']
  %s0 = inlined_call_operand.vmem [shape: bf16[64,128], index: 0, kind: input, shape index: {}]
  %s1 = inlined_call_operand.vmem [shape: bf16[128,128], index: 1, kind: input, shape index: {}]
  %s2 = inlined_call_operand.vmem [shape: f32[1,128], index: 2, kind: input, shape index: {}]
  %s3 = inlined_call_operand.vmem [shape: f32[64,128], index: 3, kind: output, shape index: {0}]
  %s4 = inlined_call_operand.vmem [shape: f32[16,128], index: 4, kind: output, shape index: {1}]
  %5 = xla_tuple %s3, %s4
  %s6 = sld [smem:[#allocation0]]
  $region61: #{multiscale_forward.25} parent=0
    _
  %s8 = ssub.s32 1, %s6
  %s9 = scalar_select 0, %s8, %s6
  loop: start=0, step=1, limit=4
  $region2: #{multiscale_forward.25} parent=0 // loop_pre_header
    _
  $region3: #{multiscale_forward.25} parent=0 // loop_header
    %s11 = sphi 0, %s15
    %p12 = scmp.ge.s32.totalorder %s11, 4
    %s18 = sphi 0, %s37
    %s19 = sphi 0, %s33
    %s20 = sphi 0, %s29
    %s21 = sphi 0, %s18
    %s22 = sphi 0, %s19
    %s23 = sphi 0, %s20
    %s24 = sphi 0, %s21
    %s25 = sphi 0, %s22
    %s26 = sphi 0, %s23
    %s42 = sphi 0, %s44
    %s45 = sphi 0, %s42
    %s46 = sphi 0, %s45
    %s62 = sphi 0, %s46
    %s70 = sphi 0, %s72
    %s73 = sphi 0, %s70
    %s74 = sphi 0, %s73
    %s90 = sphi 0, %s74
    %s96 = sphi 0, %s98
    %s99 = sphi 0, %s96
    %s100 = sphi 0, %s99
    %s116 = sphi 0, %s100
    %s124 = sphi 0, %s126
    %s127 = sphi 0, %s124
    %s128 = sphi 0, %s127
    %s144 = sphi 0, %s128
    %s152 = sphi 0, %s154
    %s155 = sphi 0, %s152
    %s156 = sphi 0, %s155
    %s172 = sphi 0, %s156
  $region4: #{multiscale_forward.25} parent=0 // loop_header_branch
    %14 = sbr.rel (%p12) target = $region8
  $region5: #{multiscale_forward.25} parent=0 // loop_body
    %s16 = ssub.s32 %s11, 1
    %s17 = ssub.s32 %s11, 2
    %s27 = sadd.s32 1, %s20
    %p28 = scmp.ge.s32.totalorder %s27, 1
    %s29 = scalar_select %p28, 0, %s27
    %s30 = sadd.s32 1, %s19
    %s31 = scalar_select %p28, %s30, %s19
    %p32 = scmp.ge.s32.totalorder %s31, 1
    %s33 = scalar_select %p32, 0, %s31
    %s34 = sadd.s32 1, %s18
    %s35 = scalar_select %p32, %s34, %s18
    %p36 = scmp.ge.s32.totalorder %s35, 2
    %s37 = scalar_select %p36, 0, %s35
    %s38 = ssub.s32 %s18, %s37
    %s39 = ssub.s32 %s20, %s29
    %s40 = sor.u32 %s38, %s39
    %p41 = scmp.eq.s32.totalorder %s40, 0
    %s43 = sadd.s32 %s42, 1
    %s44 = scalar_select %p41, %s42, %s43
    %p47 = pneg %p41
    %p48 = scmp.eq.s32.totalorder %s11, 1
    %p49 = por %p47, %p48
    %p50 = scmp.ne.s32.totalorder %s42, %s45
    %p51 = scmp.eq.s32.totalorder %s11, 0
    %p52 = por %p50, %p51
    %p53 = scmp.ne.s32.totalorder %s42, %s45
    %p54 = scmp.eq.s32.totalorder %s16, 1
    %p55 = por %p53, %p54
    %p56 = scmp.ne.s32.totalorder %s45, %s46
    %p57 = scmp.eq.s32.totalorder %s16, 0
    %p58 = por %p56, %p57
    %p59 = scmp.ne.s32.totalorder %s45, %s46
    %p60 = scmp.eq.s32.totalorder %s17, 1
    %p61 = por %p59, %p60
    %p63 = scmp.ne.s32.totalorder %s46, %s62
    %p64 = scmp.eq.s32.totalorder %s17, 0
    %p65 = por %p63, %p64
    %s66 = ssub.s32 %s20, %s29
    %s67 = ssub.s32 %s19, %s33
    %s68 = sor.u32 %s66, %s67
    %p69 = scmp.eq.s32.totalorder %s68, 0
    %s71 = sadd.s32 %s70, 1
    %s72 = scalar_select %p69, %s70, %s71
    %p75 = pneg %p69
    %p76 = scmp.eq.s32.totalorder %s11, 1
    %p77 = por %p75, %p76
    %p78 = scmp.ne.s32.totalorder %s70, %s73
    %p79 = scmp.eq.s32.totalorder %s11, 0
    %p80 = por %p78, %p79
    %p81 = scmp.ne.s32.totalorder %s70, %s73
    %p82 = scmp.eq.s32.totalorder %s16, 1
    %p83 = por %p81, %p82
    %p84 = scmp.ne.s32.totalorder %s73, %s74
    %p85 = scmp.eq.s32.totalorder %s16, 0
    %p86 = por %p84, %p85
    %p87 = scmp.ne.s32.totalorder %s73, %s74
    %p88 = scmp.eq.s32.totalorder %s17, 1
    %p89 = por %p87, %p88
    %p91 = scmp.ne.s32.totalorder %s74, %s90
    %p92 = scmp.eq.s32.totalorder %s17, 0
    %p93 = por %p91, %p92
    %s94 = ssub.s32 %s19, %s33
    %p95 = scmp.eq.s32.totalorder %s94, 0
    %s97 = sadd.s32 %s96, 1
    %s98 = scalar_select %p95, %s96, %s97
    %p101 = pneg %p95
    %p102 = scmp.eq.s32.totalorder %s11, 1
    %p103 = por %p101, %p102
    %p104 = scmp.ne.s32.totalorder %s96, %s99
    %p105 = scmp.eq.s32.totalorder %s11, 0
    %p106 = por %p104, %p105
    %p107 = scmp.ne.s32.totalorder %s96, %s99
    %p108 = scmp.eq.s32.totalorder %s16, 1
    %p109 = por %p107, %p108
    %p110 = scmp.ne.s32.totalorder %s99, %s100
    %p111 = scmp.eq.s32.totalorder %s16, 0
    %p112 = por %p110, %p111
    %p113 = scmp.ne.s32.totalorder %s99, %s100
    %p114 = scmp.eq.s32.totalorder %s17, 1
    %p115 = por %p113, %p114
    %p117 = scmp.ne.s32.totalorder %s100, %s116
    %p118 = scmp.eq.s32.totalorder %s17, 0
    %p119 = por %p117, %p118
    %s120 = ssub.s32 %s18, %s37
    %s121 = ssub.s32 %s19, %s33
    %s122 = sor.u32 %s120, %s121
    %p123 = scmp.eq.s32.totalorder %s122, 0
    %s125 = sadd.s32 %s124, 1
    %s126 = scalar_select %p123, %s124, %s125
    %p129 = pneg %p123
    %p130 = scmp.eq.s32.totalorder %s11, 1
    %p131 = por %p129, %p130
    %p132 = scmp.ne.s32.totalorder %s124, %s127
    %p133 = scmp.eq.s32.totalorder %s11, 0
    %p134 = por %p132, %p133
    %p135 = scmp.ne.s32.totalorder %s124, %s127
    %p136 = scmp.eq.s32.totalorder %s16, 1
    %p137 = por %p135, %p136
    %p138 = scmp.ne.s32.totalorder %s127, %s128
    %p139 = scmp.eq.s32.totalorder %s16, 0
    %p140 = por %p138, %p139
    %p141 = scmp.ne.s32.totalorder %s127, %s128
    %p142 = scmp.eq.s32.totalorder %s17, 1
    %p143 = por %p141, %p142
    %p145 = scmp.ne.s32.totalorder %s128, %s144
    %p146 = scmp.eq.s32.totalorder %s17, 0
    %p147 = por %p145, %p146
    %s148 = ssub.s32 %s18, %s37
    %s149 = ssub.s32 %s19, %s33
    %s150 = sor.u32 %s148, %s149
    %p151 = scmp.eq.s32.totalorder %s150, 0
    %s153 = sadd.s32 %s152, 1
    %s154 = scalar_select %p151, %s152, %s153
    %p157 = pneg %p151
    %p158 = scmp.eq.s32.totalorder %s11, 1
    %p159 = por %p157, %p158
    %p160 = scmp.ne.s32.totalorder %s152, %s155
    %p161 = scmp.eq.s32.totalorder %s11, 0
    %p162 = por %p160, %p161
    %p163 = scmp.ne.s32.totalorder %s152, %s155
    %p164 = scmp.eq.s32.totalorder %s16, 1
    %p165 = por %p163, %p164
    %p166 = scmp.ne.s32.totalorder %s155, %s156
    %p167 = scmp.eq.s32.totalorder %s16, 0
    %p168 = por %p166, %p167
    %p169 = scmp.ne.s32.totalorder %s155, %s156
    %p170 = scmp.eq.s32.totalorder %s17, 1
    %p171 = por %p169, %p170
    %p173 = scmp.ne.s32.totalorder %s156, %s172
    %p174 = scmp.eq.s32.totalorder %s17, 0
    %p175 = por %p173, %p174
    %p176 = scmp.le.s32.totalorder 1, %s11
    %p177 = scmp.lt.s32.totalorder %s11, 3
    %p178 = pnand %p176, %p177
    %p179 = pneg %p178
    // Predicated region
    $region9: #{multiscale_forward.25} parent=5 // pred_check
      _
    $region10: #{multiscale_forward.25} parent=5 // pred_check_branch
      %181 = sbr.rel (%p178) target = $region12
    $region11: #{multiscale_forward.25} parent=5 // pred_region
      %s182 = ssub.s32 %s11, 1
      // Predicated region
      $region13: #{multiscale_forward.25} parent=11 // pred_check
        %p183 = pneg %p86
      $region14: #{multiscale_forward.25} parent=11 // pred_check_branch
        %185 = sbr.rel (%p183) target = $region16
      $region15: #{multiscale_forward.25} parent=11 // pred_region
        %s186 = smul.u32 16, %s23
        %p187 = scmp.lt.s32.totalorder %s186, 15
        %s188 = scalar_select %p187, %s186, 15
        %p189 = scmp.lt.s32.totalorder %s22, 0
        %s190 = scalar_select %p189, %s22, 0
        %s191 = sadd.s32 %s190, %s188
        %s192 = smul.addr %s191, 4
        %s193 = scalar_lea.vmem %s1, %s192
        %s194 = smul.u32 16, %s23
      $region16: #{multiscale_forward.25} parent=11 // pred_fallthru
        _
      // Predicated region
      $region17: #{multiscale_forward.25} parent=11 // pred_check
        %p195 = pneg %p112
      $region18: #{multiscale_forward.25} parent=11 // pred_check_branch
        %197 = sbr.rel (%p195) target = $region20
      $region19: #{multiscale_forward.25} parent=11 // pred_region
        %p198 = scmp.lt.s32.totalorder %s22, 0
        %s199 = scalar_select %p198, %s22, 0
        %s200 = scalar_lea.vmem %s2, %s199
      $region20: #{multiscale_forward.25} parent=11 // pred_fallthru
        _
    $region12: #{multiscale_forward.25} parent=5 // pred_fallthru
      _
    %p201 = scmp.lt.s32.totalorder %s11, 2
    // Predicated region
    $region21: #{multiscale_forward.25} parent=5 // pred_check
      %p202 = pneg %p201
    $region22: #{multiscale_forward.25} parent=5 // pred_check_branch
      %204 = sbr.rel (%p202) target = $region24
    $region23: #{multiscale_forward.25} parent=5 // pred_region
      // Predicated region
      $region25: #{multiscale_forward.25} parent=23 // pred_check
        %p205 = pneg %p52
      $region26: #{multiscale_forward.25} parent=23 // pred_check_branch
        %207 = sbr.rel (%p205) target = $region28
      $region27: #{multiscale_forward.25} parent=23 // pred_region
        %s208 = smul.u32 4, %s18
        %p209 = scmp.lt.s32.totalorder %s208, 7
        %s210 = scalar_select %p209, %s208, 7
        %p211 = scmp.lt.s32.totalorder %s20, 0
        %s212 = scalar_select %p211, %s20, 0
        %s213 = sadd.s32 %s212, %s210
        %s214 = smul.addr %s213, 4
        %s215 = scalar_lea.vmem %s0, %s214
        %s216 = smul.u32 4, %s18
      $region28: #{multiscale_forward.25} parent=23 // pred_fallthru
        _
    $region24: #{multiscale_forward.25} parent=5 // pred_fallthru
      _
    %p217 = scmp.le.s32.totalorder 1, %s11
    %p218 = scmp.lt.s32.totalorder %s11, 3
    %p219 = pnand %p217, %p218
    %p220 = pneg %p219
    // Predicated region
    $region29: #{multiscale_forward.25} parent=5 // pred_check
      _
    $region30: #{multiscale_forward.25} parent=5 // pred_check_branch
      %222 = sbr.rel (%p219) target = $region32
    $region31: #{multiscale_forward.25} parent=5 // pred_region
      %s223 = ssub.s32 %s11, 1
      %s224 = smul.u32 4, %s21
      %p225 = scmp.lt.s32.totalorder %s224, 7
      %s226 = scalar_select %p225, %s224, 7
      %p227 = scmp.lt.s32.totalorder %s23, 0
      %s228 = scalar_select %p227, %s23, 0
      %s229 = sadd.s32 %s228, %s226
      %s230 = smul.addr %s229, 4
      %s231 = scalar_lea.vmem %s0, %s230
      %p232 = pneg %p58
      %p233 = pneg %p55
      %s234 = smul.u32 16, %s23
      %p235 = scmp.lt.s32.totalorder %s234, 15
      %s236 = scalar_select %p235, %s234, 15
      %p237 = scmp.lt.s32.totalorder %s22, 0
      %s238 = scalar_select %p237, %s22, 0
      %s239 = sadd.s32 %s238, %s236
      %s240 = smul.addr %s239, 4
      %s241 = scalar_lea.vmem %s1, %s240
      %p242 = pneg %p86
      %p243 = pneg %p83
      %p244 = scmp.lt.s32.totalorder %s22, 0
      %s245 = scalar_select %p244, %s22, 0
      %s246 = scalar_lea.vmem %s2, %s245
      %p247 = pneg %p112
      %p248 = pneg %p109
      %p249 = pneg %p140
      %p250 = pneg %p137
      %s251 = smul.u32 4, %s21
      %p252 = scmp.lt.s32.totalorder %s251, 7
      %s253 = scalar_select %p252, %s251, 7
      %p254 = scmp.lt.s32.totalorder %s22, 0
      %s255 = scalar_select %p254, %s22, 0
      %s256 = sadd.s32 %s255, %s253
      %s257 = smul.addr %s256, 8
      %s258 = scalar_lea.vmem %s3, %s257
      %p259 = pneg %p168
      %p260 = pneg %p165
      %p261 = scmp.lt.s32.totalorder %s21, 1
      %s262 = scalar_select %p261, %s21, 1
      %p263 = scmp.lt.s32.totalorder %s22, 0
      %s264 = scalar_select %p263, %s22, 0
      %s265 = sadd.s32 %s264, %s262
      %s266 = smul.addr %s265, 8
      %s267 = scalar_lea.vmem %s4, %s266
      %s268 = smul.u32 4, %s21
      %p269 = scmp.lt.s32.totalorder %s268, 7
      %s270 = scalar_select %p269, %s268, 7
      %p271 = scmp.lt.s32.totalorder %s23, 0
      %s272 = scalar_select %p271, %s23, 0
      %s273 = sadd.s32 %s272, %s270
      %s274 = smul.addr %s273, 4
      %s275 = scalar_lea.vmem %s0, %s274
      %s276 = smul.u32 4, %s21
      %s277 = smul.u32 16, %s23
      %p278 = scmp.lt.s32.totalorder %s277, 15
      %s279 = scalar_select %p278, %s277, 15
      %p280 = scmp.lt.s32.totalorder %s22, 0
      %s281 = scalar_select %p280, %s22, 0
      %s282 = sadd.s32 %s281, %s279
      %s283 = smul.addr %s282, 4
      %s284 = scalar_lea.vmem %s1, %s283
      %s285 = smul.u32 16, %s23
      %p286 = scmp.lt.s32.totalorder %s22, 0
      %s287 = scalar_select %p286, %s22, 0
      %s288 = scalar_lea.vmem %s2, %s287
      %s289 = smul.u32 4, %s21
      %p290 = scmp.lt.s32.totalorder %s289, 7
      %s291 = scalar_select %p290, %s289, 7
      %p292 = scmp.lt.s32.totalorder %s22, 0
      %s293 = scalar_select %p292, %s22, 0
      %s294 = sadd.s32 %s293, %s291
      %s295 = smul.addr %s294, 8
      %s296 = scalar_lea.vmem %s3, %s295
      %s297 = smul.u32 4, %s21
      %p298 = scmp.lt.s32.totalorder %s21, 1
      %s299 = scalar_select %p298, %s21, 1
      %p300 = scmp.lt.s32.totalorder %s22, 0
      %s301 = scalar_select %p300, %s22, 0
      %s302 = sadd.s32 %s301, %s299
      %s303 = smul.addr %s302, 8
      %s304 = scalar_lea.vmem %s4, %s303
      %s305 = smul.u32 %s21, 32
      %p306 = scmp.eq.s32.totalorder %s23, 0
      // Predicated region
      $region33: #{multiscale_forward.25} parent=31 // pred_check
        %p307 = pneg %p306
      $region34: #{multiscale_forward.25} parent=31 // pred_check_branch
        %309 = sbr.rel (%p307) target = $region36
      $region35: #{multiscale_forward.25} parent=31 // pred_region
        %310 = vst [vmem:[%s296] sm:$0xff] 0.0
        %311 = vst [vmem:[%s296 + $0x8] sm:$0xff] 0.0
        %312 = vst [vmem:[%s296 + $0x10] sm:$0xff] 0.0
        %313 = vst [vmem:[%s296 + $0x18] sm:$0xff] 0.0
      $region36: #{multiscale_forward.25} parent=31 // pred_fallthru
        _
      %v314 = vld [vmem:[%s296] sm:$0xff]
      %v315 = vld [vmem:[%s296 + $0x8] sm:$0xff]
      %v316 = vld [vmem:[%s296 + $0x10] sm:$0xff]
      %v317 = vld [vmem:[%s296 + $0x18] sm:$0xff]
      %v318 = vld [vmem:[%s275] sm:$0xf]
      %v319 = vld [vmem:[%s275 + $0x4] sm:$0xf]
      %v320 = vld [vmem:[%s275 + $0x8] sm:$0xf]
      %v321 = vld [vmem:[%s275 + $0xc] sm:$0xf]
      %v322 = vld [vmem:[%s284] sm:$0xf]
      %v323 = vld [vmem:[%s284 + $0x4] sm:$0xf]
      %v324 = vld [vmem:[%s284 + $0x8] sm:$0xf]
      %v325 = vld [vmem:[%s284 + $0xc] sm:$0xf]
      %v326 = vld [vmem:[%s284 + $0x10] sm:$0xf]
      %v327 = vld [vmem:[%s284 + $0x14] sm:$0xf]
      %v328 = vld [vmem:[%s284 + $0x18] sm:$0xf]
      %v329 = vld [vmem:[%s284 + $0x1c] sm:$0xf]
      %v330 = vld [vmem:[%s284 + $0x20] sm:$0xf]
      %v331 = vld [vmem:[%s284 + $0x24] sm:$0xf]
      %v332 = vld [vmem:[%s284 + $0x28] sm:$0xf]
      %v333 = vld [vmem:[%s284 + $0x2c] sm:$0xf]
      %v334 = vld [vmem:[%s284 + $0x30] sm:$0xf]
      %v335 = vld [vmem:[%s284 + $0x34] sm:$0xf]
      %v336 = vld [vmem:[%s284 + $0x38] sm:$0xf]
      %v337 = vld [vmem:[%s284 + $0x3c] sm:$0xf]
      %v342 = vunpack.c.l.b16 %v318
      %v343 = vunpack.c.l.b16 %v319
      %v344 = vunpack.c.l.b16 %v320
      %v345 = vunpack.c.l.b16 %v321
      %v346 = vpack.c.b16 %v343, %v342
      %v347 = vpack.c.b16 %v345, %v344
      %v366 = vunpack.c.l.b16 %v322
      %v367 = vunpack.c.l.b16 %v323
      %v368 = vunpack.c.l.b16 %v324
      %v369 = vunpack.c.l.b16 %v325
      %v370 = vunpack.c.l.b16 %v326
      %v371 = vunpack.c.l.b16 %v327
      %v372 = vunpack.c.l.b16 %v328
      %v373 = vunpack.c.l.b16 %v329
      %v374 = vunpack.c.l.b16 %v330
      %v375 = vunpack.c.l.b16 %v331
      %v376 = vunpack.c.l.b16 %v332
      %v377 = vunpack.c.l.b16 %v333
      %v378 = vunpack.c.l.b16 %v334
      %v379 = vunpack.c.l.b16 %v335
      %v380 = vunpack.c.l.b16 %v336
      %v381 = vunpack.c.l.b16 %v337
      %v382 = vpack.c.b16 %v367, %v366
      %v383 = vpack.c.b16 %v369, %v368
      %v384 = vpack.c.b16 %v371, %v370
      %v385 = vpack.c.b16 %v373, %v372
      %v386 = vpack.c.b16 %v375, %v374
      %v387 = vpack.c.b16 %v377, %v376
      %v388 = vpack.c.b16 %v379, %v378
      %v389 = vpack.c.b16 %v381, %v380
      %398 = vmatpush.bf16.msra.mxu0 %v389
      %399 = vmatpush.bf16.msra.mxu0 %v388
      %400 = vmatpush.bf16.msra.mxu0 %v387
      %401 = vmatpush.bf16.msra.mxu0 %v386
      %402 = vmatpush.bf16.msra.mxu0 %v385
      %403 = vmatpush.bf16.msra.mxu0 %v384
      %404 = vmatpush.bf16.msra.mxu0 %v383
      %405 = vmatpush.bf16.msra.mxu0 %v382
      %406 = vmatmul.bf16.gmra.mxu0 %v346
      %v407 = vpop.f32.mrf.mxu0
      %v408 = vadd.f32 0.0, %v407
      %v409 = vpop.f32.mrf.mxu0
      %v410 = vadd.f32 0.0, %v409
      %411 = vmatmul.bf16.gmra.mxu0 %v347
      %v412 = vpop.f32.mrf.mxu0
      %v413 = vadd.f32 0.0, %v412
      %v414 = vpop.f32.mrf.mxu0
      %v415 = vadd.f32 0.0, %v414
      %416 = vdwg.mxu0
      %v417 = vadd.f32 %v314, %v408
      %v418 = vadd.f32 %v315, %v410
      %v419 = vadd.f32 %v316, %v413
      %v420 = vadd.f32 %v317, %v415
      %421 = vst [vmem:[%s296] sm:$0xff] %v417
      %422 = vst [vmem:[%s296 + $0x8] sm:$0xff] %v418
      %423 = vst [vmem:[%s296 + $0x10] sm:$0xff] %v419
      %424 = vst [vmem:[%s296 + $0x18] sm:$0xff] %v420
      // Predicated region
      $region37: #{multiscale_forward.25} parent=31 // pred_check
        %p425 = pneg %p306
      $region38: #{multiscale_forward.25} parent=31 // pred_check_branch
        %427 = sbr.rel (%p425) target = $region40
      $region39: #{multiscale_forward.25} parent=31 // pred_region
        %v428 = vld [vmem:[%s296] sm:$0xff]
        %v429 = vld [vmem:[%s296 + $0x8] sm:$0xff]
        %v430 = vld [vmem:[%s296 + $0x10] sm:$0xff]
        %v431 = vld [vmem:[%s296 + $0x18] sm:$0xff]
        %v432 = vld [vmem:[%s288] sm:$0x1]
        %v434 = vperm.slane %v432, 0
        %v436 = vadd.f32 %v428, %v434
        %v437 = vadd.f32 %v429, %v434
        %v438 = vadd.f32 %v430, %v434
        %v439 = vadd.f32 %v431, %v434
        %440 = vst [vmem:[%s296] sm:$0xff] %v436
        %441 = vst [vmem:[%s296 + $0x8] sm:$0xff] %v437
        %442 = vst [vmem:[%s296 + $0x10] sm:$0xff] %v438
        %443 = vst [vmem:[%s296 + $0x18] sm:$0xff] %v439
        %v444 = vlaneseq
        %v445 = vshrl.u32 %v444, 7
        %v446 = vadd.s32 %v445, 8
        %v447 = vadd.s32 %v445, 16
        %v448 = vadd.s32 %v445, 24
        %v449 = vstv %s305
        %v450 = vadd.s32 %v445, %v449
        %v451 = vadd.s32 %v446, %v449
        %v452 = vadd.s32 %v447, %v449
        %v453 = vadd.s32 %v448, %v449
        %vm454 = vcmp.lt.s32.totalorder %v450, 50
        %vm455 = vcmp.lt.s32.totalorder %v451, 50
        %vm456 = vcmp.lt.s32.totalorder %v452, 50
        %vm457 = vcmp.lt.s32.totalorder %v453, 50
        %v458 = vsel %vm454, 1, 0
        %v459 = vsel %vm455, 1, 0
        %v460 = vsel %vm456, 1, 0
        %v461 = vsel %vm457, 1, 0
        %vm462 = vcmp.eq.s32.totalorder %v458, 1
        %vm463 = vcmp.eq.s32.totalorder %v459, 1
        %vm464 = vcmp.eq.s32.totalorder %v460, 1
        %vm465 = vcmp.eq.s32.totalorder %v461, 1
        %v466 = vsel %vm462, %v436, 0.0
        %v467 = vsel %vm463, %v437, 0.0
        %v468 = vsel %vm464, %v438, 0.0
        %v469 = vsel %vm465, %v439, 0.0
        %v470 = vadd.f32 %v466, %v467
        %v471 = vadd.f32 %v470, %v468
        %v472 = vadd.f32 %v471, %v469
        %v473 = vrot.slane %v472, 4
        %v474 = vadd.f32 %v472, %v473
        %v475 = vrot.slane %v474, 2
        %v476 = vadd.f32 %v474, %v475
        %v477 = vrot.slane %v476, 1
        %v478 = vadd.f32 %v476, %v477
        %v479 = vmul.f32 %v466, %v466
        %v480 = vmul.f32 %v467, %v467
        %v481 = vmul.f32 %v468, %v468
        %v482 = vmul.f32 %v469, %v469
        %v483 = vadd.f32 %v479, %v480
        %v484 = vadd.f32 %v483, %v481
        %v485 = vadd.f32 %v484, %v482
        %v486 = vrot.slane %v485, 4
        %v487 = vadd.f32 %v485, %v486
        %v488 = vrot.slane %v487, 2
        %v489 = vadd.f32 %v487, %v488
        %v490 = vrot.slane %v489, 1
        %v491 = vadd.f32 %v489, %v490
        %vm492 = vcmp.eq.s32.totalorder %v445, 0
        %v493 = vsel %vm492, %v478, 0.0
        %vm494 = vcmp.eq.s32.totalorder %v445, 1
        %v495 = vsel %vm494, %v491, 0.0
        %v496 = vadd.f32 %v493, %v495
        %497 = vst [vmem:[%s304] sm:$0xff] %v496
      $region40: #{multiscale_forward.25} parent=31 // pred_fallthru
        _
      %s498 = smul.u32 4, %s21
      %p499 = scmp.lt.s32.totalorder %s498, 7
      %s500 = scalar_select %p499, %s498, 7
      %p501 = scmp.lt.s32.totalorder %s22, 0
      %s502 = scalar_select %p501, %s22, 0
      %s503 = sadd.s32 %s502, %s500
      %s504 = smul.addr %s503, 8
      %s505 = scalar_lea.vmem %s3, %s504
      %p506 = scmp.lt.s32.totalorder %s21, 1
      %s507 = scalar_select %p506, %s21, 1
      %p508 = scmp.lt.s32.totalorder %s22, 0
      %s509 = scalar_select %p508, %s22, 0
      %s510 = sadd.s32 %s509, %s507
      %s511 = smul.addr %s510, 8
      %s512 = scalar_lea.vmem %s4, %s511
      // Predicated region
      $region41: #{multiscale_forward.25} parent=31 // pred_check
        %p513 = pneg %p137
      $region42: #{multiscale_forward.25} parent=31 // pred_check_branch
        %515 = sbr.rel (%p513) target = $region44
      $region43: #{multiscale_forward.25} parent=31 // pred_region
        %s516 = smul.u32 4, %s21
      $region44: #{multiscale_forward.25} parent=31 // pred_fallthru
        _
      // Predicated region
      $region45: #{multiscale_forward.25} parent=31 // pred_check
        %p517 = pneg %p165
      $region46: #{multiscale_forward.25} parent=31 // pred_check_branch
        %519 = sbr.rel (%p517) target = $region48
      $region47: #{multiscale_forward.25} parent=31 // pred_region
        _
      $region48: #{multiscale_forward.25} parent=31 // pred_fallthru
        _
    $region32: #{multiscale_forward.25} parent=5 // pred_fallthru
      _
    %p520 = scmp.le.s32.totalorder 2, %s11
    // Predicated region
    $region49: #{multiscale_forward.25} parent=5 // pred_check
      %p521 = pneg %p520
    $region50: #{multiscale_forward.25} parent=5 // pred_check_branch
      %523 = sbr.rel (%p521) target = $region52
    $region51: #{multiscale_forward.25} parent=5 // pred_region
      %s524 = ssub.s32 %s11, 2
      // Predicated region
      $region53: #{multiscale_forward.25} parent=51 // pred_check
        %p525 = pneg %p143
      $region54: #{multiscale_forward.25} parent=51 // pred_check_branch
        %527 = sbr.rel (%p525) target = $region56
      $region55: #{multiscale_forward.25} parent=51 // pred_region
        %s528 = smul.u32 4, %s24
        %p529 = scmp.lt.s32.totalorder %s528, 7
        %s530 = scalar_select %p529, %s528, 7
        %p531 = scmp.lt.s32.totalorder %s25, 0
        %s532 = scalar_select %p531, %s25, 0
        %s533 = sadd.s32 %s532, %s530
        %s534 = smul.addr %s533, 8
        %s535 = scalar_lea.vmem %s3, %s534
      $region56: #{multiscale_forward.25} parent=51 // pred_fallthru
        _
      // Predicated region
      $region57: #{multiscale_forward.25} parent=51 // pred_check
        %p536 = pneg %p171
      $region58: #{multiscale_forward.25} parent=51 // pred_check_branch
        %538 = sbr.rel (%p536) target = $region60
      $region59: #{multiscale_forward.25} parent=51 // pred_region
        %p539 = scmp.lt.s32.totalorder %s24, 1
        %s540 = scalar_select %p539, %s24, 1
        %p541 = scmp.lt.s32.totalorder %s25, 0
        %s542 = scalar_select %p541, %s25, 0
        %s543 = sadd.s32 %s542, %s540
        %s544 = smul.addr %s543, 8
        %s545 = scalar_lea.vmem %s4, %s544
      $region60: #{multiscale_forward.25} parent=51 // pred_fallthru
        _
    $region52: #{multiscale_forward.25} parent=5 // pred_fallthru
      _
  $region6: #{multiscale_forward.25} parent=0 // loop_footer
    %s15 = sadd.s32 1, %s11
  $region7: #{multiscale_forward.25} parent=0 // loop_footer_branch
    %10 = sbr.rel target = $region3
  $region8: #{multiscale_forward.25} parent=0 // loop_exit
    _

// kernel: multiscale_forward.26
$region0: #{multiscale_forward.26}
  #allocation0 [shape = 'u32[]', space=smem, size = 0x4, offset = 0x4, fixed_abs, tag = 'smem constant byte address 0x4 - core index']
  #allocation1 [shape = 'u32[72,128]{1,0:T(1,128)}', space=vmem, size = 0x9000, scoped, tag = 'internal scratch']
  %s0 = inlined_call_operand.vmem [shape: f32[64,128], index: 0, kind: input, shape index: {}]
  %s1 = inlined_call_operand.vmem [shape: f32[1,128], index: 1, kind: input, shape index: {}]
  %s2 = inlined_call_operand.vmem [shape: f32[1,128], index: 2, kind: input, shape index: {}]
  %s3 = inlined_call_operand.vmem [shape: bf16[64,128], index: 3, kind: output, shape index: {}]
  %s4 = sld [smem:[#allocation0]]
  $region45: #{multiscale_forward.26} parent=0
    _
  %s6 = ssub.s32 1, %s4
  %s7 = scalar_select 0, %s6, %s4
  loop: start=0, step=1, limit=4
  $region2: #{multiscale_forward.26} parent=0 // loop_pre_header
    _
  $region3: #{multiscale_forward.26} parent=0 // loop_header
    %s9 = sphi 0, %s13
    %p10 = scmp.ge.s32.totalorder %s9, 4
    %s19 = sphi 0, %s21
    %s22 = sphi 0, %s19
    %s23 = sphi 0, %s22
    %s39 = sphi 0, %s23
    %s43 = sphi 0, %s43
    %s45 = sphi 0, %s43
    %s46 = sphi 0, %s45
    %s60 = sphi 0, %s46
    %s64 = sphi 0, %s64
    %s66 = sphi 0, %s64
    %s67 = sphi 0, %s66
    %s81 = sphi 0, %s67
    %s87 = sphi 0, %s89
    %s90 = sphi 0, %s87
    %s91 = sphi 0, %s90
    %s107 = sphi 0, %s91
  $region4: #{multiscale_forward.26} parent=0 // loop_header_branch
    %12 = sbr.rel (%p10) target = $region8
  $region5: #{multiscale_forward.26} parent=0 // loop_body
    %s14 = ssub.s32 %s9, 1
    %s15 = ssub.s32 %s9, 2
    %s16 = sadd.s32 %s9, 1
    %s17 = ssub.s32 %s9, %s16
    %p18 = scmp.eq.s32.totalorder %s17, 0
    %s20 = sadd.s32 %s19, 1
    %s21 = scalar_select %p18, %s19, %s20
    %p24 = pneg %p18
    %p25 = scmp.eq.s32.totalorder %s9, 1
    %p26 = por %p24, %p25
    %p27 = scmp.ne.s32.totalorder %s19, %s22
    %p28 = scmp.eq.s32.totalorder %s9, 0
    %p29 = por %p27, %p28
    %p30 = scmp.ne.s32.totalorder %s19, %s22
    %p31 = scmp.eq.s32.totalorder %s14, 1
    %p32 = por %p30, %p31
    %p33 = scmp.ne.s32.totalorder %s22, %s23
    %p34 = scmp.eq.s32.totalorder %s14, 0
    %p35 = por %p33, %p34
    %p36 = scmp.ne.s32.totalorder %s22, %s23
    %p37 = scmp.eq.s32.totalorder %s15, 1
    %p38 = por %p36, %p37
    %p40 = scmp.ne.s32.totalorder %s23, %s39
    %p41 = scmp.eq.s32.totalorder %s15, 0
    %p42 = por %p40, %p41
    %s44 = sadd.s32 %s43, 1
    %p47 = scmp.eq.s32.totalorder %s9, 1
    %p48 = scmp.ne.s32.totalorder %s43, %s45
    %p49 = scmp.eq.s32.totalorder %s9, 0
    %p50 = por %p48, %p49
    %p51 = scmp.ne.s32.totalorder %s43, %s45
    %p52 = scmp.eq.s32.totalorder %s14, 1
    %p53 = por %p51, %p52
    %p54 = scmp.ne.s32.totalorder %s45, %s46
    %p55 = scmp.eq.s32.totalorder %s14, 0
    %p56 = por %p54, %p55
    %p57 = scmp.ne.s32.totalorder %s45, %s46
    %p58 = scmp.eq.s32.totalorder %s15, 1
    %p59 = por %p57, %p58
    %p61 = scmp.ne.s32.totalorder %s46, %s60
    %p62 = scmp.eq.s32.totalorder %s15, 0
    %p63 = por %p61, %p62
    %s65 = sadd.s32 %s64, 1
    %p68 = scmp.eq.s32.totalorder %s9, 1
    %p69 = scmp.ne.s32.totalorder %s64, %s66
    %p70 = scmp.eq.s32.totalorder %s9, 0
    %p71 = por %p69, %p70
    %p72 = scmp.ne.s32.totalorder %s64, %s66
    %p73 = scmp.eq.s32.totalorder %s14, 1
    %p74 = por %p72, %p73
    %p75 = scmp.ne.s32.totalorder %s66, %s67
    %p76 = scmp.eq.s32.totalorder %s14, 0
    %p77 = por %p75, %p76
    %p78 = scmp.ne.s32.totalorder %s66, %s67
    %p79 = scmp.eq.s32.totalorder %s15, 1
    %p80 = por %p78, %p79
    %p82 = scmp.ne.s32.totalorder %s67, %s81
    %p83 = scmp.eq.s32.totalorder %s15, 0
    %p84 = por %p82, %p83
    %s85 = ssub.s32 %s9, %s16
    %p86 = scmp.eq.s32.totalorder %s85, 0
    %s88 = sadd.s32 %s87, 1
    %s89 = scalar_select %p86, %s87, %s88
    %p92 = pneg %p86
    %p93 = scmp.eq.s32.totalorder %s9, 1
    %p94 = por %p92, %p93
    %p95 = scmp.ne.s32.totalorder %s87, %s90
    %p96 = scmp.eq.s32.totalorder %s9, 0
    %p97 = por %p95, %p96
    %p98 = scmp.ne.s32.totalorder %s87, %s90
    %p99 = scmp.eq.s32.totalorder %s14, 1
    %p100 = por %p98, %p99
    %p101 = scmp.ne.s32.totalorder %s90, %s91
    %p102 = scmp.eq.s32.totalorder %s14, 0
    %p103 = por %p101, %p102
    %p104 = scmp.ne.s32.totalorder %s90, %s91
    %p105 = scmp.eq.s32.totalorder %s15, 1
    %p106 = por %p104, %p105
    %p108 = scmp.ne.s32.totalorder %s91, %s107
    %p109 = scmp.eq.s32.totalorder %s15, 0
    %p110 = por %p108, %p109
    %p111 = scmp.le.s32.totalorder 1, %s9
    %p112 = scmp.lt.s32.totalorder %s9, 3
    %p113 = pnand %p111, %p112
    %p114 = pneg %p113
    // Predicated region
    $region9: #{multiscale_forward.26} parent=5 // pred_check
      _
    $region10: #{multiscale_forward.26} parent=5 // pred_check_branch
      %116 = sbr.rel (%p113) target = $region12
    $region11: #{multiscale_forward.26} parent=5 // pred_region
      %s117 = ssub.s32 %s9, 1
      // Predicated region
      $region13: #{multiscale_forward.26} parent=11 // pred_check
        %p118 = pneg %p56
      $region14: #{multiscale_forward.26} parent=11 // pred_check_branch
        %120 = sbr.rel (%p118) target = $region16
      $region15: #{multiscale_forward.26} parent=11 // pred_region
        _
      $region16: #{multiscale_forward.26} parent=11 // pred_fallthru
        _
      // Predicated region
      $region17: #{multiscale_forward.26} parent=11 // pred_check
        %p121 = pneg %p77
      $region18: #{multiscale_forward.26} parent=11 // pred_check_branch
        %123 = sbr.rel (%p121) target = $region20
      $region19: #{multiscale_forward.26} parent=11 // pred_region
        _
      $region20: #{multiscale_forward.26} parent=11 // pred_fallthru
        _
    $region12: #{multiscale_forward.26} parent=5 // pred_fallthru
      _
    %p124 = scmp.lt.s32.totalorder %s9, 2
    // Predicated region
    $region21: #{multiscale_forward.26} parent=5 // pred_check
      %p125 = pneg %p124
    $region22: #{multiscale_forward.26} parent=5 // pred_check_branch
      %127 = sbr.rel (%p125) target = $region24
    $region23: #{multiscale_forward.26} parent=5 // pred_region
      // Predicated region
      $region25: #{multiscale_forward.26} parent=23 // pred_check
        %p128 = pneg %p29
      $region26: #{multiscale_forward.26} parent=23 // pred_check_branch
        %130 = sbr.rel (%p128) target = $region28
      $region27: #{multiscale_forward.26} parent=23 // pred_region
        %s131 = smul.u32 4, %s9
        %p132 = scmp.lt.s32.totalorder %s131, 7
        %s133 = scalar_select %p132, %s131, 7
        %s134 = smul.addr %s133, 8
        %s135 = scalar_lea.vmem %s0, %s134
        %s136 = smul.u32 4, %s9
      $region28: #{multiscale_forward.26} parent=23 // pred_fallthru
        _
    $region24: #{multiscale_forward.26} parent=5 // pred_fallthru
      _
    %p137 = scmp.le.s32.totalorder 1, %s9
    %p138 = scmp.lt.s32.totalorder %s9, 3
    %p139 = pnand %p137, %p138
    %p140 = pneg %p139
    // Predicated region
    $region29: #{multiscale_forward.26} parent=5 // pred_check
      _
    $region30: #{multiscale_forward.26} parent=5 // pred_check_branch
      %142 = sbr.rel (%p139) target = $region32
    $region31: #{multiscale_forward.26} parent=5 // pred_region
      %s143 = ssub.s32 %s9, 1
      %s144 = smul.u32 4, %s14
      %p145 = scmp.lt.s32.totalorder %s144, 7
      %s146 = scalar_select %p145, %s144, 7
      %s147 = smul.addr %s146, 8
      %s148 = scalar_lea.vmem %s0, %s147
      %p149 = pneg %p35
      %p150 = pneg %p32
      %p151 = pneg %p56
      %p152 = pneg %p53
      %p153 = pneg %p77
      %p154 = pneg %p74
      %p155 = pneg %p103
      %p156 = pneg %p100
      %s157 = smul.u32 4, %s14
      %p158 = scmp.lt.s32.totalorder %s157, 7
      %s159 = scalar_select %p158, %s157, 7
      %s160 = smul.addr %s159, 4
      %s161 = scalar_lea.vmem %s3, %s160
      %s162 = smul.u32 4, %s14
      %p163 = scmp.lt.s32.totalorder %s162, 7
      %s164 = scalar_select %p163, %s162, 7
      %s165 = smul.addr %s164, 8
      %s166 = scalar_lea.vmem %s0, %s165
      %s167 = smul.u32 4, %s14
      %s168 = smul.u32 4, %s14
      %p169 = scmp.lt.s32.totalorder %s168, 7
      %s170 = scalar_select %p169, %s168, 7
      %s171 = smul.addr %s170, 4
      %s172 = scalar_lea.vmem %s3, %s171
      %s173 = smul.u32 4, %s14
      %v174 = vld [vmem:[%s166] sm:$0xff]
      %v175 = vld [vmem:[%s166 + $0x8] sm:$0xff]
      %v176 = vld [vmem:[%s166 + $0x10] sm:$0xff]
      %v177 = vld [vmem:[%s166 + $0x18] sm:$0xff]
      %v178 = vld [vmem:[%s1] sm:$0x1]
      %v180 = vperm.slane %v178, 0
      %v182 = vmul.f32 %v174, %v180
      %v183 = vmul.f32 %v175, %v180
      %v184 = vmul.f32 %v176, %v180
      %v185 = vmul.f32 %v177, %v180
      %v186 = vld [vmem:[%s2] sm:$0x1]
      %v188 = vperm.slane %v186, 0
      %v190 = vadd.f32 %v182, %v188
      %v191 = vadd.f32 %v183, %v188
      %v192 = vadd.f32 %v184, %v188
      %v193 = vadd.f32 %v185, %v188
      %vm194 = vcmp.ge.f32.partialorder %v190, 0.0
      %vm195 = vcmp.ge.f32.partialorder %v191, 0.0
      %vm196 = vcmp.ge.f32.partialorder %v192, 0.0
      %vm197 = vcmp.ge.f32.partialorder %v193, 0.0
      %v198 = vmul.f32 %v190, 0.2
      %v199 = vmul.f32 %v191, 0.2
      %v200 = vmul.f32 %v192, 0.2
      %v201 = vmul.f32 %v193, 0.2
      %v202 = vsel %vm194, %v190, %v198
      %v203 = vsel %vm195, %v191, %v199
      %v204 = vsel %vm196, %v192, %v200
      %v205 = vsel %vm197, %v193, %v201
      %v206 = vpack.c.bf16 %v202, %v202
      %v207 = vpack.c.bf16 %v203, %v203
      %v208 = vpack.c.bf16 %v204, %v204
      %v209 = vpack.c.bf16 %v205, %v205
      %210 = vst [vmem:[%s172] sm:$0xf] %v206
      %211 = vst [vmem:[%s172 + $0x4] sm:$0xf] %v207
      %212 = vst [vmem:[%s172 + $0x8] sm:$0xf] %v208
      %213 = vst [vmem:[%s172 + $0xc] sm:$0xf] %v209
      %s214 = smul.u32 4, %s14
      %p215 = scmp.lt.s32.totalorder %s214, 7
      %s216 = scalar_select %p215, %s214, 7
      %s217 = smul.addr %s216, 4
      %s218 = scalar_lea.vmem %s3, %s217
      // Predicated region
      $region33: #{multiscale_forward.26} parent=31 // pred_check
        %p219 = pneg %p100
      $region34: #{multiscale_forward.26} parent=31 // pred_check_branch
        %221 = sbr.rel (%p219) target = $region36
      $region35: #{multiscale_forward.26} parent=31 // pred_region
        %s222 = smul.u32 4, %s14
      $region36: #{multiscale_forward.26} parent=31 // pred_fallthru
        _
    $region32: #{multiscale_forward.26} parent=5 // pred_fallthru
      _
    %p223 = scmp.le.s32.totalorder 2, %s9
    // Predicated region
    $region37: #{multiscale_forward.26} parent=5 // pred_check
      %p224 = pneg %p223
    $region38: #{multiscale_forward.26} parent=5 // pred_check_branch
      %226 = sbr.rel (%p224) target = $region40
    $region39: #{multiscale_forward.26} parent=5 // pred_region
      %s227 = ssub.s32 %s9, 2
      // Predicated region
      $region41: #{multiscale_forward.26} parent=39 // pred_check
        %p228 = pneg %p106
      $region42: #{multiscale_forward.26} parent=39 // pred_check_branch
        %230 = sbr.rel (%p228) target = $region44
      $region43: #{multiscale_forward.26} parent=39 // pred_region
        %s231 = smul.u32 4, %s15
        %p232 = scmp.lt.s32.totalorder %s231, 7
        %s233 = scalar_select %p232, %s231, 7
        %s234 = smul.addr %s233, 4
        %s235 = scalar_lea.vmem %s3, %s234
      $region44: #{multiscale_forward.26} parent=39 // pred_fallthru
        _
    $region40: #{multiscale_forward.26} parent=5 // pred_fallthru
      _
  $region6: #{multiscale_forward.26} parent=0 // loop_footer
    %s13 = sadd.s32 1, %s9
  $region7: #{multiscale_forward.26} parent=0 // loop_footer_branch
    %8 = sbr.rel target = $region3
  $region8: #{multiscale_forward.26} parent=0 // loop_exit
    _

// kernel: multiscale_forward.28
$region0: #{multiscale_forward.28}
  #allocation0 [shape = 'u32[]', space=smem, size = 0x4, offset = 0x4, fixed_abs, tag = 'smem constant byte address 0x4 - core index']
  #allocation1 [shape = 'u32[72,128]{1,0:T(1,128)}', space=vmem, size = 0x9000, scoped, tag = 'internal scratch']
  %s0 = inlined_call_operand.vmem [shape: f32[32,128], index: 0, kind: input, shape index: {}]
  %s1 = inlined_call_operand.vmem [shape: f32[1,128], index: 1, kind: input, shape index: {}]
  %s2 = inlined_call_operand.vmem [shape: f32[1,128], index: 2, kind: input, shape index: {}]
  %s3 = inlined_call_operand.vmem [shape: bf16[32,128], index: 3, kind: output, shape index: {}]
  %s4 = sld [smem:[#allocation0]]
  $region45: #{multiscale_forward.28} parent=0
    _
  %s6 = ssub.s32 1, %s4
  %s7 = scalar_select 0, %s6, %s4
  loop: start=0, step=1, limit=4
  $region2: #{multiscale_forward.28} parent=0 // loop_pre_header
    _
  $region3: #{multiscale_forward.28} parent=0 // loop_header
    %s9 = sphi 0, %s13
    %p10 = scmp.ge.s32.totalorder %s9, 4
    %s19 = sphi 0, %s21
    %s22 = sphi 0, %s19
    %s23 = sphi 0, %s22
    %s39 = sphi 0, %s23
    %s43 = sphi 0, %s43
    %s45 = sphi 0, %s43
    %s46 = sphi 0, %s45
    %s60 = sphi 0, %s46
    %s64 = sphi 0, %s64
    %s66 = sphi 0, %s64
    %s67 = sphi 0, %s66
    %s81 = sphi 0, %s67
    %s87 = sphi 0, %s89
    %s90 = sphi 0, %s87
    %s91 = sphi 0, %s90
    %s107 = sphi 0, %s91
  $region4: #{multiscale_forward.28} parent=0 // loop_header_branch
    %12 = sbr.rel (%p10) target = $region8
  $region5: #{multiscale_forward.28} parent=0 // loop_body
    %s14 = ssub.s32 %s9, 1
    %s15 = ssub.s32 %s9, 2
    %s16 = sadd.s32 %s9, 1
    %s17 = ssub.s32 %s9, %s16
    %p18 = scmp.eq.s32.totalorder %s17, 0
    %s20 = sadd.s32 %s19, 1
    %s21 = scalar_select %p18, %s19, %s20
    %p24 = pneg %p18
    %p25 = scmp.eq.s32.totalorder %s9, 1
    %p26 = por %p24, %p25
    %p27 = scmp.ne.s32.totalorder %s19, %s22
    %p28 = scmp.eq.s32.totalorder %s9, 0
    %p29 = por %p27, %p28
    %p30 = scmp.ne.s32.totalorder %s19, %s22
    %p31 = scmp.eq.s32.totalorder %s14, 1
    %p32 = por %p30, %p31
    %p33 = scmp.ne.s32.totalorder %s22, %s23
    %p34 = scmp.eq.s32.totalorder %s14, 0
    %p35 = por %p33, %p34
    %p36 = scmp.ne.s32.totalorder %s22, %s23
    %p37 = scmp.eq.s32.totalorder %s15, 1
    %p38 = por %p36, %p37
    %p40 = scmp.ne.s32.totalorder %s23, %s39
    %p41 = scmp.eq.s32.totalorder %s15, 0
    %p42 = por %p40, %p41
    %s44 = sadd.s32 %s43, 1
    %p47 = scmp.eq.s32.totalorder %s9, 1
    %p48 = scmp.ne.s32.totalorder %s43, %s45
    %p49 = scmp.eq.s32.totalorder %s9, 0
    %p50 = por %p48, %p49
    %p51 = scmp.ne.s32.totalorder %s43, %s45
    %p52 = scmp.eq.s32.totalorder %s14, 1
    %p53 = por %p51, %p52
    %p54 = scmp.ne.s32.totalorder %s45, %s46
    %p55 = scmp.eq.s32.totalorder %s14, 0
    %p56 = por %p54, %p55
    %p57 = scmp.ne.s32.totalorder %s45, %s46
    %p58 = scmp.eq.s32.totalorder %s15, 1
    %p59 = por %p57, %p58
    %p61 = scmp.ne.s32.totalorder %s46, %s60
    %p62 = scmp.eq.s32.totalorder %s15, 0
    %p63 = por %p61, %p62
    %s65 = sadd.s32 %s64, 1
    %p68 = scmp.eq.s32.totalorder %s9, 1
    %p69 = scmp.ne.s32.totalorder %s64, %s66
    %p70 = scmp.eq.s32.totalorder %s9, 0
    %p71 = por %p69, %p70
    %p72 = scmp.ne.s32.totalorder %s64, %s66
    %p73 = scmp.eq.s32.totalorder %s14, 1
    %p74 = por %p72, %p73
    %p75 = scmp.ne.s32.totalorder %s66, %s67
    %p76 = scmp.eq.s32.totalorder %s14, 0
    %p77 = por %p75, %p76
    %p78 = scmp.ne.s32.totalorder %s66, %s67
    %p79 = scmp.eq.s32.totalorder %s15, 1
    %p80 = por %p78, %p79
    %p82 = scmp.ne.s32.totalorder %s67, %s81
    %p83 = scmp.eq.s32.totalorder %s15, 0
    %p84 = por %p82, %p83
    %s85 = ssub.s32 %s9, %s16
    %p86 = scmp.eq.s32.totalorder %s85, 0
    %s88 = sadd.s32 %s87, 1
    %s89 = scalar_select %p86, %s87, %s88
    %p92 = pneg %p86
    %p93 = scmp.eq.s32.totalorder %s9, 1
    %p94 = por %p92, %p93
    %p95 = scmp.ne.s32.totalorder %s87, %s90
    %p96 = scmp.eq.s32.totalorder %s9, 0
    %p97 = por %p95, %p96
    %p98 = scmp.ne.s32.totalorder %s87, %s90
    %p99 = scmp.eq.s32.totalorder %s14, 1
    %p100 = por %p98, %p99
    %p101 = scmp.ne.s32.totalorder %s90, %s91
    %p102 = scmp.eq.s32.totalorder %s14, 0
    %p103 = por %p101, %p102
    %p104 = scmp.ne.s32.totalorder %s90, %s91
    %p105 = scmp.eq.s32.totalorder %s15, 1
    %p106 = por %p104, %p105
    %p108 = scmp.ne.s32.totalorder %s91, %s107
    %p109 = scmp.eq.s32.totalorder %s15, 0
    %p110 = por %p108, %p109
    %p111 = scmp.le.s32.totalorder 1, %s9
    %p112 = scmp.lt.s32.totalorder %s9, 3
    %p113 = pnand %p111, %p112
    %p114 = pneg %p113
    // Predicated region
    $region9: #{multiscale_forward.28} parent=5 // pred_check
      _
    $region10: #{multiscale_forward.28} parent=5 // pred_check_branch
      %116 = sbr.rel (%p113) target = $region12
    $region11: #{multiscale_forward.28} parent=5 // pred_region
      %s117 = ssub.s32 %s9, 1
      // Predicated region
      $region13: #{multiscale_forward.28} parent=11 // pred_check
        %p118 = pneg %p56
      $region14: #{multiscale_forward.28} parent=11 // pred_check_branch
        %120 = sbr.rel (%p118) target = $region16
      $region15: #{multiscale_forward.28} parent=11 // pred_region
        _
      $region16: #{multiscale_forward.28} parent=11 // pred_fallthru
        _
      // Predicated region
      $region17: #{multiscale_forward.28} parent=11 // pred_check
        %p121 = pneg %p77
      $region18: #{multiscale_forward.28} parent=11 // pred_check_branch
        %123 = sbr.rel (%p121) target = $region20
      $region19: #{multiscale_forward.28} parent=11 // pred_region
        _
      $region20: #{multiscale_forward.28} parent=11 // pred_fallthru
        _
    $region12: #{multiscale_forward.28} parent=5 // pred_fallthru
      _
    %p124 = scmp.lt.s32.totalorder %s9, 2
    // Predicated region
    $region21: #{multiscale_forward.28} parent=5 // pred_check
      %p125 = pneg %p124
    $region22: #{multiscale_forward.28} parent=5 // pred_check_branch
      %127 = sbr.rel (%p125) target = $region24
    $region23: #{multiscale_forward.28} parent=5 // pred_region
      // Predicated region
      $region25: #{multiscale_forward.28} parent=23 // pred_check
        %p128 = pneg %p29
      $region26: #{multiscale_forward.28} parent=23 // pred_check_branch
        %130 = sbr.rel (%p128) target = $region28
      $region27: #{multiscale_forward.28} parent=23 // pred_region
        %s131 = smul.u32 2, %s9
        %p132 = scmp.lt.s32.totalorder %s131, 3
        %s133 = scalar_select %p132, %s131, 3
        %s134 = smul.addr %s133, 8
        %s135 = scalar_lea.vmem %s0, %s134
        %s136 = smul.u32 2, %s9
      $region28: #{multiscale_forward.28} parent=23 // pred_fallthru
        _
    $region24: #{multiscale_forward.28} parent=5 // pred_fallthru
      _
    %p137 = scmp.le.s32.totalorder 1, %s9
    %p138 = scmp.lt.s32.totalorder %s9, 3
    %p139 = pnand %p137, %p138
    %p140 = pneg %p139
    // Predicated region
    $region29: #{multiscale_forward.28} parent=5 // pred_check
      _
    $region30: #{multiscale_forward.28} parent=5 // pred_check_branch
      %142 = sbr.rel (%p139) target = $region32
    $region31: #{multiscale_forward.28} parent=5 // pred_region
      %s143 = ssub.s32 %s9, 1
      %s144 = smul.u32 2, %s14
      %p145 = scmp.lt.s32.totalorder %s144, 3
      %s146 = scalar_select %p145, %s144, 3
      %s147 = smul.addr %s146, 8
      %s148 = scalar_lea.vmem %s0, %s147
      %p149 = pneg %p35
      %p150 = pneg %p32
      %p151 = pneg %p56
      %p152 = pneg %p53
      %p153 = pneg %p77
      %p154 = pneg %p74
      %p155 = pneg %p103
      %p156 = pneg %p100
      %s157 = smul.u32 2, %s14
      %p158 = scmp.lt.s32.totalorder %s157, 3
      %s159 = scalar_select %p158, %s157, 3
      %s160 = smul.addr %s159, 4
      %s161 = scalar_lea.vmem %s3, %s160
      %s162 = smul.u32 2, %s14
      %p163 = scmp.lt.s32.totalorder %s162, 3
      %s164 = scalar_select %p163, %s162, 3
      %s165 = smul.addr %s164, 8
      %s166 = scalar_lea.vmem %s0, %s165
      %s167 = smul.u32 2, %s14
      %s168 = smul.u32 2, %s14
      %p169 = scmp.lt.s32.totalorder %s168, 3
      %s170 = scalar_select %p169, %s168, 3
      %s171 = smul.addr %s170, 4
      %s172 = scalar_lea.vmem %s3, %s171
      %s173 = smul.u32 2, %s14
      %v174 = vld [vmem:[%s166] sm:$0xff]
      %v175 = vld [vmem:[%s166 + $0x8] sm:$0xff]
      %v176 = vld [vmem:[%s1] sm:$0x1]
      %v178 = vperm.slane %v176, 0
      %v180 = vmul.f32 %v174, %v178
      %v181 = vmul.f32 %v175, %v178
      %v182 = vld [vmem:[%s2] sm:$0x1]
      %v184 = vperm.slane %v182, 0
      %v186 = vadd.f32 %v180, %v184
      %v187 = vadd.f32 %v181, %v184
      %vm188 = vcmp.ge.f32.partialorder %v186, 0.0
      %vm189 = vcmp.ge.f32.partialorder %v187, 0.0
      %v190 = vmul.f32 %v186, 0.2
      %v191 = vmul.f32 %v187, 0.2
      %v192 = vsel %vm188, %v186, %v190
      %v193 = vsel %vm189, %v187, %v191
      %v194 = vpack.c.bf16 %v192, %v192
      %v195 = vpack.c.bf16 %v193, %v193
      %196 = vst [vmem:[%s172] sm:$0xf] %v194
      %197 = vst [vmem:[%s172 + $0x4] sm:$0xf] %v195
      %s198 = smul.u32 2, %s14
      %p199 = scmp.lt.s32.totalorder %s198, 3
      %s200 = scalar_select %p199, %s198, 3
      %s201 = smul.addr %s200, 4
      %s202 = scalar_lea.vmem %s3, %s201
      // Predicated region
      $region33: #{multiscale_forward.28} parent=31 // pred_check
        %p203 = pneg %p100
      $region34: #{multiscale_forward.28} parent=31 // pred_check_branch
        %205 = sbr.rel (%p203) target = $region36
      $region35: #{multiscale_forward.28} parent=31 // pred_region
        %s206 = smul.u32 2, %s14
      $region36: #{multiscale_forward.28} parent=31 // pred_fallthru
        _
    $region32: #{multiscale_forward.28} parent=5 // pred_fallthru
      _
    %p207 = scmp.le.s32.totalorder 2, %s9
    // Predicated region
    $region37: #{multiscale_forward.28} parent=5 // pred_check
      %p208 = pneg %p207
    $region38: #{multiscale_forward.28} parent=5 // pred_check_branch
      %210 = sbr.rel (%p208) target = $region40
    $region39: #{multiscale_forward.28} parent=5 // pred_region
      %s211 = ssub.s32 %s9, 2
      // Predicated region
      $region41: #{multiscale_forward.28} parent=39 // pred_check
        %p212 = pneg %p106
      $region42: #{multiscale_forward.28} parent=39 // pred_check_branch
        %214 = sbr.rel (%p212) target = $region44
      $region43: #{multiscale_forward.28} parent=39 // pred_region
        %s215 = smul.u32 2, %s15
        %p216 = scmp.lt.s32.totalorder %s215, 3
        %s217 = scalar_select %p216, %s215, 3
        %s218 = smul.addr %s217, 4
        %s219 = scalar_lea.vmem %s3, %s218
      $region44: #{multiscale_forward.28} parent=39 // pred_fallthru
        _
    $region40: #{multiscale_forward.28} parent=5 // pred_fallthru
      _
  $region6: #{multiscale_forward.28} parent=0 // loop_footer
    %s13 = sadd.s32 1, %s9
  $region7: #{multiscale_forward.28} parent=0 // loop_footer_branch
    %8 = sbr.rel target = $region3
  $region8: #{multiscale_forward.28} parent=0 // loop_exit
    _

// kernel: multiscale_forward.27
$region0: #{multiscale_forward.27}
  #allocation0 [shape = 'u32[]', space=smem, size = 0x4, offset = 0x4, fixed_abs, tag = 'smem constant byte address 0x4 - core index']
  #allocation1 [shape = 'u32[72,128]{1,0:T(1,128)}', space=vmem, size = 0x9000, scoped, tag = 'internal scratch']
  %s0 = inlined_call_operand.vmem [shape: bf16[32,256], index: 0, kind: input, shape index: {}]
  %s1 = inlined_call_operand.vmem [shape: bf16[256,128], index: 1, kind: input, shape index: {}]
  %s2 = inlined_call_operand.vmem [shape: f32[1,128], index: 2, kind: input, shape index: {}]
  %s3 = inlined_call_operand.vmem [shape: f32[32,128], index: 3, kind: output, shape index: {0}]
  %s4 = inlined_call_operand.vmem [shape: f32[16,128], index: 4, kind: output, shape index: {1}]
  %5 = xla_tuple %s3, %s4
  %s6 = sld [smem:[#allocation0]]
  $region61: #{multiscale_forward.27} parent=0
    _
  %s8 = ssub.s32 1, %s6
  %s9 = scalar_select 0, %s8, %s6
  loop: start=0, step=1, limit=4
  $region2: #{multiscale_forward.27} parent=0 // loop_pre_header
    _
  $region3: #{multiscale_forward.27} parent=0 // loop_header
    %s11 = sphi 0, %s15
    %p12 = scmp.ge.s32.totalorder %s11, 4
    %s18 = sphi 0, %s37
    %s19 = sphi 0, %s33
    %s20 = sphi 0, %s29
    %s21 = sphi 0, %s18
    %s22 = sphi 0, %s19
    %s23 = sphi 0, %s20
    %s24 = sphi 0, %s21
    %s25 = sphi 0, %s22
    %s26 = sphi 0, %s23
    %s42 = sphi 0, %s44
    %s45 = sphi 0, %s42
    %s46 = sphi 0, %s45
    %s62 = sphi 0, %s46
    %s70 = sphi 0, %s72
    %s73 = sphi 0, %s70
    %s74 = sphi 0, %s73
    %s90 = sphi 0, %s74
    %s96 = sphi 0, %s98
    %s99 = sphi 0, %s96
    %s100 = sphi 0, %s99
    %s116 = sphi 0, %s100
    %s124 = sphi 0, %s126
    %s127 = sphi 0, %s124
    %s128 = sphi 0, %s127
    %s144 = sphi 0, %s128
    %s152 = sphi 0, %s154
    %s155 = sphi 0, %s152
    %s156 = sphi 0, %s155
    %s172 = sphi 0, %s156
  $region4: #{multiscale_forward.27} parent=0 // loop_header_branch
    %14 = sbr.rel (%p12) target = $region8
  $region5: #{multiscale_forward.27} parent=0 // loop_body
    %s16 = ssub.s32 %s11, 1
    %s17 = ssub.s32 %s11, 2
    %s27 = sadd.s32 1, %s20
    %p28 = scmp.ge.s32.totalorder %s27, 1
    %s29 = scalar_select %p28, 0, %s27
    %s30 = sadd.s32 1, %s19
    %s31 = scalar_select %p28, %s30, %s19
    %p32 = scmp.ge.s32.totalorder %s31, 1
    %s33 = scalar_select %p32, 0, %s31
    %s34 = sadd.s32 1, %s18
    %s35 = scalar_select %p32, %s34, %s18
    %p36 = scmp.ge.s32.totalorder %s35, 2
    %s37 = scalar_select %p36, 0, %s35
    %s38 = ssub.s32 %s18, %s37
    %s39 = ssub.s32 %s20, %s29
    %s40 = sor.u32 %s38, %s39
    %p41 = scmp.eq.s32.totalorder %s40, 0
    %s43 = sadd.s32 %s42, 1
    %s44 = scalar_select %p41, %s42, %s43
    %p47 = pneg %p41
    %p48 = scmp.eq.s32.totalorder %s11, 1
    %p49 = por %p47, %p48
    %p50 = scmp.ne.s32.totalorder %s42, %s45
    %p51 = scmp.eq.s32.totalorder %s11, 0
    %p52 = por %p50, %p51
    %p53 = scmp.ne.s32.totalorder %s42, %s45
    %p54 = scmp.eq.s32.totalorder %s16, 1
    %p55 = por %p53, %p54
    %p56 = scmp.ne.s32.totalorder %s45, %s46
    %p57 = scmp.eq.s32.totalorder %s16, 0
    %p58 = por %p56, %p57
    %p59 = scmp.ne.s32.totalorder %s45, %s46
    %p60 = scmp.eq.s32.totalorder %s17, 1
    %p61 = por %p59, %p60
    %p63 = scmp.ne.s32.totalorder %s46, %s62
    %p64 = scmp.eq.s32.totalorder %s17, 0
    %p65 = por %p63, %p64
    %s66 = ssub.s32 %s20, %s29
    %s67 = ssub.s32 %s19, %s33
    %s68 = sor.u32 %s66, %s67
    %p69 = scmp.eq.s32.totalorder %s68, 0
    %s71 = sadd.s32 %s70, 1
    %s72 = scalar_select %p69, %s70, %s71
    %p75 = pneg %p69
    %p76 = scmp.eq.s32.totalorder %s11, 1
    %p77 = por %p75, %p76
    %p78 = scmp.ne.s32.totalorder %s70, %s73
    %p79 = scmp.eq.s32.totalorder %s11, 0
    %p80 = por %p78, %p79
    %p81 = scmp.ne.s32.totalorder %s70, %s73
    %p82 = scmp.eq.s32.totalorder %s16, 1
    %p83 = por %p81, %p82
    %p84 = scmp.ne.s32.totalorder %s73, %s74
    %p85 = scmp.eq.s32.totalorder %s16, 0
    %p86 = por %p84, %p85
    %p87 = scmp.ne.s32.totalorder %s73, %s74
    %p88 = scmp.eq.s32.totalorder %s17, 1
    %p89 = por %p87, %p88
    %p91 = scmp.ne.s32.totalorder %s74, %s90
    %p92 = scmp.eq.s32.totalorder %s17, 0
    %p93 = por %p91, %p92
    %s94 = ssub.s32 %s19, %s33
    %p95 = scmp.eq.s32.totalorder %s94, 0
    %s97 = sadd.s32 %s96, 1
    %s98 = scalar_select %p95, %s96, %s97
    %p101 = pneg %p95
    %p102 = scmp.eq.s32.totalorder %s11, 1
    %p103 = por %p101, %p102
    %p104 = scmp.ne.s32.totalorder %s96, %s99
    %p105 = scmp.eq.s32.totalorder %s11, 0
    %p106 = por %p104, %p105
    %p107 = scmp.ne.s32.totalorder %s96, %s99
    %p108 = scmp.eq.s32.totalorder %s16, 1
    %p109 = por %p107, %p108
    %p110 = scmp.ne.s32.totalorder %s99, %s100
    %p111 = scmp.eq.s32.totalorder %s16, 0
    %p112 = por %p110, %p111
    %p113 = scmp.ne.s32.totalorder %s99, %s100
    %p114 = scmp.eq.s32.totalorder %s17, 1
    %p115 = por %p113, %p114
    %p117 = scmp.ne.s32.totalorder %s100, %s116
    %p118 = scmp.eq.s32.totalorder %s17, 0
    %p119 = por %p117, %p118
    %s120 = ssub.s32 %s18, %s37
    %s121 = ssub.s32 %s19, %s33
    %s122 = sor.u32 %s120, %s121
    %p123 = scmp.eq.s32.totalorder %s122, 0
    %s125 = sadd.s32 %s124, 1
    %s126 = scalar_select %p123, %s124, %s125
    %p129 = pneg %p123
    %p130 = scmp.eq.s32.totalorder %s11, 1
    %p131 = por %p129, %p130
    %p132 = scmp.ne.s32.totalorder %s124, %s127
    %p133 = scmp.eq.s32.totalorder %s11, 0
    %p134 = por %p132, %p133
    %p135 = scmp.ne.s32.totalorder %s124, %s127
    %p136 = scmp.eq.s32.totalorder %s16, 1
    %p137 = por %p135, %p136
    %p138 = scmp.ne.s32.totalorder %s127, %s128
    %p139 = scmp.eq.s32.totalorder %s16, 0
    %p140 = por %p138, %p139
    %p141 = scmp.ne.s32.totalorder %s127, %s128
    %p142 = scmp.eq.s32.totalorder %s17, 1
    %p143 = por %p141, %p142
    %p145 = scmp.ne.s32.totalorder %s128, %s144
    %p146 = scmp.eq.s32.totalorder %s17, 0
    %p147 = por %p145, %p146
    %s148 = ssub.s32 %s18, %s37
    %s149 = ssub.s32 %s19, %s33
    %s150 = sor.u32 %s148, %s149
    %p151 = scmp.eq.s32.totalorder %s150, 0
    %s153 = sadd.s32 %s152, 1
    %s154 = scalar_select %p151, %s152, %s153
    %p157 = pneg %p151
    %p158 = scmp.eq.s32.totalorder %s11, 1
    %p159 = por %p157, %p158
    %p160 = scmp.ne.s32.totalorder %s152, %s155
    %p161 = scmp.eq.s32.totalorder %s11, 0
    %p162 = por %p160, %p161
    %p163 = scmp.ne.s32.totalorder %s152, %s155
    %p164 = scmp.eq.s32.totalorder %s16, 1
    %p165 = por %p163, %p164
    %p166 = scmp.ne.s32.totalorder %s155, %s156
    %p167 = scmp.eq.s32.totalorder %s16, 0
    %p168 = por %p166, %p167
    %p169 = scmp.ne.s32.totalorder %s155, %s156
    %p170 = scmp.eq.s32.totalorder %s17, 1
    %p171 = por %p169, %p170
    %p173 = scmp.ne.s32.totalorder %s156, %s172
    %p174 = scmp.eq.s32.totalorder %s17, 0
    %p175 = por %p173, %p174
    %p176 = scmp.le.s32.totalorder 1, %s11
    %p177 = scmp.lt.s32.totalorder %s11, 3
    %p178 = pnand %p176, %p177
    %p179 = pneg %p178
    // Predicated region
    $region9: #{multiscale_forward.27} parent=5 // pred_check
      _
    $region10: #{multiscale_forward.27} parent=5 // pred_check_branch
      %181 = sbr.rel (%p178) target = $region12
    $region11: #{multiscale_forward.27} parent=5 // pred_region
      %s182 = ssub.s32 %s11, 1
      // Predicated region
      $region13: #{multiscale_forward.27} parent=11 // pred_check
        %p183 = pneg %p86
      $region14: #{multiscale_forward.27} parent=11 // pred_check_branch
        %185 = sbr.rel (%p183) target = $region16
      $region15: #{multiscale_forward.27} parent=11 // pred_region
        %s186 = smul.u32 32, %s23
        %p187 = scmp.lt.s32.totalorder %s186, 31
        %s188 = scalar_select %p187, %s186, 31
        %p189 = scmp.lt.s32.totalorder %s22, 0
        %s190 = scalar_select %p189, %s22, 0
        %s191 = sadd.s32 %s190, %s188
        %s192 = smul.addr %s191, 4
        %s193 = scalar_lea.vmem %s1, %s192
        %s194 = smul.u32 32, %s23
      $region16: #{multiscale_forward.27} parent=11 // pred_fallthru
        _
      // Predicated region
      $region17: #{multiscale_forward.27} parent=11 // pred_check
        %p195 = pneg %p112
      $region18: #{multiscale_forward.27} parent=11 // pred_check_branch
        %197 = sbr.rel (%p195) target = $region20
      $region19: #{multiscale_forward.27} parent=11 // pred_region
        %p198 = scmp.lt.s32.totalorder %s22, 0
        %s199 = scalar_select %p198, %s22, 0
        %s200 = scalar_lea.vmem %s2, %s199
      $region20: #{multiscale_forward.27} parent=11 // pred_fallthru
        _
    $region12: #{multiscale_forward.27} parent=5 // pred_fallthru
      _
    %p201 = scmp.lt.s32.totalorder %s11, 2
    // Predicated region
    $region21: #{multiscale_forward.27} parent=5 // pred_check
      %p202 = pneg %p201
    $region22: #{multiscale_forward.27} parent=5 // pred_check_branch
      %204 = sbr.rel (%p202) target = $region24
    $region23: #{multiscale_forward.27} parent=5 // pred_region
      // Predicated region
      $region25: #{multiscale_forward.27} parent=23 // pred_check
        %p205 = pneg %p52
      $region26: #{multiscale_forward.27} parent=23 // pred_check_branch
        %207 = sbr.rel (%p205) target = $region28
      $region27: #{multiscale_forward.27} parent=23 // pred_region
        %s208 = smul.u32 2, %s18
        %s209 = smul.u32 2, %s20
        %p210 = scmp.lt.s32.totalorder %s208, 3
        %s211 = scalar_select %p210, %s208, 3
        %p212 = scmp.lt.s32.totalorder %s209, 1
        %s213 = scalar_select %p212, %s209, 1
        %s214 = smul.addr %s211, 2
        %s215 = sadd.s32 %s213, %s214
        %s216 = smul.addr %s215, 4
        %s217 = scalar_lea.vmem %s0, %s216
        %s218 = smul.u32 2, %s18
        %s219 = smul.u32 2, %s20
      $region28: #{multiscale_forward.27} parent=23 // pred_fallthru
        _
    $region24: #{multiscale_forward.27} parent=5 // pred_fallthru
      _
    %p220 = scmp.le.s32.totalorder 1, %s11
    %p221 = scmp.lt.s32.totalorder %s11, 3
    %p222 = pnand %p220, %p221
    %p223 = pneg %p222
    // Predicated region
    $region29: #{multiscale_forward.27} parent=5 // pred_check
      _
    $region30: #{multiscale_forward.27} parent=5 // pred_check_branch
      %225 = sbr.rel (%p222) target = $region32
    $region31: #{multiscale_forward.27} parent=5 // pred_region
      %s226 = ssub.s32 %s11, 1
      %s227 = smul.u32 2, %s21
      %s228 = smul.u32 2, %s23
      %p229 = scmp.lt.s32.totalorder %s227, 3
      %s230 = scalar_select %p229, %s227, 3
      %p231 = scmp.lt.s32.totalorder %s228, 1
      %s232 = scalar_select %p231, %s228, 1
      %s233 = smul.addr %s230, 2
      %s234 = sadd.s32 %s232, %s233
      %s235 = smul.addr %s234, 4
      %s236 = scalar_lea.vmem %s0, %s235
      %p237 = pneg %p58
      %p238 = pneg %p55
      %s239 = smul.u32 32, %s23
      %p240 = scmp.lt.s32.totalorder %s239, 31
      %s241 = scalar_select %p240, %s239, 31
      %p242 = scmp.lt.s32.totalorder %s22, 0
      %s243 = scalar_select %p242, %s22, 0
      %s244 = sadd.s32 %s243, %s241
      %s245 = smul.addr %s244, 4
      %s246 = scalar_lea.vmem %s1, %s245
      %p247 = pneg %p86
      %p248 = pneg %p83
      %p249 = scmp.lt.s32.totalorder %s22, 0
      %s250 = scalar_select %p249, %s22, 0
      %s251 = scalar_lea.vmem %s2, %s250
      %p252 = pneg %p112
      %p253 = pneg %p109
      %p254 = pneg %p140
      %p255 = pneg %p137
      %s256 = smul.u32 2, %s21
      %p257 = scmp.lt.s32.totalorder %s256, 3
      %s258 = scalar_select %p257, %s256, 3
      %p259 = scmp.lt.s32.totalorder %s22, 0
      %s260 = scalar_select %p259, %s22, 0
      %s261 = sadd.s32 %s260, %s258
      %s262 = smul.addr %s261, 8
      %s263 = scalar_lea.vmem %s3, %s262
      %p264 = pneg %p168
      %p265 = pneg %p165
      %p266 = scmp.lt.s32.totalorder %s21, 1
      %s267 = scalar_select %p266, %s21, 1
      %p268 = scmp.lt.s32.totalorder %s22, 0
      %s269 = scalar_select %p268, %s22, 0
      %s270 = sadd.s32 %s269, %s267
      %s271 = smul.addr %s270, 8
      %s272 = scalar_lea.vmem %s4, %s271
      %s273 = smul.u32 2, %s21
      %s274 = smul.u32 2, %s23
      %p275 = scmp.lt.s32.totalorder %s273, 3
      %s276 = scalar_select %p275, %s273, 3
      %p277 = scmp.lt.s32.totalorder %s274, 1
      %s278 = scalar_select %p277, %s274, 1
      %s279 = smul.addr %s276, 2
      %s280 = sadd.s32 %s278, %s279
      %s281 = smul.addr %s280, 4
      %s282 = scalar_lea.vmem %s0, %s281
      %s283 = smul.u32 2, %s21
      %s284 = smul.u32 2, %s23
      %s285 = smul.u32 32, %s23
      %p286 = scmp.lt.s32.totalorder %s285, 31
      %s287 = scalar_select %p286, %s285, 31
      %p288 = scmp.lt.s32.totalorder %s22, 0
      %s289 = scalar_select %p288, %s22, 0
      %s290 = sadd.s32 %s289, %s287
      %s291 = smul.addr %s290, 4
      %s292 = scalar_lea.vmem %s1, %s291
      %s293 = smul.u32 32, %s23
      %p294 = scmp.lt.s32.totalorder %s22, 0
      %s295 = scalar_select %p294, %s22, 0
      %s296 = scalar_lea.vmem %s2, %s295
      %s297 = smul.u32 2, %s21
      %p298 = scmp.lt.s32.totalorder %s297, 3
      %s299 = scalar_select %p298, %s297, 3
      %p300 = scmp.lt.s32.totalorder %s22, 0
      %s301 = scalar_select %p300, %s22, 0
      %s302 = sadd.s32 %s301, %s299
      %s303 = smul.addr %s302, 8
      %s304 = scalar_lea.vmem %s3, %s303
      %s305 = smul.u32 2, %s21
      %p306 = scmp.lt.s32.totalorder %s21, 1
      %s307 = scalar_select %p306, %s21, 1
      %p308 = scmp.lt.s32.totalorder %s22, 0
      %s309 = scalar_select %p308, %s22, 0
      %s310 = sadd.s32 %s309, %s307
      %s311 = smul.addr %s310, 8
      %s312 = scalar_lea.vmem %s4, %s311
      %s313 = smul.u32 %s21, 16
      %p314 = scmp.eq.s32.totalorder %s23, 0
      // Predicated region
      $region33: #{multiscale_forward.27} parent=31 // pred_check
        %p315 = pneg %p314
      $region34: #{multiscale_forward.27} parent=31 // pred_check_branch
        %317 = sbr.rel (%p315) target = $region36
      $region35: #{multiscale_forward.27} parent=31 // pred_region
        %318 = vst [vmem:[%s304] sm:$0xff] 0.0
        %319 = vst [vmem:[%s304 + $0x8] sm:$0xff] 0.0
      $region36: #{multiscale_forward.27} parent=31 // pred_fallthru
        _
      %v320 = vld [vmem:[%s304] sm:$0xff]
      %v321 = vld [vmem:[%s304 + $0x8] sm:$0xff]
      %v322 = vld [vmem:[%s282] sm:$0xff]
      %v323 = vld [vmem:[%s282 + $0x8] sm:$0xff]
      %v324 = vld [vmem:[%s292] sm:$0xf]
      %v325 = vld [vmem:[%s292 + $0x4] sm:$0xf]
      %v326 = vld [vmem:[%s292 + $0x8] sm:$0xf]
      %v327 = vld [vmem:[%s292 + $0xc] sm:$0xf]
      %v328 = vld [vmem:[%s292 + $0x10] sm:$0xf]
      %v329 = vld [vmem:[%s292 + $0x14] sm:$0xf]
      %v330 = vld [vmem:[%s292 + $0x18] sm:$0xf]
      %v331 = vld [vmem:[%s292 + $0x1c] sm:$0xf]
      %v332 = vld [vmem:[%s292 + $0x20] sm:$0xf]
      %v333 = vld [vmem:[%s292 + $0x24] sm:$0xf]
      %v334 = vld [vmem:[%s292 + $0x28] sm:$0xf]
      %v335 = vld [vmem:[%s292 + $0x2c] sm:$0xf]
      %v336 = vld [vmem:[%s292 + $0x30] sm:$0xf]
      %v337 = vld [vmem:[%s292 + $0x34] sm:$0xf]
      %v338 = vld [vmem:[%s292 + $0x38] sm:$0xf]
      %v339 = vld [vmem:[%s292 + $0x3c] sm:$0xf]
      %v340 = vld [vmem:[%s292 + $0x40] sm:$0xf]
      %v341 = vld [vmem:[%s292 + $0x44] sm:$0xf]
      %v342 = vld [vmem:[%s292 + $0x48] sm:$0xf]
      %v343 = vld [vmem:[%s292 + $0x4c] sm:$0xf]
      %v344 = vld [vmem:[%s292 + $0x50] sm:$0xf]
      %v345 = vld [vmem:[%s292 + $0x54] sm:$0xf]
      %v346 = vld [vmem:[%s292 + $0x58] sm:$0xf]
      %v347 = vld [vmem:[%s292 + $0x5c] sm:$0xf]
      %v348 = vld [vmem:[%s292 + $0x60] sm:$0xf]
      %v349 = vld [vmem:[%s292 + $0x64] sm:$0xf]
      %v350 = vld [vmem:[%s292 + $0x68] sm:$0xf]
      %v351 = vld [vmem:[%s292 + $0x6c] sm:$0xf]
      %v352 = vld [vmem:[%s292 + $0x70] sm:$0xf]
      %v353 = vld [vmem:[%s292 + $0x74] sm:$0xf]
      %v354 = vld [vmem:[%s292 + $0x78] sm:$0xf]
      %v355 = vld [vmem:[%s292 + $0x7c] sm:$0xf]
      %v358 = vunpack.c.l.b16 %v322
      %v359 = vunpack.c.h.b16 %v322
      %v360 = vunpack.c.l.b16 %v323
      %v361 = vunpack.c.h.b16 %v323
      %v362 = vpack.c.b16 %v360, %v358
      %v363 = vpack.c.b16 %v361, %v359
      %v398 = vunpack.c.l.b16 %v324
      %v399 = vunpack.c.l.b16 %v325
      %v400 = vunpack.c.l.b16 %v326
      %v401 = vunpack.c.l.b16 %v327
      %v402 = vunpack.c.l.b16 %v328
      %v403 = vunpack.c.l.b16 %v329
      %v404 = vunpack.c.l.b16 %v330
      %v405 = vunpack.c.l.b16 %v331
      %v406 = vunpack.c.l.b16 %v332
      %v407 = vunpack.c.l.b16 %v333
      %v408 = vunpack.c.l.b16 %v334
      %v409 = vunpack.c.l.b16 %v335
      %v410 = vunpack.c.l.b16 %v336
      %v411 = vunpack.c.l.b16 %v337
      %v412 = vunpack.c.l.b16 %v338
      %v413 = vunpack.c.l.b16 %v339
      %v414 = vunpack.c.l.b16 %v340
      %v415 = vunpack.c.l.b16 %v341
      %v416 = vunpack.c.l.b16 %v342
      %v417 = vunpack.c.l.b16 %v343
      %v418 = vunpack.c.l.b16 %v344
      %v419 = vunpack.c.l.b16 %v345
      %v420 = vunpack.c.l.b16 %v346
      %v421 = vunpack.c.l.b16 %v347
      %v422 = vunpack.c.l.b16 %v348
      %v423 = vunpack.c.l.b16 %v349
      %v424 = vunpack.c.l.b16 %v350
      %v425 = vunpack.c.l.b16 %v351
      %v426 = vunpack.c.l.b16 %v352
      %v427 = vunpack.c.l.b16 %v353
      %v428 = vunpack.c.l.b16 %v354
      %v429 = vunpack.c.l.b16 %v355
      %v430 = vpack.c.b16 %v399, %v398
      %v431 = vpack.c.b16 %v401, %v400
      %v432 = vpack.c.b16 %v403, %v402
      %v433 = vpack.c.b16 %v405, %v404
      %v434 = vpack.c.b16 %v407, %v406
      %v435 = vpack.c.b16 %v409, %v408
      %v436 = vpack.c.b16 %v411, %v410
      %v437 = vpack.c.b16 %v413, %v412
      %v438 = vpack.c.b16 %v415, %v414
      %v439 = vpack.c.b16 %v417, %v416
      %v440 = vpack.c.b16 %v419, %v418
      %v441 = vpack.c.b16 %v421, %v420
      %v442 = vpack.c.b16 %v423, %v422
      %v443 = vpack.c.b16 %v425, %v424
      %v444 = vpack.c.b16 %v427, %v426
      %v445 = vpack.c.b16 %v429, %v428
      %462 = vmatpush.bf16.msra.mxu0 %v437
      %463 = vmatpush.bf16.msra.mxu0 %v436
      %464 = vmatpush.bf16.msra.mxu0 %v435
      %465 = vmatpush.bf16.msra.mxu0 %v434
      %466 = vmatpush.bf16.msra.mxu0 %v433
      %467 = vmatpush.bf16.msra.mxu0 %v432
      %468 = vmatpush.bf16.msra.mxu0 %v431
      %469 = vmatpush.bf16.msra.mxu0 %v430
      %470 = vmatmul.bf16.gmra.mxu0 %v362
      %v471 = vpop.f32.mrf.mxu0
      %v472 = vadd.f32 0.0, %v471
      %v473 = vpop.f32.mrf.mxu0
      %v474 = vadd.f32 0.0, %v473
      %475 = vdwg.mxu0
      %476 = vmatpush.bf16.msra.mxu0 %v445
      %477 = vmatpush.bf16.msra.mxu0 %v444
      %478 = vmatpush.bf16.msra.mxu0 %v443
      %479 = vmatpush.bf16.msra.mxu0 %v442
      %480 = vmatpush.bf16.msra.mxu0 %v441
      %481 = vmatpush.bf16.msra.mxu0 %v440
      %482 = vmatpush.bf16.msra.mxu0 %v439
      %483 = vmatpush.bf16.msra.mxu0 %v438
      %484 = vmatmul.bf16.gmra.mxu0 %v363
      %v485 = vpop.f32.mrf.mxu0
      %v486 = vadd.f32 %v472, %v485
      %v487 = vpop.f32.mrf.mxu0
      %v488 = vadd.f32 %v474, %v487
      %489 = vdwg.mxu0
      %v490 = vadd.f32 %v320, %v486
      %v491 = vadd.f32 %v321, %v488
      %492 = vst [vmem:[%s304] sm:$0xff] %v490
      %493 = vst [vmem:[%s304 + $0x8] sm:$0xff] %v491
      // Predicated region
      $region37: #{multiscale_forward.27} parent=31 // pred_check
        %p494 = pneg %p314
      $region38: #{multiscale_forward.27} parent=31 // pred_check_branch
        %496 = sbr.rel (%p494) target = $region40
      $region39: #{multiscale_forward.27} parent=31 // pred_region
        %v497 = vld [vmem:[%s304] sm:$0xff]
        %v498 = vld [vmem:[%s304 + $0x8] sm:$0xff]
        %v499 = vld [vmem:[%s296] sm:$0x1]
        %v501 = vperm.slane %v499, 0
        %v503 = vadd.f32 %v497, %v501
        %v504 = vadd.f32 %v498, %v501
        %505 = vst [vmem:[%s304] sm:$0xff] %v503
        %506 = vst [vmem:[%s304 + $0x8] sm:$0xff] %v504
        %v507 = vlaneseq
        %v508 = vshrl.u32 %v507, 7
        %v509 = vadd.s32 %v508, 8
        %v510 = vstv %s313
        %v511 = vadd.s32 %v508, %v510
        %v512 = vadd.s32 %v509, %v510
        %vm513 = vcmp.lt.s32.totalorder %v511, 18
        %vm514 = vcmp.lt.s32.totalorder %v512, 18
        %v515 = vsel %vm513, 1, 0
        %v516 = vsel %vm514, 1, 0
        %vm517 = vcmp.eq.s32.totalorder %v515, 1
        %vm518 = vcmp.eq.s32.totalorder %v516, 1
        %v519 = vsel %vm517, %v503, 0.0
        %v520 = vsel %vm518, %v504, 0.0
        %v521 = vadd.f32 %v519, %v520
        %v522 = vrot.slane %v521, 4
        %v523 = vadd.f32 %v521, %v522
        %v524 = vrot.slane %v523, 2
        %v525 = vadd.f32 %v523, %v524
        %v526 = vrot.slane %v525, 1
        %v527 = vadd.f32 %v525, %v526
        %v528 = vmul.f32 %v519, %v519
        %v529 = vmul.f32 %v520, %v520
        %v530 = vadd.f32 %v528, %v529
        %v531 = vrot.slane %v530, 4
        %v532 = vadd.f32 %v530, %v531
        %v533 = vrot.slane %v532, 2
        %v534 = vadd.f32 %v532, %v533
        %v535 = vrot.slane %v534, 1
        %v536 = vadd.f32 %v534, %v535
        %vm537 = vcmp.eq.s32.totalorder %v508, 0
        %v538 = vsel %vm537, %v527, 0.0
        %vm539 = vcmp.eq.s32.totalorder %v508, 1
        %v540 = vsel %vm539, %v536, 0.0
        %v541 = vadd.f32 %v538, %v540
        %542 = vst [vmem:[%s312] sm:$0xff] %v541
      $region40: #{multiscale_forward.27} parent=31 // pred_fallthru
        _
      %s543 = smul.u32 2, %s21
      %p544 = scmp.lt.s32.totalorder %s543, 3
      %s545 = scalar_select %p544, %s543, 3
      %p546 = scmp.lt.s32.totalorder %s22, 0
      %s547 = scalar_select %p546, %s22, 0
      %s548 = sadd.s32 %s547, %s545
      %s549 = smul.addr %s548, 8
      %s550 = scalar_lea.vmem %s3, %s549
      %p551 = scmp.lt.s32.totalorder %s21, 1
      %s552 = scalar_select %p551, %s21, 1
      %p553 = scmp.lt.s32.totalorder %s22, 0
      %s554 = scalar_select %p553, %s22, 0
      %s555 = sadd.s32 %s554, %s552
      %s556 = smul.addr %s555, 8
      %s557 = scalar_lea.vmem %s4, %s556
      // Predicated region
      $region41: #{multiscale_forward.27} parent=31 // pred_check
        %p558 = pneg %p137
      $region42: #{multiscale_forward.27} parent=31 // pred_check_branch
        %560 = sbr.rel (%p558) target = $region44
      $region43: #{multiscale_forward.27} parent=31 // pred_region
        %s561 = smul.u32 2, %s21
      $region44: #{multiscale_forward.27} parent=31 // pred_fallthru
        _
      // Predicated region
      $region45: #{multiscale_forward.27} parent=31 // pred_check
        %p562 = pneg %p165
      $region46: #{multiscale_forward.27} parent=31 // pred_check_branch
        %564 = sbr.rel (%p562) target = $region48
      $region47: #{multiscale_forward.27} parent=31 // pred_region
        _
      $region48: #{multiscale_forward.27} parent=31 // pred_fallthru
        _
    $region32: #{multiscale_forward.27} parent=5 // pred_fallthru
      _
    %p565 = scmp.le.s32.totalorder 2, %s11
    // Predicated region
    $region49: #{multiscale_forward.27} parent=5 // pred_check
      %p566 = pneg %p565
    $region50: #{multiscale_forward.27} parent=5 // pred_check_branch
      %568 = sbr.rel (%p566) target = $region52
    $region51: #{multiscale_forward.27} parent=5 // pred_region
      %s569 = ssub.s32 %s11, 2
      // Predicated region
      $region53: #{multiscale_forward.27} parent=51 // pred_check
        %p570 = pneg %p143
      $region54: #{multiscale_forward.27} parent=51 // pred_check_branch
        %572 = sbr.rel (%p570) target = $region56
      $region55: #{multiscale_forward.27} parent=51 // pred_region
        %s573 = smul.u32 2, %s24
        %p574 = scmp.lt.s32.totalorder %s573, 3
        %s575 = scalar_select %p574, %s573, 3
        %p576 = scmp.lt.s32.totalorder %s25, 0
        %s577 = scalar_select %p576, %s25, 0
        %s578 = sadd.s32 %s577, %s575
        %s579 = smul.addr %s578, 8
        %s580 = scalar_lea.vmem %s3, %s579
      $region56: #{multiscale_forward.27} parent=51 // pred_fallthru
        _
      // Predicated region
      $region57: #{multiscale_forward.27} parent=51 // pred_check
        %p581 = pneg %p171
      $region58: #{multiscale_forward.27} parent=51 // pred_check_branch
        %583 = sbr.rel (%p581) target = $region60
      $region59: #{multiscale_forward.27} parent=51 // pred_region
        %p584 = scmp.lt.s32.totalorder %s24, 1
        %s585 = scalar_select %p584, %s24, 1
        %p586 = scmp.lt.s32.totalorder %s25, 0
        %s587 = scalar_select %p586, %s25, 0
        %s588 = sadd.s32 %s587, %s585
        %s589 = smul.addr %s588, 8
        %s590 = scalar_lea.vmem %s4, %s589
      $region60: #{multiscale_forward.27} parent=51 // pred_fallthru
        _
    $region52: #{multiscale_forward.27} parent=5 // pred_fallthru
      _
  $region6: #{multiscale_forward.27} parent=0 // loop_footer
    %s15 = sadd.s32 1, %s11
  $region7: #{multiscale_forward.27} parent=0 // loop_footer_branch
    %10 = sbr.rel target = $region3
  $region8: #{multiscale_forward.27} parent=0 // loop_exit
    _

// kernel: multiscale_forward.29
$region0: #{multiscale_forward.29}
  #allocation0 [shape = 'u32[]', space=smem, size = 0x4, offset = 0x4, fixed_abs, tag = 'smem constant byte address 0x4 - core index']
  #allocation1 [shape = 'u32[72,128]{1,0:T(1,128)}', space=vmem, size = 0x9000, scoped, tag = 'internal scratch']
  %s0 = inlined_call_operand.vmem [shape: bf16[32,512], index: 0, kind: input, shape index: {}]
  %s1 = inlined_call_operand.vmem [shape: bf16[512,128], index: 1, kind: input, shape index: {}]
  %s2 = inlined_call_operand.vmem [shape: f32[1,128], index: 2, kind: input, shape index: {}]
  %s3 = inlined_call_operand.vmem [shape: f32[32,128], index: 3, kind: output, shape index: {0}]
  %s4 = inlined_call_operand.vmem [shape: f32[16,128], index: 4, kind: output, shape index: {1}]
  %5 = xla_tuple %s3, %s4
  %s6 = sld [smem:[#allocation0]]
  $region61: #{multiscale_forward.29} parent=0
    _
  %s8 = ssub.s32 1, %s6
  %s9 = scalar_select 0, %s8, %s6
  loop: start=0, step=1, limit=4
  $region2: #{multiscale_forward.29} parent=0 // loop_pre_header
    _
  $region3: #{multiscale_forward.29} parent=0 // loop_header
    %s11 = sphi 0, %s15
    %p12 = scmp.ge.s32.totalorder %s11, 4
    %s18 = sphi 0, %s37
    %s19 = sphi 0, %s33
    %s20 = sphi 0, %s29
    %s21 = sphi 0, %s18
    %s22 = sphi 0, %s19
    %s23 = sphi 0, %s20
    %s24 = sphi 0, %s21
    %s25 = sphi 0, %s22
    %s26 = sphi 0, %s23
    %s42 = sphi 0, %s44
    %s45 = sphi 0, %s42
    %s46 = sphi 0, %s45
    %s62 = sphi 0, %s46
    %s70 = sphi 0, %s72
    %s73 = sphi 0, %s70
    %s74 = sphi 0, %s73
    %s90 = sphi 0, %s74
    %s96 = sphi 0, %s98
    %s99 = sphi 0, %s96
    %s100 = sphi 0, %s99
    %s116 = sphi 0, %s100
    %s124 = sphi 0, %s126
    %s127 = sphi 0, %s124
    %s128 = sphi 0, %s127
    %s144 = sphi 0, %s128
    %s152 = sphi 0, %s154
    %s155 = sphi 0, %s152
    %s156 = sphi 0, %s155
    %s172 = sphi 0, %s156
  $region4: #{multiscale_forward.29} parent=0 // loop_header_branch
    %14 = sbr.rel (%p12) target = $region8
  $region5: #{multiscale_forward.29} parent=0 // loop_body
    %s16 = ssub.s32 %s11, 1
    %s17 = ssub.s32 %s11, 2
    %s27 = sadd.s32 1, %s20
    %p28 = scmp.ge.s32.totalorder %s27, 1
    %s29 = scalar_select %p28, 0, %s27
    %s30 = sadd.s32 1, %s19
    %s31 = scalar_select %p28, %s30, %s19
    %p32 = scmp.ge.s32.totalorder %s31, 1
    %s33 = scalar_select %p32, 0, %s31
    %s34 = sadd.s32 1, %s18
    %s35 = scalar_select %p32, %s34, %s18
    %p36 = scmp.ge.s32.totalorder %s35, 2
    %s37 = scalar_select %p36, 0, %s35
    %s38 = ssub.s32 %s18, %s37
    %s39 = ssub.s32 %s20, %s29
    %s40 = sor.u32 %s38, %s39
    %p41 = scmp.eq.s32.totalorder %s40, 0
    %s43 = sadd.s32 %s42, 1
    %s44 = scalar_select %p41, %s42, %s43
    %p47 = pneg %p41
    %p48 = scmp.eq.s32.totalorder %s11, 1
    %p49 = por %p47, %p48
    %p50 = scmp.ne.s32.totalorder %s42, %s45
    %p51 = scmp.eq.s32.totalorder %s11, 0
    %p52 = por %p50, %p51
    %p53 = scmp.ne.s32.totalorder %s42, %s45
    %p54 = scmp.eq.s32.totalorder %s16, 1
    %p55 = por %p53, %p54
    %p56 = scmp.ne.s32.totalorder %s45, %s46
    %p57 = scmp.eq.s32.totalorder %s16, 0
    %p58 = por %p56, %p57
    %p59 = scmp.ne.s32.totalorder %s45, %s46
    %p60 = scmp.eq.s32.totalorder %s17, 1
    %p61 = por %p59, %p60
    %p63 = scmp.ne.s32.totalorder %s46, %s62
    %p64 = scmp.eq.s32.totalorder %s17, 0
    %p65 = por %p63, %p64
    %s66 = ssub.s32 %s20, %s29
    %s67 = ssub.s32 %s19, %s33
    %s68 = sor.u32 %s66, %s67
    %p69 = scmp.eq.s32.totalorder %s68, 0
    %s71 = sadd.s32 %s70, 1
    %s72 = scalar_select %p69, %s70, %s71
    %p75 = pneg %p69
    %p76 = scmp.eq.s32.totalorder %s11, 1
    %p77 = por %p75, %p76
    %p78 = scmp.ne.s32.totalorder %s70, %s73
    %p79 = scmp.eq.s32.totalorder %s11, 0
    %p80 = por %p78, %p79
    %p81 = scmp.ne.s32.totalorder %s70, %s73
    %p82 = scmp.eq.s32.totalorder %s16, 1
    %p83 = por %p81, %p82
    %p84 = scmp.ne.s32.totalorder %s73, %s74
    %p85 = scmp.eq.s32.totalorder %s16, 0
    %p86 = por %p84, %p85
    %p87 = scmp.ne.s32.totalorder %s73, %s74
    %p88 = scmp.eq.s32.totalorder %s17, 1
    %p89 = por %p87, %p88
    %p91 = scmp.ne.s32.totalorder %s74, %s90
    %p92 = scmp.eq.s32.totalorder %s17, 0
    %p93 = por %p91, %p92
    %s94 = ssub.s32 %s19, %s33
    %p95 = scmp.eq.s32.totalorder %s94, 0
    %s97 = sadd.s32 %s96, 1
    %s98 = scalar_select %p95, %s96, %s97
    %p101 = pneg %p95
    %p102 = scmp.eq.s32.totalorder %s11, 1
    %p103 = por %p101, %p102
    %p104 = scmp.ne.s32.totalorder %s96, %s99
    %p105 = scmp.eq.s32.totalorder %s11, 0
    %p106 = por %p104, %p105
    %p107 = scmp.ne.s32.totalorder %s96, %s99
    %p108 = scmp.eq.s32.totalorder %s16, 1
    %p109 = por %p107, %p108
    %p110 = scmp.ne.s32.totalorder %s99, %s100
    %p111 = scmp.eq.s32.totalorder %s16, 0
    %p112 = por %p110, %p111
    %p113 = scmp.ne.s32.totalorder %s99, %s100
    %p114 = scmp.eq.s32.totalorder %s17, 1
    %p115 = por %p113, %p114
    %p117 = scmp.ne.s32.totalorder %s100, %s116
    %p118 = scmp.eq.s32.totalorder %s17, 0
    %p119 = por %p117, %p118
    %s120 = ssub.s32 %s18, %s37
    %s121 = ssub.s32 %s19, %s33
    %s122 = sor.u32 %s120, %s121
    %p123 = scmp.eq.s32.totalorder %s122, 0
    %s125 = sadd.s32 %s124, 1
    %s126 = scalar_select %p123, %s124, %s125
    %p129 = pneg %p123
    %p130 = scmp.eq.s32.totalorder %s11, 1
    %p131 = por %p129, %p130
    %p132 = scmp.ne.s32.totalorder %s124, %s127
    %p133 = scmp.eq.s32.totalorder %s11, 0
    %p134 = por %p132, %p133
    %p135 = scmp.ne.s32.totalorder %s124, %s127
    %p136 = scmp.eq.s32.totalorder %s16, 1
    %p137 = por %p135, %p136
    %p138 = scmp.ne.s32.totalorder %s127, %s128
    %p139 = scmp.eq.s32.totalorder %s16, 0
    %p140 = por %p138, %p139
    %p141 = scmp.ne.s32.totalorder %s127, %s128
    %p142 = scmp.eq.s32.totalorder %s17, 1
    %p143 = por %p141, %p142
    %p145 = scmp.ne.s32.totalorder %s128, %s144
    %p146 = scmp.eq.s32.totalorder %s17, 0
    %p147 = por %p145, %p146
    %s148 = ssub.s32 %s18, %s37
    %s149 = ssub.s32 %s19, %s33
    %s150 = sor.u32 %s148, %s149
    %p151 = scmp.eq.s32.totalorder %s150, 0
    %s153 = sadd.s32 %s152, 1
    %s154 = scalar_select %p151, %s152, %s153
    %p157 = pneg %p151
    %p158 = scmp.eq.s32.totalorder %s11, 1
    %p159 = por %p157, %p158
    %p160 = scmp.ne.s32.totalorder %s152, %s155
    %p161 = scmp.eq.s32.totalorder %s11, 0
    %p162 = por %p160, %p161
    %p163 = scmp.ne.s32.totalorder %s152, %s155
    %p164 = scmp.eq.s32.totalorder %s16, 1
    %p165 = por %p163, %p164
    %p166 = scmp.ne.s32.totalorder %s155, %s156
    %p167 = scmp.eq.s32.totalorder %s16, 0
    %p168 = por %p166, %p167
    %p169 = scmp.ne.s32.totalorder %s155, %s156
    %p170 = scmp.eq.s32.totalorder %s17, 1
    %p171 = por %p169, %p170
    %p173 = scmp.ne.s32.totalorder %s156, %s172
    %p174 = scmp.eq.s32.totalorder %s17, 0
    %p175 = por %p173, %p174
    %p176 = scmp.le.s32.totalorder 1, %s11
    %p177 = scmp.lt.s32.totalorder %s11, 3
    %p178 = pnand %p176, %p177
    %p179 = pneg %p178
    // Predicated region
    $region9: #{multiscale_forward.29} parent=5 // pred_check
      _
    $region10: #{multiscale_forward.29} parent=5 // pred_check_branch
      %181 = sbr.rel (%p178) target = $region12
    $region11: #{multiscale_forward.29} parent=5 // pred_region
      %s182 = ssub.s32 %s11, 1
      // Predicated region
      $region13: #{multiscale_forward.29} parent=11 // pred_check
        %p183 = pneg %p86
      $region14: #{multiscale_forward.29} parent=11 // pred_check_branch
        %185 = sbr.rel (%p183) target = $region16
      $region15: #{multiscale_forward.29} parent=11 // pred_region
        %s186 = smul.u32 64, %s23
        %p187 = scmp.lt.s32.totalorder %s186, 63
        %s188 = scalar_select %p187, %s186, 63
        %p189 = scmp.lt.s32.totalorder %s22, 0
        %s190 = scalar_select %p189, %s22, 0
        %s191 = sadd.s32 %s190, %s188
        %s192 = smul.addr %s191, 4
        %s193 = scalar_lea.vmem %s1, %s192
        %s194 = smul.u32 64, %s23
      $region16: #{multiscale_forward.29} parent=11 // pred_fallthru
        _
      // Predicated region
      $region17: #{multiscale_forward.29} parent=11 // pred_check
        %p195 = pneg %p112
      $region18: #{multiscale_forward.29} parent=11 // pred_check_branch
        %197 = sbr.rel (%p195) target = $region20
      $region19: #{multiscale_forward.29} parent=11 // pred_region
        %p198 = scmp.lt.s32.totalorder %s22, 0
        %s199 = scalar_select %p198, %s22, 0
        %s200 = scalar_lea.vmem %s2, %s199
      $region20: #{multiscale_forward.29} parent=11 // pred_fallthru
        _
    $region12: #{multiscale_forward.29} parent=5 // pred_fallthru
      _
    %p201 = scmp.lt.s32.totalorder %s11, 2
    // Predicated region
    $region21: #{multiscale_forward.29} parent=5 // pred_check
      %p202 = pneg %p201
    $region22: #{multiscale_forward.29} parent=5 // pred_check_branch
      %204 = sbr.rel (%p202) target = $region24
    $region23: #{multiscale_forward.29} parent=5 // pred_region
      // Predicated region
      $region25: #{multiscale_forward.29} parent=23 // pred_check
        %p205 = pneg %p52
      $region26: #{multiscale_forward.29} parent=23 // pred_check_branch
        %207 = sbr.rel (%p205) target = $region28
      $region27: #{multiscale_forward.29} parent=23 // pred_region
        %s208 = smul.u32 2, %s18
        %s209 = smul.u32 4, %s20
        %p210 = scmp.lt.s32.totalorder %s208, 3
        %s211 = scalar_select %p210, %s208, 3
        %p212 = scmp.lt.s32.totalorder %s209, 3
        %s213 = scalar_select %p212, %s209, 3
        %s214 = smul.addr %s211, 4
        %s215 = sadd.s32 %s213, %s214
        %s216 = smul.addr %s215, 4
        %s217 = scalar_lea.vmem %s0, %s216
        %s218 = smul.u32 2, %s18
        %s219 = smul.u32 4, %s20
      $region28: #{multiscale_forward.29} parent=23 // pred_fallthru
        _
    $region24: #{multiscale_forward.29} parent=5 // pred_fallthru
      _
    %p220 = scmp.le.s32.totalorder 1, %s11
    %p221 = scmp.lt.s32.totalorder %s11, 3
    %p222 = pnand %p220, %p221
    %p223 = pneg %p222
    // Predicated region
    $region29: #{multiscale_forward.29} parent=5 // pred_check
      _
    $region30: #{multiscale_forward.29} parent=5 // pred_check_branch
      %225 = sbr.rel (%p222) target = $region32
    $region31: #{multiscale_forward.29} parent=5 // pred_region
      %s226 = ssub.s32 %s11, 1
      %s227 = smul.u32 2, %s21
      %s228 = smul.u32 4, %s23
      %p229 = scmp.lt.s32.totalorder %s227, 3
      %s230 = scalar_select %p229, %s227, 3
      %p231 = scmp.lt.s32.totalorder %s228, 3
      %s232 = scalar_select %p231, %s228, 3
      %s233 = smul.addr %s230, 4
      %s234 = sadd.s32 %s232, %s233
      %s235 = smul.addr %s234, 4
      %s236 = scalar_lea.vmem %s0, %s235
      %p237 = pneg %p58
      %p238 = pneg %p55
      %s239 = smul.u32 64, %s23
      %p240 = scmp.lt.s32.totalorder %s239, 63
      %s241 = scalar_select %p240, %s239, 63
      %p242 = scmp.lt.s32.totalorder %s22, 0
      %s243 = scalar_select %p242, %s22, 0
      %s244 = sadd.s32 %s243, %s241
      %s245 = smul.addr %s244, 4
      %s246 = scalar_lea.vmem %s1, %s245
      %p247 = pneg %p86
      %p248 = pneg %p83
      %p249 = scmp.lt.s32.totalorder %s22, 0
      %s250 = scalar_select %p249, %s22, 0
      %s251 = scalar_lea.vmem %s2, %s250
      %p252 = pneg %p112
      %p253 = pneg %p109
      %p254 = pneg %p140
      %p255 = pneg %p137
      %s256 = smul.u32 2, %s21
      %p257 = scmp.lt.s32.totalorder %s256, 3
      %s258 = scalar_select %p257, %s256, 3
      %p259 = scmp.lt.s32.totalorder %s22, 0
      %s260 = scalar_select %p259, %s22, 0
      %s261 = sadd.s32 %s260, %s258
      %s262 = smul.addr %s261, 8
      %s263 = scalar_lea.vmem %s3, %s262
      %p264 = pneg %p168
      %p265 = pneg %p165
      %p266 = scmp.lt.s32.totalorder %s21, 1
      %s267 = scalar_select %p266, %s21, 1
      %p268 = scmp.lt.s32.totalorder %s22, 0
      %s269 = scalar_select %p268, %s22, 0
      %s270 = sadd.s32 %s269, %s267
      %s271 = smul.addr %s270, 8
      %s272 = scalar_lea.vmem %s4, %s271
      %s273 = smul.u32 2, %s21
      %s274 = smul.u32 4, %s23
      %p275 = scmp.lt.s32.totalorder %s273, 3
      %s276 = scalar_select %p275, %s273, 3
      %p277 = scmp.lt.s32.totalorder %s274, 3
      %s278 = scalar_select %p277, %s274, 3
      %s279 = smul.addr %s276, 4
      %s280 = sadd.s32 %s278, %s279
      %s281 = smul.addr %s280, 4
      %s282 = scalar_lea.vmem %s0, %s281
      %s283 = smul.u32 2, %s21
      %s284 = smul.u32 4, %s23
      %s285 = smul.u32 64, %s23
      %p286 = scmp.lt.s32.totalorder %s285, 63
      %s287 = scalar_select %p286, %s285, 63
      %p288 = scmp.lt.s32.totalorder %s22, 0
      %s289 = scalar_select %p288, %s22, 0
      %s290 = sadd.s32 %s289, %s287
      %s291 = smul.addr %s290, 4
      %s292 = scalar_lea.vmem %s1, %s291
      %s293 = smul.u32 64, %s23
      %p294 = scmp.lt.s32.totalorder %s22, 0
      %s295 = scalar_select %p294, %s22, 0
      %s296 = scalar_lea.vmem %s2, %s295
      %s297 = smul.u32 2, %s21
      %p298 = scmp.lt.s32.totalorder %s297, 3
      %s299 = scalar_select %p298, %s297, 3
      %p300 = scmp.lt.s32.totalorder %s22, 0
      %s301 = scalar_select %p300, %s22, 0
      %s302 = sadd.s32 %s301, %s299
      %s303 = smul.addr %s302, 8
      %s304 = scalar_lea.vmem %s3, %s303
      %s305 = smul.u32 2, %s21
      %p306 = scmp.lt.s32.totalorder %s21, 1
      %s307 = scalar_select %p306, %s21, 1
      %p308 = scmp.lt.s32.totalorder %s22, 0
      %s309 = scalar_select %p308, %s22, 0
      %s310 = sadd.s32 %s309, %s307
      %s311 = smul.addr %s310, 8
      %s312 = scalar_lea.vmem %s4, %s311
      %s313 = smul.u32 %s21, 16
      %p314 = scmp.eq.s32.totalorder %s23, 0
      // Predicated region
      $region33: #{multiscale_forward.29} parent=31 // pred_check
        %p315 = pneg %p314
      $region34: #{multiscale_forward.29} parent=31 // pred_check_branch
        %317 = sbr.rel (%p315) target = $region36
      $region35: #{multiscale_forward.29} parent=31 // pred_region
        %318 = vst [vmem:[%s304] sm:$0xff] 0.0
        %319 = vst [vmem:[%s304 + $0x8] sm:$0xff] 0.0
      $region36: #{multiscale_forward.29} parent=31 // pred_fallthru
        _
      %v320 = vld [vmem:[%s304] sm:$0xff]
      %v321 = vld [vmem:[%s304 + $0x8] sm:$0xff]
      %v322 = vld [vmem:[%s282] sm:$0xff]
      %v323 = vld [vmem:[%s282 + $0x8] sm:$0xff]
      %v324 = vld [vmem:[%s282 + $0x10] sm:$0xff]
      %v325 = vld [vmem:[%s282 + $0x18] sm:$0xff]
      %v326 = vld [vmem:[%s292] sm:$0xf]
      %v327 = vld [vmem:[%s292 + $0x4] sm:$0xf]
      %v328 = vld [vmem:[%s292 + $0x8] sm:$0xf]
      %v329 = vld [vmem:[%s292 + $0xc] sm:$0xf]
      %v330 = vld [vmem:[%s292 + $0x10] sm:$0xf]
      %v331 = vld [vmem:[%s292 + $0x14] sm:$0xf]
      %v332 = vld [vmem:[%s292 + $0x18] sm:$0xf]
      %v333 = vld [vmem:[%s292 + $0x1c] sm:$0xf]
      %v334 = vld [vmem:[%s292 + $0x20] sm:$0xf]
      %v335 = vld [vmem:[%s292 + $0x24] sm:$0xf]
      %v336 = vld [vmem:[%s292 + $0x28] sm:$0xf]
      %v337 = vld [vmem:[%s292 + $0x2c] sm:$0xf]
      %v338 = vld [vmem:[%s292 + $0x30] sm:$0xf]
      %v339 = vld [vmem:[%s292 + $0x34] sm:$0xf]
      %v340 = vld [vmem:[%s292 + $0x38] sm:$0xf]
      %v341 = vld [vmem:[%s292 + $0x3c] sm:$0xf]
      %v342 = vld [vmem:[%s292 + $0x40] sm:$0xf]
      %v343 = vld [vmem:[%s292 + $0x44] sm:$0xf]
      %v344 = vld [vmem:[%s292 + $0x48] sm:$0xf]
      %v345 = vld [vmem:[%s292 + $0x4c] sm:$0xf]
      %v346 = vld [vmem:[%s292 + $0x50] sm:$0xf]
      %v347 = vld [vmem:[%s292 + $0x54] sm:$0xf]
      %v348 = vld [vmem:[%s292 + $0x58] sm:$0xf]
      %v349 = vld [vmem:[%s292 + $0x5c] sm:$0xf]
      %v350 = vld [vmem:[%s292 + $0x60] sm:$0xf]
      %v351 = vld [vmem:[%s292 + $0x64] sm:$0xf]
      %v352 = vld [vmem:[%s292 + $0x68] sm:$0xf]
      %v353 = vld [vmem:[%s292 + $0x6c] sm:$0xf]
      %v354 = vld [vmem:[%s292 + $0x70] sm:$0xf]
      %v355 = vld [vmem:[%s292 + $0x74] sm:$0xf]
      %v356 = vld [vmem:[%s292 + $0x78] sm:$0xf]
      %v357 = vld [vmem:[%s292 + $0x7c] sm:$0xf]
      %v358 = vld [vmem:[%s292 + $0x80] sm:$0xf]
      %v359 = vld [vmem:[%s292 + $0x84] sm:$0xf]
      %v360 = vld [vmem:[%s292 + $0x88] sm:$0xf]
      %v361 = vld [vmem:[%s292 + $0x8c] sm:$0xf]
      %v362 = vld [vmem:[%s292 + $0x90] sm:$0xf]
      %v363 = vld [vmem:[%s292 + $0x94] sm:$0xf]
      %v364 = vld [vmem:[%s292 + $0x98] sm:$0xf]
      %v365 = vld [vmem:[%s292 + $0x9c] sm:$0xf]
      %v366 = vld [vmem:[%s292 + $0xa0] sm:$0xf]
      %v367 = vld [vmem:[%s292 + $0xa4] sm:$0xf]
      %v368 = vld [vmem:[%s292 + $0xa8] sm:$0xf]
      %v369 = vld [vmem:[%s292 + $0xac] sm:$0xf]
      %v370 = vld [vmem:[%s292 + $0xb0] sm:$0xf]
      %v371 = vld [vmem:[%s292 + $0xb4] sm:$0xf]
      %v372 = vld [vmem:[%s292 + $0xb8] sm:$0xf]
      %v373 = vld [vmem:[%s292 + $0xbc] sm:$0xf]
      %v374 = vld [vmem:[%s292 + $0xc0] sm:$0xf]
      %v375 = vld [vmem:[%s292 + $0xc4] sm:$0xf]
      %v376 = vld [vmem:[%s292 + $0xc8] sm:$0xf]
      %v377 = vld [vmem:[%s292 + $0xcc] sm:$0xf]
      %v378 = vld [vmem:[%s292 + $0xd0] sm:$0xf]
      %v379 = vld [vmem:[%s292 + $0xd4] sm:$0xf]
      %v380 = vld [vmem:[%s292 + $0xd8] sm:$0xf]
      %v381 = vld [vmem:[%s292 + $0xdc] sm:$0xf]
      %v382 = vld [vmem:[%s292 + $0xe0] sm:$0xf]
      %v383 = vld [vmem:[%s292 + $0xe4] sm:$0xf]
      %v384 = vld [vmem:[%s292 + $0xe8] sm:$0xf]
      %v385 = vld [vmem:[%s292 + $0xec] sm:$0xf]
      %v386 = vld [vmem:[%s292 + $0xf0] sm:$0xf]
      %v387 = vld [vmem:[%s292 + $0xf4] sm:$0xf]
      %v388 = vld [vmem:[%s292 + $0xf8] sm:$0xf]
      %v389 = vld [vmem:[%s292 + $0xfc] sm:$0xf]
      %v394 = vunpack.c.l.b16 %v322
      %v395 = vunpack.c.h.b16 %v322
      %v396 = vunpack.c.l.b16 %v323
      %v397 = vunpack.c.h.b16 %v323
      %v398 = vunpack.c.l.b16 %v324
      %v399 = vunpack.c.h.b16 %v324
      %v400 = vunpack.c.l.b16 %v325
      %v401 = vunpack.c.h.b16 %v325
      %v402 = vpack.c.b16 %v398, %v394
      %v403 = vpack.c.b16 %v399, %v395
      %v404 = vpack.c.b16 %v400, %v396
      %v405 = vpack.c.b16 %v401, %v397
      %v474 = vunpack.c.l.b16 %v326
      %v475 = vunpack.c.l.b16 %v327
      %v476 = vunpack.c.l.b16 %v328
      %v477 = vunpack.c.l.b16 %v329
      %v478 = vunpack.c.l.b16 %v330
      %v479 = vunpack.c.l.b16 %v331
      %v480 = vunpack.c.l.b16 %v332
      %v481 = vunpack.c.l.b16 %v333
      %v482 = vunpack.c.l.b16 %v334
      %v483 = vunpack.c.l.b16 %v335
      %v484 = vunpack.c.l.b16 %v336
      %v485 = vunpack.c.l.b16 %v337
      %v486 = vunpack.c.l.b16 %v338
      %v487 = vunpack.c.l.b16 %v339
      %v488 = vunpack.c.l.b16 %v340
      %v489 = vunpack.c.l.b16 %v341
      %v490 = vunpack.c.l.b16 %v342
      %v491 = vunpack.c.l.b16 %v343
      %v492 = vunpack.c.l.b16 %v344
      %v493 = vunpack.c.l.b16 %v345
      %v494 = vunpack.c.l.b16 %v346
      %v495 = vunpack.c.l.b16 %v347
      %v496 = vunpack.c.l.b16 %v348
      %v497 = vunpack.c.l.b16 %v349
      %v498 = vunpack.c.l.b16 %v350
      %v499 = vunpack.c.l.b16 %v351
      %v500 = vunpack.c.l.b16 %v352
      %v501 = vunpack.c.l.b16 %v353
      %v502 = vunpack.c.l.b16 %v354
      %v503 = vunpack.c.l.b16 %v355
      %v504 = vunpack.c.l.b16 %v356
      %v505 = vunpack.c.l.b16 %v357
      %v506 = vunpack.c.l.b16 %v358
      %v507 = vunpack.c.l.b16 %v359
      %v508 = vunpack.c.l.b16 %v360
      %v509 = vunpack.c.l.b16 %v361
      %v510 = vunpack.c.l.b16 %v362
      %v511 = vunpack.c.l.b16 %v363
      %v512 = vunpack.c.l.b16 %v364
      %v513 = vunpack.c.l.b16 %v365
      %v514 = vunpack.c.l.b16 %v366
      %v515 = vunpack.c.l.b16 %v367
      %v516 = vunpack.c.l.b16 %v368
      %v517 = vunpack.c.l.b16 %v369
      %v518 = vunpack.c.l.b16 %v370
      %v519 = vunpack.c.l.b16 %v371
      %v520 = vunpack.c.l.b16 %v372
      %v521 = vunpack.c.l.b16 %v373
      %v522 = vunpack.c.l.b16 %v374
      %v523 = vunpack.c.l.b16 %v375
      %v524 = vunpack.c.l.b16 %v376
      %v525 = vunpack.c.l.b16 %v377
      %v526 = vunpack.c.l.b16 %v378
      %v527 = vunpack.c.l.b16 %v379
      %v528 = vunpack.c.l.b16 %v380
      %v529 = vunpack.c.l.b16 %v381
      %v530 = vunpack.c.l.b16 %v382
      %v531 = vunpack.c.l.b16 %v383
      %v532 = vunpack.c.l.b16 %v384
      %v533 = vunpack.c.l.b16 %v385
      %v534 = vunpack.c.l.b16 %v386
      %v535 = vunpack.c.l.b16 %v387
      %v536 = vunpack.c.l.b16 %v388
      %v537 = vunpack.c.l.b16 %v389
      %v538 = vpack.c.b16 %v475, %v474
      %v539 = vpack.c.b16 %v477, %v476
      %v540 = vpack.c.b16 %v479, %v478
      %v541 = vpack.c.b16 %v481, %v480
      %v542 = vpack.c.b16 %v483, %v482
      %v543 = vpack.c.b16 %v485, %v484
      %v544 = vpack.c.b16 %v487, %v486
      %v545 = vpack.c.b16 %v489, %v488
      %v546 = vpack.c.b16 %v491, %v490
      %v547 = vpack.c.b16 %v493, %v492
      %v548 = vpack.c.b16 %v495, %v494
      %v549 = vpack.c.b16 %v497, %v496
      %v550 = vpack.c.b16 %v499, %v498
      %v551 = vpack.c.b16 %v501, %v500
      %v552 = vpack.c.b16 %v503, %v502
      %v553 = vpack.c.b16 %v505, %v504
      %v554 = vpack.c.b16 %v507, %v506
      %v555 = vpack.c.b16 %v509, %v508
      %v556 = vpack.c.b16 %v511, %v510
      %v557 = vpack.c.b16 %v513, %v512
      %v558 = vpack.c.b16 %v515, %v514
      %v559 = vpack.c.b16 %v517, %v516
      %v560 = vpack.c.b16 %v519, %v518
      %v561 = vpack.c.b16 %v521, %v520
      %v562 = vpack.c.b16 %v523, %v522
      %v563 = vpack.c.b16 %v525, %v524
      %v564 = vpack.c.b16 %v527, %v526
      %v565 = vpack.c.b16 %v529, %v528
      %v566 = vpack.c.b16 %v531, %v530
      %v567 = vpack.c.b16 %v533, %v532
      %v568 = vpack.c.b16 %v535, %v534
      %v569 = vpack.c.b16 %v537, %v536
      %602 = vmatpush.bf16.msra.mxu0 %v545
      %603 = vmatpush.bf16.msra.mxu0 %v544
      %604 = vmatpush.bf16.msra.mxu0 %v543
      %605 = vmatpush.bf16.msra.mxu0 %v542
      %606 = vmatpush.bf16.msra.mxu0 %v541
      %607 = vmatpush.bf16.msra.mxu0 %v540
      %608 = vmatpush.bf16.msra.mxu0 %v539
      %609 = vmatpush.bf16.msra.mxu0 %v538
      %610 = vmatmul.bf16.gmra.mxu0 %v402
      %v611 = vpop.f32.mrf.mxu0
      %v612 = vadd.f32 0.0, %v611
      %v613 = vpop.f32.mrf.mxu0
      %v614 = vadd.f32 0.0, %v613
      %615 = vdwg.mxu0
      %616 = vmatpush.bf16.msra.mxu0 %v553
      %617 = vmatpush.bf16.msra.mxu0 %v552
      %618 = vmatpush.bf16.msra.mxu0 %v551
      %619 = vmatpush.bf16.msra.mxu0 %v550
      %620 = vmatpush.bf16.msra.mxu0 %v549
      %621 = vmatpush.bf16.msra.mxu0 %v548
      %622 = vmatpush.bf16.msra.mxu0 %v547
      %623 = vmatpush.bf16.msra.mxu0 %v546
      %624 = vmatmul.bf16.gmra.mxu0 %v403
      %v625 = vpop.f32.mrf.mxu0
      %v626 = vadd.f32 %v612, %v625
      %v627 = vpop.f32.mrf.mxu0
      %v628 = vadd.f32 %v614, %v627
      %629 = vdwg.mxu0
      %630 = vmatpush.bf16.msra.mxu0 %v561
      %631 = vmatpush.bf16.msra.mxu0 %v560
      %632 = vmatpush.bf16.msra.mxu0 %v559
      %633 = vmatpush.bf16.msra.mxu0 %v558
      %634 = vmatpush.bf16.msra.mxu0 %v557
      %635 = vmatpush.bf16.msra.mxu0 %v556
      %636 = vmatpush.bf16.msra.mxu0 %v555
      %637 = vmatpush.bf16.msra.mxu0 %v554
      %638 = vmatmul.bf16.gmra.mxu0 %v404
      %v639 = vpop.f32.mrf.mxu0
      %v640 = vadd.f32 %v626, %v639
      %v641 = vpop.f32.mrf.mxu0
      %v642 = vadd.f32 %v628, %v641
      %643 = vdwg.mxu0
      %644 = vmatpush.bf16.msra.mxu0 %v569
      %645 = vmatpush.bf16.msra.mxu0 %v568
      %646 = vmatpush.bf16.msra.mxu0 %v567
      %647 = vmatpush.bf16.msra.mxu0 %v566
      %648 = vmatpush.bf16.msra.mxu0 %v565
      %649 = vmatpush.bf16.msra.mxu0 %v564
      %650 = vmatpush.bf16.msra.mxu0 %v563
      %651 = vmatpush.bf16.msra.mxu0 %v562
      %652 = vmatmul.bf16.gmra.mxu0 %v405
      %v653 = vpop.f32.mrf.mxu0
      %v654 = vadd.f32 %v640, %v653
      %v655 = vpop.f32.mrf.mxu0
      %v656 = vadd.f32 %v642, %v655
      %657 = vdwg.mxu0
      %v658 = vadd.f32 %v320, %v654
      %v659 = vadd.f32 %v321, %v656
      %660 = vst [vmem:[%s304] sm:$0xff] %v658
      %661 = vst [vmem:[%s304 + $0x8] sm:$0xff] %v659
      // Predicated region
      $region37: #{multiscale_forward.29} parent=31 // pred_check
        %p662 = pneg %p314
      $region38: #{multiscale_forward.29} parent=31 // pred_check_branch
        %664 = sbr.rel (%p662) target = $region40
      $region39: #{multiscale_forward.29} parent=31 // pred_region
        %v665 = vld [vmem:[%s304] sm:$0xff]
        %v666 = vld [vmem:[%s304 + $0x8] sm:$0xff]
        %v667 = vld [vmem:[%s296] sm:$0x1]
        %v669 = vperm.slane %v667, 0
        %v671 = vadd.f32 %v665, %v669
        %v672 = vadd.f32 %v666, %v669
        %673 = vst [vmem:[%s304] sm:$0xff] %v671
        %674 = vst [vmem:[%s304 + $0x8] sm:$0xff] %v672
        %v675 = vlaneseq
        %v676 = vshrl.u32 %v675, 7
        %v677 = vadd.s32 %v676, 8
        %v678 = vstv %s313
        %v679 = vadd.s32 %v676, %v678
        %v680 = vadd.s32 %v677, %v678
        %vm681 = vcmp.lt.s32.totalorder %v679, 32
        %vm682 = vcmp.lt.s32.totalorder %v680, 32
        %v683 = vsel %vm681, 1, 0
        %v684 = vsel %vm682, 1, 0
        %vm685 = vcmp.eq.s32.totalorder %v683, 1
        %vm686 = vcmp.eq.s32.totalorder %v684, 1
        %v687 = vsel %vm685, %v671, 0.0
        %v688 = vsel %vm686, %v672, 0.0
        %v689 = vadd.f32 %v687, %v688
        %v690 = vrot.slane %v689, 4
        %v691 = vadd.f32 %v689, %v690
        %v692 = vrot.slane %v691, 2
        %v693 = vadd.f32 %v691, %v692
        %v694 = vrot.slane %v693, 1
        %v695 = vadd.f32 %v693, %v694
        %v696 = vmul.f32 %v687, %v687
        %v697 = vmul.f32 %v688, %v688
        %v698 = vadd.f32 %v696, %v697
        %v699 = vrot.slane %v698, 4
        %v700 = vadd.f32 %v698, %v699
        %v701 = vrot.slane %v700, 2
        %v702 = vadd.f32 %v700, %v701
        %v703 = vrot.slane %v702, 1
        %v704 = vadd.f32 %v702, %v703
        %vm705 = vcmp.eq.s32.totalorder %v676, 0
        %v706 = vsel %vm705, %v695, 0.0
        %vm707 = vcmp.eq.s32.totalorder %v676, 1
        %v708 = vsel %vm707, %v704, 0.0
        %v709 = vadd.f32 %v706, %v708
        %710 = vst [vmem:[%s312] sm:$0xff] %v709
      $region40: #{multiscale_forward.29} parent=31 // pred_fallthru
        _
      %s711 = smul.u32 2, %s21
      %p712 = scmp.lt.s32.totalorder %s711, 3
      %s713 = scalar_select %p712, %s711, 3
      %p714 = scmp.lt.s32.totalorder %s22, 0
      %s715 = scalar_select %p714, %s22, 0
      %s716 = sadd.s32 %s715, %s713
      %s717 = smul.addr %s716, 8
      %s718 = scalar_lea.vmem %s3, %s717
      %p719 = scmp.lt.s32.totalorder %s21, 1
      %s720 = scalar_select %p719, %s21, 1
      %p721 = scmp.lt.s32.totalorder %s22, 0
      %s722 = scalar_select %p721, %s22, 0
      %s723 = sadd.s32 %s722, %s720
      %s724 = smul.addr %s723, 8
      %s725 = scalar_lea.vmem %s4, %s724
      // Predicated region
      $region41: #{multiscale_forward.29} parent=31 // pred_check
        %p726 = pneg %p137
      $region42: #{multiscale_forward.29} parent=31 // pred_check_branch
        %728 = sbr.rel (%p726) target = $region44
      $region43: #{multiscale_forward.29} parent=31 // pred_region
        %s729 = smul.u32 2, %s21
      $region44: #{multiscale_forward.29} parent=31 // pred_fallthru
        _
      // Predicated region
      $region45: #{multiscale_forward.29} parent=31 // pred_check
        %p730 = pneg %p165
      $region46: #{multiscale_forward.29} parent=31 // pred_check_branch
        %732 = sbr.rel (%p730) target = $region48
      $region47: #{multiscale_forward.29} parent=31 // pred_region
        _
      $region48: #{multiscale_forward.29} parent=31 // pred_fallthru
        _
    $region32: #{multiscale_forward.29} parent=5 // pred_fallthru
      _
    %p733 = scmp.le.s32.totalorder 2, %s11
    // Predicated region
    $region49: #{multiscale_forward.29} parent=5 // pred_check
      %p734 = pneg %p733
    $region50: #{multiscale_forward.29} parent=5 // pred_check_branch
      %736 = sbr.rel (%p734) target = $region52
    $region51: #{multiscale_forward.29} parent=5 // pred_region
      %s737 = ssub.s32 %s11, 2
      // Predicated region
      $region53: #{multiscale_forward.29} parent=51 // pred_check
        %p738 = pneg %p143
      $region54: #{multiscale_forward.29} parent=51 // pred_check_branch
        %740 = sbr.rel (%p738) target = $region56
      $region55: #{multiscale_forward.29} parent=51 // pred_region
        %s741 = smul.u32 2, %s24
        %p742 = scmp.lt.s32.totalorder %s741, 3
        %s743 = scalar_select %p742, %s741, 3
        %p744 = scmp.lt.s32.totalorder %s25, 0
        %s745 = scalar_select %p744, %s25, 0
        %s746 = sadd.s32 %s745, %s743
        %s747 = smul.addr %s746, 8
        %s748 = scalar_lea.vmem %s3, %s747
      $region56: #{multiscale_forward.29} parent=51 // pred_fallthru
        _
      // Predicated region
      $region57: #{multiscale_forward.29} parent=51 // pred_check
        %p749 = pneg %p171
      $region58: #{multiscale_forward.29} parent=51 // pred_check_branch
        %751 = sbr.rel (%p749) target = $region60
      $region59: #{multiscale_forward.29} parent=51 // pred_region
        %p752 = scmp.lt.s32.totalorder %s24, 1
        %s753 = scalar_select %p752, %s24, 1
        %p754 = scmp.lt.s32.totalorder %s25, 0
        %s755 = scalar_select %p754, %s25, 0
        %s756 = sadd.s32 %s755, %s753
        %s757 = smul.addr %s756, 8
        %s758 = scalar_lea.vmem %s4, %s757
      $region60: #{multiscale_forward.29} parent=51 // pred_fallthru
        _
    $region52: #{multiscale_forward.29} parent=5 // pred_fallthru
      _
  $region6: #{multiscale_forward.29} parent=0 // loop_footer
    %s15 = sadd.s32 1, %s11
  $region7: #{multiscale_forward.29} parent=0 // loop_footer_branch
    %10 = sbr.rel target = $region3
  $region8: #{multiscale_forward.29} parent=0 // loop_exit
    _

// kernel: multiscale_forward.31
$region0: #{multiscale_forward.31}
  #allocation0 [shape = 'u32[]', space=smem, size = 0x4, offset = 0x4, fixed_abs, tag = 'smem constant byte address 0x4 - core index']
  #allocation1 [shape = 'u32[72,128]{1,0:T(1,128)}', space=vmem, size = 0x9000, scoped, tag = 'internal scratch']
  %s0 = inlined_call_operand.vmem [shape: bf16[64,1024], index: 0, kind: input, shape index: {}]
  %s1 = inlined_call_operand.vmem [shape: bf16[1024,128], index: 1, kind: input, shape index: {}]
  %s2 = inlined_call_operand.vmem [shape: f32[1,128], index: 2, kind: input, shape index: {}]
  %s3 = inlined_call_operand.vmem [shape: f32[64,128], index: 3, kind: output, shape index: {}]
  %s4 = sld [smem:[#allocation0]]
  $region53: #{multiscale_forward.31} parent=0
    _
  %s6 = ssub.s32 1, %s4
  %s7 = scalar_select 0, %s6, %s4
  loop: start=0, step=1, limit=4
  $region2: #{multiscale_forward.31} parent=0 // loop_pre_header
    _
  $region3: #{multiscale_forward.31} parent=0 // loop_header
    %s9 = sphi 0, %s13
    %p10 = scmp.ge.s32.totalorder %s9, 4
    %s16 = sphi 0, %s35
    %s17 = sphi 0, %s31
    %s18 = sphi 0, %s27
    %s19 = sphi 0, %s16
    %s20 = sphi 0, %s17
    %s21 = sphi 0, %s18
    %s22 = sphi 0, %s19
    %s23 = sphi 0, %s20
    %s24 = sphi 0, %s21
    %s40 = sphi 0, %s42
    %s43 = sphi 0, %s40
    %s44 = sphi 0, %s43
    %s60 = sphi 0, %s44
    %s68 = sphi 0, %s70
    %s71 = sphi 0, %s68
    %s72 = sphi 0, %s71
    %s88 = sphi 0, %s72
    %s94 = sphi 0, %s96
    %s97 = sphi 0, %s94
    %s98 = sphi 0, %s97
    %s114 = sphi 0, %s98
    %s122 = sphi 0, %s124
    %s125 = sphi 0, %s122
    %s126 = sphi 0, %s125
    %s142 = sphi 0, %s126
  $region4: #{multiscale_forward.31} parent=0 // loop_header_branch
    %12 = sbr.rel (%p10) target = $region8
  $region5: #{multiscale_forward.31} parent=0 // loop_body
    %s14 = ssub.s32 %s9, 1
    %s15 = ssub.s32 %s9, 2
    %s25 = sadd.s32 1, %s18
    %p26 = scmp.ge.s32.totalorder %s25, 1
    %s27 = scalar_select %p26, 0, %s25
    %s28 = sadd.s32 1, %s17
    %s29 = scalar_select %p26, %s28, %s17
    %p30 = scmp.ge.s32.totalorder %s29, 1
    %s31 = scalar_select %p30, 0, %s29
    %s32 = sadd.s32 1, %s16
    %s33 = scalar_select %p30, %s32, %s16
    %p34 = scmp.ge.s32.totalorder %s33, 2
    %s35 = scalar_select %p34, 0, %s33
    %s36 = ssub.s32 %s16, %s35
    %s37 = ssub.s32 %s18, %s27
    %s38 = sor.u32 %s36, %s37
    %p39 = scmp.eq.s32.totalorder %s38, 0
    %s41 = sadd.s32 %s40, 1
    %s42 = scalar_select %p39, %s40, %s41
    %p45 = pneg %p39
    %p46 = scmp.eq.s32.totalorder %s9, 1
    %p47 = por %p45, %p46
    %p48 = scmp.ne.s32.totalorder %s40, %s43
    %p49 = scmp.eq.s32.totalorder %s9, 0
    %p50 = por %p48, %p49
    %p51 = scmp.ne.s32.totalorder %s40, %s43
    %p52 = scmp.eq.s32.totalorder %s14, 1
    %p53 = por %p51, %p52
    %p54 = scmp.ne.s32.totalorder %s43, %s44
    %p55 = scmp.eq.s32.totalorder %s14, 0
    %p56 = por %p54, %p55
    %p57 = scmp.ne.s32.totalorder %s43, %s44
    %p58 = scmp.eq.s32.totalorder %s15, 1
    %p59 = por %p57, %p58
    %p61 = scmp.ne.s32.totalorder %s44, %s60
    %p62 = scmp.eq.s32.totalorder %s15, 0
    %p63 = por %p61, %p62
    %s64 = ssub.s32 %s18, %s27
    %s65 = ssub.s32 %s17, %s31
    %s66 = sor.u32 %s64, %s65
    %p67 = scmp.eq.s32.totalorder %s66, 0
    %s69 = sadd.s32 %s68, 1
    %s70 = scalar_select %p67, %s68, %s69
    %p73 = pneg %p67
    %p74 = scmp.eq.s32.totalorder %s9, 1
    %p75 = por %p73, %p74
    %p76 = scmp.ne.s32.totalorder %s68, %s71
    %p77 = scmp.eq.s32.totalorder %s9, 0
    %p78 = por %p76, %p77
    %p79 = scmp.ne.s32.totalorder %s68, %s71
    %p80 = scmp.eq.s32.totalorder %s14, 1
    %p81 = por %p79, %p80
    %p82 = scmp.ne.s32.totalorder %s71, %s72
    %p83 = scmp.eq.s32.totalorder %s14, 0
    %p84 = por %p82, %p83
    %p85 = scmp.ne.s32.totalorder %s71, %s72
    %p86 = scmp.eq.s32.totalorder %s15, 1
    %p87 = por %p85, %p86
    %p89 = scmp.ne.s32.totalorder %s72, %s88
    %p90 = scmp.eq.s32.totalorder %s15, 0
    %p91 = por %p89, %p90
    %s92 = ssub.s32 %s17, %s31
    %p93 = scmp.eq.s32.totalorder %s92, 0
    %s95 = sadd.s32 %s94, 1
    %s96 = scalar_select %p93, %s94, %s95
    %p99 = pneg %p93
    %p100 = scmp.eq.s32.totalorder %s9, 1
    %p101 = por %p99, %p100
    %p102 = scmp.ne.s32.totalorder %s94, %s97
    %p103 = scmp.eq.s32.totalorder %s9, 0
    %p104 = por %p102, %p103
    %p105 = scmp.ne.s32.totalorder %s94, %s97
    %p106 = scmp.eq.s32.totalorder %s14, 1
    %p107 = por %p105, %p106
    %p108 = scmp.ne.s32.totalorder %s97, %s98
    %p109 = scmp.eq.s32.totalorder %s14, 0
    %p110 = por %p108, %p109
    %p111 = scmp.ne.s32.totalorder %s97, %s98
    %p112 = scmp.eq.s32.totalorder %s15, 1
    %p113 = por %p111, %p112
    %p115 = scmp.ne.s32.totalorder %s98, %s114
    %p116 = scmp.eq.s32.totalorder %s15, 0
    %p117 = por %p115, %p116
    %s118 = ssub.s32 %s16, %s35
    %s119 = ssub.s32 %s17, %s31
    %s120 = sor.u32 %s118, %s119
    %p121 = scmp.eq.s32.totalorder %s120, 0
    %s123 = sadd.s32 %s122, 1
    %s124 = scalar_select %p121, %s122, %s123
    %p127 = pneg %p121
    %p128 = scmp.eq.s32.totalorder %s9, 1
    %p129 = por %p127, %p128
    %p130 = scmp.ne.s32.totalorder %s122, %s125
    %p131 = scmp.eq.s32.totalorder %s9, 0
    %p132 = por %p130, %p131
    %p133 = scmp.ne.s32.totalorder %s122, %s125
    %p134 = scmp.eq.s32.totalorder %s14, 1
    %p135 = por %p133, %p134
    %p136 = scmp.ne.s32.totalorder %s125, %s126
    %p137 = scmp.eq.s32.totalorder %s14, 0
    %p138 = por %p136, %p137
    %p139 = scmp.ne.s32.totalorder %s125, %s126
    %p140 = scmp.eq.s32.totalorder %s15, 1
    %p141 = por %p139, %p140
    %p143 = scmp.ne.s32.totalorder %s126, %s142
    %p144 = scmp.eq.s32.totalorder %s15, 0
    %p145 = por %p143, %p144
    %p146 = scmp.le.s32.totalorder 1, %s9
    %p147 = scmp.lt.s32.totalorder %s9, 3
    %p148 = pnand %p146, %p147
    %p149 = pneg %p148
    // Predicated region
    $region9: #{multiscale_forward.31} parent=5 // pred_check
      _
    $region10: #{multiscale_forward.31} parent=5 // pred_check_branch
      %151 = sbr.rel (%p148) target = $region12
    $region11: #{multiscale_forward.31} parent=5 // pred_region
      %s152 = ssub.s32 %s9, 1
      // Predicated region
      $region13: #{multiscale_forward.31} parent=11 // pred_check
        %p153 = pneg %p84
      $region14: #{multiscale_forward.31} parent=11 // pred_check_branch
        %155 = sbr.rel (%p153) target = $region16
      $region15: #{multiscale_forward.31} parent=11 // pred_region
        %s156 = smul.u32 128, %s21
        %p157 = scmp.lt.s32.totalorder %s156, 127
        %s158 = scalar_select %p157, %s156, 127
        %p159 = scmp.lt.s32.totalorder %s20, 0
        %s160 = scalar_select %p159, %s20, 0
        %s161 = sadd.s32 %s160, %s158
        %s162 = smul.addr %s161, 4
        %s163 = scalar_lea.vmem %s1, %s162
        %s164 = smul.u32 128, %s21
      $region16: #{multiscale_forward.31} parent=11 // pred_fallthru
        _
      // Predicated region
      $region17: #{multiscale_forward.31} parent=11 // pred_check
        %p165 = pneg %p110
      $region18: #{multiscale_forward.31} parent=11 // pred_check_branch
        %167 = sbr.rel (%p165) target = $region20
      $region19: #{multiscale_forward.31} parent=11 // pred_region
        %p168 = scmp.lt.s32.totalorder %s20, 0
        %s169 = scalar_select %p168, %s20, 0
        %s170 = scalar_lea.vmem %s2, %s169
      $region20: #{multiscale_forward.31} parent=11 // pred_fallthru
        _
    $region12: #{multiscale_forward.31} parent=5 // pred_fallthru
      _
    %p171 = scmp.lt.s32.totalorder %s9, 2
    // Predicated region
    $region21: #{multiscale_forward.31} parent=5 // pred_check
      %p172 = pneg %p171
    $region22: #{multiscale_forward.31} parent=5 // pred_check_branch
      %174 = sbr.rel (%p172) target = $region24
    $region23: #{multiscale_forward.31} parent=5 // pred_region
      // Predicated region
      $region25: #{multiscale_forward.31} parent=23 // pred_check
        %p175 = pneg %p50
      $region26: #{multiscale_forward.31} parent=23 // pred_check_branch
        %177 = sbr.rel (%p175) target = $region28
      $region27: #{multiscale_forward.31} parent=23 // pred_region
        %s178 = smul.u32 4, %s16
        %s179 = smul.u32 8, %s18
        %p180 = scmp.lt.s32.totalorder %s178, 7
        %s181 = scalar_select %p180, %s178, 7
        %p182 = scmp.lt.s32.totalorder %s179, 7
        %s183 = scalar_select %p182, %s179, 7
        %s184 = smul.addr %s181, 8
        %s185 = sadd.s32 %s183, %s184
        %s186 = smul.addr %s185, 4
        %s187 = scalar_lea.vmem %s0, %s186
        %s188 = smul.u32 4, %s16
        %s189 = smul.u32 8, %s18
      $region28: #{multiscale_forward.31} parent=23 // pred_fallthru
        _
    $region24: #{multiscale_forward.31} parent=5 // pred_fallthru
      _
    %p190 = scmp.le.s32.totalorder 1, %s9
    %p191 = scmp.lt.s32.totalorder %s9, 3
    %p192 = pnand %p190, %p191
    %p193 = pneg %p192
    // Predicated region
    $region29: #{multiscale_forward.31} parent=5 // pred_check
      _
    $region30: #{multiscale_forward.31} parent=5 // pred_check_branch
      %195 = sbr.rel (%p192) target = $region32
    $region31: #{multiscale_forward.31} parent=5 // pred_region
      %s196 = ssub.s32 %s9, 1
      %s197 = smul.u32 4, %s19
      %s198 = smul.u32 8, %s21
      %p199 = scmp.lt.s32.totalorder %s197, 7
      %s200 = scalar_select %p199, %s197, 7
      %p201 = scmp.lt.s32.totalorder %s198, 7
      %s202 = scalar_select %p201, %s198, 7
      %s203 = smul.addr %s200, 8
      %s204 = sadd.s32 %s202, %s203
      %s205 = smul.addr %s204, 4
      %s206 = scalar_lea.vmem %s0, %s205
      %p207 = pneg %p56
      %p208 = pneg %p53
      %s209 = smul.u32 128, %s21
      %p210 = scmp.lt.s32.totalorder %s209, 127
      %s211 = scalar_select %p210, %s209, 127
      %p212 = scmp.lt.s32.totalorder %s20, 0
      %s213 = scalar_select %p212, %s20, 0
      %s214 = sadd.s32 %s213, %s211
      %s215 = smul.addr %s214, 4
      %s216 = scalar_lea.vmem %s1, %s215
      %p217 = pneg %p84
      %p218 = pneg %p81
      %p219 = scmp.lt.s32.totalorder %s20, 0
      %s220 = scalar_select %p219, %s20, 0
      %s221 = scalar_lea.vmem %s2, %s220
      %p222 = pneg %p110
      %p223 = pneg %p107
      %p224 = pneg %p138
      %p225 = pneg %p135
      %s226 = smul.u32 4, %s19
      %p227 = scmp.lt.s32.totalorder %s226, 7
      %s228 = scalar_select %p227, %s226, 7
      %p229 = scmp.lt.s32.totalorder %s20, 0
      %s230 = scalar_select %p229, %s20, 0
      %s231 = sadd.s32 %s230, %s228
      %s232 = smul.addr %s231, 8
      %s233 = scalar_lea.vmem %s3, %s232
      %s234 = smul.u32 4, %s19
      %s235 = smul.u32 8, %s21
      %p236 = scmp.lt.s32.totalorder %s234, 7
      %s237 = scalar_select %p236, %s234, 7
      %p238 = scmp.lt.s32.totalorder %s235, 7
      %s239 = scalar_select %p238, %s235, 7
      %s240 = smul.addr %s237, 8
      %s241 = sadd.s32 %s239, %s240
      %s242 = smul.addr %s241, 4
      %s243 = scalar_lea.vmem %s0, %s242
      %s244 = smul.u32 4, %s19
      %s245 = smul.u32 8, %s21
      %s246 = smul.u32 128, %s21
      %p247 = scmp.lt.s32.totalorder %s246, 127
      %s248 = scalar_select %p247, %s246, 127
      %p249 = scmp.lt.s32.totalorder %s20, 0
      %s250 = scalar_select %p249, %s20, 0
      %s251 = sadd.s32 %s250, %s248
      %s252 = smul.addr %s251, 4
      %s253 = scalar_lea.vmem %s1, %s252
      %s254 = smul.u32 128, %s21
      %p255 = scmp.lt.s32.totalorder %s20, 0
      %s256 = scalar_select %p255, %s20, 0
      %s257 = scalar_lea.vmem %s2, %s256
      %s258 = smul.u32 4, %s19
      %p259 = scmp.lt.s32.totalorder %s258, 7
      %s260 = scalar_select %p259, %s258, 7
      %p261 = scmp.lt.s32.totalorder %s20, 0
      %s262 = scalar_select %p261, %s20, 0
      %s263 = sadd.s32 %s262, %s260
      %s264 = smul.addr %s263, 8
      %s265 = scalar_lea.vmem %s3, %s264
      %s266 = smul.u32 4, %s19
      %p267 = scmp.eq.s32.totalorder %s21, 0
      // Predicated region
      $region33: #{multiscale_forward.31} parent=31 // pred_check
        %p268 = pneg %p267
      $region34: #{multiscale_forward.31} parent=31 // pred_check_branch
        %270 = sbr.rel (%p268) target = $region36
      $region35: #{multiscale_forward.31} parent=31 // pred_region
        %271 = vst [vmem:[%s265] sm:$0xff] 0.0
        %272 = vst [vmem:[%s265 + $0x8] sm:$0xff] 0.0
        %273 = vst [vmem:[%s265 + $0x10] sm:$0xff] 0.0
        %274 = vst [vmem:[%s265 + $0x18] sm:$0xff] 0.0
      $region36: #{multiscale_forward.31} parent=31 // pred_fallthru
        _
      %v275 = vld [vmem:[%s265] sm:$0xff]
      %v276 = vld [vmem:[%s265 + $0x8] sm:$0xff]
      %v277 = vld [vmem:[%s265 + $0x10] sm:$0xff]
      %v278 = vld [vmem:[%s265 + $0x18] sm:$0xff]
      %v279 = vld [vmem:[%s243] sm:$0xff]
      %v280 = vld [vmem:[%s243 + $0x8] sm:$0xff]
      %v281 = vld [vmem:[%s243 + $0x10] sm:$0xff]
      %v282 = vld [vmem:[%s243 + $0x18] sm:$0xff]
      %v283 = vld [vmem:[%s243 + $0x20] sm:$0xff]
      %v284 = vld [vmem:[%s243 + $0x28] sm:$0xff]
      %v285 = vld [vmem:[%s243 + $0x30] sm:$0xff]
      %v286 = vld [vmem:[%s243 + $0x38] sm:$0xff]
      %v287 = vld [vmem:[%s243 + $0x40] sm:$0xff]
      %v288 = vld [vmem:[%s243 + $0x48] sm:$0xff]
      %v289 = vld [vmem:[%s243 + $0x50] sm:$0xff]
      %v290 = vld [vmem:[%s243 + $0x58] sm:$0xff]
      %v291 = vld [vmem:[%s243 + $0x60] sm:$0xff]
      %v292 = vld [vmem:[%s243 + $0x68] sm:$0xff]
      %v293 = vld [vmem:[%s243 + $0x70] sm:$0xff]
      %v294 = vld [vmem:[%s243 + $0x78] sm:$0xff]
      %v295 = vld [vmem:[%s253] sm:$0xf]
      %v296 = vld [vmem:[%s253 + $0x4] sm:$0xf]
      %v297 = vld [vmem:[%s253 + $0x8] sm:$0xf]
      %v298 = vld [vmem:[%s253 + $0xc] sm:$0xf]
      %v299 = vld [vmem:[%s253 + $0x10] sm:$0xf]
      %v300 = vld [vmem:[%s253 + $0x14] sm:$0xf]
      %v301 = vld [vmem:[%s253 + $0x18] sm:$0xf]
      %v302 = vld [vmem:[%s253 + $0x1c] sm:$0xf]
      %v303 = vld [vmem:[%s253 + $0x20] sm:$0xf]
      %v304 = vld [vmem:[%s253 + $0x24] sm:$0xf]
      %v305 = vld [vmem:[%s253 + $0x28] sm:$0xf]
      %v306 = vld [vmem:[%s253 + $0x2c] sm:$0xf]
      %v307 = vld [vmem:[%s253 + $0x30] sm:$0xf]
      %v308 = vld [vmem:[%s253 + $0x34] sm:$0xf]
      %v309 = vld [vmem:[%s253 + $0x38] sm:$0xf]
      %v310 = vld [vmem:[%s253 + $0x3c] sm:$0xf]
      %v311 = vld [vmem:[%s253 + $0x40] sm:$0xf]
      %v312 = vld [vmem:[%s253 + $0x44] sm:$0xf]
      %v313 = vld [vmem:[%s253 + $0x48] sm:$0xf]
      %v314 = vld [vmem:[%s253 + $0x4c] sm:$0xf]
      %v315 = vld [vmem:[%s253 + $0x50] sm:$0xf]
      %v316 = vld [vmem:[%s253 + $0x54] sm:$0xf]
      %v317 = vld [vmem:[%s253 + $0x58] sm:$0xf]
      %v318 = vld [vmem:[%s253 + $0x5c] sm:$0xf]
      %v319 = vld [vmem:[%s253 + $0x60] sm:$0xf]
      %v320 = vld [vmem:[%s253 + $0x64] sm:$0xf]
      %v321 = vld [vmem:[%s253 + $0x68] sm:$0xf]
      %v322 = vld [vmem:[%s253 + $0x6c] sm:$0xf]
      %v323 = vld [vmem:[%s253 + $0x70] sm:$0xf]
      %v324 = vld [vmem:[%s253 + $0x74] sm:$0xf]
      %v325 = vld [vmem:[%s253 + $0x78] sm:$0xf]
      %v326 = vld [vmem:[%s253 + $0x7c] sm:$0xf]
      %v327 = vld [vmem:[%s253 + $0x80] sm:$0xf]
      %v328 = vld [vmem:[%s253 + $0x84] sm:$0xf]
      %v329 = vld [vmem:[%s253 + $0x88] sm:$0xf]
      %v330 = vld [vmem:[%s253 + $0x8c] sm:$0xf]
      %v331 = vld [vmem:[%s253 + $0x90] sm:$0xf]
      %v332 = vld [vmem:[%s253 + $0x94] sm:$0xf]
      %v333 = vld [vmem:[%s253 + $0x98] sm:$0xf]
      %v334 = vld [vmem:[%s253 + $0x9c] sm:$0xf]
      %v335 = vld [vmem:[%s253 + $0xa0] sm:$0xf]
      %v336 = vld [vmem:[%s253 + $0xa4] sm:$0xf]
      %v337 = vld [vmem:[%s253 + $0xa8] sm:$0xf]
      %v338 = vld [vmem:[%s253 + $0xac] sm:$0xf]
      %v339 = vld [vmem:[%s253 + $0xb0] sm:$0xf]
      %v340 = vld [vmem:[%s253 + $0xb4] sm:$0xf]
      %v341 = vld [vmem:[%s253 + $0xb8] sm:$0xf]
      %v342 = vld [vmem:[%s253 + $0xbc] sm:$0xf]
      %v343 = vld [vmem:[%s253 + $0xc0] sm:$0xf]
      %v344 = vld [vmem:[%s253 + $0xc4] sm:$0xf]
      %v345 = vld [vmem:[%s253 + $0xc8] sm:$0xf]
      %v346 = vld [vmem:[%s253 + $0xcc] sm:$0xf]
      %v347 = vld [vmem:[%s253 + $0xd0] sm:$0xf]
      %v348 = vld [vmem:[%s253 + $0xd4] sm:$0xf]
      %v349 = vld [vmem:[%s253 + $0xd8] sm:$0xf]
      %v350 = vld [vmem:[%s253 + $0xdc] sm:$0xf]
      %v351 = vld [vmem:[%s253 + $0xe0] sm:$0xf]
      %v352 = vld [vmem:[%s253 + $0xe4] sm:$0xf]
      %v353 = vld [vmem:[%s253 + $0xe8] sm:$0xf]
      %v354 = vld [vmem:[%s253 + $0xec] sm:$0xf]
      %v355 = vld [vmem:[%s253 + $0xf0] sm:$0xf]
      %v356 = vld [vmem:[%s253 + $0xf4] sm:$0xf]
      %v357 = vld [vmem:[%s253 + $0xf8] sm:$0xf]
      %v358 = vld [vmem:[%s253 + $0xfc] sm:$0xf]
      %v359 = vld [vmem:[%s253 + $0x100] sm:$0xf]
      %v360 = vld [vmem:[%s253 + $0x104] sm:$0xf]
      %v361 = vld [vmem:[%s253 + $0x108] sm:$0xf]
      %v362 = vld [vmem:[%s253 + $0x10c] sm:$0xf]
      %v363 = vld [vmem:[%s253 + $0x110] sm:$0xf]
      %v364 = vld [vmem:[%s253 + $0x114] sm:$0xf]
      %v365 = vld [vmem:[%s253 + $0x118] sm:$0xf]
      %v366 = vld [vmem:[%s253 + $0x11c] sm:$0xf]
      %v367 = vld [vmem:[%s253 + $0x120] sm:$0xf]
      %v368 = vld [vmem:[%s253 + $0x124] sm:$0xf]
      %v369 = vld [vmem:[%s253 + $0x128] sm:$0xf]
      %v370 = vld [vmem:[%s253 + $0x12c] sm:$0xf]
      %v371 = vld [vmem:[%s253 + $0x130] sm:$0xf]
      %v372 = vld [vmem:[%s253 + $0x134] sm:$0xf]
      %v373 = vld [vmem:[%s253 + $0x138] sm:$0xf]
      %v374 = vld [vmem:[%s253 + $0x13c] sm:$0xf]
      %v375 = vld [vmem:[%s253 + $0x140] sm:$0xf]
      %v376 = vld [vmem:[%s253 + $0x144] sm:$0xf]
      %v377 = vld [vmem:[%s253 + $0x148] sm:$0xf]
      %v378 = vld [vmem:[%s253 + $0x14c] sm:$0xf]
      %v379 = vld [vmem:[%s253 + $0x150] sm:$0xf]
      %v380 = vld [vmem:[%s253 + $0x154] sm:$0xf]
      %v381 = vld [vmem:[%s253 + $0x158] sm:$0xf]
      %v382 = vld [vmem:[%s253 + $0x15c] sm:$0xf]
      %v383 = vld [vmem:[%s253 + $0x160] sm:$0xf]
      %v384 = vld [vmem:[%s253 + $0x164] sm:$0xf]
      %v385 = vld [vmem:[%s253 + $0x168] sm:$0xf]
      %v386 = vld [vmem:[%s253 + $0x16c] sm:$0xf]
      %v387 = vld [vmem:[%s253 + $0x170] sm:$0xf]
      %v388 = vld [vmem:[%s253 + $0x174] sm:$0xf]
      %v389 = vld [vmem:[%s253 + $0x178] sm:$0xf]
      %v390 = vld [vmem:[%s253 + $0x17c] sm:$0xf]
      %v391 = vld [vmem:[%s253 + $0x180] sm:$0xf]
      %v392 = vld [vmem:[%s253 + $0x184] sm:$0xf]
      %v393 = vld [vmem:[%s253 + $0x188] sm:$0xf]
      %v394 = vld [vmem:[%s253 + $0x18c] sm:$0xf]
      %v395 = vld [vmem:[%s253 + $0x190] sm:$0xf]
      %v396 = vld [vmem:[%s253 + $0x194] sm:$0xf]
      %v397 = vld [vmem:[%s253 + $0x198] sm:$0xf]
      %v398 = vld [vmem:[%s253 + $0x19c] sm:$0xf]
      %v399 = vld [vmem:[%s253 + $0x1a0] sm:$0xf]
      %v400 = vld [vmem:[%s253 + $0x1a4] sm:$0xf]
      %v401 = vld [vmem:[%s253 + $0x1a8] sm:$0xf]
      %v402 = vld [vmem:[%s253 + $0x1ac] sm:$0xf]
      %v403 = vld [vmem:[%s253 + $0x1b0] sm:$0xf]
      %v404 = vld [vmem:[%s253 + $0x1b4] sm:$0xf]
      %v405 = vld [vmem:[%s253 + $0x1b8] sm:$0xf]
      %v406 = vld [vmem:[%s253 + $0x1bc] sm:$0xf]
      %v407 = vld [vmem:[%s253 + $0x1c0] sm:$0xf]
      %v408 = vld [vmem:[%s253 + $0x1c4] sm:$0xf]
      %v409 = vld [vmem:[%s253 + $0x1c8] sm:$0xf]
      %v410 = vld [vmem:[%s253 + $0x1cc] sm:$0xf]
      %v411 = vld [vmem:[%s253 + $0x1d0] sm:$0xf]
      %v412 = vld [vmem:[%s253 + $0x1d4] sm:$0xf]
      %v413 = vld [vmem:[%s253 + $0x1d8] sm:$0xf]
      %v414 = vld [vmem:[%s253 + $0x1dc] sm:$0xf]
      %v415 = vld [vmem:[%s253 + $0x1e0] sm:$0xf]
      %v416 = vld [vmem:[%s253 + $0x1e4] sm:$0xf]
      %v417 = vld [vmem:[%s253 + $0x1e8] sm:$0xf]
      %v418 = vld [vmem:[%s253 + $0x1ec] sm:$0xf]
      %v419 = vld [vmem:[%s253 + $0x1f0] sm:$0xf]
      %v420 = vld [vmem:[%s253 + $0x1f4] sm:$0xf]
      %v421 = vld [vmem:[%s253 + $0x1f8] sm:$0xf]
      %v422 = vld [vmem:[%s253 + $0x1fc] sm:$0xf]
      %v439 = vunpack.c.l.b16 %v279
      %v440 = vunpack.c.h.b16 %v279
      %v441 = vunpack.c.l.b16 %v280
      %v442 = vunpack.c.h.b16 %v280
      %v443 = vunpack.c.l.b16 %v281
      %v444 = vunpack.c.h.b16 %v281
      %v445 = vunpack.c.l.b16 %v282
      %v446 = vunpack.c.h.b16 %v282
      %v447 = vunpack.c.l.b16 %v283
      %v448 = vunpack.c.h.b16 %v283
      %v449 = vunpack.c.l.b16 %v284
      %v450 = vunpack.c.h.b16 %v284
      %v451 = vunpack.c.l.b16 %v285
      %v452 = vunpack.c.h.b16 %v285
      %v453 = vunpack.c.l.b16 %v286
      %v454 = vunpack.c.h.b16 %v286
      %v455 = vunpack.c.l.b16 %v287
      %v456 = vunpack.c.h.b16 %v287
      %v457 = vunpack.c.l.b16 %v288
      %v458 = vunpack.c.h.b16 %v288
      %v459 = vunpack.c.l.b16 %v289
      %v460 = vunpack.c.h.b16 %v289
      %v461 = vunpack.c.l.b16 %v290
      %v462 = vunpack.c.h.b16 %v290
      %v463 = vunpack.c.l.b16 %v291
      %v464 = vunpack.c.h.b16 %v291
      %v465 = vunpack.c.l.b16 %v292
      %v466 = vunpack.c.h.b16 %v292
      %v467 = vunpack.c.l.b16 %v293
      %v468 = vunpack.c.h.b16 %v293
      %v469 = vunpack.c.l.b16 %v294
      %v470 = vunpack.c.h.b16 %v294
      %v471 = vpack.c.b16 %v447, %v439
      %v472 = vpack.c.b16 %v448, %v440
      %v473 = vpack.c.b16 %v449, %v441
      %v474 = vpack.c.b16 %v450, %v442
      %v475 = vpack.c.b16 %v451, %v443
      %v476 = vpack.c.b16 %v452, %v444
      %v477 = vpack.c.b16 %v453, %v445
      %v478 = vpack.c.b16 %v454, %v446
      %v479 = vpack.c.b16 %v463, %v455
      %v480 = vpack.c.b16 %v464, %v456
      %v481 = vpack.c.b16 %v465, %v457
      %v482 = vpack.c.b16 %v466, %v458
      %v483 = vpack.c.b16 %v467, %v459
      %v484 = vpack.c.b16 %v468, %v460
      %v485 = vpack.c.b16 %v469, %v461
      %v486 = vpack.c.b16 %v470, %v462
      %v631 = vunpack.c.l.b16 %v295
      %v632 = vunpack.c.l.b16 %v296
      %v633 = vunpack.c.l.b16 %v297
      %v634 = vunpack.c.l.b16 %v298
      %v635 = vunpack.c.l.b16 %v299
      %v636 = vunpack.c.l.b16 %v300
      %v637 = vunpack.c.l.b16 %v301
      %v638 = vunpack.c.l.b16 %v302
      %v639 = vunpack.c.l.b16 %v303
      %v640 = vunpack.c.l.b16 %v304
      %v641 = vunpack.c.l.b16 %v305
      %v642 = vunpack.c.l.b16 %v306
      %v643 = vunpack.c.l.b16 %v307
      %v644 = vunpack.c.l.b16 %v308
      %v645 = vunpack.c.l.b16 %v309
      %v646 = vunpack.c.l.b16 %v310
      %v647 = vunpack.c.l.b16 %v311
      %v648 = vunpack.c.l.b16 %v312
      %v649 = vunpack.c.l.b16 %v313
      %v650 = vunpack.c.l.b16 %v314
      %v651 = vunpack.c.l.b16 %v315
      %v652 = vunpack.c.l.b16 %v316
      %v653 = vunpack.c.l.b16 %v317
      %v654 = vunpack.c.l.b16 %v318
      %v655 = vunpack.c.l.b16 %v319
      %v656 = vunpack.c.l.b16 %v320
      %v657 = vunpack.c.l.b16 %v321
      %v658 = vunpack.c.l.b16 %v322
      %v659 = vunpack.c.l.b16 %v323
      %v660 = vunpack.c.l.b16 %v324
      %v661 = vunpack.c.l.b16 %v325
      %v662 = vunpack.c.l.b16 %v326
      %v663 = vunpack.c.l.b16 %v327
      %v664 = vunpack.c.l.b16 %v328
      %v665 = vunpack.c.l.b16 %v329
      %v666 = vunpack.c.l.b16 %v330
      %v667 = vunpack.c.l.b16 %v331
      %v668 = vunpack.c.l.b16 %v332
      %v669 = vunpack.c.l.b16 %v333
      %v670 = vunpack.c.l.b16 %v334
      %v671 = vunpack.c.l.b16 %v335
      %v672 = vunpack.c.l.b16 %v336
      %v673 = vunpack.c.l.b16 %v337
      %v674 = vunpack.c.l.b16 %v338
      %v675 = vunpack.c.l.b16 %v339
      %v676 = vunpack.c.l.b16 %v340
      %v677 = vunpack.c.l.b16 %v341
      %v678 = vunpack.c.l.b16 %v342
      %v679 = vunpack.c.l.b16 %v343
      %v680 = vunpack.c.l.b16 %v344
      %v681 = vunpack.c.l.b16 %v345
      %v682 = vunpack.c.l.b16 %v346
      %v683 = vunpack.c.l.b16 %v347
      %v684 = vunpack.c.l.b16 %v348
      %v685 = vunpack.c.l.b16 %v349
      %v686 = vunpack.c.l.b16 %v350
      %v687 = vunpack.c.l.b16 %v351
      %v688 = vunpack.c.l.b16 %v352
      %v689 = vunpack.c.l.b16 %v353
      %v690 = vunpack.c.l.b16 %v354
      %v691 = vunpack.c.l.b16 %v355
      %v692 = vunpack.c.l.b16 %v356
      %v693 = vunpack.c.l.b16 %v357
      %v694 = vunpack.c.l.b16 %v358
      %v695 = vunpack.c.l.b16 %v359
      %v696 = vunpack.c.l.b16 %v360
      %v697 = vunpack.c.l.b16 %v361
      %v698 = vunpack.c.l.b16 %v362
      %v699 = vunpack.c.l.b16 %v363
      %v700 = vunpack.c.l.b16 %v364
      %v701 = vunpack.c.l.b16 %v365
      %v702 = vunpack.c.l.b16 %v366
      %v703 = vunpack.c.l.b16 %v367
      %v704 = vunpack.c.l.b16 %v368
      %v705 = vunpack.c.l.b16 %v369
      %v706 = vunpack.c.l.b16 %v370
      %v707 = vunpack.c.l.b16 %v371
      %v708 = vunpack.c.l.b16 %v372
      %v709 = vunpack.c.l.b16 %v373
      %v710 = vunpack.c.l.b16 %v374
      %v711 = vunpack.c.l.b16 %v375
      %v712 = vunpack.c.l.b16 %v376
      %v713 = vunpack.c.l.b16 %v377
      %v714 = vunpack.c.l.b16 %v378
      %v715 = vunpack.c.l.b16 %v379
      %v716 = vunpack.c.l.b16 %v380
      %v717 = vunpack.c.l.b16 %v381
      %v718 = vunpack.c.l.b16 %v382
      %v719 = vunpack.c.l.b16 %v383
      %v720 = vunpack.c.l.b16 %v384
      %v721 = vunpack.c.l.b16 %v385
      %v722 = vunpack.c.l.b16 %v386
      %v723 = vunpack.c.l.b16 %v387
      %v724 = vunpack.c.l.b16 %v388
      %v725 = vunpack.c.l.b16 %v389
      %v726 = vunpack.c.l.b16 %v390
      %v727 = vunpack.c.l.b16 %v391
      %v728 = vunpack.c.l.b16 %v392
      %v729 = vunpack.c.l.b16 %v393
      %v730 = vunpack.c.l.b16 %v394
      %v731 = vunpack.c.l.b16 %v395
      %v732 = vunpack.c.l.b16 %v396
      %v733 = vunpack.c.l.b16 %v397
      %v734 = vunpack.c.l.b16 %v398
      %v735 = vunpack.c.l.b16 %v399
      %v736 = vunpack.c.l.b16 %v400
      %v737 = vunpack.c.l.b16 %v401
      %v738 = vunpack.c.l.b16 %v402
      %v739 = vunpack.c.l.b16 %v403
      %v740 = vunpack.c.l.b16 %v404
      %v741 = vunpack.c.l.b16 %v405
      %v742 = vunpack.c.l.b16 %v406
      %v743 = vunpack.c.l.b16 %v407
      %v744 = vunpack.c.l.b16 %v408
      %v745 = vunpack.c.l.b16 %v409
      %v746 = vunpack.c.l.b16 %v410
      %v747 = vunpack.c.l.b16 %v411
      %v748 = vunpack.c.l.b16 %v412
      %v749 = vunpack.c.l.b16 %v413
      %v750 = vunpack.c.l.b16 %v414
      %v751 = vunpack.c.l.b16 %v415
      %v752 = vunpack.c.l.b16 %v416
      %v753 = vunpack.c.l.b16 %v417
      %v754 = vunpack.c.l.b16 %v418
      %v755 = vunpack.c.l.b16 %v419
      %v756 = vunpack.c.l.b16 %v420
      %v757 = vunpack.c.l.b16 %v421
      %v758 = vunpack.c.l.b16 %v422
      %v759 = vpack.c.b16 %v632, %v631
      %v760 = vpack.c.b16 %v634, %v633
      %v761 = vpack.c.b16 %v636, %v635
      %v762 = vpack.c.b16 %v638, %v637
      %v763 = vpack.c.b16 %v640, %v639
      %v764 = vpack.c.b16 %v642, %v641
      %v765 = vpack.c.b16 %v644, %v643
      %v766 = vpack.c.b16 %v646, %v645
      %v767 = vpack.c.b16 %v648, %v647
      %v768 = vpack.c.b16 %v650, %v649
      %v769 = vpack.c.b16 %v652, %v651
      %v770 = vpack.c.b16 %v654, %v653
      %v771 = vpack.c.b16 %v656, %v655
      %v772 = vpack.c.b16 %v658, %v657
      %v773 = vpack.c.b16 %v660, %v659
      %v774 = vpack.c.b16 %v662, %v661
      %v775 = vpack.c.b16 %v664, %v663
      %v776 = vpack.c.b16 %v666, %v665
      %v777 = vpack.c.b16 %v668, %v667
      %v778 = vpack.c.b16 %v670, %v669
      %v779 = vpack.c.b16 %v672, %v671
      %v780 = vpack.c.b16 %v674, %v673
      %v781 = vpack.c.b16 %v676, %v675
      %v782 = vpack.c.b16 %v678, %v677
      %v783 = vpack.c.b16 %v680, %v679
      %v784 = vpack.c.b16 %v682, %v681
      %v785 = vpack.c.b16 %v684, %v683
      %v786 = vpack.c.b16 %v686, %v685
      %v787 = vpack.c.b16 %v688, %v687
      %v788 = vpack.c.b16 %v690, %v689
      %v789 = vpack.c.b16 %v692, %v691
      %v790 = vpack.c.b16 %v694, %v693
      %v791 = vpack.c.b16 %v696, %v695
      %v792 = vpack.c.b16 %v698, %v697
      %v793 = vpack.c.b16 %v700, %v699
      %v794 = vpack.c.b16 %v702, %v701
      %v795 = vpack.c.b16 %v704, %v703
      %v796 = vpack.c.b16 %v706, %v705
      %v797 = vpack.c.b16 %v708, %v707
      %v798 = vpack.c.b16 %v710, %v709
      %v799 = vpack.c.b16 %v712, %v711
      %v800 = vpack.c.b16 %v714, %v713
      %v801 = vpack.c.b16 %v716, %v715
      %v802 = vpack.c.b16 %v718, %v717
      %v803 = vpack.c.b16 %v720, %v719
      %v804 = vpack.c.b16 %v722, %v721
      %v805 = vpack.c.b16 %v724, %v723
      %v806 = vpack.c.b16 %v726, %v725
      %v807 = vpack.c.b16 %v728, %v727
      %v808 = vpack.c.b16 %v730, %v729
      %v809 = vpack.c.b16 %v732, %v731
      %v810 = vpack.c.b16 %v734, %v733
      %v811 = vpack.c.b16 %v736, %v735
      %v812 = vpack.c.b16 %v738, %v737
      %v813 = vpack.c.b16 %v740, %v739
      %v814 = vpack.c.b16 %v742, %v741
      %v815 = vpack.c.b16 %v744, %v743
      %v816 = vpack.c.b16 %v746, %v745
      %v817 = vpack.c.b16 %v748, %v747
      %v818 = vpack.c.b16 %v750, %v749
      %v819 = vpack.c.b16 %v752, %v751
      %v820 = vpack.c.b16 %v754, %v753
      %v821 = vpack.c.b16 %v756, %v755
      %v822 = vpack.c.b16 %v758, %v757
      %887 = vmatpush.bf16.msra.mxu0 %v766
      %888 = vmatpush.bf16.msra.mxu0 %v765
      %889 = vmatpush.bf16.msra.mxu0 %v764
      %890 = vmatpush.bf16.msra.mxu0 %v763
      %891 = vmatpush.bf16.msra.mxu0 %v762
      %892 = vmatpush.bf16.msra.mxu0 %v761
      %893 = vmatpush.bf16.msra.mxu0 %v760
      %894 = vmatpush.bf16.msra.mxu0 %v759
      %895 = vmatmul.bf16.gmra.mxu0 %v471
      %v896 = vpop.f32.mrf.mxu0
      %v897 = vadd.f32 0.0, %v896
      %v898 = vpop.f32.mrf.mxu0
      %v899 = vadd.f32 0.0, %v898
      %900 = vmatmul.bf16.gmra.mxu0 %v479
      %v901 = vpop.f32.mrf.mxu0
      %v902 = vadd.f32 0.0, %v901
      %v903 = vpop.f32.mrf.mxu0
      %v904 = vadd.f32 0.0, %v903
      %905 = vdwg.mxu0
      %906 = vmatpush.bf16.msra.mxu0 %v774
      %907 = vmatpush.bf16.msra.mxu0 %v773
      %908 = vmatpush.bf16.msra.mxu0 %v772
      %909 = vmatpush.bf16.msra.mxu0 %v771
      %910 = vmatpush.bf16.msra.mxu0 %v770
      %911 = vmatpush.bf16.msra.mxu0 %v769
      %912 = vmatpush.bf16.msra.mxu0 %v768
      %913 = vmatpush.bf16.msra.mxu0 %v767
      %914 = vmatmul.bf16.gmra.mxu0 %v472
      %v915 = vpop.f32.mrf.mxu0
      %v916 = vadd.f32 %v897, %v915
      %v917 = vpop.f32.mrf.mxu0
      %v918 = vadd.f32 %v899, %v917
      %919 = vmatmul.bf16.gmra.mxu0 %v480
      %v920 = vpop.f32.mrf.mxu0
      %v921 = vadd.f32 %v902, %v920
      %v922 = vpop.f32.mrf.mxu0
      %v923 = vadd.f32 %v904, %v922
      %924 = vdwg.mxu0
      %925 = vmatpush.bf16.msra.mxu0 %v782
      %926 = vmatpush.bf16.msra.mxu0 %v781
      %927 = vmatpush.bf16.msra.mxu0 %v780
      %928 = vmatpush.bf16.msra.mxu0 %v779
      %929 = vmatpush.bf16.msra.mxu0 %v778
      %930 = vmatpush.bf16.msra.mxu0 %v777
      %931 = vmatpush.bf16.msra.mxu0 %v776
      %932 = vmatpush.bf16.msra.mxu0 %v775
      %933 = vmatmul.bf16.gmra.mxu0 %v473
      %v934 = vpop.f32.mrf.mxu0
      %v935 = vadd.f32 %v916, %v934
      %v936 = vpop.f32.mrf.mxu0
      %v937 = vadd.f32 %v918, %v936
      %938 = vmatmul.bf16.gmra.mxu0 %v481
      %v939 = vpop.f32.mrf.mxu0
      %v940 = vadd.f32 %v921, %v939
      %v941 = vpop.f32.mrf.mxu0
      %v942 = vadd.f32 %v923, %v941
      %943 = vdwg.mxu0
      %944 = vmatpush.bf16.msra.mxu0 %v790
      %945 = vmatpush.bf16.msra.mxu0 %v789
      %946 = vmatpush.bf16.msra.mxu0 %v788
      %947 = vmatpush.bf16.msra.mxu0 %v787
      %948 = vmatpush.bf16.msra.mxu0 %v786
      %949 = vmatpush.bf16.msra.mxu0 %v785
      %950 = vmatpush.bf16.msra.mxu0 %v784
      %951 = vmatpush.bf16.msra.mxu0 %v783
      %952 = vmatmul.bf16.gmra.mxu0 %v474
      %v953 = vpop.f32.mrf.mxu0
      %v954 = vadd.f32 %v935, %v953
      %v955 = vpop.f32.mrf.mxu0
      %v956 = vadd.f32 %v937, %v955
      %957 = vmatmul.bf16.gmra.mxu0 %v482
      %v958 = vpop.f32.mrf.mxu0
      %v959 = vadd.f32 %v940, %v958
      %v960 = vpop.f32.mrf.mxu0
      %v961 = vadd.f32 %v942, %v960
      %962 = vdwg.mxu0
      %963 = vmatpush.bf16.msra.mxu0 %v798
      %964 = vmatpush.bf16.msra.mxu0 %v797
      %965 = vmatpush.bf16.msra.mxu0 %v796
      %966 = vmatpush.bf16.msra.mxu0 %v795
      %967 = vmatpush.bf16.msra.mxu0 %v794
      %968 = vmatpush.bf16.msra.mxu0 %v793
      %969 = vmatpush.bf16.msra.mxu0 %v792
      %970 = vmatpush.bf16.msra.mxu0 %v791
      %971 = vmatmul.bf16.gmra.mxu0 %v475
      %v972 = vpop.f32.mrf.mxu0
      %v973 = vadd.f32 %v954, %v972
      %v974 = vpop.f32.mrf.mxu0
      %v975 = vadd.f32 %v956, %v974
      %976 = vmatmul.bf16.gmra.mxu0 %v483
      %v977 = vpop.f32.mrf.mxu0
      %v978 = vadd.f32 %v959, %v977
      %v979 = vpop.f32.mrf.mxu0
      %v980 = vadd.f32 %v961, %v979
      %981 = vdwg.mxu0
      %982 = vmatpush.bf16.msra.mxu0 %v806
      %983 = vmatpush.bf16.msra.mxu0 %v805
      %984 = vmatpush.bf16.msra.mxu0 %v804
      %985 = vmatpush.bf16.msra.mxu0 %v803
      %986 = vmatpush.bf16.msra.mxu0 %v802
      %987 = vmatpush.bf16.msra.mxu0 %v801
      %988 = vmatpush.bf16.msra.mxu0 %v800
      %989 = vmatpush.bf16.msra.mxu0 %v799
      %990 = vmatmul.bf16.gmra.mxu0 %v476
      %v991 = vpop.f32.mrf.mxu0
      %v992 = vadd.f32 %v973, %v991
      %v993 = vpop.f32.mrf.mxu0
      %v994 = vadd.f32 %v975, %v993
      %995 = vmatmul.bf16.gmra.mxu0 %v484
      %v996 = vpop.f32.mrf.mxu0
      %v997 = vadd.f32 %v978, %v996
      %v998 = vpop.f32.mrf.mxu0
      %v999 = vadd.f32 %v980, %v998
      %1000 = vdwg.mxu0
      %1001 = vmatpush.bf16.msra.mxu0 %v814
      %1002 = vmatpush.bf16.msra.mxu0 %v813
      %1003 = vmatpush.bf16.msra.mxu0 %v812
      %1004 = vmatpush.bf16.msra.mxu0 %v811
      %1005 = vmatpush.bf16.msra.mxu0 %v810
      %1006 = vmatpush.bf16.msra.mxu0 %v809
      %1007 = vmatpush.bf16.msra.mxu0 %v808
      %1008 = vmatpush.bf16.msra.mxu0 %v807
      %1009 = vmatmul.bf16.gmra.mxu0 %v477
      %v1010 = vpop.f32.mrf.mxu0
      %v1011 = vadd.f32 %v992, %v1010
      %v1012 = vpop.f32.mrf.mxu0
      %v1013 = vadd.f32 %v994, %v1012
      %1014 = vmatmul.bf16.gmra.mxu0 %v485
      %v1015 = vpop.f32.mrf.mxu0
      %v1016 = vadd.f32 %v997, %v1015
      %v1017 = vpop.f32.mrf.mxu0
      %v1018 = vadd.f32 %v999, %v1017
      %1019 = vdwg.mxu0
      %1020 = vmatpush.bf16.msra.mxu0 %v822
      %1021 = vmatpush.bf16.msra.mxu0 %v821
      %1022 = vmatpush.bf16.msra.mxu0 %v820
      %1023 = vmatpush.bf16.msra.mxu0 %v819
      %1024 = vmatpush.bf16.msra.mxu0 %v818
      %1025 = vmatpush.bf16.msra.mxu0 %v817
      %1026 = vmatpush.bf16.msra.mxu0 %v816
      %1027 = vmatpush.bf16.msra.mxu0 %v815
      %1028 = vmatmul.bf16.gmra.mxu0 %v478
      %v1029 = vpop.f32.mrf.mxu0
      %v1030 = vadd.f32 %v1011, %v1029
      %v1031 = vpop.f32.mrf.mxu0
      %v1032 = vadd.f32 %v1013, %v1031
      %1033 = vmatmul.bf16.gmra.mxu0 %v486
      %v1034 = vpop.f32.mrf.mxu0
      %v1035 = vadd.f32 %v1016, %v1034
      %v1036 = vpop.f32.mrf.mxu0
      %v1037 = vadd.f32 %v1018, %v1036
      %1038 = vdwg.mxu0
      %v1039 = vadd.f32 %v275, %v1030
      %v1040 = vadd.f32 %v276, %v1032
      %v1041 = vadd.f32 %v277, %v1035
      %v1042 = vadd.f32 %v278, %v1037
      %1043 = vst [vmem:[%s265] sm:$0xff] %v1039
      %1044 = vst [vmem:[%s265 + $0x8] sm:$0xff] %v1040
      %1045 = vst [vmem:[%s265 + $0x10] sm:$0xff] %v1041
      %1046 = vst [vmem:[%s265 + $0x18] sm:$0xff] %v1042
      // Predicated region
      $region37: #{multiscale_forward.31} parent=31 // pred_check
        %p1047 = pneg %p267
      $region38: #{multiscale_forward.31} parent=31 // pred_check_branch
        %1049 = sbr.rel (%p1047) target = $region40
      $region39: #{multiscale_forward.31} parent=31 // pred_region
        %v1050 = vld [vmem:[%s265] sm:$0xff]
        %v1051 = vld [vmem:[%s265 + $0x8] sm:$0xff]
        %v1052 = vld [vmem:[%s265 + $0x10] sm:$0xff]
        %v1053 = vld [vmem:[%s265 + $0x18] sm:$0xff]
        %v1054 = vld [vmem:[%s257] sm:$0x1]
        %v1056 = vperm.slane %v1054, 0
        %v1058 = vadd.f32 %v1050, %v1056
        %v1059 = vadd.f32 %v1051, %v1056
        %v1060 = vadd.f32 %v1052, %v1056
        %v1061 = vadd.f32 %v1053, %v1056
        %1062 = vst [vmem:[%s265] sm:$0xff] %v1058
        %1063 = vst [vmem:[%s265 + $0x8] sm:$0xff] %v1059
        %1064 = vst [vmem:[%s265 + $0x10] sm:$0xff] %v1060
        %1065 = vst [vmem:[%s265 + $0x18] sm:$0xff] %v1061
      $region40: #{multiscale_forward.31} parent=31 // pred_fallthru
        _
      %s1066 = smul.u32 4, %s19
      %p1067 = scmp.lt.s32.totalorder %s1066, 7
      %s1068 = scalar_select %p1067, %s1066, 7
      %p1069 = scmp.lt.s32.totalorder %s20, 0
      %s1070 = scalar_select %p1069, %s20, 0
      %s1071 = sadd.s32 %s1070, %s1068
      %s1072 = smul.addr %s1071, 8
      %s1073 = scalar_lea.vmem %s3, %s1072
      // Predicated region
      $region41: #{multiscale_forward.31} parent=31 // pred_check
        %p1074 = pneg %p135
      $region42: #{multiscale_forward.31} parent=31 // pred_check_branch
        %1076 = sbr.rel (%p1074) target = $region44
      $region43: #{multiscale_forward.31} parent=31 // pred_region
        %s1077 = smul.u32 4, %s19
      $region44: #{multiscale_forward.31} parent=31 // pred_fallthru
        _
    $region32: #{multiscale_forward.31} parent=5 // pred_fallthru
      _
    %p1078 = scmp.le.s32.totalorder 2, %s9
    // Predicated region
    $region45: #{multiscale_forward.31} parent=5 // pred_check
      %p1079 = pneg %p1078
    $region46: #{multiscale_forward.31} parent=5 // pred_check_branch
      %1081 = sbr.rel (%p1079) target = $region48
    $region47: #{multiscale_forward.31} parent=5 // pred_region
      %s1082 = ssub.s32 %s9, 2
      // Predicated region
      $region49: #{multiscale_forward.31} parent=47 // pred_check
        %p1083 = pneg %p141
      $region50: #{multiscale_forward.31} parent=47 // pred_check_branch
        %1085 = sbr.rel (%p1083) target = $region52
      $region51: #{multiscale_forward.31} parent=47 // pred_region
        %s1086 = smul.u32 4, %s22
        %p1087 = scmp.lt.s32.totalorder %s1086, 7
        %s1088 = scalar_select %p1087, %s1086, 7
        %p1089 = scmp.lt.s32.totalorder %s23, 0
        %s1090 = scalar_select %p1089, %s23, 0
        %s1091 = sadd.s32 %s1090, %s1088
        %s1092 = smul.addr %s1091, 8
        %s1093 = scalar_lea.vmem %s3, %s1092
      $region52: #{multiscale_forward.31} parent=47 // pred_fallthru
        _
    $region48: #{multiscale_forward.31} parent=5 // pred_fallthru
      _
  $region6: #{multiscale_forward.31} parent=0 // loop_footer
    %s13 = sadd.s32 1, %s9
  $region7: #{multiscale_forward.31} parent=0 // loop_footer_branch
    %8 = sbr.rel target = $region3
  $region8: #{multiscale_forward.31} parent=0 // loop_exit
    _

// kernel: multiscale_forward.32
$region0: #{multiscale_forward.32}
  #allocation0 [shape = 'u32[]', space=smem, size = 0x4, offset = 0x4, fixed_abs, tag = 'smem constant byte address 0x4 - core index']
  #allocation1 [shape = 'u32[72,128]{1,0:T(1,128)}', space=vmem, size = 0x9000, scoped, tag = 'internal scratch']
  #allocation2 [shape = 'f32[32,128]{1,0:T(8,128)}', space=vmem, size = 0x4000, scoped, tag = 'scratch operand']
  %s0 = inlined_call_operand.vmem [shape: bf16[64,128], index: 0, kind: input, shape index: {}]
  %s1 = inlined_call_operand.vmem [shape: bf16[128,128], index: 1, kind: input, shape index: {}]
  %s2 = inlined_call_operand.vmem [shape: f32[1,128], index: 2, kind: input, shape index: {}]
  %s3 = inlined_call_operand.vmem [shape: bf16[64,128], index: 3, kind: output, shape index: {}]
  %s4 = sld [smem:[#allocation0]]
  $region53: #{multiscale_forward.32} parent=0
    _
  %s6 = ssub.s32 1, %s4
  %s7 = scalar_select 0, %s6, %s4
  loop: start=0, step=1, limit=4
  $region2: #{multiscale_forward.32} parent=0 // loop_pre_header
    _
  $region3: #{multiscale_forward.32} parent=0 // loop_header
    %s9 = sphi 0, %s13
    %p10 = scmp.ge.s32.totalorder %s9, 4
    %s16 = sphi 0, %s35
    %s17 = sphi 0, %s31
    %s18 = sphi 0, %s27
    %s19 = sphi 0, %s16
    %s20 = sphi 0, %s17
    %s21 = sphi 0, %s18
    %s22 = sphi 0, %s19
    %s23 = sphi 0, %s20
    %s24 = sphi 0, %s21
    %s40 = sphi 0, %s42
    %s43 = sphi 0, %s40
    %s44 = sphi 0, %s43
    %s60 = sphi 0, %s44
    %s68 = sphi 0, %s70
    %s71 = sphi 0, %s68
    %s72 = sphi 0, %s71
    %s88 = sphi 0, %s72
    %s94 = sphi 0, %s96
    %s97 = sphi 0, %s94
    %s98 = sphi 0, %s97
    %s114 = sphi 0, %s98
    %s122 = sphi 0, %s124
    %s125 = sphi 0, %s122
    %s126 = sphi 0, %s125
    %s142 = sphi 0, %s126
  $region4: #{multiscale_forward.32} parent=0 // loop_header_branch
    %12 = sbr.rel (%p10) target = $region8
  $region5: #{multiscale_forward.32} parent=0 // loop_body
    %s14 = ssub.s32 %s9, 1
    %s15 = ssub.s32 %s9, 2
    %s25 = sadd.s32 1, %s18
    %p26 = scmp.ge.s32.totalorder %s25, 1
    %s27 = scalar_select %p26, 0, %s25
    %s28 = sadd.s32 1, %s17
    %s29 = scalar_select %p26, %s28, %s17
    %p30 = scmp.ge.s32.totalorder %s29, 1
    %s31 = scalar_select %p30, 0, %s29
    %s32 = sadd.s32 1, %s16
    %s33 = scalar_select %p30, %s32, %s16
    %p34 = scmp.ge.s32.totalorder %s33, 2
    %s35 = scalar_select %p34, 0, %s33
    %s36 = ssub.s32 %s16, %s35
    %s37 = ssub.s32 %s18, %s27
    %s38 = sor.u32 %s36, %s37
    %p39 = scmp.eq.s32.totalorder %s38, 0
    %s41 = sadd.s32 %s40, 1
    %s42 = scalar_select %p39, %s40, %s41
    %p45 = pneg %p39
    %p46 = scmp.eq.s32.totalorder %s9, 1
    %p47 = por %p45, %p46
    %p48 = scmp.ne.s32.totalorder %s40, %s43
    %p49 = scmp.eq.s32.totalorder %s9, 0
    %p50 = por %p48, %p49
    %p51 = scmp.ne.s32.totalorder %s40, %s43
    %p52 = scmp.eq.s32.totalorder %s14, 1
    %p53 = por %p51, %p52
    %p54 = scmp.ne.s32.totalorder %s43, %s44
    %p55 = scmp.eq.s32.totalorder %s14, 0
    %p56 = por %p54, %p55
    %p57 = scmp.ne.s32.totalorder %s43, %s44
    %p58 = scmp.eq.s32.totalorder %s15, 1
    %p59 = por %p57, %p58
    %p61 = scmp.ne.s32.totalorder %s44, %s60
    %p62 = scmp.eq.s32.totalorder %s15, 0
    %p63 = por %p61, %p62
    %s64 = ssub.s32 %s18, %s27
    %s65 = ssub.s32 %s17, %s31
    %s66 = sor.u32 %s64, %s65
    %p67 = scmp.eq.s32.totalorder %s66, 0
    %s69 = sadd.s32 %s68, 1
    %s70 = scalar_select %p67, %s68, %s69
    %p73 = pneg %p67
    %p74 = scmp.eq.s32.totalorder %s9, 1
    %p75 = por %p73, %p74
    %p76 = scmp.ne.s32.totalorder %s68, %s71
    %p77 = scmp.eq.s32.totalorder %s9, 0
    %p78 = por %p76, %p77
    %p79 = scmp.ne.s32.totalorder %s68, %s71
    %p80 = scmp.eq.s32.totalorder %s14, 1
    %p81 = por %p79, %p80
    %p82 = scmp.ne.s32.totalorder %s71, %s72
    %p83 = scmp.eq.s32.totalorder %s14, 0
    %p84 = por %p82, %p83
    %p85 = scmp.ne.s32.totalorder %s71, %s72
    %p86 = scmp.eq.s32.totalorder %s15, 1
    %p87 = por %p85, %p86
    %p89 = scmp.ne.s32.totalorder %s72, %s88
    %p90 = scmp.eq.s32.totalorder %s15, 0
    %p91 = por %p89, %p90
    %s92 = ssub.s32 %s17, %s31
    %p93 = scmp.eq.s32.totalorder %s92, 0
    %s95 = sadd.s32 %s94, 1
    %s96 = scalar_select %p93, %s94, %s95
    %p99 = pneg %p93
    %p100 = scmp.eq.s32.totalorder %s9, 1
    %p101 = por %p99, %p100
    %p102 = scmp.ne.s32.totalorder %s94, %s97
    %p103 = scmp.eq.s32.totalorder %s9, 0
    %p104 = por %p102, %p103
    %p105 = scmp.ne.s32.totalorder %s94, %s97
    %p106 = scmp.eq.s32.totalorder %s14, 1
    %p107 = por %p105, %p106
    %p108 = scmp.ne.s32.totalorder %s97, %s98
    %p109 = scmp.eq.s32.totalorder %s14, 0
    %p110 = por %p108, %p109
    %p111 = scmp.ne.s32.totalorder %s97, %s98
    %p112 = scmp.eq.s32.totalorder %s15, 1
    %p113 = por %p111, %p112
    %p115 = scmp.ne.s32.totalorder %s98, %s114
    %p116 = scmp.eq.s32.totalorder %s15, 0
    %p117 = por %p115, %p116
    %s118 = ssub.s32 %s16, %s35
    %s119 = ssub.s32 %s17, %s31
    %s120 = sor.u32 %s118, %s119
    %p121 = scmp.eq.s32.totalorder %s120, 0
    %s123 = sadd.s32 %s122, 1
    %s124 = scalar_select %p121, %s122, %s123
    %p127 = pneg %p121
    %p128 = scmp.eq.s32.totalorder %s9, 1
    %p129 = por %p127, %p128
    %p130 = scmp.ne.s32.totalorder %s122, %s125
    %p131 = scmp.eq.s32.totalorder %s9, 0
    %p132 = por %p130, %p131
    %p133 = scmp.ne.s32.totalorder %s122, %s125
    %p134 = scmp.eq.s32.totalorder %s14, 1
    %p135 = por %p133, %p134
    %p136 = scmp.ne.s32.totalorder %s125, %s126
    %p137 = scmp.eq.s32.totalorder %s14, 0
    %p138 = por %p136, %p137
    %p139 = scmp.ne.s32.totalorder %s125, %s126
    %p140 = scmp.eq.s32.totalorder %s15, 1
    %p141 = por %p139, %p140
    %p143 = scmp.ne.s32.totalorder %s126, %s142
    %p144 = scmp.eq.s32.totalorder %s15, 0
    %p145 = por %p143, %p144
    %p146 = scmp.le.s32.totalorder 1, %s9
    %p147 = scmp.lt.s32.totalorder %s9, 3
    %p148 = pnand %p146, %p147
    %p149 = pneg %p148
    // Predicated region
    $region9: #{multiscale_forward.32} parent=5 // pred_check
      _
    $region10: #{multiscale_forward.32} parent=5 // pred_check_branch
      %151 = sbr.rel (%p148) target = $region12
    $region11: #{multiscale_forward.32} parent=5 // pred_region
      %s152 = ssub.s32 %s9, 1
      // Predicated region
      $region13: #{multiscale_forward.32} parent=11 // pred_check
        %p153 = pneg %p84
      $region14: #{multiscale_forward.32} parent=11 // pred_check_branch
        %155 = sbr.rel (%p153) target = $region16
      $region15: #{multiscale_forward.32} parent=11 // pred_region
        %s156 = smul.u32 16, %s21
        %p157 = scmp.lt.s32.totalorder %s156, 15
        %s158 = scalar_select %p157, %s156, 15
        %p159 = scmp.lt.s32.totalorder %s20, 0
        %s160 = scalar_select %p159, %s20, 0
        %s161 = sadd.s32 %s160, %s158
        %s162 = smul.addr %s161, 4
        %s163 = scalar_lea.vmem %s1, %s162
        %s164 = smul.u32 16, %s21
      $region16: #{multiscale_forward.32} parent=11 // pred_fallthru
        _
      // Predicated region
      $region17: #{multiscale_forward.32} parent=11 // pred_check
        %p165 = pneg %p110
      $region18: #{multiscale_forward.32} parent=11 // pred_check_branch
        %167 = sbr.rel (%p165) target = $region20
      $region19: #{multiscale_forward.32} parent=11 // pred_region
        %p168 = scmp.lt.s32.totalorder %s20, 0
        %s169 = scalar_select %p168, %s20, 0
        %s170 = scalar_lea.vmem %s2, %s169
      $region20: #{multiscale_forward.32} parent=11 // pred_fallthru
        _
    $region12: #{multiscale_forward.32} parent=5 // pred_fallthru
      _
    %p171 = scmp.lt.s32.totalorder %s9, 2
    // Predicated region
    $region21: #{multiscale_forward.32} parent=5 // pred_check
      %p172 = pneg %p171
    $region22: #{multiscale_forward.32} parent=5 // pred_check_branch
      %174 = sbr.rel (%p172) target = $region24
    $region23: #{multiscale_forward.32} parent=5 // pred_region
      // Predicated region
      $region25: #{multiscale_forward.32} parent=23 // pred_check
        %p175 = pneg %p50
      $region26: #{multiscale_forward.32} parent=23 // pred_check_branch
        %177 = sbr.rel (%p175) target = $region28
      $region27: #{multiscale_forward.32} parent=23 // pred_region
        %s178 = smul.u32 4, %s16
        %p179 = scmp.lt.s32.totalorder %s178, 7
        %s180 = scalar_select %p179, %s178, 7
        %p181 = scmp.lt.s32.totalorder %s18, 0
        %s182 = scalar_select %p181, %s18, 0
        %s183 = sadd.s32 %s182, %s180
        %s184 = smul.addr %s183, 4
        %s185 = scalar_lea.vmem %s0, %s184
        %s186 = smul.u32 4, %s16
      $region28: #{multiscale_forward.32} parent=23 // pred_fallthru
        _
    $region24: #{multiscale_forward.32} parent=5 // pred_fallthru
      _
    %p187 = scmp.le.s32.totalorder 1, %s9
    %p188 = scmp.lt.s32.totalorder %s9, 3
    %p189 = pnand %p187, %p188
    %p190 = pneg %p189
    // Predicated region
    $region29: #{multiscale_forward.32} parent=5 // pred_check
      _
    $region30: #{multiscale_forward.32} parent=5 // pred_check_branch
      %192 = sbr.rel (%p189) target = $region32
    $region31: #{multiscale_forward.32} parent=5 // pred_region
      %s193 = ssub.s32 %s9, 1
      %s194 = smul.u32 4, %s19
      %p195 = scmp.lt.s32.totalorder %s194, 7
      %s196 = scalar_select %p195, %s194, 7
      %p197 = scmp.lt.s32.totalorder %s21, 0
      %s198 = scalar_select %p197, %s21, 0
      %s199 = sadd.s32 %s198, %s196
      %s200 = smul.addr %s199, 4
      %s201 = scalar_lea.vmem %s0, %s200
      %p202 = pneg %p56
      %p203 = pneg %p53
      %s204 = smul.u32 16, %s21
      %p205 = scmp.lt.s32.totalorder %s204, 15
      %s206 = scalar_select %p205, %s204, 15
      %p207 = scmp.lt.s32.totalorder %s20, 0
      %s208 = scalar_select %p207, %s20, 0
      %s209 = sadd.s32 %s208, %s206
      %s210 = smul.addr %s209, 4
      %s211 = scalar_lea.vmem %s1, %s210
      %p212 = pneg %p84
      %p213 = pneg %p81
      %p214 = scmp.lt.s32.totalorder %s20, 0
      %s215 = scalar_select %p214, %s20, 0
      %s216 = scalar_lea.vmem %s2, %s215
      %p217 = pneg %p110
      %p218 = pneg %p107
      %p219 = pneg %p138
      %p220 = pneg %p135
      %s221 = smul.u32 4, %s19
      %p222 = scmp.lt.s32.totalorder %s221, 7
      %s223 = scalar_select %p222, %s221, 7
      %p224 = scmp.lt.s32.totalorder %s20, 0
      %s225 = scalar_select %p224, %s20, 0
      %s226 = sadd.s32 %s225, %s223
      %s227 = smul.addr %s226, 4
      %s228 = scalar_lea.vmem %s3, %s227
      %s229 = smul.u32 4, %s19
      %p230 = scmp.lt.s32.totalorder %s229, 7
      %s231 = scalar_select %p230, %s229, 7
      %p232 = scmp.lt.s32.totalorder %s21, 0
      %s233 = scalar_select %p232, %s21, 0
      %s234 = sadd.s32 %s233, %s231
      %s235 = smul.addr %s234, 4
      %s236 = scalar_lea.vmem %s0, %s235
      %s237 = smul.u32 4, %s19
      %s238 = smul.u32 16, %s21
      %p239 = scmp.lt.s32.totalorder %s238, 15
      %s240 = scalar_select %p239, %s238, 15
      %p241 = scmp.lt.s32.totalorder %s20, 0
      %s242 = scalar_select %p241, %s20, 0
      %s243 = sadd.s32 %s242, %s240
      %s244 = smul.addr %s243, 4
      %s245 = scalar_lea.vmem %s1, %s244
      %s246 = smul.u32 16, %s21
      %p247 = scmp.lt.s32.totalorder %s20, 0
      %s248 = scalar_select %p247, %s20, 0
      %s249 = scalar_lea.vmem %s2, %s248
      %s250 = smul.u32 4, %s19
      %p251 = scmp.lt.s32.totalorder %s250, 7
      %s252 = scalar_select %p251, %s250, 7
      %p253 = scmp.lt.s32.totalorder %s20, 0
      %s254 = scalar_select %p253, %s20, 0
      %s255 = sadd.s32 %s254, %s252
      %s256 = smul.addr %s255, 4
      %s257 = scalar_lea.vmem %s3, %s256
      %s258 = smul.u32 4, %s19
      %p259 = scmp.eq.s32.totalorder %s21, 0
      // Predicated region
      $region33: #{multiscale_forward.32} parent=31 // pred_check
        %p260 = pneg %p259
      $region34: #{multiscale_forward.32} parent=31 // pred_check_branch
        %262 = sbr.rel (%p260) target = $region36
      $region35: #{multiscale_forward.32} parent=31 // pred_region
        %263 = vst [vmem:[#allocation2] sm:$0xff] 0.0
        %264 = vst [vmem:[#allocation2 + $0x8] sm:$0xff] 0.0
        %265 = vst [vmem:[#allocation2 + $0x10] sm:$0xff] 0.0
        %266 = vst [vmem:[#allocation2 + $0x18] sm:$0xff] 0.0
      $region36: #{multiscale_forward.32} parent=31 // pred_fallthru
        _
      %v267 = vld [vmem:[#allocation2] sm:$0xff]
      %v268 = vld [vmem:[#allocation2 + $0x8] sm:$0xff]
      %v269 = vld [vmem:[#allocation2 + $0x10] sm:$0xff]
      %v270 = vld [vmem:[#allocation2 + $0x18] sm:$0xff]
      %v271 = vld [vmem:[%s236] sm:$0xf]
      %v272 = vld [vmem:[%s236 + $0x4] sm:$0xf]
      %v273 = vld [vmem:[%s236 + $0x8] sm:$0xf]
      %v274 = vld [vmem:[%s236 + $0xc] sm:$0xf]
      %v275 = vld [vmem:[%s245] sm:$0xf]
      %v276 = vld [vmem:[%s245 + $0x4] sm:$0xf]
      %v277 = vld [vmem:[%s245 + $0x8] sm:$0xf]
      %v278 = vld [vmem:[%s245 + $0xc] sm:$0xf]
      %v279 = vld [vmem:[%s245 + $0x10] sm:$0xf]
      %v280 = vld [vmem:[%s245 + $0x14] sm:$0xf]
      %v281 = vld [vmem:[%s245 + $0x18] sm:$0xf]
      %v282 = vld [vmem:[%s245 + $0x1c] sm:$0xf]
      %v283 = vld [vmem:[%s245 + $0x20] sm:$0xf]
      %v284 = vld [vmem:[%s245 + $0x24] sm:$0xf]
      %v285 = vld [vmem:[%s245 + $0x28] sm:$0xf]
      %v286 = vld [vmem:[%s245 + $0x2c] sm:$0xf]
      %v287 = vld [vmem:[%s245 + $0x30] sm:$0xf]
      %v288 = vld [vmem:[%s245 + $0x34] sm:$0xf]
      %v289 = vld [vmem:[%s245 + $0x38] sm:$0xf]
      %v290 = vld [vmem:[%s245 + $0x3c] sm:$0xf]
      %v295 = vunpack.c.l.b16 %v271
      %v296 = vunpack.c.l.b16 %v272
      %v297 = vunpack.c.l.b16 %v273
      %v298 = vunpack.c.l.b16 %v274
      %v299 = vpack.c.b16 %v296, %v295
      %v300 = vpack.c.b16 %v298, %v297
      %v319 = vunpack.c.l.b16 %v275
      %v320 = vunpack.c.l.b16 %v276
      %v321 = vunpack.c.l.b16 %v277
      %v322 = vunpack.c.l.b16 %v278
      %v323 = vunpack.c.l.b16 %v279
      %v324 = vunpack.c.l.b16 %v280
      %v325 = vunpack.c.l.b16 %v281
      %v326 = vunpack.c.l.b16 %v282
      %v327 = vunpack.c.l.b16 %v283
      %v328 = vunpack.c.l.b16 %v284
      %v329 = vunpack.c.l.b16 %v285
      %v330 = vunpack.c.l.b16 %v286
      %v331 = vunpack.c.l.b16 %v287
      %v332 = vunpack.c.l.b16 %v288
      %v333 = vunpack.c.l.b16 %v289
      %v334 = vunpack.c.l.b16 %v290
      %v335 = vpack.c.b16 %v320, %v319
      %v336 = vpack.c.b16 %v322, %v321
      %v337 = vpack.c.b16 %v324, %v323
      %v338 = vpack.c.b16 %v326, %v325
      %v339 = vpack.c.b16 %v328, %v327
      %v340 = vpack.c.b16 %v330, %v329
      %v341 = vpack.c.b16 %v332, %v331
      %v342 = vpack.c.b16 %v334, %v333
      %351 = vmatpush.bf16.msra.mxu0 %v342
      %352 = vmatpush.bf16.msra.mxu0 %v341
      %353 = vmatpush.bf16.msra.mxu0 %v340
      %354 = vmatpush.bf16.msra.mxu0 %v339
      %355 = vmatpush.bf16.msra.mxu0 %v338
      %356 = vmatpush.bf16.msra.mxu0 %v337
      %357 = vmatpush.bf16.msra.mxu0 %v336
      %358 = vmatpush.bf16.msra.mxu0 %v335
      %359 = vmatmul.bf16.gmra.mxu0 %v299
      %v360 = vpop.f32.mrf.mxu0
      %v361 = vadd.f32 0.0, %v360
      %v362 = vpop.f32.mrf.mxu0
      %v363 = vadd.f32 0.0, %v362
      %364 = vmatmul.bf16.gmra.mxu0 %v300
      %v365 = vpop.f32.mrf.mxu0
      %v366 = vadd.f32 0.0, %v365
      %v367 = vpop.f32.mrf.mxu0
      %v368 = vadd.f32 0.0, %v367
      %369 = vdwg.mxu0
      %v370 = vadd.f32 %v267, %v361
      %v371 = vadd.f32 %v268, %v363
      %v372 = vadd.f32 %v269, %v366
      %v373 = vadd.f32 %v270, %v368
      %374 = vst [vmem:[#allocation2] sm:$0xff] %v370
      %375 = vst [vmem:[#allocation2 + $0x8] sm:$0xff] %v371
      %376 = vst [vmem:[#allocation2 + $0x10] sm:$0xff] %v372
      %377 = vst [vmem:[#allocation2 + $0x18] sm:$0xff] %v373
      // Predicated region
      $region37: #{multiscale_forward.32} parent=31 // pred_check
        %p378 = pneg %p259
      $region38: #{multiscale_forward.32} parent=31 // pred_check_branch
        %380 = sbr.rel (%p378) target = $region40
      $region39: #{multiscale_forward.32} parent=31 // pred_region
        %v381 = vld [vmem:[#allocation2] sm:$0xff]
        %v382 = vld [vmem:[#allocation2 + $0x8] sm:$0xff]
        %v383 = vld [vmem:[#allocation2 + $0x10] sm:$0xff]
        %v384 = vld [vmem:[#allocation2 + $0x18] sm:$0xff]
        %v385 = vld [vmem:[%s249] sm:$0x1]
        %v387 = vperm.slane %v385, 0
        %v389 = vadd.f32 %v381, %v387
        %v390 = vadd.f32 %v382, %v387
        %v391 = vadd.f32 %v383, %v387
        %v392 = vadd.f32 %v384, %v387
        %vm393 = vcmp.ge.f32.partialorder %v389, 0.0
        %vm394 = vcmp.ge.f32.partialorder %v390, 0.0
        %vm395 = vcmp.ge.f32.partialorder %v391, 0.0
        %vm396 = vcmp.ge.f32.partialorder %v392, 0.0
        %v397 = vmul.f32 %v389, 0.2
        %v398 = vmul.f32 %v390, 0.2
        %v399 = vmul.f32 %v391, 0.2
        %v400 = vmul.f32 %v392, 0.2
        %v401 = vsel %vm393, %v389, %v397
        %v402 = vsel %vm394, %v390, %v398
        %v403 = vsel %vm395, %v391, %v399
        %v404 = vsel %vm396, %v392, %v400
        %v405 = vpack.c.bf16 %v401, %v401
        %v406 = vpack.c.bf16 %v402, %v402
        %v407 = vpack.c.bf16 %v403, %v403
        %v408 = vpack.c.bf16 %v404, %v404
        %409 = vst [vmem:[%s257] sm:$0xf] %v405
        %410 = vst [vmem:[%s257 + $0x4] sm:$0xf] %v406
        %411 = vst [vmem:[%s257 + $0x8] sm:$0xf] %v407
        %412 = vst [vmem:[%s257 + $0xc] sm:$0xf] %v408
      $region40: #{multiscale_forward.32} parent=31 // pred_fallthru
        _
      %s413 = smul.u32 4, %s19
      %p414 = scmp.lt.s32.totalorder %s413, 7
      %s415 = scalar_select %p414, %s413, 7
      %p416 = scmp.lt.s32.totalorder %s20, 0
      %s417 = scalar_select %p416, %s20, 0
      %s418 = sadd.s32 %s417, %s415
      %s419 = smul.addr %s418, 4
      %s420 = scalar_lea.vmem %s3, %s419
      // Predicated region
      $region41: #{multiscale_forward.32} parent=31 // pred_check
        %p421 = pneg %p135
      $region42: #{multiscale_forward.32} parent=31 // pred_check_branch
        %423 = sbr.rel (%p421) target = $region44
      $region43: #{multiscale_forward.32} parent=31 // pred_region
        %s424 = smul.u32 4, %s19
      $region44: #{multiscale_forward.32} parent=31 // pred_fallthru
        _
    $region32: #{multiscale_forward.32} parent=5 // pred_fallthru
      _
    %p425 = scmp.le.s32.totalorder 2, %s9
    // Predicated region
    $region45: #{multiscale_forward.32} parent=5 // pred_check
      %p426 = pneg %p425
    $region46: #{multiscale_forward.32} parent=5 // pred_check_branch
      %428 = sbr.rel (%p426) target = $region48
    $region47: #{multiscale_forward.32} parent=5 // pred_region
      %s429 = ssub.s32 %s9, 2
      // Predicated region
      $region49: #{multiscale_forward.32} parent=47 // pred_check
        %p430 = pneg %p141
      $region50: #{multiscale_forward.32} parent=47 // pred_check_branch
        %432 = sbr.rel (%p430) target = $region52
      $region51: #{multiscale_forward.32} parent=47 // pred_region
        %s433 = smul.u32 4, %s22
        %p434 = scmp.lt.s32.totalorder %s433, 7
        %s435 = scalar_select %p434, %s433, 7
        %p436 = scmp.lt.s32.totalorder %s23, 0
        %s437 = scalar_select %p436, %s23, 0
        %s438 = sadd.s32 %s437, %s435
        %s439 = smul.addr %s438, 4
        %s440 = scalar_lea.vmem %s3, %s439
      $region52: #{multiscale_forward.32} parent=47 // pred_fallthru
        _
    $region48: #{multiscale_forward.32} parent=5 // pred_fallthru
      _
  $region6: #{multiscale_forward.32} parent=0 // loop_footer
    %s13 = sadd.s32 1, %s9
  $region7: #{multiscale_forward.32} parent=0 // loop_footer_branch
    %8 = sbr.rel target = $region3
  $region8: #{multiscale_forward.32} parent=0 // loop_exit
    _

// kernel: multiscale_forward.33
$region0: #{multiscale_forward.33}
  #allocation0 [shape = 'u32[]', space=smem, size = 0x4, offset = 0x4, fixed_abs, tag = 'smem constant byte address 0x4 - core index']
  #allocation1 [shape = 'u32[72,128]{1,0:T(1,128)}', space=vmem, size = 0x9000, scoped, tag = 'internal scratch']
  %s0 = inlined_call_operand.vmem [shape: bf16[32,128], index: 0, kind: input, shape index: {}]
  %s1 = inlined_call_operand.vmem [shape: bf16[128,128], index: 1, kind: input, shape index: {}]
  %s2 = inlined_call_operand.vmem [shape: f32[1,128], index: 2, kind: input, shape index: {}]
  %s3 = inlined_call_operand.vmem [shape: f32[32,128], index: 3, kind: output, shape index: {0}]
  %s4 = inlined_call_operand.vmem [shape: f32[16,128], index: 4, kind: output, shape index: {1}]
  %5 = xla_tuple %s3, %s4
  %s6 = sld [smem:[#allocation0]]
  $region61: #{multiscale_forward.33} parent=0
    _
  %s8 = ssub.s32 1, %s6
  %s9 = scalar_select 0, %s8, %s6
  loop: start=0, step=1, limit=4
  $region2: #{multiscale_forward.33} parent=0 // loop_pre_header
    _
  $region3: #{multiscale_forward.33} parent=0 // loop_header
    %s11 = sphi 0, %s15
    %p12 = scmp.ge.s32.totalorder %s11, 4
    %s18 = sphi 0, %s37
    %s19 = sphi 0, %s33
    %s20 = sphi 0, %s29
    %s21 = sphi 0, %s18
    %s22 = sphi 0, %s19
    %s23 = sphi 0, %s20
    %s24 = sphi 0, %s21
    %s25 = sphi 0, %s22
    %s26 = sphi 0, %s23
    %s42 = sphi 0, %s44
    %s45 = sphi 0, %s42
    %s46 = sphi 0, %s45
    %s62 = sphi 0, %s46
    %s70 = sphi 0, %s72
    %s73 = sphi 0, %s70
    %s74 = sphi 0, %s73
    %s90 = sphi 0, %s74
    %s96 = sphi 0, %s98
    %s99 = sphi 0, %s96
    %s100 = sphi 0, %s99
    %s116 = sphi 0, %s100
    %s124 = sphi 0, %s126
    %s127 = sphi 0, %s124
    %s128 = sphi 0, %s127
    %s144 = sphi 0, %s128
    %s152 = sphi 0, %s154
    %s155 = sphi 0, %s152
    %s156 = sphi 0, %s155
    %s172 = sphi 0, %s156
  $region4: #{multiscale_forward.33} parent=0 // loop_header_branch
    %14 = sbr.rel (%p12) target = $region8
  $region5: #{multiscale_forward.33} parent=0 // loop_body
    %s16 = ssub.s32 %s11, 1
    %s17 = ssub.s32 %s11, 2
    %s27 = sadd.s32 1, %s20
    %p28 = scmp.ge.s32.totalorder %s27, 1
    %s29 = scalar_select %p28, 0, %s27
    %s30 = sadd.s32 1, %s19
    %s31 = scalar_select %p28, %s30, %s19
    %p32 = scmp.ge.s32.totalorder %s31, 1
    %s33 = scalar_select %p32, 0, %s31
    %s34 = sadd.s32 1, %s18
    %s35 = scalar_select %p32, %s34, %s18
    %p36 = scmp.ge.s32.totalorder %s35, 2
    %s37 = scalar_select %p36, 0, %s35
    %s38 = ssub.s32 %s18, %s37
    %s39 = ssub.s32 %s20, %s29
    %s40 = sor.u32 %s38, %s39
    %p41 = scmp.eq.s32.totalorder %s40, 0
    %s43 = sadd.s32 %s42, 1
    %s44 = scalar_select %p41, %s42, %s43
    %p47 = pneg %p41
    %p48 = scmp.eq.s32.totalorder %s11, 1
    %p49 = por %p47, %p48
    %p50 = scmp.ne.s32.totalorder %s42, %s45
    %p51 = scmp.eq.s32.totalorder %s11, 0
    %p52 = por %p50, %p51
    %p53 = scmp.ne.s32.totalorder %s42, %s45
    %p54 = scmp.eq.s32.totalorder %s16, 1
    %p55 = por %p53, %p54
    %p56 = scmp.ne.s32.totalorder %s45, %s46
    %p57 = scmp.eq.s32.totalorder %s16, 0
    %p58 = por %p56, %p57
    %p59 = scmp.ne.s32.totalorder %s45, %s46
    %p60 = scmp.eq.s32.totalorder %s17, 1
    %p61 = por %p59, %p60
    %p63 = scmp.ne.s32.totalorder %s46, %s62
    %p64 = scmp.eq.s32.totalorder %s17, 0
    %p65 = por %p63, %p64
    %s66 = ssub.s32 %s20, %s29
    %s67 = ssub.s32 %s19, %s33
    %s68 = sor.u32 %s66, %s67
    %p69 = scmp.eq.s32.totalorder %s68, 0
    %s71 = sadd.s32 %s70, 1
    %s72 = scalar_select %p69, %s70, %s71
    %p75 = pneg %p69
    %p76 = scmp.eq.s32.totalorder %s11, 1
    %p77 = por %p75, %p76
    %p78 = scmp.ne.s32.totalorder %s70, %s73
    %p79 = scmp.eq.s32.totalorder %s11, 0
    %p80 = por %p78, %p79
    %p81 = scmp.ne.s32.totalorder %s70, %s73
    %p82 = scmp.eq.s32.totalorder %s16, 1
    %p83 = por %p81, %p82
    %p84 = scmp.ne.s32.totalorder %s73, %s74
    %p85 = scmp.eq.s32.totalorder %s16, 0
    %p86 = por %p84, %p85
    %p87 = scmp.ne.s32.totalorder %s73, %s74
    %p88 = scmp.eq.s32.totalorder %s17, 1
    %p89 = por %p87, %p88
    %p91 = scmp.ne.s32.totalorder %s74, %s90
    %p92 = scmp.eq.s32.totalorder %s17, 0
    %p93 = por %p91, %p92
    %s94 = ssub.s32 %s19, %s33
    %p95 = scmp.eq.s32.totalorder %s94, 0
    %s97 = sadd.s32 %s96, 1
    %s98 = scalar_select %p95, %s96, %s97
    %p101 = pneg %p95
    %p102 = scmp.eq.s32.totalorder %s11, 1
    %p103 = por %p101, %p102
    %p104 = scmp.ne.s32.totalorder %s96, %s99
    %p105 = scmp.eq.s32.totalorder %s11, 0
    %p106 = por %p104, %p105
    %p107 = scmp.ne.s32.totalorder %s96, %s99
    %p108 = scmp.eq.s32.totalorder %s16, 1
    %p109 = por %p107, %p108
    %p110 = scmp.ne.s32.totalorder %s99, %s100
    %p111 = scmp.eq.s32.totalorder %s16, 0
    %p112 = por %p110, %p111
    %p113 = scmp.ne.s32.totalorder %s99, %s100
    %p114 = scmp.eq.s32.totalorder %s17, 1
    %p115 = por %p113, %p114
    %p117 = scmp.ne.s32.totalorder %s100, %s116
    %p118 = scmp.eq.s32.totalorder %s17, 0
    %p119 = por %p117, %p118
    %s120 = ssub.s32 %s18, %s37
    %s121 = ssub.s32 %s19, %s33
    %s122 = sor.u32 %s120, %s121
    %p123 = scmp.eq.s32.totalorder %s122, 0
    %s125 = sadd.s32 %s124, 1
    %s126 = scalar_select %p123, %s124, %s125
    %p129 = pneg %p123
    %p130 = scmp.eq.s32.totalorder %s11, 1
    %p131 = por %p129, %p130
    %p132 = scmp.ne.s32.totalorder %s124, %s127
    %p133 = scmp.eq.s32.totalorder %s11, 0
    %p134 = por %p132, %p133
    %p135 = scmp.ne.s32.totalorder %s124, %s127
    %p136 = scmp.eq.s32.totalorder %s16, 1
    %p137 = por %p135, %p136
    %p138 = scmp.ne.s32.totalorder %s127, %s128
    %p139 = scmp.eq.s32.totalorder %s16, 0
    %p140 = por %p138, %p139
    %p141 = scmp.ne.s32.totalorder %s127, %s128
    %p142 = scmp.eq.s32.totalorder %s17, 1
    %p143 = por %p141, %p142
    %p145 = scmp.ne.s32.totalorder %s128, %s144
    %p146 = scmp.eq.s32.totalorder %s17, 0
    %p147 = por %p145, %p146
    %s148 = ssub.s32 %s18, %s37
    %s149 = ssub.s32 %s19, %s33
    %s150 = sor.u32 %s148, %s149
    %p151 = scmp.eq.s32.totalorder %s150, 0
    %s153 = sadd.s32 %s152, 1
    %s154 = scalar_select %p151, %s152, %s153
    %p157 = pneg %p151
    %p158 = scmp.eq.s32.totalorder %s11, 1
    %p159 = por %p157, %p158
    %p160 = scmp.ne.s32.totalorder %s152, %s155
    %p161 = scmp.eq.s32.totalorder %s11, 0
    %p162 = por %p160, %p161
    %p163 = scmp.ne.s32.totalorder %s152, %s155
    %p164 = scmp.eq.s32.totalorder %s16, 1
    %p165 = por %p163, %p164
    %p166 = scmp.ne.s32.totalorder %s155, %s156
    %p167 = scmp.eq.s32.totalorder %s16, 0
    %p168 = por %p166, %p167
    %p169 = scmp.ne.s32.totalorder %s155, %s156
    %p170 = scmp.eq.s32.totalorder %s17, 1
    %p171 = por %p169, %p170
    %p173 = scmp.ne.s32.totalorder %s156, %s172
    %p174 = scmp.eq.s32.totalorder %s17, 0
    %p175 = por %p173, %p174
    %p176 = scmp.le.s32.totalorder 1, %s11
    %p177 = scmp.lt.s32.totalorder %s11, 3
    %p178 = pnand %p176, %p177
    %p179 = pneg %p178
    // Predicated region
    $region9: #{multiscale_forward.33} parent=5 // pred_check
      _
    $region10: #{multiscale_forward.33} parent=5 // pred_check_branch
      %181 = sbr.rel (%p178) target = $region12
    $region11: #{multiscale_forward.33} parent=5 // pred_region
      %s182 = ssub.s32 %s11, 1
      // Predicated region
      $region13: #{multiscale_forward.33} parent=11 // pred_check
        %p183 = pneg %p86
      $region14: #{multiscale_forward.33} parent=11 // pred_check_branch
        %185 = sbr.rel (%p183) target = $region16
      $region15: #{multiscale_forward.33} parent=11 // pred_region
        %s186 = smul.u32 16, %s23
        %p187 = scmp.lt.s32.totalorder %s186, 15
        %s188 = scalar_select %p187, %s186, 15
        %p189 = scmp.lt.s32.totalorder %s22, 0
        %s190 = scalar_select %p189, %s22, 0
        %s191 = sadd.s32 %s190, %s188
        %s192 = smul.addr %s191, 4
        %s193 = scalar_lea.vmem %s1, %s192
        %s194 = smul.u32 16, %s23
      $region16: #{multiscale_forward.33} parent=11 // pred_fallthru
        _
      // Predicated region
      $region17: #{multiscale_forward.33} parent=11 // pred_check
        %p195 = pneg %p112
      $region18: #{multiscale_forward.33} parent=11 // pred_check_branch
        %197 = sbr.rel (%p195) target = $region20
      $region19: #{multiscale_forward.33} parent=11 // pred_region
        %p198 = scmp.lt.s32.totalorder %s22, 0
        %s199 = scalar_select %p198, %s22, 0
        %s200 = scalar_lea.vmem %s2, %s199
      $region20: #{multiscale_forward.33} parent=11 // pred_fallthru
        _
    $region12: #{multiscale_forward.33} parent=5 // pred_fallthru
      _
    %p201 = scmp.lt.s32.totalorder %s11, 2
    // Predicated region
    $region21: #{multiscale_forward.33} parent=5 // pred_check
      %p202 = pneg %p201
    $region22: #{multiscale_forward.33} parent=5 // pred_check_branch
      %204 = sbr.rel (%p202) target = $region24
    $region23: #{multiscale_forward.33} parent=5 // pred_region
      // Predicated region
      $region25: #{multiscale_forward.33} parent=23 // pred_check
        %p205 = pneg %p52
      $region26: #{multiscale_forward.33} parent=23 // pred_check_branch
        %207 = sbr.rel (%p205) target = $region28
      $region27: #{multiscale_forward.33} parent=23 // pred_region
        %s208 = smul.u32 2, %s18
        %p209 = scmp.lt.s32.totalorder %s208, 3
        %s210 = scalar_select %p209, %s208, 3
        %p211 = scmp.lt.s32.totalorder %s20, 0
        %s212 = scalar_select %p211, %s20, 0
        %s213 = sadd.s32 %s212, %s210
        %s214 = smul.addr %s213, 4
        %s215 = scalar_lea.vmem %s0, %s214
        %s216 = smul.u32 2, %s18
      $region28: #{multiscale_forward.33} parent=23 // pred_fallthru
        _
    $region24: #{multiscale_forward.33} parent=5 // pred_fallthru
      _
    %p217 = scmp.le.s32.totalorder 1, %s11
    %p218 = scmp.lt.s32.totalorder %s11, 3
    %p219 = pnand %p217, %p218
    %p220 = pneg %p219
    // Predicated region
    $region29: #{multiscale_forward.33} parent=5 // pred_check
      _
    $region30: #{multiscale_forward.33} parent=5 // pred_check_branch
      %222 = sbr.rel (%p219) target = $region32
    $region31: #{multiscale_forward.33} parent=5 // pred_region
      %s223 = ssub.s32 %s11, 1
      %s224 = smul.u32 2, %s21
      %p225 = scmp.lt.s32.totalorder %s224, 3
      %s226 = scalar_select %p225, %s224, 3
      %p227 = scmp.lt.s32.totalorder %s23, 0
      %s228 = scalar_select %p227, %s23, 0
      %s229 = sadd.s32 %s228, %s226
      %s230 = smul.addr %s229, 4
      %s231 = scalar_lea.vmem %s0, %s230
      %p232 = pneg %p58
      %p233 = pneg %p55
      %s234 = smul.u32 16, %s23
      %p235 = scmp.lt.s32.totalorder %s234, 15
      %s236 = scalar_select %p235, %s234, 15
      %p237 = scmp.lt.s32.totalorder %s22, 0
      %s238 = scalar_select %p237, %s22, 0
      %s239 = sadd.s32 %s238, %s236
      %s240 = smul.addr %s239, 4
      %s241 = scalar_lea.vmem %s1, %s240
      %p242 = pneg %p86
      %p243 = pneg %p83
      %p244 = scmp.lt.s32.totalorder %s22, 0
      %s245 = scalar_select %p244, %s22, 0
      %s246 = scalar_lea.vmem %s2, %s245
      %p247 = pneg %p112
      %p248 = pneg %p109
      %p249 = pneg %p140
      %p250 = pneg %p137
      %s251 = smul.u32 2, %s21
      %p252 = scmp.lt.s32.totalorder %s251, 3
      %s253 = scalar_select %p252, %s251, 3
      %p254 = scmp.lt.s32.totalorder %s22, 0
      %s255 = scalar_select %p254, %s22, 0
      %s256 = sadd.s32 %s255, %s253
      %s257 = smul.addr %s256, 8
      %s258 = scalar_lea.vmem %s3, %s257
      %p259 = pneg %p168
      %p260 = pneg %p165
      %p261 = scmp.lt.s32.totalorder %s21, 1
      %s262 = scalar_select %p261, %s21, 1
      %p263 = scmp.lt.s32.totalorder %s22, 0
      %s264 = scalar_select %p263, %s22, 0
      %s265 = sadd.s32 %s264, %s262
      %s266 = smul.addr %s265, 8
      %s267 = scalar_lea.vmem %s4, %s266
      %s268 = smul.u32 2, %s21
      %p269 = scmp.lt.s32.totalorder %s268, 3
      %s270 = scalar_select %p269, %s268, 3
      %p271 = scmp.lt.s32.totalorder %s23, 0
      %s272 = scalar_select %p271, %s23, 0
      %s273 = sadd.s32 %s272, %s270
      %s274 = smul.addr %s273, 4
      %s275 = scalar_lea.vmem %s0, %s274
      %s276 = smul.u32 2, %s21
      %s277 = smul.u32 16, %s23
      %p278 = scmp.lt.s32.totalorder %s277, 15
      %s279 = scalar_select %p278, %s277, 15
      %p280 = scmp.lt.s32.totalorder %s22, 0
      %s281 = scalar_select %p280, %s22, 0
      %s282 = sadd.s32 %s281, %s279
      %s283 = smul.addr %s282, 4
      %s284 = scalar_lea.vmem %s1, %s283
      %s285 = smul.u32 16, %s23
      %p286 = scmp.lt.s32.totalorder %s22, 0
      %s287 = scalar_select %p286, %s22, 0
      %s288 = scalar_lea.vmem %s2, %s287
      %s289 = smul.u32 2, %s21
      %p290 = scmp.lt.s32.totalorder %s289, 3
      %s291 = scalar_select %p290, %s289, 3
      %p292 = scmp.lt.s32.totalorder %s22, 0
      %s293 = scalar_select %p292, %s22, 0
      %s294 = sadd.s32 %s293, %s291
      %s295 = smul.addr %s294, 8
      %s296 = scalar_lea.vmem %s3, %s295
      %s297 = smul.u32 2, %s21
      %p298 = scmp.lt.s32.totalorder %s21, 1
      %s299 = scalar_select %p298, %s21, 1
      %p300 = scmp.lt.s32.totalorder %s22, 0
      %s301 = scalar_select %p300, %s22, 0
      %s302 = sadd.s32 %s301, %s299
      %s303 = smul.addr %s302, 8
      %s304 = scalar_lea.vmem %s4, %s303
      %s305 = smul.u32 %s21, 16
      %p306 = scmp.eq.s32.totalorder %s23, 0
      // Predicated region
      $region33: #{multiscale_forward.33} parent=31 // pred_check
        %p307 = pneg %p306
      $region34: #{multiscale_forward.33} parent=31 // pred_check_branch
        %309 = sbr.rel (%p307) target = $region36
      $region35: #{multiscale_forward.33} parent=31 // pred_region
        %310 = vst [vmem:[%s296] sm:$0xff] 0.0
        %311 = vst [vmem:[%s296 + $0x8] sm:$0xff] 0.0
      $region36: #{multiscale_forward.33} parent=31 // pred_fallthru
        _
      %v312 = vld [vmem:[%s296] sm:$0xff]
      %v313 = vld [vmem:[%s296 + $0x8] sm:$0xff]
      %v314 = vld [vmem:[%s275] sm:$0xf]
      %v315 = vld [vmem:[%s275 + $0x4] sm:$0xf]
      %v316 = vld [vmem:[%s284] sm:$0xf]
      %v317 = vld [vmem:[%s284 + $0x4] sm:$0xf]
      %v318 = vld [vmem:[%s284 + $0x8] sm:$0xf]
      %v319 = vld [vmem:[%s284 + $0xc] sm:$0xf]
      %v320 = vld [vmem:[%s284 + $0x10] sm:$0xf]
      %v321 = vld [vmem:[%s284 + $0x14] sm:$0xf]
      %v322 = vld [vmem:[%s284 + $0x18] sm:$0xf]
      %v323 = vld [vmem:[%s284 + $0x1c] sm:$0xf]
      %v324 = vld [vmem:[%s284 + $0x20] sm:$0xf]
      %v325 = vld [vmem:[%s284 + $0x24] sm:$0xf]
      %v326 = vld [vmem:[%s284 + $0x28] sm:$0xf]
      %v327 = vld [vmem:[%s284 + $0x2c] sm:$0xf]
      %v328 = vld [vmem:[%s284 + $0x30] sm:$0xf]
      %v329 = vld [vmem:[%s284 + $0x34] sm:$0xf]
      %v330 = vld [vmem:[%s284 + $0x38] sm:$0xf]
      %v331 = vld [vmem:[%s284 + $0x3c] sm:$0xf]
      %v334 = vunpack.c.l.b16 %v314
      %v335 = vunpack.c.l.b16 %v315
      %v336 = vpack.c.b16 %v335, %v334
      %v354 = vunpack.c.l.b16 %v316
      %v355 = vunpack.c.l.b16 %v317
      %v356 = vunpack.c.l.b16 %v318
      %v357 = vunpack.c.l.b16 %v319
      %v358 = vunpack.c.l.b16 %v320
      %v359 = vunpack.c.l.b16 %v321
      %v360 = vunpack.c.l.b16 %v322
      %v361 = vunpack.c.l.b16 %v323
      %v362 = vunpack.c.l.b16 %v324
      %v363 = vunpack.c.l.b16 %v325
      %v364 = vunpack.c.l.b16 %v326
      %v365 = vunpack.c.l.b16 %v327
      %v366 = vunpack.c.l.b16 %v328
      %v367 = vunpack.c.l.b16 %v329
      %v368 = vunpack.c.l.b16 %v330
      %v369 = vunpack.c.l.b16 %v331
      %v370 = vpack.c.b16 %v355, %v354
      %v371 = vpack.c.b16 %v357, %v356
      %v372 = vpack.c.b16 %v359, %v358
      %v373 = vpack.c.b16 %v361, %v360
      %v374 = vpack.c.b16 %v363, %v362
      %v375 = vpack.c.b16 %v365, %v364
      %v376 = vpack.c.b16 %v367, %v366
      %v377 = vpack.c.b16 %v369, %v368
      %386 = vmatpush.bf16.msra.mxu0 %v377
      %387 = vmatpush.bf16.msra.mxu0 %v376
      %388 = vmatpush.bf16.msra.mxu0 %v375
      %389 = vmatpush.bf16.msra.mxu0 %v374
      %390 = vmatpush.bf16.msra.mxu0 %v373
      %391 = vmatpush.bf16.msra.mxu0 %v372
      %392 = vmatpush.bf16.msra.mxu0 %v371
      %393 = vmatpush.bf16.msra.mxu0 %v370
      %394 = vmatmul.bf16.gmra.mxu0 %v336
      %v395 = vpop.f32.mrf.mxu0
      %v396 = vadd.f32 0.0, %v395
      %v397 = vpop.f32.mrf.mxu0
      %v398 = vadd.f32 0.0, %v397
      %399 = vdwg.mxu0
      %v400 = vadd.f32 %v312, %v396
      %v401 = vadd.f32 %v313, %v398
      %402 = vst [vmem:[%s296] sm:$0xff] %v400
      %403 = vst [vmem:[%s296 + $0x8] sm:$0xff] %v401
      // Predicated region
      $region37: #{multiscale_forward.33} parent=31 // pred_check
        %p404 = pneg %p306
      $region38: #{multiscale_forward.33} parent=31 // pred_check_branch
        %406 = sbr.rel (%p404) target = $region40
      $region39: #{multiscale_forward.33} parent=31 // pred_region
        %v407 = vld [vmem:[%s296] sm:$0xff]
        %v408 = vld [vmem:[%s296 + $0x8] sm:$0xff]
        %v409 = vld [vmem:[%s288] sm:$0x1]
        %v411 = vperm.slane %v409, 0
        %v413 = vadd.f32 %v407, %v411
        %v414 = vadd.f32 %v408, %v411
        %415 = vst [vmem:[%s296] sm:$0xff] %v413
        %416 = vst [vmem:[%s296 + $0x8] sm:$0xff] %v414
        %v417 = vlaneseq
        %v418 = vshrl.u32 %v417, 7
        %v419 = vadd.s32 %v418, 8
        %v420 = vstv %s305
        %v421 = vadd.s32 %v418, %v420
        %v422 = vadd.s32 %v419, %v420
        %vm423 = vcmp.lt.s32.totalorder %v421, 18
        %vm424 = vcmp.lt.s32.totalorder %v422, 18
        %v425 = vsel %vm423, 1, 0
        %v426 = vsel %vm424, 1, 0
        %vm427 = vcmp.eq.s32.totalorder %v425, 1
        %vm428 = vcmp.eq.s32.totalorder %v426, 1
        %v429 = vsel %vm427, %v413, 0.0
        %v430 = vsel %vm428, %v414, 0.0
        %v431 = vadd.f32 %v429, %v430
        %v432 = vrot.slane %v431, 4
        %v433 = vadd.f32 %v431, %v432
        %v434 = vrot.slane %v433, 2
        %v435 = vadd.f32 %v433, %v434
        %v436 = vrot.slane %v435, 1
        %v437 = vadd.f32 %v435, %v436
        %v438 = vmul.f32 %v429, %v429
        %v439 = vmul.f32 %v430, %v430
        %v440 = vadd.f32 %v438, %v439
        %v441 = vrot.slane %v440, 4
        %v442 = vadd.f32 %v440, %v441
        %v443 = vrot.slane %v442, 2
        %v444 = vadd.f32 %v442, %v443
        %v445 = vrot.slane %v444, 1
        %v446 = vadd.f32 %v444, %v445
        %vm447 = vcmp.eq.s32.totalorder %v418, 0
        %v448 = vsel %vm447, %v437, 0.0
        %vm449 = vcmp.eq.s32.totalorder %v418, 1
        %v450 = vsel %vm449, %v446, 0.0
        %v451 = vadd.f32 %v448, %v450
        %452 = vst [vmem:[%s304] sm:$0xff] %v451
      $region40: #{multiscale_forward.33} parent=31 // pred_fallthru
        _
      %s453 = smul.u32 2, %s21
      %p454 = scmp.lt.s32.totalorder %s453, 3
      %s455 = scalar_select %p454, %s453, 3
      %p456 = scmp.lt.s32.totalorder %s22, 0
      %s457 = scalar_select %p456, %s22, 0
      %s458 = sadd.s32 %s457, %s455
      %s459 = smul.addr %s458, 8
      %s460 = scalar_lea.vmem %s3, %s459
      %p461 = scmp.lt.s32.totalorder %s21, 1
      %s462 = scalar_select %p461, %s21, 1
      %p463 = scmp.lt.s32.totalorder %s22, 0
      %s464 = scalar_select %p463, %s22, 0
      %s465 = sadd.s32 %s464, %s462
      %s466 = smul.addr %s465, 8
      %s467 = scalar_lea.vmem %s4, %s466
      // Predicated region
      $region41: #{multiscale_forward.33} parent=31 // pred_check
        %p468 = pneg %p137
      $region42: #{multiscale_forward.33} parent=31 // pred_check_branch
        %470 = sbr.rel (%p468) target = $region44
      $region43: #{multiscale_forward.33} parent=31 // pred_region
        %s471 = smul.u32 2, %s21
      $region44: #{multiscale_forward.33} parent=31 // pred_fallthru
        _
      // Predicated region
      $region45: #{multiscale_forward.33} parent=31 // pred_check
        %p472 = pneg %p165
      $region46: #{multiscale_forward.33} parent=31 // pred_check_branch
        %474 = sbr.rel (%p472) target = $region48
      $region47: #{multiscale_forward.33} parent=31 // pred_region
        _
      $region48: #{multiscale_forward.33} parent=31 // pred_fallthru
        _
    $region32: #{multiscale_forward.33} parent=5 // pred_fallthru
      _
    %p475 = scmp.le.s32.totalorder 2, %s11
    // Predicated region
    $region49: #{multiscale_forward.33} parent=5 // pred_check
      %p476 = pneg %p475
    $region50: #{multiscale_forward.33} parent=5 // pred_check_branch
      %478 = sbr.rel (%p476) target = $region52
    $region51: #{multiscale_forward.33} parent=5 // pred_region
      %s479 = ssub.s32 %s11, 2
      // Predicated region
      $region53: #{multiscale_forward.33} parent=51 // pred_check
        %p480 = pneg %p143
      $region54: #{multiscale_forward.33} parent=51 // pred_check_branch
        %482 = sbr.rel (%p480) target = $region56
      $region55: #{multiscale_forward.33} parent=51 // pred_region
        %s483 = smul.u32 2, %s24
        %p484 = scmp.lt.s32.totalorder %s483, 3
        %s485 = scalar_select %p484, %s483, 3
        %p486 = scmp.lt.s32.totalorder %s25, 0
        %s487 = scalar_select %p486, %s25, 0
        %s488 = sadd.s32 %s487, %s485
        %s489 = smul.addr %s488, 8
        %s490 = scalar_lea.vmem %s3, %s489
      $region56: #{multiscale_forward.33} parent=51 // pred_fallthru
        _
      // Predicated region
      $region57: #{multiscale_forward.33} parent=51 // pred_check
        %p491 = pneg %p171
      $region58: #{multiscale_forward.33} parent=51 // pred_check_branch
        %493 = sbr.rel (%p491) target = $region60
      $region59: #{multiscale_forward.33} parent=51 // pred_region
        %p494 = scmp.lt.s32.totalorder %s24, 1
        %s495 = scalar_select %p494, %s24, 1
        %p496 = scmp.lt.s32.totalorder %s25, 0
        %s497 = scalar_select %p496, %s25, 0
        %s498 = sadd.s32 %s497, %s495
        %s499 = smul.addr %s498, 8
        %s500 = scalar_lea.vmem %s4, %s499
      $region60: #{multiscale_forward.33} parent=51 // pred_fallthru
        _
    $region52: #{multiscale_forward.33} parent=5 // pred_fallthru
      _
  $region6: #{multiscale_forward.33} parent=0 // loop_footer
    %s15 = sadd.s32 1, %s11
  $region7: #{multiscale_forward.33} parent=0 // loop_footer_branch
    %10 = sbr.rel target = $region3
  $region8: #{multiscale_forward.33} parent=0 // loop_exit
    _

// kernel: multiscale_forward.36
$region0: #{multiscale_forward.36}
  #allocation0 [shape = 'u32[]', space=smem, size = 0x4, offset = 0x4, fixed_abs, tag = 'smem constant byte address 0x4 - core index']
  #allocation1 [shape = 'u32[72,128]{1,0:T(1,128)}', space=vmem, size = 0x9000, scoped, tag = 'internal scratch']
  %s0 = inlined_call_operand.vmem [shape: f32[16,128], index: 0, kind: input, shape index: {}]
  %s1 = inlined_call_operand.vmem [shape: f32[1,128], index: 1, kind: input, shape index: {}]
  %s2 = inlined_call_operand.vmem [shape: f32[1,128], index: 2, kind: input, shape index: {}]
  %s3 = inlined_call_operand.vmem [shape: bf16[16,128], index: 3, kind: output, shape index: {}]
  %s4 = sld [smem:[#allocation0]]
  $region22: #{multiscale_forward.36} parent=0
    _
  %s6 = ssub.s32 1, %s4
  %s7 = scalar_select 0, %s6, %s4
  // Predicated region
  $region2: #{multiscale_forward.36} parent=0 // pred_check
    _
  $region3: #{multiscale_forward.36} parent=0 // pred_check_branch
    %9 = sbr.rel (0) target = $region5
  $region4: #{multiscale_forward.36} parent=0 // pred_region
    _
  $region5: #{multiscale_forward.36} parent=0 // pred_fallthru
    _
  // Predicated region
  $region6: #{multiscale_forward.36} parent=0 // pred_check
    _
  $region7: #{multiscale_forward.36} parent=0 // pred_check_branch
    %11 = sbr.rel (0) target = $region9
  $region8: #{multiscale_forward.36} parent=0 // pred_region
    _
  $region9: #{multiscale_forward.36} parent=0 // pred_fallthru
    _
  // Predicated region
  $region10: #{multiscale_forward.36} parent=0 // pred_check
    _
  $region11: #{multiscale_forward.36} parent=0 // pred_check_branch
    %13 = sbr.rel (0) target = $region13
  $region12: #{multiscale_forward.36} parent=0 // pred_region
    _
  $region13: #{multiscale_forward.36} parent=0 // pred_fallthru
    _
  %v14 = vld [vmem:[%s0] sm:$0xff]
  %v15 = vld [vmem:[%s0 + $0x8] sm:$0xff]
  %v16 = vld [vmem:[%s1] sm:$0x1]
  %v18 = vperm.slane %v16, 0
  %v20 = vmul.f32 %v14, %v18
  %v21 = vmul.f32 %v15, %v18
  %v22 = vld [vmem:[%s2] sm:$0x1]
  %v24 = vperm.slane %v22, 0
  %v26 = vadd.f32 %v20, %v24
  %v27 = vadd.f32 %v21, %v24
  %vm28 = vcmp.ge.f32.partialorder %v26, 0.0
  %vm29 = vcmp.ge.f32.partialorder %v27, 0.0
  %v30 = vmul.f32 %v26, 0.2
  %v31 = vmul.f32 %v27, 0.2
  %v32 = vsel %vm28, %v26, %v30
  %v33 = vsel %vm29, %v27, %v31
  %v34 = vpack.c.bf16 %v32, %v32
  %v35 = vpack.c.bf16 %v33, %v33
  %36 = vst [vmem:[%s3] sm:$0xf] %v34
  %37 = vst [vmem:[%s3 + $0x4] sm:$0xf] %v35
  // Predicated region
  $region14: #{multiscale_forward.36} parent=0 // pred_check
    _
  $region15: #{multiscale_forward.36} parent=0 // pred_check_branch
    %39 = sbr.rel (0) target = $region17
  $region16: #{multiscale_forward.36} parent=0 // pred_region
    _
  $region17: #{multiscale_forward.36} parent=0 // pred_fallthru
    _
  // Predicated region
  $region18: #{multiscale_forward.36} parent=0 // pred_check
    _
  $region19: #{multiscale_forward.36} parent=0 // pred_check_branch
    %41 = sbr.rel (0) target = $region21
  $region20: #{multiscale_forward.36} parent=0 // pred_region
    _
  $region21: #{multiscale_forward.36} parent=0 // pred_fallthru
    _

// kernel: multiscale_forward.35
$region0: #{multiscale_forward.35}
  #allocation0 [shape = 'u32[]', space=smem, size = 0x4, offset = 0x4, fixed_abs, tag = 'smem constant byte address 0x4 - core index']
  #allocation1 [shape = 'u32[72,128]{1,0:T(1,128)}', space=vmem, size = 0x9000, scoped, tag = 'internal scratch']
  %s0 = inlined_call_operand.vmem [shape: bf16[16,256], index: 0, kind: input, shape index: {}]
  %s1 = inlined_call_operand.vmem [shape: bf16[256,128], index: 1, kind: input, shape index: {}]
  %s2 = inlined_call_operand.vmem [shape: f32[1,128], index: 2, kind: input, shape index: {}]
  %s3 = inlined_call_operand.vmem [shape: f32[16,128], index: 3, kind: output, shape index: {0}]
  %s4 = inlined_call_operand.vmem [shape: f32[8,128], index: 4, kind: output, shape index: {1}]
  %5 = xla_tuple %s3, %s4
  %s6 = sld [smem:[#allocation0]]
  $region38: #{multiscale_forward.35} parent=0
    _
  %s8 = ssub.s32 1, %s6
  %s9 = scalar_select 0, %s8, %s6
  // Predicated region
  $region2: #{multiscale_forward.35} parent=0 // pred_check
    _
  $region3: #{multiscale_forward.35} parent=0 // pred_check_branch
    %11 = sbr.rel (0) target = $region5
  $region4: #{multiscale_forward.35} parent=0 // pred_region
    _
  $region5: #{multiscale_forward.35} parent=0 // pred_fallthru
    _
  // Predicated region
  $region6: #{multiscale_forward.35} parent=0 // pred_check
    _
  $region7: #{multiscale_forward.35} parent=0 // pred_check_branch
    %13 = sbr.rel (0) target = $region9
  $region8: #{multiscale_forward.35} parent=0 // pred_region
    _
  $region9: #{multiscale_forward.35} parent=0 // pred_fallthru
    _
  // Predicated region
  $region10: #{multiscale_forward.35} parent=0 // pred_check
    _
  $region11: #{multiscale_forward.35} parent=0 // pred_check_branch
    %15 = sbr.rel (0) target = $region13
  $region12: #{multiscale_forward.35} parent=0 // pred_region
    _
  $region13: #{multiscale_forward.35} parent=0 // pred_fallthru
    _
  %s16 = smul.u32 0, 16
  %p17 = scmp.eq.s32.totalorder 0, 0
  // Predicated region
  $region14: #{multiscale_forward.35} parent=0 // pred_check
    %p18 = pneg %p17
  $region15: #{multiscale_forward.35} parent=0 // pred_check_branch
    %20 = sbr.rel (%p18) target = $region17
  $region16: #{multiscale_forward.35} parent=0 // pred_region
    %21 = vst [vmem:[%s3] sm:$0xff] 0.0
    %22 = vst [vmem:[%s3 + $0x8] sm:$0xff] 0.0
  $region17: #{multiscale_forward.35} parent=0 // pred_fallthru
    _
  %v23 = vld [vmem:[%s3] sm:$0xff]
  %v24 = vld [vmem:[%s3 + $0x8] sm:$0xff]
  %v25 = vld [vmem:[%s0] sm:$0xff]
  %v26 = vld [vmem:[%s0 + $0x8] sm:$0xff]
  %v27 = vld [vmem:[%s1] sm:$0xf]
  %v28 = vld [vmem:[%s1 + $0x4] sm:$0xf]
  %v29 = vld [vmem:[%s1 + $0x8] sm:$0xf]
  %v30 = vld [vmem:[%s1 + $0xc] sm:$0xf]
  %v31 = vld [vmem:[%s1 + $0x10] sm:$0xf]
  %v32 = vld [vmem:[%s1 + $0x14] sm:$0xf]
  %v33 = vld [vmem:[%s1 + $0x18] sm:$0xf]
  %v34 = vld [vmem:[%s1 + $0x1c] sm:$0xf]
  %v35 = vld [vmem:[%s1 + $0x20] sm:$0xf]
  %v36 = vld [vmem:[%s1 + $0x24] sm:$0xf]
  %v37 = vld [vmem:[%s1 + $0x28] sm:$0xf]
  %v38 = vld [vmem:[%s1 + $0x2c] sm:$0xf]
  %v39 = vld [vmem:[%s1 + $0x30] sm:$0xf]
  %v40 = vld [vmem:[%s1 + $0x34] sm:$0xf]
  %v41 = vld [vmem:[%s1 + $0x38] sm:$0xf]
  %v42 = vld [vmem:[%s1 + $0x3c] sm:$0xf]
  %v43 = vld [vmem:[%s1 + $0x40] sm:$0xf]
  %v44 = vld [vmem:[%s1 + $0x44] sm:$0xf]
  %v45 = vld [vmem:[%s1 + $0x48] sm:$0xf]
  %v46 = vld [vmem:[%s1 + $0x4c] sm:$0xf]
  %v47 = vld [vmem:[%s1 + $0x50] sm:$0xf]
  %v48 = vld [vmem:[%s1 + $0x54] sm:$0xf]
  %v49 = vld [vmem:[%s1 + $0x58] sm:$0xf]
  %v50 = vld [vmem:[%s1 + $0x5c] sm:$0xf]
  %v51 = vld [vmem:[%s1 + $0x60] sm:$0xf]
  %v52 = vld [vmem:[%s1 + $0x64] sm:$0xf]
  %v53 = vld [vmem:[%s1 + $0x68] sm:$0xf]
  %v54 = vld [vmem:[%s1 + $0x6c] sm:$0xf]
  %v55 = vld [vmem:[%s1 + $0x70] sm:$0xf]
  %v56 = vld [vmem:[%s1 + $0x74] sm:$0xf]
  %v57 = vld [vmem:[%s1 + $0x78] sm:$0xf]
  %v58 = vld [vmem:[%s1 + $0x7c] sm:$0xf]
  %v61 = vunpack.c.l.b16 %v25
  %v62 = vunpack.c.h.b16 %v25
  %v63 = vunpack.c.l.b16 %v26
  %v64 = vunpack.c.h.b16 %v26
  %v65 = vpack.c.b16 %v63, %v61
  %v66 = vpack.c.b16 %v64, %v62
  %v101 = vunpack.c.l.b16 %v27
  %v102 = vunpack.c.l.b16 %v28
  %v103 = vunpack.c.l.b16 %v29
  %v104 = vunpack.c.l.b16 %v30
  %v105 = vunpack.c.l.b16 %v31
  %v106 = vunpack.c.l.b16 %v32
  %v107 = vunpack.c.l.b16 %v33
  %v108 = vunpack.c.l.b16 %v34
  %v109 = vunpack.c.l.b16 %v35
  %v110 = vunpack.c.l.b16 %v36
  %v111 = vunpack.c.l.b16 %v37
  %v112 = vunpack.c.l.b16 %v38
  %v113 = vunpack.c.l.b16 %v39
  %v114 = vunpack.c.l.b16 %v40
  %v115 = vunpack.c.l.b16 %v41
  %v116 = vunpack.c.l.b16 %v42
  %v117 = vunpack.c.l.b16 %v43
  %v118 = vunpack.c.l.b16 %v44
  %v119 = vunpack.c.l.b16 %v45
  %v120 = vunpack.c.l.b16 %v46
  %v121 = vunpack.c.l.b16 %v47
  %v122 = vunpack.c.l.b16 %v48
  %v123 = vunpack.c.l.b16 %v49
  %v124 = vunpack.c.l.b16 %v50
  %v125 = vunpack.c.l.b16 %v51
  %v126 = vunpack.c.l.b16 %v52
  %v127 = vunpack.c.l.b16 %v53
  %v128 = vunpack.c.l.b16 %v54
  %v129 = vunpack.c.l.b16 %v55
  %v130 = vunpack.c.l.b16 %v56
  %v131 = vunpack.c.l.b16 %v57
  %v132 = vunpack.c.l.b16 %v58
  %v133 = vpack.c.b16 %v102, %v101
  %v134 = vpack.c.b16 %v104, %v103
  %v135 = vpack.c.b16 %v106, %v105
  %v136 = vpack.c.b16 %v108, %v107
  %v137 = vpack.c.b16 %v110, %v109
  %v138 = vpack.c.b16 %v112, %v111
  %v139 = vpack.c.b16 %v114, %v113
  %v140 = vpack.c.b16 %v116, %v115
  %v141 = vpack.c.b16 %v118, %v117
  %v142 = vpack.c.b16 %v120, %v119
  %v143 = vpack.c.b16 %v122, %v121
  %v144 = vpack.c.b16 %v124, %v123
  %v145 = vpack.c.b16 %v126, %v125
  %v146 = vpack.c.b16 %v128, %v127
  %v147 = vpack.c.b16 %v130, %v129
  %v148 = vpack.c.b16 %v132, %v131
  %165 = vmatpush.bf16.msra.mxu0 %v140
  %166 = vmatpush.bf16.msra.mxu0 %v139
  %167 = vmatpush.bf16.msra.mxu0 %v138
  %168 = vmatpush.bf16.msra.mxu0 %v137
  %169 = vmatpush.bf16.msra.mxu0 %v136
  %170 = vmatpush.bf16.msra.mxu0 %v135
  %171 = vmatpush.bf16.msra.mxu0 %v134
  %172 = vmatpush.bf16.msra.mxu0 %v133
  %173 = vmatmul.bf16.gmra.mxu0 %v65
  %v174 = vpop.f32.mrf.mxu0
  %v175 = vadd.f32 0.0, %v174
  %v176 = vpop.f32.mrf.mxu0
  %v177 = vadd.f32 0.0, %v176
  %178 = vdwg.mxu0
  %179 = vmatpush.bf16.msra.mxu0 %v148
  %180 = vmatpush.bf16.msra.mxu0 %v147
  %181 = vmatpush.bf16.msra.mxu0 %v146
  %182 = vmatpush.bf16.msra.mxu0 %v145
  %183 = vmatpush.bf16.msra.mxu0 %v144
  %184 = vmatpush.bf16.msra.mxu0 %v143
  %185 = vmatpush.bf16.msra.mxu0 %v142
  %186 = vmatpush.bf16.msra.mxu0 %v141
  %187 = vmatmul.bf16.gmra.mxu0 %v66
  %v188 = vpop.f32.mrf.mxu0
  %v189 = vadd.f32 %v175, %v188
  %v190 = vpop.f32.mrf.mxu0
  %v191 = vadd.f32 %v177, %v190
  %192 = vdwg.mxu0
  %v193 = vadd.f32 %v23, %v189
  %v194 = vadd.f32 %v24, %v191
  %195 = vst [vmem:[%s3] sm:$0xff] %v193
  %196 = vst [vmem:[%s3 + $0x8] sm:$0xff] %v194
  // Predicated region
  $region18: #{multiscale_forward.35} parent=0 // pred_check
    %p197 = pneg %p17
  $region19: #{multiscale_forward.35} parent=0 // pred_check_branch
    %199 = sbr.rel (%p197) target = $region21
  $region20: #{multiscale_forward.35} parent=0 // pred_region
    %v200 = vld [vmem:[%s3] sm:$0xff]
    %v201 = vld [vmem:[%s3 + $0x8] sm:$0xff]
    %v202 = vld [vmem:[%s2] sm:$0x1]
    %v204 = vperm.slane %v202, 0
    %v206 = vadd.f32 %v200, %v204
    %v207 = vadd.f32 %v201, %v204
    %208 = vst [vmem:[%s3] sm:$0xff] %v206
    %209 = vst [vmem:[%s3 + $0x8] sm:$0xff] %v207
    %v210 = vlaneseq
    %v211 = vshrl.u32 %v210, 7
    %v212 = vadd.s32 %v211, 8
    %v213 = vstv %s16
    %v214 = vadd.s32 %v211, %v213
    %v215 = vadd.s32 %v212, %v213
    %vm216 = vcmp.lt.s32.totalorder %v214, 8
    %vm217 = vcmp.lt.s32.totalorder %v215, 8
    %v218 = vsel %vm216, 1, 0
    %v219 = vsel %vm217, 1, 0
    %vm220 = vcmp.eq.s32.totalorder %v218, 1
    %vm221 = vcmp.eq.s32.totalorder %v219, 1
    %v222 = vsel %vm220, %v206, 0.0
    %v223 = vsel %vm221, %v207, 0.0
    %v224 = vadd.f32 %v222, %v223
    %v225 = vrot.slane %v224, 4
    %v226 = vadd.f32 %v224, %v225
    %v227 = vrot.slane %v226, 2
    %v228 = vadd.f32 %v226, %v227
    %v229 = vrot.slane %v228, 1
    %v230 = vadd.f32 %v228, %v229
    %v231 = vmul.f32 %v222, %v222
    %v232 = vmul.f32 %v223, %v223
    %v233 = vadd.f32 %v231, %v232
    %v234 = vrot.slane %v233, 4
    %v235 = vadd.f32 %v233, %v234
    %v236 = vrot.slane %v235, 2
    %v237 = vadd.f32 %v235, %v236
    %v238 = vrot.slane %v237, 1
    %v239 = vadd.f32 %v237, %v238
    %vm240 = vcmp.eq.s32.totalorder %v211, 0
    %v241 = vsel %vm240, %v230, 0.0
    %vm242 = vcmp.eq.s32.totalorder %v211, 1
    %v243 = vsel %vm242, %v239, 0.0
    %v244 = vadd.f32 %v241, %v243
    %245 = vst [vmem:[%s4] sm:$0xff] %v244
  $region21: #{multiscale_forward.35} parent=0 // pred_fallthru
    _
  // Predicated region
  $region22: #{multiscale_forward.35} parent=0 // pred_check
    _
  $region23: #{multiscale_forward.35} parent=0 // pred_check_branch
    %247 = sbr.rel (0) target = $region25
  $region24: #{multiscale_forward.35} parent=0 // pred_region
    _
  $region25: #{multiscale_forward.35} parent=0 // pred_fallthru
    _
  // Predicated region
  $region26: #{multiscale_forward.35} parent=0 // pred_check
    _
  $region27: #{multiscale_forward.35} parent=0 // pred_check_branch
    %249 = sbr.rel (0) target = $region29
  $region28: #{multiscale_forward.35} parent=0 // pred_region
    _
  $region29: #{multiscale_forward.35} parent=0 // pred_fallthru
    _
  // Predicated region
  $region30: #{multiscale_forward.35} parent=0 // pred_check
    _
  $region31: #{multiscale_forward.35} parent=0 // pred_check_branch
    %251 = sbr.rel (0) target = $region33
  $region32: #{multiscale_forward.35} parent=0 // pred_region
    _
  $region33: #{multiscale_forward.35} parent=0 // pred_fallthru
    _
  // Predicated region
  $region34: #{multiscale_forward.35} parent=0 // pred_check
    _
  $region35: #{multiscale_forward.35} parent=0 // pred_check_branch
    %253 = sbr.rel (0) target = $region37
  $region36: #{multiscale_forward.35} parent=0 // pred_region
    _
  $region37: #{multiscale_forward.35} parent=0 // pred_fallthru
    _

// kernel: multiscale_forward.37
$region0: #{multiscale_forward.37}
  #allocation0 [shape = 'u32[]', space=smem, size = 0x4, offset = 0x4, fixed_abs, tag = 'smem constant byte address 0x4 - core index']
  #allocation1 [shape = 'u32[72,128]{1,0:T(1,128)}', space=vmem, size = 0x9000, scoped, tag = 'internal scratch']
  %s0 = inlined_call_operand.vmem [shape: bf16[32,512], index: 0, kind: input, shape index: {}]
  %s1 = inlined_call_operand.vmem [shape: bf16[512,128], index: 1, kind: input, shape index: {}]
  %s2 = inlined_call_operand.vmem [shape: f32[1,128], index: 2, kind: input, shape index: {}]
  %s3 = inlined_call_operand.vmem [shape: f32[32,128], index: 3, kind: output, shape index: {0}]
  %s4 = inlined_call_operand.vmem [shape: f32[16,128], index: 4, kind: output, shape index: {1}]
  %5 = xla_tuple %s3, %s4
  %s6 = sld [smem:[#allocation0]]
  $region61: #{multiscale_forward.37} parent=0
    _
  %s8 = ssub.s32 1, %s6
  %s9 = scalar_select 0, %s8, %s6
  loop: start=0, step=1, limit=4
  $region2: #{multiscale_forward.37} parent=0 // loop_pre_header
    _
  $region3: #{multiscale_forward.37} parent=0 // loop_header
    %s11 = sphi 0, %s15
    %p12 = scmp.ge.s32.totalorder %s11, 4
    %s18 = sphi 0, %s37
    %s19 = sphi 0, %s33
    %s20 = sphi 0, %s29
    %s21 = sphi 0, %s18
    %s22 = sphi 0, %s19
    %s23 = sphi 0, %s20
    %s24 = sphi 0, %s21
    %s25 = sphi 0, %s22
    %s26 = sphi 0, %s23
    %s42 = sphi 0, %s44
    %s45 = sphi 0, %s42
    %s46 = sphi 0, %s45
    %s62 = sphi 0, %s46
    %s70 = sphi 0, %s72
    %s73 = sphi 0, %s70
    %s74 = sphi 0, %s73
    %s90 = sphi 0, %s74
    %s96 = sphi 0, %s98
    %s99 = sphi 0, %s96
    %s100 = sphi 0, %s99
    %s116 = sphi 0, %s100
    %s124 = sphi 0, %s126
    %s127 = sphi 0, %s124
    %s128 = sphi 0, %s127
    %s144 = sphi 0, %s128
    %s152 = sphi 0, %s154
    %s155 = sphi 0, %s152
    %s156 = sphi 0, %s155
    %s172 = sphi 0, %s156
  $region4: #{multiscale_forward.37} parent=0 // loop_header_branch
    %14 = sbr.rel (%p12) target = $region8
  $region5: #{multiscale_forward.37} parent=0 // loop_body
    %s16 = ssub.s32 %s11, 1
    %s17 = ssub.s32 %s11, 2
    %s27 = sadd.s32 1, %s20
    %p28 = scmp.ge.s32.totalorder %s27, 1
    %s29 = scalar_select %p28, 0, %s27
    %s30 = sadd.s32 1, %s19
    %s31 = scalar_select %p28, %s30, %s19
    %p32 = scmp.ge.s32.totalorder %s31, 1
    %s33 = scalar_select %p32, 0, %s31
    %s34 = sadd.s32 1, %s18
    %s35 = scalar_select %p32, %s34, %s18
    %p36 = scmp.ge.s32.totalorder %s35, 2
    %s37 = scalar_select %p36, 0, %s35
    %s38 = ssub.s32 %s18, %s37
    %s39 = ssub.s32 %s20, %s29
    %s40 = sor.u32 %s38, %s39
    %p41 = scmp.eq.s32.totalorder %s40, 0
    %s43 = sadd.s32 %s42, 1
    %s44 = scalar_select %p41, %s42, %s43
    %p47 = pneg %p41
    %p48 = scmp.eq.s32.totalorder %s11, 1
    %p49 = por %p47, %p48
    %p50 = scmp.ne.s32.totalorder %s42, %s45
    %p51 = scmp.eq.s32.totalorder %s11, 0
    %p52 = por %p50, %p51
    %p53 = scmp.ne.s32.totalorder %s42, %s45
    %p54 = scmp.eq.s32.totalorder %s16, 1
    %p55 = por %p53, %p54
    %p56 = scmp.ne.s32.totalorder %s45, %s46
    %p57 = scmp.eq.s32.totalorder %s16, 0
    %p58 = por %p56, %p57
    %p59 = scmp.ne.s32.totalorder %s45, %s46
    %p60 = scmp.eq.s32.totalorder %s17, 1
    %p61 = por %p59, %p60
    %p63 = scmp.ne.s32.totalorder %s46, %s62
    %p64 = scmp.eq.s32.totalorder %s17, 0
    %p65 = por %p63, %p64
    %s66 = ssub.s32 %s20, %s29
    %s67 = ssub.s32 %s19, %s33
    %s68 = sor.u32 %s66, %s67
    %p69 = scmp.eq.s32.totalorder %s68, 0
    %s71 = sadd.s32 %s70, 1
    %s72 = scalar_select %p69, %s70, %s71
    %p75 = pneg %p69
    %p76 = scmp.eq.s32.totalorder %s11, 1
    %p77 = por %p75, %p76
    %p78 = scmp.ne.s32.totalorder %s70, %s73
    %p79 = scmp.eq.s32.totalorder %s11, 0
    %p80 = por %p78, %p79
    %p81 = scmp.ne.s32.totalorder %s70, %s73
    %p82 = scmp.eq.s32.totalorder %s16, 1
    %p83 = por %p81, %p82
    %p84 = scmp.ne.s32.totalorder %s73, %s74
    %p85 = scmp.eq.s32.totalorder %s16, 0
    %p86 = por %p84, %p85
    %p87 = scmp.ne.s32.totalorder %s73, %s74
    %p88 = scmp.eq.s32.totalorder %s17, 1
    %p89 = por %p87, %p88
    %p91 = scmp.ne.s32.totalorder %s74, %s90
    %p92 = scmp.eq.s32.totalorder %s17, 0
    %p93 = por %p91, %p92
    %s94 = ssub.s32 %s19, %s33
    %p95 = scmp.eq.s32.totalorder %s94, 0
    %s97 = sadd.s32 %s96, 1
    %s98 = scalar_select %p95, %s96, %s97
    %p101 = pneg %p95
    %p102 = scmp.eq.s32.totalorder %s11, 1
    %p103 = por %p101, %p102
    %p104 = scmp.ne.s32.totalorder %s96, %s99
    %p105 = scmp.eq.s32.totalorder %s11, 0
    %p106 = por %p104, %p105
    %p107 = scmp.ne.s32.totalorder %s96, %s99
    %p108 = scmp.eq.s32.totalorder %s16, 1
    %p109 = por %p107, %p108
    %p110 = scmp.ne.s32.totalorder %s99, %s100
    %p111 = scmp.eq.s32.totalorder %s16, 0
    %p112 = por %p110, %p111
    %p113 = scmp.ne.s32.totalorder %s99, %s100
    %p114 = scmp.eq.s32.totalorder %s17, 1
    %p115 = por %p113, %p114
    %p117 = scmp.ne.s32.totalorder %s100, %s116
    %p118 = scmp.eq.s32.totalorder %s17, 0
    %p119 = por %p117, %p118
    %s120 = ssub.s32 %s18, %s37
    %s121 = ssub.s32 %s19, %s33
    %s122 = sor.u32 %s120, %s121
    %p123 = scmp.eq.s32.totalorder %s122, 0
    %s125 = sadd.s32 %s124, 1
    %s126 = scalar_select %p123, %s124, %s125
    %p129 = pneg %p123
    %p130 = scmp.eq.s32.totalorder %s11, 1
    %p131 = por %p129, %p130
    %p132 = scmp.ne.s32.totalorder %s124, %s127
    %p133 = scmp.eq.s32.totalorder %s11, 0
    %p134 = por %p132, %p133
    %p135 = scmp.ne.s32.totalorder %s124, %s127
    %p136 = scmp.eq.s32.totalorder %s16, 1
    %p137 = por %p135, %p136
    %p138 = scmp.ne.s32.totalorder %s127, %s128
    %p139 = scmp.eq.s32.totalorder %s16, 0
    %p140 = por %p138, %p139
    %p141 = scmp.ne.s32.totalorder %s127, %s128
    %p142 = scmp.eq.s32.totalorder %s17, 1
    %p143 = por %p141, %p142
    %p145 = scmp.ne.s32.totalorder %s128, %s144
    %p146 = scmp.eq.s32.totalorder %s17, 0
    %p147 = por %p145, %p146
    %s148 = ssub.s32 %s18, %s37
    %s149 = ssub.s32 %s19, %s33
    %s150 = sor.u32 %s148, %s149
    %p151 = scmp.eq.s32.totalorder %s150, 0
    %s153 = sadd.s32 %s152, 1
    %s154 = scalar_select %p151, %s152, %s153
    %p157 = pneg %p151
    %p158 = scmp.eq.s32.totalorder %s11, 1
    %p159 = por %p157, %p158
    %p160 = scmp.ne.s32.totalorder %s152, %s155
    %p161 = scmp.eq.s32.totalorder %s11, 0
    %p162 = por %p160, %p161
    %p163 = scmp.ne.s32.totalorder %s152, %s155
    %p164 = scmp.eq.s32.totalorder %s16, 1
    %p165 = por %p163, %p164
    %p166 = scmp.ne.s32.totalorder %s155, %s156
    %p167 = scmp.eq.s32.totalorder %s16, 0
    %p168 = por %p166, %p167
    %p169 = scmp.ne.s32.totalorder %s155, %s156
    %p170 = scmp.eq.s32.totalorder %s17, 1
    %p171 = por %p169, %p170
    %p173 = scmp.ne.s32.totalorder %s156, %s172
    %p174 = scmp.eq.s32.totalorder %s17, 0
    %p175 = por %p173, %p174
    %p176 = scmp.le.s32.totalorder 1, %s11
    %p177 = scmp.lt.s32.totalorder %s11, 3
    %p178 = pnand %p176, %p177
    %p179 = pneg %p178
    // Predicated region
    $region9: #{multiscale_forward.37} parent=5 // pred_check
      _
    $region10: #{multiscale_forward.37} parent=5 // pred_check_branch
      %181 = sbr.rel (%p178) target = $region12
    $region11: #{multiscale_forward.37} parent=5 // pred_region
      %s182 = ssub.s32 %s11, 1
      // Predicated region
      $region13: #{multiscale_forward.37} parent=11 // pred_check
        %p183 = pneg %p86
      $region14: #{multiscale_forward.37} parent=11 // pred_check_branch
        %185 = sbr.rel (%p183) target = $region16
      $region15: #{multiscale_forward.37} parent=11 // pred_region
        %s186 = smul.u32 64, %s23
        %p187 = scmp.lt.s32.totalorder %s186, 63
        %s188 = scalar_select %p187, %s186, 63
        %p189 = scmp.lt.s32.totalorder %s22, 0
        %s190 = scalar_select %p189, %s22, 0
        %s191 = sadd.s32 %s190, %s188
        %s192 = smul.addr %s191, 4
        %s193 = scalar_lea.vmem %s1, %s192
        %s194 = smul.u32 64, %s23
      $region16: #{multiscale_forward.37} parent=11 // pred_fallthru
        _
      // Predicated region
      $region17: #{multiscale_forward.37} parent=11 // pred_check
        %p195 = pneg %p112
      $region18: #{multiscale_forward.37} parent=11 // pred_check_branch
        %197 = sbr.rel (%p195) target = $region20
      $region19: #{multiscale_forward.37} parent=11 // pred_region
        %p198 = scmp.lt.s32.totalorder %s22, 0
        %s199 = scalar_select %p198, %s22, 0
        %s200 = scalar_lea.vmem %s2, %s199
      $region20: #{multiscale_forward.37} parent=11 // pred_fallthru
        _
    $region12: #{multiscale_forward.37} parent=5 // pred_fallthru
      _
    %p201 = scmp.lt.s32.totalorder %s11, 2
    // Predicated region
    $region21: #{multiscale_forward.37} parent=5 // pred_check
      %p202 = pneg %p201
    $region22: #{multiscale_forward.37} parent=5 // pred_check_branch
      %204 = sbr.rel (%p202) target = $region24
    $region23: #{multiscale_forward.37} parent=5 // pred_region
      // Predicated region
      $region25: #{multiscale_forward.37} parent=23 // pred_check
        %p205 = pneg %p52
      $region26: #{multiscale_forward.37} parent=23 // pred_check_branch
        %207 = sbr.rel (%p205) target = $region28
      $region27: #{multiscale_forward.37} parent=23 // pred_region
        %s208 = smul.u32 2, %s18
        %s209 = smul.u32 4, %s20
        %p210 = scmp.lt.s32.totalorder %s208, 3
        %s211 = scalar_select %p210, %s208, 3
        %p212 = scmp.lt.s32.totalorder %s209, 3
        %s213 = scalar_select %p212, %s209, 3
        %s214 = smul.addr %s211, 4
        %s215 = sadd.s32 %s213, %s214
        %s216 = smul.addr %s215, 4
        %s217 = scalar_lea.vmem %s0, %s216
        %s218 = smul.u32 2, %s18
        %s219 = smul.u32 4, %s20
      $region28: #{multiscale_forward.37} parent=23 // pred_fallthru
        _
    $region24: #{multiscale_forward.37} parent=5 // pred_fallthru
      _
    %p220 = scmp.le.s32.totalorder 1, %s11
    %p221 = scmp.lt.s32.totalorder %s11, 3
    %p222 = pnand %p220, %p221
    %p223 = pneg %p222
    // Predicated region
    $region29: #{multiscale_forward.37} parent=5 // pred_check
      _
    $region30: #{multiscale_forward.37} parent=5 // pred_check_branch
      %225 = sbr.rel (%p222) target = $region32
    $region31: #{multiscale_forward.37} parent=5 // pred_region
      %s226 = ssub.s32 %s11, 1
      %s227 = smul.u32 2, %s21
      %s228 = smul.u32 4, %s23
      %p229 = scmp.lt.s32.totalorder %s227, 3
      %s230 = scalar_select %p229, %s227, 3
      %p231 = scmp.lt.s32.totalorder %s228, 3
      %s232 = scalar_select %p231, %s228, 3
      %s233 = smul.addr %s230, 4
      %s234 = sadd.s32 %s232, %s233
      %s235 = smul.addr %s234, 4
      %s236 = scalar_lea.vmem %s0, %s235
      %p237 = pneg %p58
      %p238 = pneg %p55
      %s239 = smul.u32 64, %s23
      %p240 = scmp.lt.s32.totalorder %s239, 63
      %s241 = scalar_select %p240, %s239, 63
      %p242 = scmp.lt.s32.totalorder %s22, 0
      %s243 = scalar_select %p242, %s22, 0
      %s244 = sadd.s32 %s243, %s241
      %s245 = smul.addr %s244, 4
      %s246 = scalar_lea.vmem %s1, %s245
      %p247 = pneg %p86
      %p248 = pneg %p83
      %p249 = scmp.lt.s32.totalorder %s22, 0
      %s250 = scalar_select %p249, %s22, 0
      %s251 = scalar_lea.vmem %s2, %s250
      %p252 = pneg %p112
      %p253 = pneg %p109
      %p254 = pneg %p140
      %p255 = pneg %p137
      %s256 = smul.u32 2, %s21
      %p257 = scmp.lt.s32.totalorder %s256, 3
      %s258 = scalar_select %p257, %s256, 3
      %p259 = scmp.lt.s32.totalorder %s22, 0
      %s260 = scalar_select %p259, %s22, 0
      %s261 = sadd.s32 %s260, %s258
      %s262 = smul.addr %s261, 8
      %s263 = scalar_lea.vmem %s3, %s262
      %p264 = pneg %p168
      %p265 = pneg %p165
      %p266 = scmp.lt.s32.totalorder %s21, 1
      %s267 = scalar_select %p266, %s21, 1
      %p268 = scmp.lt.s32.totalorder %s22, 0
      %s269 = scalar_select %p268, %s22, 0
      %s270 = sadd.s32 %s269, %s267
      %s271 = smul.addr %s270, 8
      %s272 = scalar_lea.vmem %s4, %s271
      %s273 = smul.u32 2, %s21
      %s274 = smul.u32 4, %s23
      %p275 = scmp.lt.s32.totalorder %s273, 3
      %s276 = scalar_select %p275, %s273, 3
      %p277 = scmp.lt.s32.totalorder %s274, 3
      %s278 = scalar_select %p277, %s274, 3
      %s279 = smul.addr %s276, 4
      %s280 = sadd.s32 %s278, %s279
      %s281 = smul.addr %s280, 4
      %s282 = scalar_lea.vmem %s0, %s281
      %s283 = smul.u32 2, %s21
      %s284 = smul.u32 4, %s23
      %s285 = smul.u32 64, %s23
      %p286 = scmp.lt.s32.totalorder %s285, 63
      %s287 = scalar_select %p286, %s285, 63
      %p288 = scmp.lt.s32.totalorder %s22, 0
      %s289 = scalar_select %p288, %s22, 0
      %s290 = sadd.s32 %s289, %s287
      %s291 = smul.addr %s290, 4
      %s292 = scalar_lea.vmem %s1, %s291
      %s293 = smul.u32 64, %s23
      %p294 = scmp.lt.s32.totalorder %s22, 0
      %s295 = scalar_select %p294, %s22, 0
      %s296 = scalar_lea.vmem %s2, %s295
      %s297 = smul.u32 2, %s21
      %p298 = scmp.lt.s32.totalorder %s297, 3
      %s299 = scalar_select %p298, %s297, 3
      %p300 = scmp.lt.s32.totalorder %s22, 0
      %s301 = scalar_select %p300, %s22, 0
      %s302 = sadd.s32 %s301, %s299
      %s303 = smul.addr %s302, 8
      %s304 = scalar_lea.vmem %s3, %s303
      %s305 = smul.u32 2, %s21
      %p306 = scmp.lt.s32.totalorder %s21, 1
      %s307 = scalar_select %p306, %s21, 1
      %p308 = scmp.lt.s32.totalorder %s22, 0
      %s309 = scalar_select %p308, %s22, 0
      %s310 = sadd.s32 %s309, %s307
      %s311 = smul.addr %s310, 8
      %s312 = scalar_lea.vmem %s4, %s311
      %s313 = smul.u32 %s21, 16
      %p314 = scmp.eq.s32.totalorder %s23, 0
      // Predicated region
      $region33: #{multiscale_forward.37} parent=31 // pred_check
        %p315 = pneg %p314
      $region34: #{multiscale_forward.37} parent=31 // pred_check_branch
        %317 = sbr.rel (%p315) target = $region36
      $region35: #{multiscale_forward.37} parent=31 // pred_region
        %318 = vst [vmem:[%s304] sm:$0xff] 0.0
        %319 = vst [vmem:[%s304 + $0x8] sm:$0xff] 0.0
      $region36: #{multiscale_forward.37} parent=31 // pred_fallthru
        _
      %v320 = vld [vmem:[%s304] sm:$0xff]
      %v321 = vld [vmem:[%s304 + $0x8] sm:$0xff]
      %v322 = vld [vmem:[%s282] sm:$0xff]
      %v323 = vld [vmem:[%s282 + $0x8] sm:$0xff]
      %v324 = vld [vmem:[%s282 + $0x10] sm:$0xff]
      %v325 = vld [vmem:[%s282 + $0x18] sm:$0xff]
      %v326 = vld [vmem:[%s292] sm:$0xf]
      %v327 = vld [vmem:[%s292 + $0x4] sm:$0xf]
      %v328 = vld [vmem:[%s292 + $0x8] sm:$0xf]
      %v329 = vld [vmem:[%s292 + $0xc] sm:$0xf]
      %v330 = vld [vmem:[%s292 + $0x10] sm:$0xf]
      %v331 = vld [vmem:[%s292 + $0x14] sm:$0xf]
      %v332 = vld [vmem:[%s292 + $0x18] sm:$0xf]
      %v333 = vld [vmem:[%s292 + $0x1c] sm:$0xf]
      %v334 = vld [vmem:[%s292 + $0x20] sm:$0xf]
      %v335 = vld [vmem:[%s292 + $0x24] sm:$0xf]
      %v336 = vld [vmem:[%s292 + $0x28] sm:$0xf]
      %v337 = vld [vmem:[%s292 + $0x2c] sm:$0xf]
      %v338 = vld [vmem:[%s292 + $0x30] sm:$0xf]
      %v339 = vld [vmem:[%s292 + $0x34] sm:$0xf]
      %v340 = vld [vmem:[%s292 + $0x38] sm:$0xf]
      %v341 = vld [vmem:[%s292 + $0x3c] sm:$0xf]
      %v342 = vld [vmem:[%s292 + $0x40] sm:$0xf]
      %v343 = vld [vmem:[%s292 + $0x44] sm:$0xf]
      %v344 = vld [vmem:[%s292 + $0x48] sm:$0xf]
      %v345 = vld [vmem:[%s292 + $0x4c] sm:$0xf]
      %v346 = vld [vmem:[%s292 + $0x50] sm:$0xf]
      %v347 = vld [vmem:[%s292 + $0x54] sm:$0xf]
      %v348 = vld [vmem:[%s292 + $0x58] sm:$0xf]
      %v349 = vld [vmem:[%s292 + $0x5c] sm:$0xf]
      %v350 = vld [vmem:[%s292 + $0x60] sm:$0xf]
      %v351 = vld [vmem:[%s292 + $0x64] sm:$0xf]
      %v352 = vld [vmem:[%s292 + $0x68] sm:$0xf]
      %v353 = vld [vmem:[%s292 + $0x6c] sm:$0xf]
      %v354 = vld [vmem:[%s292 + $0x70] sm:$0xf]
      %v355 = vld [vmem:[%s292 + $0x74] sm:$0xf]
      %v356 = vld [vmem:[%s292 + $0x78] sm:$0xf]
      %v357 = vld [vmem:[%s292 + $0x7c] sm:$0xf]
      %v358 = vld [vmem:[%s292 + $0x80] sm:$0xf]
      %v359 = vld [vmem:[%s292 + $0x84] sm:$0xf]
      %v360 = vld [vmem:[%s292 + $0x88] sm:$0xf]
      %v361 = vld [vmem:[%s292 + $0x8c] sm:$0xf]
      %v362 = vld [vmem:[%s292 + $0x90] sm:$0xf]
      %v363 = vld [vmem:[%s292 + $0x94] sm:$0xf]
      %v364 = vld [vmem:[%s292 + $0x98] sm:$0xf]
      %v365 = vld [vmem:[%s292 + $0x9c] sm:$0xf]
      %v366 = vld [vmem:[%s292 + $0xa0] sm:$0xf]
      %v367 = vld [vmem:[%s292 + $0xa4] sm:$0xf]
      %v368 = vld [vmem:[%s292 + $0xa8] sm:$0xf]
      %v369 = vld [vmem:[%s292 + $0xac] sm:$0xf]
      %v370 = vld [vmem:[%s292 + $0xb0] sm:$0xf]
      %v371 = vld [vmem:[%s292 + $0xb4] sm:$0xf]
      %v372 = vld [vmem:[%s292 + $0xb8] sm:$0xf]
      %v373 = vld [vmem:[%s292 + $0xbc] sm:$0xf]
      %v374 = vld [vmem:[%s292 + $0xc0] sm:$0xf]
      %v375 = vld [vmem:[%s292 + $0xc4] sm:$0xf]
      %v376 = vld [vmem:[%s292 + $0xc8] sm:$0xf]
      %v377 = vld [vmem:[%s292 + $0xcc] sm:$0xf]
      %v378 = vld [vmem:[%s292 + $0xd0] sm:$0xf]
      %v379 = vld [vmem:[%s292 + $0xd4] sm:$0xf]
      %v380 = vld [vmem:[%s292 + $0xd8] sm:$0xf]
      %v381 = vld [vmem:[%s292 + $0xdc] sm:$0xf]
      %v382 = vld [vmem:[%s292 + $0xe0] sm:$0xf]
      %v383 = vld [vmem:[%s292 + $0xe4] sm:$0xf]
      %v384 = vld [vmem:[%s292 + $0xe8] sm:$0xf]
      %v385 = vld [vmem:[%s292 + $0xec] sm:$0xf]
      %v386 = vld [vmem:[%s292 + $0xf0] sm:$0xf]
      %v387 = vld [vmem:[%s292 + $0xf4] sm:$0xf]
      %v388 = vld [vmem:[%s292 + $0xf8] sm:$0xf]
      %v389 = vld [vmem:[%s292 + $0xfc] sm:$0xf]
      %v394 = vunpack.c.l.b16 %v322
      %v395 = vunpack.c.h.b16 %v322
      %v396 = vunpack.c.l.b16 %v323
      %v397 = vunpack.c.h.b16 %v323
      %v398 = vunpack.c.l.b16 %v324
      %v399 = vunpack.c.h.b16 %v324
      %v400 = vunpack.c.l.b16 %v325
      %v401 = vunpack.c.h.b16 %v325
      %v402 = vpack.c.b16 %v398, %v394
      %v403 = vpack.c.b16 %v399, %v395
      %v404 = vpack.c.b16 %v400, %v396
      %v405 = vpack.c.b16 %v401, %v397
      %v474 = vunpack.c.l.b16 %v326
      %v475 = vunpack.c.l.b16 %v327
      %v476 = vunpack.c.l.b16 %v328
      %v477 = vunpack.c.l.b16 %v329
      %v478 = vunpack.c.l.b16 %v330
      %v479 = vunpack.c.l.b16 %v331
      %v480 = vunpack.c.l.b16 %v332
      %v481 = vunpack.c.l.b16 %v333
      %v482 = vunpack.c.l.b16 %v334
      %v483 = vunpack.c.l.b16 %v335
      %v484 = vunpack.c.l.b16 %v336
      %v485 = vunpack.c.l.b16 %v337
      %v486 = vunpack.c.l.b16 %v338
      %v487 = vunpack.c.l.b16 %v339
      %v488 = vunpack.c.l.b16 %v340
      %v489 = vunpack.c.l.b16 %v341
      %v490 = vunpack.c.l.b16 %v342
      %v491 = vunpack.c.l.b16 %v343
      %v492 = vunpack.c.l.b16 %v344
      %v493 = vunpack.c.l.b16 %v345
      %v494 = vunpack.c.l.b16 %v346
      %v495 = vunpack.c.l.b16 %v347
      %v496 = vunpack.c.l.b16 %v348
      %v497 = vunpack.c.l.b16 %v349
      %v498 = vunpack.c.l.b16 %v350
      %v499 = vunpack.c.l.b16 %v351
      %v500 = vunpack.c.l.b16 %v352
      %v501 = vunpack.c.l.b16 %v353
      %v502 = vunpack.c.l.b16 %v354
      %v503 = vunpack.c.l.b16 %v355
      %v504 = vunpack.c.l.b16 %v356
      %v505 = vunpack.c.l.b16 %v357
      %v506 = vunpack.c.l.b16 %v358
      %v507 = vunpack.c.l.b16 %v359
      %v508 = vunpack.c.l.b16 %v360
      %v509 = vunpack.c.l.b16 %v361
      %v510 = vunpack.c.l.b16 %v362
      %v511 = vunpack.c.l.b16 %v363
      %v512 = vunpack.c.l.b16 %v364
      %v513 = vunpack.c.l.b16 %v365
      %v514 = vunpack.c.l.b16 %v366
      %v515 = vunpack.c.l.b16 %v367
      %v516 = vunpack.c.l.b16 %v368
      %v517 = vunpack.c.l.b16 %v369
      %v518 = vunpack.c.l.b16 %v370
      %v519 = vunpack.c.l.b16 %v371
      %v520 = vunpack.c.l.b16 %v372
      %v521 = vunpack.c.l.b16 %v373
      %v522 = vunpack.c.l.b16 %v374
      %v523 = vunpack.c.l.b16 %v375
      %v524 = vunpack.c.l.b16 %v376
      %v525 = vunpack.c.l.b16 %v377
      %v526 = vunpack.c.l.b16 %v378
      %v527 = vunpack.c.l.b16 %v379
      %v528 = vunpack.c.l.b16 %v380
      %v529 = vunpack.c.l.b16 %v381
      %v530 = vunpack.c.l.b16 %v382
      %v531 = vunpack.c.l.b16 %v383
      %v532 = vunpack.c.l.b16 %v384
      %v533 = vunpack.c.l.b16 %v385
      %v534 = vunpack.c.l.b16 %v386
      %v535 = vunpack.c.l.b16 %v387
      %v536 = vunpack.c.l.b16 %v388
      %v537 = vunpack.c.l.b16 %v389
      %v538 = vpack.c.b16 %v475, %v474
      %v539 = vpack.c.b16 %v477, %v476
      %v540 = vpack.c.b16 %v479, %v478
      %v541 = vpack.c.b16 %v481, %v480
      %v542 = vpack.c.b16 %v483, %v482
      %v543 = vpack.c.b16 %v485, %v484
      %v544 = vpack.c.b16 %v487, %v486
      %v545 = vpack.c.b16 %v489, %v488
      %v546 = vpack.c.b16 %v491, %v490
      %v547 = vpack.c.b16 %v493, %v492
      %v548 = vpack.c.b16 %v495, %v494
      %v549 = vpack.c.b16 %v497, %v496
      %v550 = vpack.c.b16 %v499, %v498
      %v551 = vpack.c.b16 %v501, %v500
      %v552 = vpack.c.b16 %v503, %v502
      %v553 = vpack.c.b16 %v505, %v504
      %v554 = vpack.c.b16 %v507, %v506
      %v555 = vpack.c.b16 %v509, %v508
      %v556 = vpack.c.b16 %v511, %v510
      %v557 = vpack.c.b16 %v513, %v512
      %v558 = vpack.c.b16 %v515, %v514
      %v559 = vpack.c.b16 %v517, %v516
      %v560 = vpack.c.b16 %v519, %v518
      %v561 = vpack.c.b16 %v521, %v520
      %v562 = vpack.c.b16 %v523, %v522
      %v563 = vpack.c.b16 %v525, %v524
      %v564 = vpack.c.b16 %v527, %v526
      %v565 = vpack.c.b16 %v529, %v528
      %v566 = vpack.c.b16 %v531, %v530
      %v567 = vpack.c.b16 %v533, %v532
      %v568 = vpack.c.b16 %v535, %v534
      %v569 = vpack.c.b16 %v537, %v536
      %602 = vmatpush.bf16.msra.mxu0 %v545
      %603 = vmatpush.bf16.msra.mxu0 %v544
      %604 = vmatpush.bf16.msra.mxu0 %v543
      %605 = vmatpush.bf16.msra.mxu0 %v542
      %606 = vmatpush.bf16.msra.mxu0 %v541
      %607 = vmatpush.bf16.msra.mxu0 %v540
      %608 = vmatpush.bf16.msra.mxu0 %v539
      %609 = vmatpush.bf16.msra.mxu0 %v538
      %610 = vmatmul.bf16.gmra.mxu0 %v402
      %v611 = vpop.f32.mrf.mxu0
      %v612 = vadd.f32 0.0, %v611
      %v613 = vpop.f32.mrf.mxu0
      %v614 = vadd.f32 0.0, %v613
      %615 = vdwg.mxu0
      %616 = vmatpush.bf16.msra.mxu0 %v553
      %617 = vmatpush.bf16.msra.mxu0 %v552
      %618 = vmatpush.bf16.msra.mxu0 %v551
      %619 = vmatpush.bf16.msra.mxu0 %v550
      %620 = vmatpush.bf16.msra.mxu0 %v549
      %621 = vmatpush.bf16.msra.mxu0 %v548
      %622 = vmatpush.bf16.msra.mxu0 %v547
      %623 = vmatpush.bf16.msra.mxu0 %v546
      %624 = vmatmul.bf16.gmra.mxu0 %v403
      %v625 = vpop.f32.mrf.mxu0
      %v626 = vadd.f32 %v612, %v625
      %v627 = vpop.f32.mrf.mxu0
      %v628 = vadd.f32 %v614, %v627
      %629 = vdwg.mxu0
      %630 = vmatpush.bf16.msra.mxu0 %v561
      %631 = vmatpush.bf16.msra.mxu0 %v560
      %632 = vmatpush.bf16.msra.mxu0 %v559
      %633 = vmatpush.bf16.msra.mxu0 %v558
      %634 = vmatpush.bf16.msra.mxu0 %v557
      %635 = vmatpush.bf16.msra.mxu0 %v556
      %636 = vmatpush.bf16.msra.mxu0 %v555
      %637 = vmatpush.bf16.msra.mxu0 %v554
      %638 = vmatmul.bf16.gmra.mxu0 %v404
      %v639 = vpop.f32.mrf.mxu0
      %v640 = vadd.f32 %v626, %v639
      %v641 = vpop.f32.mrf.mxu0
      %v642 = vadd.f32 %v628, %v641
      %643 = vdwg.mxu0
      %644 = vmatpush.bf16.msra.mxu0 %v569
      %645 = vmatpush.bf16.msra.mxu0 %v568
      %646 = vmatpush.bf16.msra.mxu0 %v567
      %647 = vmatpush.bf16.msra.mxu0 %v566
      %648 = vmatpush.bf16.msra.mxu0 %v565
      %649 = vmatpush.bf16.msra.mxu0 %v564
      %650 = vmatpush.bf16.msra.mxu0 %v563
      %651 = vmatpush.bf16.msra.mxu0 %v562
      %652 = vmatmul.bf16.gmra.mxu0 %v405
      %v653 = vpop.f32.mrf.mxu0
      %v654 = vadd.f32 %v640, %v653
      %v655 = vpop.f32.mrf.mxu0
      %v656 = vadd.f32 %v642, %v655
      %657 = vdwg.mxu0
      %v658 = vadd.f32 %v320, %v654
      %v659 = vadd.f32 %v321, %v656
      %660 = vst [vmem:[%s304] sm:$0xff] %v658
      %661 = vst [vmem:[%s304 + $0x8] sm:$0xff] %v659
      // Predicated region
      $region37: #{multiscale_forward.37} parent=31 // pred_check
        %p662 = pneg %p314
      $region38: #{multiscale_forward.37} parent=31 // pred_check_branch
        %664 = sbr.rel (%p662) target = $region40
      $region39: #{multiscale_forward.37} parent=31 // pred_region
        %v665 = vld [vmem:[%s304] sm:$0xff]
        %v666 = vld [vmem:[%s304 + $0x8] sm:$0xff]
        %v667 = vld [vmem:[%s296] sm:$0x1]
        %v669 = vperm.slane %v667, 0
        %v671 = vadd.f32 %v665, %v669
        %v672 = vadd.f32 %v666, %v669
        %673 = vst [vmem:[%s304] sm:$0xff] %v671
        %674 = vst [vmem:[%s304 + $0x8] sm:$0xff] %v672
        %v675 = vlaneseq
        %v676 = vshrl.u32 %v675, 7
        %v677 = vadd.s32 %v676, 8
        %v678 = vstv %s313
        %v679 = vadd.s32 %v676, %v678
        %v680 = vadd.s32 %v677, %v678
        %vm681 = vcmp.lt.s32.totalorder %v679, 18
        %vm682 = vcmp.lt.s32.totalorder %v680, 18
        %v683 = vsel %vm681, 1, 0
        %v684 = vsel %vm682, 1, 0
        %vm685 = vcmp.eq.s32.totalorder %v683, 1
        %vm686 = vcmp.eq.s32.totalorder %v684, 1
        %v687 = vsel %vm685, %v671, 0.0
        %v688 = vsel %vm686, %v672, 0.0
        %v689 = vadd.f32 %v687, %v688
        %v690 = vrot.slane %v689, 4
        %v691 = vadd.f32 %v689, %v690
        %v692 = vrot.slane %v691, 2
        %v693 = vadd.f32 %v691, %v692
        %v694 = vrot.slane %v693, 1
        %v695 = vadd.f32 %v693, %v694
        %v696 = vmul.f32 %v687, %v687
        %v697 = vmul.f32 %v688, %v688
        %v698 = vadd.f32 %v696, %v697
        %v699 = vrot.slane %v698, 4
        %v700 = vadd.f32 %v698, %v699
        %v701 = vrot.slane %v700, 2
        %v702 = vadd.f32 %v700, %v701
        %v703 = vrot.slane %v702, 1
        %v704 = vadd.f32 %v702, %v703
        %vm705 = vcmp.eq.s32.totalorder %v676, 0
        %v706 = vsel %vm705, %v695, 0.0
        %vm707 = vcmp.eq.s32.totalorder %v676, 1
        %v708 = vsel %vm707, %v704, 0.0
        %v709 = vadd.f32 %v706, %v708
        %710 = vst [vmem:[%s312] sm:$0xff] %v709
      $region40: #{multiscale_forward.37} parent=31 // pred_fallthru
        _
      %s711 = smul.u32 2, %s21
      %p712 = scmp.lt.s32.totalorder %s711, 3
      %s713 = scalar_select %p712, %s711, 3
      %p714 = scmp.lt.s32.totalorder %s22, 0
      %s715 = scalar_select %p714, %s22, 0
      %s716 = sadd.s32 %s715, %s713
      %s717 = smul.addr %s716, 8
      %s718 = scalar_lea.vmem %s3, %s717
      %p719 = scmp.lt.s32.totalorder %s21, 1
      %s720 = scalar_select %p719, %s21, 1
      %p721 = scmp.lt.s32.totalorder %s22, 0
      %s722 = scalar_select %p721, %s22, 0
      %s723 = sadd.s32 %s722, %s720
      %s724 = smul.addr %s723, 8
      %s725 = scalar_lea.vmem %s4, %s724
      // Predicated region
      $region41: #{multiscale_forward.37} parent=31 // pred_check
        %p726 = pneg %p137
      $region42: #{multiscale_forward.37} parent=31 // pred_check_branch
        %728 = sbr.rel (%p726) target = $region44
      $region43: #{multiscale_forward.37} parent=31 // pred_region
        %s729 = smul.u32 2, %s21
      $region44: #{multiscale_forward.37} parent=31 // pred_fallthru
        _
      // Predicated region
      $region45: #{multiscale_forward.37} parent=31 // pred_check
        %p730 = pneg %p165
      $region46: #{multiscale_forward.37} parent=31 // pred_check_branch
        %732 = sbr.rel (%p730) target = $region48
      $region47: #{multiscale_forward.37} parent=31 // pred_region
        _
      $region48: #{multiscale_forward.37} parent=31 // pred_fallthru
        _
    $region32: #{multiscale_forward.37} parent=5 // pred_fallthru
      _
    %p733 = scmp.le.s32.totalorder 2, %s11
    // Predicated region
    $region49: #{multiscale_forward.37} parent=5 // pred_check
      %p734 = pneg %p733
    $region50: #{multiscale_forward.37} parent=5 // pred_check_branch
      %736 = sbr.rel (%p734) target = $region52
    $region51: #{multiscale_forward.37} parent=5 // pred_region
      %s737 = ssub.s32 %s11, 2
      // Predicated region
      $region53: #{multiscale_forward.37} parent=51 // pred_check
        %p738 = pneg %p143
      $region54: #{multiscale_forward.37} parent=51 // pred_check_branch
        %740 = sbr.rel (%p738) target = $region56
      $region55: #{multiscale_forward.37} parent=51 // pred_region
        %s741 = smul.u32 2, %s24
        %p742 = scmp.lt.s32.totalorder %s741, 3
        %s743 = scalar_select %p742, %s741, 3
        %p744 = scmp.lt.s32.totalorder %s25, 0
        %s745 = scalar_select %p744, %s25, 0
        %s746 = sadd.s32 %s745, %s743
        %s747 = smul.addr %s746, 8
        %s748 = scalar_lea.vmem %s3, %s747
      $region56: #{multiscale_forward.37} parent=51 // pred_fallthru
        _
      // Predicated region
      $region57: #{multiscale_forward.37} parent=51 // pred_check
        %p749 = pneg %p171
      $region58: #{multiscale_forward.37} parent=51 // pred_check_branch
        %751 = sbr.rel (%p749) target = $region60
      $region59: #{multiscale_forward.37} parent=51 // pred_region
        %p752 = scmp.lt.s32.totalorder %s24, 1
        %s753 = scalar_select %p752, %s24, 1
        %p754 = scmp.lt.s32.totalorder %s25, 0
        %s755 = scalar_select %p754, %s25, 0
        %s756 = sadd.s32 %s755, %s753
        %s757 = smul.addr %s756, 8
        %s758 = scalar_lea.vmem %s4, %s757
      $region60: #{multiscale_forward.37} parent=51 // pred_fallthru
        _
    $region52: #{multiscale_forward.37} parent=5 // pred_fallthru
      _
  $region6: #{multiscale_forward.37} parent=0 // loop_footer
    %s15 = sadd.s32 1, %s11
  $region7: #{multiscale_forward.37} parent=0 // loop_footer_branch
    %10 = sbr.rel target = $region3
  $region8: #{multiscale_forward.37} parent=0 // loop_exit
    _

// kernel: multiscale_forward.39
$region0: #{multiscale_forward.39}
  #allocation0 [shape = 'u32[]', space=smem, size = 0x4, offset = 0x4, fixed_abs, tag = 'smem constant byte address 0x4 - core index']
  #allocation1 [shape = 'u32[72,128]{1,0:T(1,128)}', space=vmem, size = 0x9000, scoped, tag = 'internal scratch']
  %s0 = inlined_call_operand.vmem [shape: bf16[32,1024], index: 0, kind: input, shape index: {}]
  %s1 = inlined_call_operand.vmem [shape: bf16[1024,128], index: 1, kind: input, shape index: {}]
  %s2 = inlined_call_operand.vmem [shape: f32[1,128], index: 2, kind: input, shape index: {}]
  %s3 = inlined_call_operand.vmem [shape: f32[32,128], index: 3, kind: output, shape index: {}]
  %s4 = sld [smem:[#allocation0]]
  $region53: #{multiscale_forward.39} parent=0
    _
  %s6 = ssub.s32 1, %s4
  %s7 = scalar_select 0, %s6, %s4
  loop: start=0, step=1, limit=4
  $region2: #{multiscale_forward.39} parent=0 // loop_pre_header
    _
  $region3: #{multiscale_forward.39} parent=0 // loop_header
    %s9 = sphi 0, %s13
    %p10 = scmp.ge.s32.totalorder %s9, 4
    %s16 = sphi 0, %s35
    %s17 = sphi 0, %s31
    %s18 = sphi 0, %s27
    %s19 = sphi 0, %s16
    %s20 = sphi 0, %s17
    %s21 = sphi 0, %s18
    %s22 = sphi 0, %s19
    %s23 = sphi 0, %s20
    %s24 = sphi 0, %s21
    %s40 = sphi 0, %s42
    %s43 = sphi 0, %s40
    %s44 = sphi 0, %s43
    %s60 = sphi 0, %s44
    %s68 = sphi 0, %s70
    %s71 = sphi 0, %s68
    %s72 = sphi 0, %s71
    %s88 = sphi 0, %s72
    %s94 = sphi 0, %s96
    %s97 = sphi 0, %s94
    %s98 = sphi 0, %s97
    %s114 = sphi 0, %s98
    %s122 = sphi 0, %s124
    %s125 = sphi 0, %s122
    %s126 = sphi 0, %s125
    %s142 = sphi 0, %s126
  $region4: #{multiscale_forward.39} parent=0 // loop_header_branch
    %12 = sbr.rel (%p10) target = $region8
  $region5: #{multiscale_forward.39} parent=0 // loop_body
    %s14 = ssub.s32 %s9, 1
    %s15 = ssub.s32 %s9, 2
    %s25 = sadd.s32 1, %s18
    %p26 = scmp.ge.s32.totalorder %s25, 1
    %s27 = scalar_select %p26, 0, %s25
    %s28 = sadd.s32 1, %s17
    %s29 = scalar_select %p26, %s28, %s17
    %p30 = scmp.ge.s32.totalorder %s29, 1
    %s31 = scalar_select %p30, 0, %s29
    %s32 = sadd.s32 1, %s16
    %s33 = scalar_select %p30, %s32, %s16
    %p34 = scmp.ge.s32.totalorder %s33, 2
    %s35 = scalar_select %p34, 0, %s33
    %s36 = ssub.s32 %s16, %s35
    %s37 = ssub.s32 %s18, %s27
    %s38 = sor.u32 %s36, %s37
    %p39 = scmp.eq.s32.totalorder %s38, 0
    %s41 = sadd.s32 %s40, 1
    %s42 = scalar_select %p39, %s40, %s41
    %p45 = pneg %p39
    %p46 = scmp.eq.s32.totalorder %s9, 1
    %p47 = por %p45, %p46
    %p48 = scmp.ne.s32.totalorder %s40, %s43
    %p49 = scmp.eq.s32.totalorder %s9, 0
    %p50 = por %p48, %p49
    %p51 = scmp.ne.s32.totalorder %s40, %s43
    %p52 = scmp.eq.s32.totalorder %s14, 1
    %p53 = por %p51, %p52
    %p54 = scmp.ne.s32.totalorder %s43, %s44
    %p55 = scmp.eq.s32.totalorder %s14, 0
    %p56 = por %p54, %p55
    %p57 = scmp.ne.s32.totalorder %s43, %s44
    %p58 = scmp.eq.s32.totalorder %s15, 1
    %p59 = por %p57, %p58
    %p61 = scmp.ne.s32.totalorder %s44, %s60
    %p62 = scmp.eq.s32.totalorder %s15, 0
    %p63 = por %p61, %p62
    %s64 = ssub.s32 %s18, %s27
    %s65 = ssub.s32 %s17, %s31
    %s66 = sor.u32 %s64, %s65
    %p67 = scmp.eq.s32.totalorder %s66, 0
    %s69 = sadd.s32 %s68, 1
    %s70 = scalar_select %p67, %s68, %s69
    %p73 = pneg %p67
    %p74 = scmp.eq.s32.totalorder %s9, 1
    %p75 = por %p73, %p74
    %p76 = scmp.ne.s32.totalorder %s68, %s71
    %p77 = scmp.eq.s32.totalorder %s9, 0
    %p78 = por %p76, %p77
    %p79 = scmp.ne.s32.totalorder %s68, %s71
    %p80 = scmp.eq.s32.totalorder %s14, 1
    %p81 = por %p79, %p80
    %p82 = scmp.ne.s32.totalorder %s71, %s72
    %p83 = scmp.eq.s32.totalorder %s14, 0
    %p84 = por %p82, %p83
    %p85 = scmp.ne.s32.totalorder %s71, %s72
    %p86 = scmp.eq.s32.totalorder %s15, 1
    %p87 = por %p85, %p86
    %p89 = scmp.ne.s32.totalorder %s72, %s88
    %p90 = scmp.eq.s32.totalorder %s15, 0
    %p91 = por %p89, %p90
    %s92 = ssub.s32 %s17, %s31
    %p93 = scmp.eq.s32.totalorder %s92, 0
    %s95 = sadd.s32 %s94, 1
    %s96 = scalar_select %p93, %s94, %s95
    %p99 = pneg %p93
    %p100 = scmp.eq.s32.totalorder %s9, 1
    %p101 = por %p99, %p100
    %p102 = scmp.ne.s32.totalorder %s94, %s97
    %p103 = scmp.eq.s32.totalorder %s9, 0
    %p104 = por %p102, %p103
    %p105 = scmp.ne.s32.totalorder %s94, %s97
    %p106 = scmp.eq.s32.totalorder %s14, 1
    %p107 = por %p105, %p106
    %p108 = scmp.ne.s32.totalorder %s97, %s98
    %p109 = scmp.eq.s32.totalorder %s14, 0
    %p110 = por %p108, %p109
    %p111 = scmp.ne.s32.totalorder %s97, %s98
    %p112 = scmp.eq.s32.totalorder %s15, 1
    %p113 = por %p111, %p112
    %p115 = scmp.ne.s32.totalorder %s98, %s114
    %p116 = scmp.eq.s32.totalorder %s15, 0
    %p117 = por %p115, %p116
    %s118 = ssub.s32 %s16, %s35
    %s119 = ssub.s32 %s17, %s31
    %s120 = sor.u32 %s118, %s119
    %p121 = scmp.eq.s32.totalorder %s120, 0
    %s123 = sadd.s32 %s122, 1
    %s124 = scalar_select %p121, %s122, %s123
    %p127 = pneg %p121
    %p128 = scmp.eq.s32.totalorder %s9, 1
    %p129 = por %p127, %p128
    %p130 = scmp.ne.s32.totalorder %s122, %s125
    %p131 = scmp.eq.s32.totalorder %s9, 0
    %p132 = por %p130, %p131
    %p133 = scmp.ne.s32.totalorder %s122, %s125
    %p134 = scmp.eq.s32.totalorder %s14, 1
    %p135 = por %p133, %p134
    %p136 = scmp.ne.s32.totalorder %s125, %s126
    %p137 = scmp.eq.s32.totalorder %s14, 0
    %p138 = por %p136, %p137
    %p139 = scmp.ne.s32.totalorder %s125, %s126
    %p140 = scmp.eq.s32.totalorder %s15, 1
    %p141 = por %p139, %p140
    %p143 = scmp.ne.s32.totalorder %s126, %s142
    %p144 = scmp.eq.s32.totalorder %s15, 0
    %p145 = por %p143, %p144
    %p146 = scmp.le.s32.totalorder 1, %s9
    %p147 = scmp.lt.s32.totalorder %s9, 3
    %p148 = pnand %p146, %p147
    %p149 = pneg %p148
    // Predicated region
    $region9: #{multiscale_forward.39} parent=5 // pred_check
      _
    $region10: #{multiscale_forward.39} parent=5 // pred_check_branch
      %151 = sbr.rel (%p148) target = $region12
    $region11: #{multiscale_forward.39} parent=5 // pred_region
      %s152 = ssub.s32 %s9, 1
      // Predicated region
      $region13: #{multiscale_forward.39} parent=11 // pred_check
        %p153 = pneg %p84
      $region14: #{multiscale_forward.39} parent=11 // pred_check_branch
        %155 = sbr.rel (%p153) target = $region16
      $region15: #{multiscale_forward.39} parent=11 // pred_region
        %s156 = smul.u32 128, %s21
        %p157 = scmp.lt.s32.totalorder %s156, 127
        %s158 = scalar_select %p157, %s156, 127
        %p159 = scmp.lt.s32.totalorder %s20, 0
        %s160 = scalar_select %p159, %s20, 0
        %s161 = sadd.s32 %s160, %s158
        %s162 = smul.addr %s161, 4
        %s163 = scalar_lea.vmem %s1, %s162
        %s164 = smul.u32 128, %s21
      $region16: #{multiscale_forward.39} parent=11 // pred_fallthru
        _
      // Predicated region
      $region17: #{multiscale_forward.39} parent=11 // pred_check
        %p165 = pneg %p110
      $region18: #{multiscale_forward.39} parent=11 // pred_check_branch
        %167 = sbr.rel (%p165) target = $region20
      $region19: #{multiscale_forward.39} parent=11 // pred_region
        %p168 = scmp.lt.s32.totalorder %s20, 0
        %s169 = scalar_select %p168, %s20, 0
        %s170 = scalar_lea.vmem %s2, %s169
      $region20: #{multiscale_forward.39} parent=11 // pred_fallthru
        _
    $region12: #{multiscale_forward.39} parent=5 // pred_fallthru
      _
    %p171 = scmp.lt.s32.totalorder %s9, 2
    // Predicated region
    $region21: #{multiscale_forward.39} parent=5 // pred_check
      %p172 = pneg %p171
    $region22: #{multiscale_forward.39} parent=5 // pred_check_branch
      %174 = sbr.rel (%p172) target = $region24
    $region23: #{multiscale_forward.39} parent=5 // pred_region
      // Predicated region
      $region25: #{multiscale_forward.39} parent=23 // pred_check
        %p175 = pneg %p50
      $region26: #{multiscale_forward.39} parent=23 // pred_check_branch
        %177 = sbr.rel (%p175) target = $region28
      $region27: #{multiscale_forward.39} parent=23 // pred_region
        %s178 = smul.u32 2, %s16
        %s179 = smul.u32 8, %s18
        %p180 = scmp.lt.s32.totalorder %s178, 3
        %s181 = scalar_select %p180, %s178, 3
        %p182 = scmp.lt.s32.totalorder %s179, 7
        %s183 = scalar_select %p182, %s179, 7
        %s184 = smul.addr %s181, 8
        %s185 = sadd.s32 %s183, %s184
        %s186 = smul.addr %s185, 4
        %s187 = scalar_lea.vmem %s0, %s186
        %s188 = smul.u32 2, %s16
        %s189 = smul.u32 8, %s18
      $region28: #{multiscale_forward.39} parent=23 // pred_fallthru
        _
    $region24: #{multiscale_forward.39} parent=5 // pred_fallthru
      _
    %p190 = scmp.le.s32.totalorder 1, %s9
    %p191 = scmp.lt.s32.totalorder %s9, 3
    %p192 = pnand %p190, %p191
    %p193 = pneg %p192
    // Predicated region
    $region29: #{multiscale_forward.39} parent=5 // pred_check
      _
    $region30: #{multiscale_forward.39} parent=5 // pred_check_branch
      %195 = sbr.rel (%p192) target = $region32
    $region31: #{multiscale_forward.39} parent=5 // pred_region
      %s196 = ssub.s32 %s9, 1
      %s197 = smul.u32 2, %s19
      %s198 = smul.u32 8, %s21
      %p199 = scmp.lt.s32.totalorder %s197, 3
      %s200 = scalar_select %p199, %s197, 3
      %p201 = scmp.lt.s32.totalorder %s198, 7
      %s202 = scalar_select %p201, %s198, 7
      %s203 = smul.addr %s200, 8
      %s204 = sadd.s32 %s202, %s203
      %s205 = smul.addr %s204, 4
      %s206 = scalar_lea.vmem %s0, %s205
      %p207 = pneg %p56
      %p208 = pneg %p53
      %s209 = smul.u32 128, %s21
      %p210 = scmp.lt.s32.totalorder %s209, 127
      %s211 = scalar_select %p210, %s209, 127
      %p212 = scmp.lt.s32.totalorder %s20, 0
      %s213 = scalar_select %p212, %s20, 0
      %s214 = sadd.s32 %s213, %s211
      %s215 = smul.addr %s214, 4
      %s216 = scalar_lea.vmem %s1, %s215
      %p217 = pneg %p84
      %p218 = pneg %p81
      %p219 = scmp.lt.s32.totalorder %s20, 0
      %s220 = scalar_select %p219, %s20, 0
      %s221 = scalar_lea.vmem %s2, %s220
      %p222 = pneg %p110
      %p223 = pneg %p107
      %p224 = pneg %p138
      %p225 = pneg %p135
      %s226 = smul.u32 2, %s19
      %p227 = scmp.lt.s32.totalorder %s226, 3
      %s228 = scalar_select %p227, %s226, 3
      %p229 = scmp.lt.s32.totalorder %s20, 0
      %s230 = scalar_select %p229, %s20, 0
      %s231 = sadd.s32 %s230, %s228
      %s232 = smul.addr %s231, 8
      %s233 = scalar_lea.vmem %s3, %s232
      %s234 = smul.u32 2, %s19
      %s235 = smul.u32 8, %s21
      %p236 = scmp.lt.s32.totalorder %s234, 3
      %s237 = scalar_select %p236, %s234, 3
      %p238 = scmp.lt.s32.totalorder %s235, 7
      %s239 = scalar_select %p238, %s235, 7
      %s240 = smul.addr %s237, 8
      %s241 = sadd.s32 %s239, %s240
      %s242 = smul.addr %s241, 4
      %s243 = scalar_lea.vmem %s0, %s242
      %s244 = smul.u32 2, %s19
      %s245 = smul.u32 8, %s21
      %s246 = smul.u32 128, %s21
      %p247 = scmp.lt.s32.totalorder %s246, 127
      %s248 = scalar_select %p247, %s246, 127
      %p249 = scmp.lt.s32.totalorder %s20, 0
      %s250 = scalar_select %p249, %s20, 0
      %s251 = sadd.s32 %s250, %s248
      %s252 = smul.addr %s251, 4
      %s253 = scalar_lea.vmem %s1, %s252
      %s254 = smul.u32 128, %s21
      %p255 = scmp.lt.s32.totalorder %s20, 0
      %s256 = scalar_select %p255, %s20, 0
      %s257 = scalar_lea.vmem %s2, %s256
      %s258 = smul.u32 2, %s19
      %p259 = scmp.lt.s32.totalorder %s258, 3
      %s260 = scalar_select %p259, %s258, 3
      %p261 = scmp.lt.s32.totalorder %s20, 0
      %s262 = scalar_select %p261, %s20, 0
      %s263 = sadd.s32 %s262, %s260
      %s264 = smul.addr %s263, 8
      %s265 = scalar_lea.vmem %s3, %s264
      %s266 = smul.u32 2, %s19
      %p267 = scmp.eq.s32.totalorder %s21, 0
      // Predicated region
      $region33: #{multiscale_forward.39} parent=31 // pred_check
        %p268 = pneg %p267
      $region34: #{multiscale_forward.39} parent=31 // pred_check_branch
        %270 = sbr.rel (%p268) target = $region36
      $region35: #{multiscale_forward.39} parent=31 // pred_region
        %271 = vst [vmem:[%s265] sm:$0xff] 0.0
        %272 = vst [vmem:[%s265 + $0x8] sm:$0xff] 0.0
      $region36: #{multiscale_forward.39} parent=31 // pred_fallthru
        _
      %v273 = vld [vmem:[%s265] sm:$0xff]
      %v274 = vld [vmem:[%s265 + $0x8] sm:$0xff]
      %v275 = vld [vmem:[%s243] sm:$0xff]
      %v276 = vld [vmem:[%s243 + $0x8] sm:$0xff]
      %v277 = vld [vmem:[%s243 + $0x10] sm:$0xff]
      %v278 = vld [vmem:[%s243 + $0x18] sm:$0xff]
      %v279 = vld [vmem:[%s243 + $0x20] sm:$0xff]
      %v280 = vld [vmem:[%s243 + $0x28] sm:$0xff]
      %v281 = vld [vmem:[%s243 + $0x30] sm:$0xff]
      %v282 = vld [vmem:[%s243 + $0x38] sm:$0xff]
      %v283 = vld [vmem:[%s253] sm:$0xf]
      %v284 = vld [vmem:[%s253 + $0x4] sm:$0xf]
      %v285 = vld [vmem:[%s253 + $0x8] sm:$0xf]
      %v286 = vld [vmem:[%s253 + $0xc] sm:$0xf]
      %v287 = vld [vmem:[%s253 + $0x10] sm:$0xf]
      %v288 = vld [vmem:[%s253 + $0x14] sm:$0xf]
      %v289 = vld [vmem:[%s253 + $0x18] sm:$0xf]
      %v290 = vld [vmem:[%s253 + $0x1c] sm:$0xf]
      %v291 = vld [vmem:[%s253 + $0x20] sm:$0xf]
      %v292 = vld [vmem:[%s253 + $0x24] sm:$0xf]
      %v293 = vld [vmem:[%s253 + $0x28] sm:$0xf]
      %v294 = vld [vmem:[%s253 + $0x2c] sm:$0xf]
      %v295 = vld [vmem:[%s253 + $0x30] sm:$0xf]
      %v296 = vld [vmem:[%s253 + $0x34] sm:$0xf]
      %v297 = vld [vmem:[%s253 + $0x38] sm:$0xf]
      %v298 = vld [vmem:[%s253 + $0x3c] sm:$0xf]
      %v299 = vld [vmem:[%s253 + $0x40] sm:$0xf]
      %v300 = vld [vmem:[%s253 + $0x44] sm:$0xf]
      %v301 = vld [vmem:[%s253 + $0x48] sm:$0xf]
      %v302 = vld [vmem:[%s253 + $0x4c] sm:$0xf]
      %v303 = vld [vmem:[%s253 + $0x50] sm:$0xf]
      %v304 = vld [vmem:[%s253 + $0x54] sm:$0xf]
      %v305 = vld [vmem:[%s253 + $0x58] sm:$0xf]
      %v306 = vld [vmem:[%s253 + $0x5c] sm:$0xf]
      %v307 = vld [vmem:[%s253 + $0x60] sm:$0xf]
      %v308 = vld [vmem:[%s253 + $0x64] sm:$0xf]
      %v309 = vld [vmem:[%s253 + $0x68] sm:$0xf]
      %v310 = vld [vmem:[%s253 + $0x6c] sm:$0xf]
      %v311 = vld [vmem:[%s253 + $0x70] sm:$0xf]
      %v312 = vld [vmem:[%s253 + $0x74] sm:$0xf]
      %v313 = vld [vmem:[%s253 + $0x78] sm:$0xf]
      %v314 = vld [vmem:[%s253 + $0x7c] sm:$0xf]
      %v315 = vld [vmem:[%s253 + $0x80] sm:$0xf]
      %v316 = vld [vmem:[%s253 + $0x84] sm:$0xf]
      %v317 = vld [vmem:[%s253 + $0x88] sm:$0xf]
      %v318 = vld [vmem:[%s253 + $0x8c] sm:$0xf]
      %v319 = vld [vmem:[%s253 + $0x90] sm:$0xf]
      %v320 = vld [vmem:[%s253 + $0x94] sm:$0xf]
      %v321 = vld [vmem:[%s253 + $0x98] sm:$0xf]
      %v322 = vld [vmem:[%s253 + $0x9c] sm:$0xf]
      %v323 = vld [vmem:[%s253 + $0xa0] sm:$0xf]
      %v324 = vld [vmem:[%s253 + $0xa4] sm:$0xf]
      %v325 = vld [vmem:[%s253 + $0xa8] sm:$0xf]
      %v326 = vld [vmem:[%s253 + $0xac] sm:$0xf]
      %v327 = vld [vmem:[%s253 + $0xb0] sm:$0xf]
      %v328 = vld [vmem:[%s253 + $0xb4] sm:$0xf]
      %v329 = vld [vmem:[%s253 + $0xb8] sm:$0xf]
      %v330 = vld [vmem:[%s253 + $0xbc] sm:$0xf]
      %v331 = vld [vmem:[%s253 + $0xc0] sm:$0xf]
      %v332 = vld [vmem:[%s253 + $0xc4] sm:$0xf]
      %v333 = vld [vmem:[%s253 + $0xc8] sm:$0xf]
      %v334 = vld [vmem:[%s253 + $0xcc] sm:$0xf]
      %v335 = vld [vmem:[%s253 + $0xd0] sm:$0xf]
      %v336 = vld [vmem:[%s253 + $0xd4] sm:$0xf]
      %v337 = vld [vmem:[%s253 + $0xd8] sm:$0xf]
      %v338 = vld [vmem:[%s253 + $0xdc] sm:$0xf]
      %v339 = vld [vmem:[%s253 + $0xe0] sm:$0xf]
      %v340 = vld [vmem:[%s253 + $0xe4] sm:$0xf]
      %v341 = vld [vmem:[%s253 + $0xe8] sm:$0xf]
      %v342 = vld [vmem:[%s253 + $0xec] sm:$0xf]
      %v343 = vld [vmem:[%s253 + $0xf0] sm:$0xf]
      %v344 = vld [vmem:[%s253 + $0xf4] sm:$0xf]
      %v345 = vld [vmem:[%s253 + $0xf8] sm:$0xf]
      %v346 = vld [vmem:[%s253 + $0xfc] sm:$0xf]
      %v347 = vld [vmem:[%s253 + $0x100] sm:$0xf]
      %v348 = vld [vmem:[%s253 + $0x104] sm:$0xf]
      %v349 = vld [vmem:[%s253 + $0x108] sm:$0xf]
      %v350 = vld [vmem:[%s253 + $0x10c] sm:$0xf]
      %v351 = vld [vmem:[%s253 + $0x110] sm:$0xf]
      %v352 = vld [vmem:[%s253 + $0x114] sm:$0xf]
      %v353 = vld [vmem:[%s253 + $0x118] sm:$0xf]
      %v354 = vld [vmem:[%s253 + $0x11c] sm:$0xf]
      %v355 = vld [vmem:[%s253 + $0x120] sm:$0xf]
      %v356 = vld [vmem:[%s253 + $0x124] sm:$0xf]
      %v357 = vld [vmem:[%s253 + $0x128] sm:$0xf]
      %v358 = vld [vmem:[%s253 + $0x12c] sm:$0xf]
      %v359 = vld [vmem:[%s253 + $0x130] sm:$0xf]
      %v360 = vld [vmem:[%s253 + $0x134] sm:$0xf]
      %v361 = vld [vmem:[%s253 + $0x138] sm:$0xf]
      %v362 = vld [vmem:[%s253 + $0x13c] sm:$0xf]
      %v363 = vld [vmem:[%s253 + $0x140] sm:$0xf]
      %v364 = vld [vmem:[%s253 + $0x144] sm:$0xf]
      %v365 = vld [vmem:[%s253 + $0x148] sm:$0xf]
      %v366 = vld [vmem:[%s253 + $0x14c] sm:$0xf]
      %v367 = vld [vmem:[%s253 + $0x150] sm:$0xf]
      %v368 = vld [vmem:[%s253 + $0x154] sm:$0xf]
      %v369 = vld [vmem:[%s253 + $0x158] sm:$0xf]
      %v370 = vld [vmem:[%s253 + $0x15c] sm:$0xf]
      %v371 = vld [vmem:[%s253 + $0x160] sm:$0xf]
      %v372 = vld [vmem:[%s253 + $0x164] sm:$0xf]
      %v373 = vld [vmem:[%s253 + $0x168] sm:$0xf]
      %v374 = vld [vmem:[%s253 + $0x16c] sm:$0xf]
      %v375 = vld [vmem:[%s253 + $0x170] sm:$0xf]
      %v376 = vld [vmem:[%s253 + $0x174] sm:$0xf]
      %v377 = vld [vmem:[%s253 + $0x178] sm:$0xf]
      %v378 = vld [vmem:[%s253 + $0x17c] sm:$0xf]
      %v379 = vld [vmem:[%s253 + $0x180] sm:$0xf]
      %v380 = vld [vmem:[%s253 + $0x184] sm:$0xf]
      %v381 = vld [vmem:[%s253 + $0x188] sm:$0xf]
      %v382 = vld [vmem:[%s253 + $0x18c] sm:$0xf]
      %v383 = vld [vmem:[%s253 + $0x190] sm:$0xf]
      %v384 = vld [vmem:[%s253 + $0x194] sm:$0xf]
      %v385 = vld [vmem:[%s253 + $0x198] sm:$0xf]
      %v386 = vld [vmem:[%s253 + $0x19c] sm:$0xf]
      %v387 = vld [vmem:[%s253 + $0x1a0] sm:$0xf]
      %v388 = vld [vmem:[%s253 + $0x1a4] sm:$0xf]
      %v389 = vld [vmem:[%s253 + $0x1a8] sm:$0xf]
      %v390 = vld [vmem:[%s253 + $0x1ac] sm:$0xf]
      %v391 = vld [vmem:[%s253 + $0x1b0] sm:$0xf]
      %v392 = vld [vmem:[%s253 + $0x1b4] sm:$0xf]
      %v393 = vld [vmem:[%s253 + $0x1b8] sm:$0xf]
      %v394 = vld [vmem:[%s253 + $0x1bc] sm:$0xf]
      %v395 = vld [vmem:[%s253 + $0x1c0] sm:$0xf]
      %v396 = vld [vmem:[%s253 + $0x1c4] sm:$0xf]
      %v397 = vld [vmem:[%s253 + $0x1c8] sm:$0xf]
      %v398 = vld [vmem:[%s253 + $0x1cc] sm:$0xf]
      %v399 = vld [vmem:[%s253 + $0x1d0] sm:$0xf]
      %v400 = vld [vmem:[%s253 + $0x1d4] sm:$0xf]
      %v401 = vld [vmem:[%s253 + $0x1d8] sm:$0xf]
      %v402 = vld [vmem:[%s253 + $0x1dc] sm:$0xf]
      %v403 = vld [vmem:[%s253 + $0x1e0] sm:$0xf]
      %v404 = vld [vmem:[%s253 + $0x1e4] sm:$0xf]
      %v405 = vld [vmem:[%s253 + $0x1e8] sm:$0xf]
      %v406 = vld [vmem:[%s253 + $0x1ec] sm:$0xf]
      %v407 = vld [vmem:[%s253 + $0x1f0] sm:$0xf]
      %v408 = vld [vmem:[%s253 + $0x1f4] sm:$0xf]
      %v409 = vld [vmem:[%s253 + $0x1f8] sm:$0xf]
      %v410 = vld [vmem:[%s253 + $0x1fc] sm:$0xf]
      %v419 = vunpack.c.l.b16 %v275
      %v420 = vunpack.c.h.b16 %v275
      %v421 = vunpack.c.l.b16 %v276
      %v422 = vunpack.c.h.b16 %v276
      %v423 = vunpack.c.l.b16 %v277
      %v424 = vunpack.c.h.b16 %v277
      %v425 = vunpack.c.l.b16 %v278
      %v426 = vunpack.c.h.b16 %v278
      %v427 = vunpack.c.l.b16 %v279
      %v428 = vunpack.c.h.b16 %v279
      %v429 = vunpack.c.l.b16 %v280
      %v430 = vunpack.c.h.b16 %v280
      %v431 = vunpack.c.l.b16 %v281
      %v432 = vunpack.c.h.b16 %v281
      %v433 = vunpack.c.l.b16 %v282
      %v434 = vunpack.c.h.b16 %v282
      %v435 = vpack.c.b16 %v427, %v419
      %v436 = vpack.c.b16 %v428, %v420
      %v437 = vpack.c.b16 %v429, %v421
      %v438 = vpack.c.b16 %v430, %v422
      %v439 = vpack.c.b16 %v431, %v423
      %v440 = vpack.c.b16 %v432, %v424
      %v441 = vpack.c.b16 %v433, %v425
      %v442 = vpack.c.b16 %v434, %v426
      %v579 = vunpack.c.l.b16 %v283
      %v580 = vunpack.c.l.b16 %v284
      %v581 = vunpack.c.l.b16 %v285
      %v582 = vunpack.c.l.b16 %v286
      %v583 = vunpack.c.l.b16 %v287
      %v584 = vunpack.c.l.b16 %v288
      %v585 = vunpack.c.l.b16 %v289
      %v586 = vunpack.c.l.b16 %v290
      %v587 = vunpack.c.l.b16 %v291
      %v588 = vunpack.c.l.b16 %v292
      %v589 = vunpack.c.l.b16 %v293
      %v590 = vunpack.c.l.b16 %v294
      %v591 = vunpack.c.l.b16 %v295
      %v592 = vunpack.c.l.b16 %v296
      %v593 = vunpack.c.l.b16 %v297
      %v594 = vunpack.c.l.b16 %v298
      %v595 = vunpack.c.l.b16 %v299
      %v596 = vunpack.c.l.b16 %v300
      %v597 = vunpack.c.l.b16 %v301
      %v598 = vunpack.c.l.b16 %v302
      %v599 = vunpack.c.l.b16 %v303
      %v600 = vunpack.c.l.b16 %v304
      %v601 = vunpack.c.l.b16 %v305
      %v602 = vunpack.c.l.b16 %v306
      %v603 = vunpack.c.l.b16 %v307
      %v604 = vunpack.c.l.b16 %v308
      %v605 = vunpack.c.l.b16 %v309
      %v606 = vunpack.c.l.b16 %v310
      %v607 = vunpack.c.l.b16 %v311
      %v608 = vunpack.c.l.b16 %v312
      %v609 = vunpack.c.l.b16 %v313
      %v610 = vunpack.c.l.b16 %v314
      %v611 = vunpack.c.l.b16 %v315
      %v612 = vunpack.c.l.b16 %v316
      %v613 = vunpack.c.l.b16 %v317
      %v614 = vunpack.c.l.b16 %v318
      %v615 = vunpack.c.l.b16 %v319
      %v616 = vunpack.c.l.b16 %v320
      %v617 = vunpack.c.l.b16 %v321
      %v618 = vunpack.c.l.b16 %v322
      %v619 = vunpack.c.l.b16 %v323
      %v620 = vunpack.c.l.b16 %v324
      %v621 = vunpack.c.l.b16 %v325
      %v622 = vunpack.c.l.b16 %v326
      %v623 = vunpack.c.l.b16 %v327
      %v624 = vunpack.c.l.b16 %v328
      %v625 = vunpack.c.l.b16 %v329
      %v626 = vunpack.c.l.b16 %v330
      %v627 = vunpack.c.l.b16 %v331
      %v628 = vunpack.c.l.b16 %v332
      %v629 = vunpack.c.l.b16 %v333
      %v630 = vunpack.c.l.b16 %v334
      %v631 = vunpack.c.l.b16 %v335
      %v632 = vunpack.c.l.b16 %v336
      %v633 = vunpack.c.l.b16 %v337
      %v634 = vunpack.c.l.b16 %v338
      %v635 = vunpack.c.l.b16 %v339
      %v636 = vunpack.c.l.b16 %v340
      %v637 = vunpack.c.l.b16 %v341
      %v638 = vunpack.c.l.b16 %v342
      %v639 = vunpack.c.l.b16 %v343
      %v640 = vunpack.c.l.b16 %v344
      %v641 = vunpack.c.l.b16 %v345
      %v642 = vunpack.c.l.b16 %v346
      %v643 = vunpack.c.l.b16 %v347
      %v644 = vunpack.c.l.b16 %v348
      %v645 = vunpack.c.l.b16 %v349
      %v646 = vunpack.c.l.b16 %v350
      %v647 = vunpack.c.l.b16 %v351
      %v648 = vunpack.c.l.b16 %v352
      %v649 = vunpack.c.l.b16 %v353
      %v650 = vunpack.c.l.b16 %v354
      %v651 = vunpack.c.l.b16 %v355
      %v652 = vunpack.c.l.b16 %v356
      %v653 = vunpack.c.l.b16 %v357
      %v654 = vunpack.c.l.b16 %v358
      %v655 = vunpack.c.l.b16 %v359
      %v656 = vunpack.c.l.b16 %v360
      %v657 = vunpack.c.l.b16 %v361
      %v658 = vunpack.c.l.b16 %v362
      %v659 = vunpack.c.l.b16 %v363
      %v660 = vunpack.c.l.b16 %v364
      %v661 = vunpack.c.l.b16 %v365
      %v662 = vunpack.c.l.b16 %v366
      %v663 = vunpack.c.l.b16 %v367
      %v664 = vunpack.c.l.b16 %v368
      %v665 = vunpack.c.l.b16 %v369
      %v666 = vunpack.c.l.b16 %v370
      %v667 = vunpack.c.l.b16 %v371
      %v668 = vunpack.c.l.b16 %v372
      %v669 = vunpack.c.l.b16 %v373
      %v670 = vunpack.c.l.b16 %v374
      %v671 = vunpack.c.l.b16 %v375
      %v672 = vunpack.c.l.b16 %v376
      %v673 = vunpack.c.l.b16 %v377
      %v674 = vunpack.c.l.b16 %v378
      %v675 = vunpack.c.l.b16 %v379
      %v676 = vunpack.c.l.b16 %v380
      %v677 = vunpack.c.l.b16 %v381
      %v678 = vunpack.c.l.b16 %v382
      %v679 = vunpack.c.l.b16 %v383
      %v680 = vunpack.c.l.b16 %v384
      %v681 = vunpack.c.l.b16 %v385
      %v682 = vunpack.c.l.b16 %v386
      %v683 = vunpack.c.l.b16 %v387
      %v684 = vunpack.c.l.b16 %v388
      %v685 = vunpack.c.l.b16 %v389
      %v686 = vunpack.c.l.b16 %v390
      %v687 = vunpack.c.l.b16 %v391
      %v688 = vunpack.c.l.b16 %v392
      %v689 = vunpack.c.l.b16 %v393
      %v690 = vunpack.c.l.b16 %v394
      %v691 = vunpack.c.l.b16 %v395
      %v692 = vunpack.c.l.b16 %v396
      %v693 = vunpack.c.l.b16 %v397
      %v694 = vunpack.c.l.b16 %v398
      %v695 = vunpack.c.l.b16 %v399
      %v696 = vunpack.c.l.b16 %v400
      %v697 = vunpack.c.l.b16 %v401
      %v698 = vunpack.c.l.b16 %v402
      %v699 = vunpack.c.l.b16 %v403
      %v700 = vunpack.c.l.b16 %v404
      %v701 = vunpack.c.l.b16 %v405
      %v702 = vunpack.c.l.b16 %v406
      %v703 = vunpack.c.l.b16 %v407
      %v704 = vunpack.c.l.b16 %v408
      %v705 = vunpack.c.l.b16 %v409
      %v706 = vunpack.c.l.b16 %v410
      %v707 = vpack.c.b16 %v580, %v579
      %v708 = vpack.c.b16 %v582, %v581
      %v709 = vpack.c.b16 %v584, %v583
      %v710 = vpack.c.b16 %v586, %v585
      %v711 = vpack.c.b16 %v588, %v587
      %v712 = vpack.c.b16 %v590, %v589
      %v713 = vpack.c.b16 %v592, %v591
      %v714 = vpack.c.b16 %v594, %v593
      %v715 = vpack.c.b16 %v596, %v595
      %v716 = vpack.c.b16 %v598, %v597
      %v717 = vpack.c.b16 %v600, %v599
      %v718 = vpack.c.b16 %v602, %v601
      %v719 = vpack.c.b16 %v604, %v603
      %v720 = vpack.c.b16 %v606, %v605
      %v721 = vpack.c.b16 %v608, %v607
      %v722 = vpack.c.b16 %v610, %v609
      %v723 = vpack.c.b16 %v612, %v611
      %v724 = vpack.c.b16 %v614, %v613
      %v725 = vpack.c.b16 %v616, %v615
      %v726 = vpack.c.b16 %v618, %v617
      %v727 = vpack.c.b16 %v620, %v619
      %v728 = vpack.c.b16 %v622, %v621
      %v729 = vpack.c.b16 %v624, %v623
      %v730 = vpack.c.b16 %v626, %v625
      %v731 = vpack.c.b16 %v628, %v627
      %v732 = vpack.c.b16 %v630, %v629
      %v733 = vpack.c.b16 %v632, %v631
      %v734 = vpack.c.b16 %v634, %v633
      %v735 = vpack.c.b16 %v636, %v635
      %v736 = vpack.c.b16 %v638, %v637
      %v737 = vpack.c.b16 %v640, %v639
      %v738 = vpack.c.b16 %v642, %v641
      %v739 = vpack.c.b16 %v644, %v643
      %v740 = vpack.c.b16 %v646, %v645
      %v741 = vpack.c.b16 %v648, %v647
      %v742 = vpack.c.b16 %v650, %v649
      %v743 = vpack.c.b16 %v652, %v651
      %v744 = vpack.c.b16 %v654, %v653
      %v745 = vpack.c.b16 %v656, %v655
      %v746 = vpack.c.b16 %v658, %v657
      %v747 = vpack.c.b16 %v660, %v659
      %v748 = vpack.c.b16 %v662, %v661
      %v749 = vpack.c.b16 %v664, %v663
      %v750 = vpack.c.b16 %v666, %v665
      %v751 = vpack.c.b16 %v668, %v667
      %v752 = vpack.c.b16 %v670, %v669
      %v753 = vpack.c.b16 %v672, %v671
      %v754 = vpack.c.b16 %v674, %v673
      %v755 = vpack.c.b16 %v676, %v675
      %v756 = vpack.c.b16 %v678, %v677
      %v757 = vpack.c.b16 %v680, %v679
      %v758 = vpack.c.b16 %v682, %v681
      %v759 = vpack.c.b16 %v684, %v683
      %v760 = vpack.c.b16 %v686, %v685
      %v761 = vpack.c.b16 %v688, %v687
      %v762 = vpack.c.b16 %v690, %v689
      %v763 = vpack.c.b16 %v692, %v691
      %v764 = vpack.c.b16 %v694, %v693
      %v765 = vpack.c.b16 %v696, %v695
      %v766 = vpack.c.b16 %v698, %v697
      %v767 = vpack.c.b16 %v700, %v699
      %v768 = vpack.c.b16 %v702, %v701
      %v769 = vpack.c.b16 %v704, %v703
      %v770 = vpack.c.b16 %v706, %v705
      %835 = vmatpush.bf16.msra.mxu0 %v714
      %836 = vmatpush.bf16.msra.mxu0 %v713
      %837 = vmatpush.bf16.msra.mxu0 %v712
      %838 = vmatpush.bf16.msra.mxu0 %v711
      %839 = vmatpush.bf16.msra.mxu0 %v710
      %840 = vmatpush.bf16.msra.mxu0 %v709
      %841 = vmatpush.bf16.msra.mxu0 %v708
      %842 = vmatpush.bf16.msra.mxu0 %v707
      %843 = vmatmul.bf16.gmra.mxu0 %v435
      %v844 = vpop.f32.mrf.mxu0
      %v845 = vadd.f32 0.0, %v844
      %v846 = vpop.f32.mrf.mxu0
      %v847 = vadd.f32 0.0, %v846
      %848 = vdwg.mxu0
      %849 = vmatpush.bf16.msra.mxu0 %v722
      %850 = vmatpush.bf16.msra.mxu0 %v721
      %851 = vmatpush.bf16.msra.mxu0 %v720
      %852 = vmatpush.bf16.msra.mxu0 %v719
      %853 = vmatpush.bf16.msra.mxu0 %v718
      %854 = vmatpush.bf16.msra.mxu0 %v717
      %855 = vmatpush.bf16.msra.mxu0 %v716
      %856 = vmatpush.bf16.msra.mxu0 %v715
      %857 = vmatmul.bf16.gmra.mxu0 %v436
      %v858 = vpop.f32.mrf.mxu0
      %v859 = vadd.f32 %v845, %v858
      %v860 = vpop.f32.mrf.mxu0
      %v861 = vadd.f32 %v847, %v860
      %862 = vdwg.mxu0
      %863 = vmatpush.bf16.msra.mxu0 %v730
      %864 = vmatpush.bf16.msra.mxu0 %v729
      %865 = vmatpush.bf16.msra.mxu0 %v728
      %866 = vmatpush.bf16.msra.mxu0 %v727
      %867 = vmatpush.bf16.msra.mxu0 %v726
      %868 = vmatpush.bf16.msra.mxu0 %v725
      %869 = vmatpush.bf16.msra.mxu0 %v724
      %870 = vmatpush.bf16.msra.mxu0 %v723
      %871 = vmatmul.bf16.gmra.mxu0 %v437
      %v872 = vpop.f32.mrf.mxu0
      %v873 = vadd.f32 %v859, %v872
      %v874 = vpop.f32.mrf.mxu0
      %v875 = vadd.f32 %v861, %v874
      %876 = vdwg.mxu0
      %877 = vmatpush.bf16.msra.mxu0 %v738
      %878 = vmatpush.bf16.msra.mxu0 %v737
      %879 = vmatpush.bf16.msra.mxu0 %v736
      %880 = vmatpush.bf16.msra.mxu0 %v735
      %881 = vmatpush.bf16.msra.mxu0 %v734
      %882 = vmatpush.bf16.msra.mxu0 %v733
      %883 = vmatpush.bf16.msra.mxu0 %v732
      %884 = vmatpush.bf16.msra.mxu0 %v731
      %885 = vmatmul.bf16.gmra.mxu0 %v438
      %v886 = vpop.f32.mrf.mxu0
      %v887 = vadd.f32 %v873, %v886
      %v888 = vpop.f32.mrf.mxu0
      %v889 = vadd.f32 %v875, %v888
      %890 = vdwg.mxu0
      %891 = vmatpush.bf16.msra.mxu0 %v746
      %892 = vmatpush.bf16.msra.mxu0 %v745
      %893 = vmatpush.bf16.msra.mxu0 %v744
      %894 = vmatpush.bf16.msra.mxu0 %v743
      %895 = vmatpush.bf16.msra.mxu0 %v742
      %896 = vmatpush.bf16.msra.mxu0 %v741
      %897 = vmatpush.bf16.msra.mxu0 %v740
      %898 = vmatpush.bf16.msra.mxu0 %v739
      %899 = vmatmul.bf16.gmra.mxu0 %v439
      %v900 = vpop.f32.mrf.mxu0
      %v901 = vadd.f32 %v887, %v900
      %v902 = vpop.f32.mrf.mxu0
      %v903 = vadd.f32 %v889, %v902
      %904 = vdwg.mxu0
      %905 = vmatpush.bf16.msra.mxu0 %v754
      %906 = vmatpush.bf16.msra.mxu0 %v753
      %907 = vmatpush.bf16.msra.mxu0 %v752
      %908 = vmatpush.bf16.msra.mxu0 %v751
      %909 = vmatpush.bf16.msra.mxu0 %v750
      %910 = vmatpush.bf16.msra.mxu0 %v749
      %911 = vmatpush.bf16.msra.mxu0 %v748
      %912 = vmatpush.bf16.msra.mxu0 %v747
      %913 = vmatmul.bf16.gmra.mxu0 %v440
      %v914 = vpop.f32.mrf.mxu0
      %v915 = vadd.f32 %v901, %v914
      %v916 = vpop.f32.mrf.mxu0
      %v917 = vadd.f32 %v903, %v916
      %918 = vdwg.mxu0
      %919 = vmatpush.bf16.msra.mxu0 %v762
      %920 = vmatpush.bf16.msra.mxu0 %v761
      %921 = vmatpush.bf16.msra.mxu0 %v760
      %922 = vmatpush.bf16.msra.mxu0 %v759
      %923 = vmatpush.bf16.msra.mxu0 %v758
      %924 = vmatpush.bf16.msra.mxu0 %v757
      %925 = vmatpush.bf16.msra.mxu0 %v756
      %926 = vmatpush.bf16.msra.mxu0 %v755
      %927 = vmatmul.bf16.gmra.mxu0 %v441
      %v928 = vpop.f32.mrf.mxu0
      %v929 = vadd.f32 %v915, %v928
      %v930 = vpop.f32.mrf.mxu0
      %v931 = vadd.f32 %v917, %v930
      %932 = vdwg.mxu0
      %933 = vmatpush.bf16.msra.mxu0 %v770
      %934 = vmatpush.bf16.msra.mxu0 %v769
      %935 = vmatpush.bf16.msra.mxu0 %v768
      %936 = vmatpush.bf16.msra.mxu0 %v767
      %937 = vmatpush.bf16.msra.mxu0 %v766
      %938 = vmatpush.bf16.msra.mxu0 %v765
      %939 = vmatpush.bf16.msra.mxu0 %v764
      %940 = vmatpush.bf16.msra.mxu0 %v763
      %941 = vmatmul.bf16.gmra.mxu0 %v442
      %v942 = vpop.f32.mrf.mxu0
      %v943 = vadd.f32 %v929, %v942
      %v944 = vpop.f32.mrf.mxu0
      %v945 = vadd.f32 %v931, %v944
      %946 = vdwg.mxu0
      %v947 = vadd.f32 %v273, %v943
      %v948 = vadd.f32 %v274, %v945
      %949 = vst [vmem:[%s265] sm:$0xff] %v947
      %950 = vst [vmem:[%s265 + $0x8] sm:$0xff] %v948
      // Predicated region
      $region37: #{multiscale_forward.39} parent=31 // pred_check
        %p951 = pneg %p267
      $region38: #{multiscale_forward.39} parent=31 // pred_check_branch
        %953 = sbr.rel (%p951) target = $region40
      $region39: #{multiscale_forward.39} parent=31 // pred_region
        %v954 = vld [vmem:[%s265] sm:$0xff]
        %v955 = vld [vmem:[%s265 + $0x8] sm:$0xff]
        %v956 = vld [vmem:[%s257] sm:$0x1]
        %v958 = vperm.slane %v956, 0
        %v960 = vadd.f32 %v954, %v958
        %v961 = vadd.f32 %v955, %v958
        %962 = vst [vmem:[%s265] sm:$0xff] %v960
        %963 = vst [vmem:[%s265 + $0x8] sm:$0xff] %v961
      $region40: #{multiscale_forward.39} parent=31 // pred_fallthru
        _
      %s964 = smul.u32 2, %s19
      %p965 = scmp.lt.s32.totalorder %s964, 3
      %s966 = scalar_select %p965, %s964, 3
      %p967 = scmp.lt.s32.totalorder %s20, 0
      %s968 = scalar_select %p967, %s20, 0
      %s969 = sadd.s32 %s968, %s966
      %s970 = smul.addr %s969, 8
      %s971 = scalar_lea.vmem %s3, %s970
      // Predicated region
      $region41: #{multiscale_forward.39} parent=31 // pred_check
        %p972 = pneg %p135
      $region42: #{multiscale_forward.39} parent=31 // pred_check_branch
        %974 = sbr.rel (%p972) target = $region44
      $region43: #{multiscale_forward.39} parent=31 // pred_region
        %s975 = smul.u32 2, %s19
      $region44: #{multiscale_forward.39} parent=31 // pred_fallthru
        _
    $region32: #{multiscale_forward.39} parent=5 // pred_fallthru
      _
    %p976 = scmp.le.s32.totalorder 2, %s9
    // Predicated region
    $region45: #{multiscale_forward.39} parent=5 // pred_check
      %p977 = pneg %p976
    $region46: #{multiscale_forward.39} parent=5 // pred_check_branch
      %979 = sbr.rel (%p977) target = $region48
    $region47: #{multiscale_forward.39} parent=5 // pred_region
      %s980 = ssub.s32 %s9, 2
      // Predicated region
      $region49: #{multiscale_forward.39} parent=47 // pred_check
        %p981 = pneg %p141
      $region50: #{multiscale_forward.39} parent=47 // pred_check_branch
        %983 = sbr.rel (%p981) target = $region52
      $region51: #{multiscale_forward.39} parent=47 // pred_region
        %s984 = smul.u32 2, %s22
        %p985 = scmp.lt.s32.totalorder %s984, 3
        %s986 = scalar_select %p985, %s984, 3
        %p987 = scmp.lt.s32.totalorder %s23, 0
        %s988 = scalar_select %p987, %s23, 0
        %s989 = sadd.s32 %s988, %s986
        %s990 = smul.addr %s989, 8
        %s991 = scalar_lea.vmem %s3, %s990
      $region52: #{multiscale_forward.39} parent=47 // pred_fallthru
        _
    $region48: #{multiscale_forward.39} parent=5 // pred_fallthru
      _
  $region6: #{multiscale_forward.39} parent=0 // loop_footer
    %s13 = sadd.s32 1, %s9
  $region7: #{multiscale_forward.39} parent=0 // loop_footer_branch
    %8 = sbr.rel target = $region3
  $region8: #{multiscale_forward.39} parent=0 // loop_exit
    _

// kernel: multiscale_forward.40
$region0: #{multiscale_forward.40}
  #allocation0 [shape = 'u32[]', space=smem, size = 0x4, offset = 0x4, fixed_abs, tag = 'smem constant byte address 0x4 - core index']
  #allocation1 [shape = 'u32[72,128]{1,0:T(1,128)}', space=vmem, size = 0x9000, scoped, tag = 'internal scratch']
  #allocation2 [shape = 'f32[16,128]{1,0:T(8,128)}', space=vmem, size = 0x2000, scoped, tag = 'scratch operand']
  %s0 = inlined_call_operand.vmem [shape: bf16[32,128], index: 0, kind: input, shape index: {}]
  %s1 = inlined_call_operand.vmem [shape: bf16[128,128], index: 1, kind: input, shape index: {}]
  %s2 = inlined_call_operand.vmem [shape: f32[1,128], index: 2, kind: input, shape index: {}]
  %s3 = inlined_call_operand.vmem [shape: bf16[32,128], index: 3, kind: output, shape index: {}]
  %s4 = sld [smem:[#allocation0]]
  $region53: #{multiscale_forward.40} parent=0
    _
  %s6 = ssub.s32 1, %s4
  %s7 = scalar_select 0, %s6, %s4
  loop: start=0, step=1, limit=4
  $region2: #{multiscale_forward.40} parent=0 // loop_pre_header
    _
  $region3: #{multiscale_forward.40} parent=0 // loop_header
    %s9 = sphi 0, %s13
    %p10 = scmp.ge.s32.totalorder %s9, 4
    %s16 = sphi 0, %s35
    %s17 = sphi 0, %s31
    %s18 = sphi 0, %s27
    %s19 = sphi 0, %s16
    %s20 = sphi 0, %s17
    %s21 = sphi 0, %s18
    %s22 = sphi 0, %s19
    %s23 = sphi 0, %s20
    %s24 = sphi 0, %s21
    %s40 = sphi 0, %s42
    %s43 = sphi 0, %s40
    %s44 = sphi 0, %s43
    %s60 = sphi 0, %s44
    %s68 = sphi 0, %s70
    %s71 = sphi 0, %s68
    %s72 = sphi 0, %s71
    %s88 = sphi 0, %s72
    %s94 = sphi 0, %s96
    %s97 = sphi 0, %s94
    %s98 = sphi 0, %s97
    %s114 = sphi 0, %s98
    %s122 = sphi 0, %s124
    %s125 = sphi 0, %s122
    %s126 = sphi 0, %s125
    %s142 = sphi 0, %s126
  $region4: #{multiscale_forward.40} parent=0 // loop_header_branch
    %12 = sbr.rel (%p10) target = $region8
  $region5: #{multiscale_forward.40} parent=0 // loop_body
    %s14 = ssub.s32 %s9, 1
    %s15 = ssub.s32 %s9, 2
    %s25 = sadd.s32 1, %s18
    %p26 = scmp.ge.s32.totalorder %s25, 1
    %s27 = scalar_select %p26, 0, %s25
    %s28 = sadd.s32 1, %s17
    %s29 = scalar_select %p26, %s28, %s17
    %p30 = scmp.ge.s32.totalorder %s29, 1
    %s31 = scalar_select %p30, 0, %s29
    %s32 = sadd.s32 1, %s16
    %s33 = scalar_select %p30, %s32, %s16
    %p34 = scmp.ge.s32.totalorder %s33, 2
    %s35 = scalar_select %p34, 0, %s33
    %s36 = ssub.s32 %s16, %s35
    %s37 = ssub.s32 %s18, %s27
    %s38 = sor.u32 %s36, %s37
    %p39 = scmp.eq.s32.totalorder %s38, 0
    %s41 = sadd.s32 %s40, 1
    %s42 = scalar_select %p39, %s40, %s41
    %p45 = pneg %p39
    %p46 = scmp.eq.s32.totalorder %s9, 1
    %p47 = por %p45, %p46
    %p48 = scmp.ne.s32.totalorder %s40, %s43
    %p49 = scmp.eq.s32.totalorder %s9, 0
    %p50 = por %p48, %p49
    %p51 = scmp.ne.s32.totalorder %s40, %s43
    %p52 = scmp.eq.s32.totalorder %s14, 1
    %p53 = por %p51, %p52
    %p54 = scmp.ne.s32.totalorder %s43, %s44
    %p55 = scmp.eq.s32.totalorder %s14, 0
    %p56 = por %p54, %p55
    %p57 = scmp.ne.s32.totalorder %s43, %s44
    %p58 = scmp.eq.s32.totalorder %s15, 1
    %p59 = por %p57, %p58
    %p61 = scmp.ne.s32.totalorder %s44, %s60
    %p62 = scmp.eq.s32.totalorder %s15, 0
    %p63 = por %p61, %p62
    %s64 = ssub.s32 %s18, %s27
    %s65 = ssub.s32 %s17, %s31
    %s66 = sor.u32 %s64, %s65
    %p67 = scmp.eq.s32.totalorder %s66, 0
    %s69 = sadd.s32 %s68, 1
    %s70 = scalar_select %p67, %s68, %s69
    %p73 = pneg %p67
    %p74 = scmp.eq.s32.totalorder %s9, 1
    %p75 = por %p73, %p74
    %p76 = scmp.ne.s32.totalorder %s68, %s71
    %p77 = scmp.eq.s32.totalorder %s9, 0
    %p78 = por %p76, %p77
    %p79 = scmp.ne.s32.totalorder %s68, %s71
    %p80 = scmp.eq.s32.totalorder %s14, 1
    %p81 = por %p79, %p80
    %p82 = scmp.ne.s32.totalorder %s71, %s72
    %p83 = scmp.eq.s32.totalorder %s14, 0
    %p84 = por %p82, %p83
    %p85 = scmp.ne.s32.totalorder %s71, %s72
    %p86 = scmp.eq.s32.totalorder %s15, 1
    %p87 = por %p85, %p86
    %p89 = scmp.ne.s32.totalorder %s72, %s88
    %p90 = scmp.eq.s32.totalorder %s15, 0
    %p91 = por %p89, %p90
    %s92 = ssub.s32 %s17, %s31
    %p93 = scmp.eq.s32.totalorder %s92, 0
    %s95 = sadd.s32 %s94, 1
    %s96 = scalar_select %p93, %s94, %s95
    %p99 = pneg %p93
    %p100 = scmp.eq.s32.totalorder %s9, 1
    %p101 = por %p99, %p100
    %p102 = scmp.ne.s32.totalorder %s94, %s97
    %p103 = scmp.eq.s32.totalorder %s9, 0
    %p104 = por %p102, %p103
    %p105 = scmp.ne.s32.totalorder %s94, %s97
    %p106 = scmp.eq.s32.totalorder %s14, 1
    %p107 = por %p105, %p106
    %p108 = scmp.ne.s32.totalorder %s97, %s98
    %p109 = scmp.eq.s32.totalorder %s14, 0
    %p110 = por %p108, %p109
    %p111 = scmp.ne.s32.totalorder %s97, %s98
    %p112 = scmp.eq.s32.totalorder %s15, 1
    %p113 = por %p111, %p112
    %p115 = scmp.ne.s32.totalorder %s98, %s114
    %p116 = scmp.eq.s32.totalorder %s15, 0
    %p117 = por %p115, %p116
    %s118 = ssub.s32 %s16, %s35
    %s119 = ssub.s32 %s17, %s31
    %s120 = sor.u32 %s118, %s119
    %p121 = scmp.eq.s32.totalorder %s120, 0
    %s123 = sadd.s32 %s122, 1
    %s124 = scalar_select %p121, %s122, %s123
    %p127 = pneg %p121
    %p128 = scmp.eq.s32.totalorder %s9, 1
    %p129 = por %p127, %p128
    %p130 = scmp.ne.s32.totalorder %s122, %s125
    %p131 = scmp.eq.s32.totalorder %s9, 0
    %p132 = por %p130, %p131
    %p133 = scmp.ne.s32.totalorder %s122, %s125
    %p134 = scmp.eq.s32.totalorder %s14, 1
    %p135 = por %p133, %p134
    %p136 = scmp.ne.s32.totalorder %s125, %s126
    %p137 = scmp.eq.s32.totalorder %s14, 0
    %p138 = por %p136, %p137
    %p139 = scmp.ne.s32.totalorder %s125, %s126
    %p140 = scmp.eq.s32.totalorder %s15, 1
    %p141 = por %p139, %p140
    %p143 = scmp.ne.s32.totalorder %s126, %s142
    %p144 = scmp.eq.s32.totalorder %s15, 0
    %p145 = por %p143, %p144
    %p146 = scmp.le.s32.totalorder 1, %s9
    %p147 = scmp.lt.s32.totalorder %s9, 3
    %p148 = pnand %p146, %p147
    %p149 = pneg %p148
    // Predicated region
    $region9: #{multiscale_forward.40} parent=5 // pred_check
      _
    $region10: #{multiscale_forward.40} parent=5 // pred_check_branch
      %151 = sbr.rel (%p148) target = $region12
    $region11: #{multiscale_forward.40} parent=5 // pred_region
      %s152 = ssub.s32 %s9, 1
      // Predicated region
      $region13: #{multiscale_forward.40} parent=11 // pred_check
        %p153 = pneg %p84
      $region14: #{multiscale_forward.40} parent=11 // pred_check_branch
        %155 = sbr.rel (%p153) target = $region16
      $region15: #{multiscale_forward.40} parent=11 // pred_region
        %s156 = smul.u32 16, %s21
        %p157 = scmp.lt.s32.totalorder %s156, 15
        %s158 = scalar_select %p157, %s156, 15
        %p159 = scmp.lt.s32.totalorder %s20, 0
        %s160 = scalar_select %p159, %s20, 0
        %s161 = sadd.s32 %s160, %s158
        %s162 = smul.addr %s161, 4
        %s163 = scalar_lea.vmem %s1, %s162
        %s164 = smul.u32 16, %s21
      $region16: #{multiscale_forward.40} parent=11 // pred_fallthru
        _
      // Predicated region
      $region17: #{multiscale_forward.40} parent=11 // pred_check
        %p165 = pneg %p110
      $region18: #{multiscale_forward.40} parent=11 // pred_check_branch
        %167 = sbr.rel (%p165) target = $region20
      $region19: #{multiscale_forward.40} parent=11 // pred_region
        %p168 = scmp.lt.s32.totalorder %s20, 0
        %s169 = scalar_select %p168, %s20, 0
        %s170 = scalar_lea.vmem %s2, %s169
      $region20: #{multiscale_forward.40} parent=11 // pred_fallthru
        _
    $region12: #{multiscale_forward.40} parent=5 // pred_fallthru
      _
    %p171 = scmp.lt.s32.totalorder %s9, 2
    // Predicated region
    $region21: #{multiscale_forward.40} parent=5 // pred_check
      %p172 = pneg %p171
    $region22: #{multiscale_forward.40} parent=5 // pred_check_branch
      %174 = sbr.rel (%p172) target = $region24
    $region23: #{multiscale_forward.40} parent=5 // pred_region
      // Predicated region
      $region25: #{multiscale_forward.40} parent=23 // pred_check
        %p175 = pneg %p50
      $region26: #{multiscale_forward.40} parent=23 // pred_check_branch
        %177 = sbr.rel (%p175) target = $region28
      $region27: #{multiscale_forward.40} parent=23 // pred_region
        %s178 = smul.u32 2, %s16
        %p179 = scmp.lt.s32.totalorder %s178, 3
        %s180 = scalar_select %p179, %s178, 3
        %p181 = scmp.lt.s32.totalorder %s18, 0
        %s182 = scalar_select %p181, %s18, 0
        %s183 = sadd.s32 %s182, %s180
        %s184 = smul.addr %s183, 4
        %s185 = scalar_lea.vmem %s0, %s184
        %s186 = smul.u32 2, %s16
      $region28: #{multiscale_forward.40} parent=23 // pred_fallthru
        _
    $region24: #{multiscale_forward.40} parent=5 // pred_fallthru
      _
    %p187 = scmp.le.s32.totalorder 1, %s9
    %p188 = scmp.lt.s32.totalorder %s9, 3
    %p189 = pnand %p187, %p188
    %p190 = pneg %p189
    // Predicated region
    $region29: #{multiscale_forward.40} parent=5 // pred_check
      _
    $region30: #{multiscale_forward.40} parent=5 // pred_check_branch
      %192 = sbr.rel (%p189) target = $region32
    $region31: #{multiscale_forward.40} parent=5 // pred_region
      %s193 = ssub.s32 %s9, 1
      %s194 = smul.u32 2, %s19
      %p195 = scmp.lt.s32.totalorder %s194, 3
      %s196 = scalar_select %p195, %s194, 3
      %p197 = scmp.lt.s32.totalorder %s21, 0
      %s198 = scalar_select %p197, %s21, 0
      %s199 = sadd.s32 %s198, %s196
      %s200 = smul.addr %s199, 4
      %s201 = scalar_lea.vmem %s0, %s200
      %p202 = pneg %p56
      %p203 = pneg %p53
      %s204 = smul.u32 16, %s21
      %p205 = scmp.lt.s32.totalorder %s204, 15
      %s206 = scalar_select %p205, %s204, 15
      %p207 = scmp.lt.s32.totalorder %s20, 0
      %s208 = scalar_select %p207, %s20, 0
      %s209 = sadd.s32 %s208, %s206
      %s210 = smul.addr %s209, 4
      %s211 = scalar_lea.vmem %s1, %s210
      %p212 = pneg %p84
      %p213 = pneg %p81
      %p214 = scmp.lt.s32.totalorder %s20, 0
      %s215 = scalar_select %p214, %s20, 0
      %s216 = scalar_lea.vmem %s2, %s215
      %p217 = pneg %p110
      %p218 = pneg %p107
      %p219 = pneg %p138
      %p220 = pneg %p135
      %s221 = smul.u32 2, %s19
      %p222 = scmp.lt.s32.totalorder %s221, 3
      %s223 = scalar_select %p222, %s221, 3
      %p224 = scmp.lt.s32.totalorder %s20, 0
      %s225 = scalar_select %p224, %s20, 0
      %s226 = sadd.s32 %s225, %s223
      %s227 = smul.addr %s226, 4
      %s228 = scalar_lea.vmem %s3, %s227
      %s229 = smul.u32 2, %s19
      %p230 = scmp.lt.s32.totalorder %s229, 3
      %s231 = scalar_select %p230, %s229, 3
      %p232 = scmp.lt.s32.totalorder %s21, 0
      %s233 = scalar_select %p232, %s21, 0
      %s234 = sadd.s32 %s233, %s231
      %s235 = smul.addr %s234, 4
      %s236 = scalar_lea.vmem %s0, %s235
      %s237 = smul.u32 2, %s19
      %s238 = smul.u32 16, %s21
      %p239 = scmp.lt.s32.totalorder %s238, 15
      %s240 = scalar_select %p239, %s238, 15
      %p241 = scmp.lt.s32.totalorder %s20, 0
      %s242 = scalar_select %p241, %s20, 0
      %s243 = sadd.s32 %s242, %s240
      %s244 = smul.addr %s243, 4
      %s245 = scalar_lea.vmem %s1, %s244
      %s246 = smul.u32 16, %s21
      %p247 = scmp.lt.s32.totalorder %s20, 0
      %s248 = scalar_select %p247, %s20, 0
      %s249 = scalar_lea.vmem %s2, %s248
      %s250 = smul.u32 2, %s19
      %p251 = scmp.lt.s32.totalorder %s250, 3
      %s252 = scalar_select %p251, %s250, 3
      %p253 = scmp.lt.s32.totalorder %s20, 0
      %s254 = scalar_select %p253, %s20, 0
      %s255 = sadd.s32 %s254, %s252
      %s256 = smul.addr %s255, 4
      %s257 = scalar_lea.vmem %s3, %s256
      %s258 = smul.u32 2, %s19
      %p259 = scmp.eq.s32.totalorder %s21, 0
      // Predicated region
      $region33: #{multiscale_forward.40} parent=31 // pred_check
        %p260 = pneg %p259
      $region34: #{multiscale_forward.40} parent=31 // pred_check_branch
        %262 = sbr.rel (%p260) target = $region36
      $region35: #{multiscale_forward.40} parent=31 // pred_region
        %263 = vst [vmem:[#allocation2] sm:$0xff] 0.0
        %264 = vst [vmem:[#allocation2 + $0x8] sm:$0xff] 0.0
      $region36: #{multiscale_forward.40} parent=31 // pred_fallthru
        _
      %v265 = vld [vmem:[#allocation2] sm:$0xff]
      %v266 = vld [vmem:[#allocation2 + $0x8] sm:$0xff]
      %v267 = vld [vmem:[%s236] sm:$0xf]
      %v268 = vld [vmem:[%s236 + $0x4] sm:$0xf]
      %v269 = vld [vmem:[%s245] sm:$0xf]
      %v270 = vld [vmem:[%s245 + $0x4] sm:$0xf]
      %v271 = vld [vmem:[%s245 + $0x8] sm:$0xf]
      %v272 = vld [vmem:[%s245 + $0xc] sm:$0xf]
      %v273 = vld [vmem:[%s245 + $0x10] sm:$0xf]
      %v274 = vld [vmem:[%s245 + $0x14] sm:$0xf]
      %v275 = vld [vmem:[%s245 + $0x18] sm:$0xf]
      %v276 = vld [vmem:[%s245 + $0x1c] sm:$0xf]
      %v277 = vld [vmem:[%s245 + $0x20] sm:$0xf]
      %v278 = vld [vmem:[%s245 + $0x24] sm:$0xf]
      %v279 = vld [vmem:[%s245 + $0x28] sm:$0xf]
      %v280 = vld [vmem:[%s245 + $0x2c] sm:$0xf]
      %v281 = vld [vmem:[%s245 + $0x30] sm:$0xf]
      %v282 = vld [vmem:[%s245 + $0x34] sm:$0xf]
      %v283 = vld [vmem:[%s245 + $0x38] sm:$0xf]
      %v284 = vld [vmem:[%s245 + $0x3c] sm:$0xf]
      %v287 = vunpack.c.l.b16 %v267
      %v288 = vunpack.c.l.b16 %v268
      %v289 = vpack.c.b16 %v288, %v287
      %v307 = vunpack.c.l.b16 %v269
      %v308 = vunpack.c.l.b16 %v270
      %v309 = vunpack.c.l.b16 %v271
      %v310 = vunpack.c.l.b16 %v272
      %v311 = vunpack.c.l.b16 %v273
      %v312 = vunpack.c.l.b16 %v274
      %v313 = vunpack.c.l.b16 %v275
      %v314 = vunpack.c.l.b16 %v276
      %v315 = vunpack.c.l.b16 %v277
      %v316 = vunpack.c.l.b16 %v278
      %v317 = vunpack.c.l.b16 %v279
      %v318 = vunpack.c.l.b16 %v280
      %v319 = vunpack.c.l.b16 %v281
      %v320 = vunpack.c.l.b16 %v282
      %v321 = vunpack.c.l.b16 %v283
      %v322 = vunpack.c.l.b16 %v284
      %v323 = vpack.c.b16 %v308, %v307
      %v324 = vpack.c.b16 %v310, %v309
      %v325 = vpack.c.b16 %v312, %v311
      %v326 = vpack.c.b16 %v314, %v313
      %v327 = vpack.c.b16 %v316, %v315
      %v328 = vpack.c.b16 %v318, %v317
      %v329 = vpack.c.b16 %v320, %v319
      %v330 = vpack.c.b16 %v322, %v321
      %339 = vmatpush.bf16.msra.mxu0 %v330
      %340 = vmatpush.bf16.msra.mxu0 %v329
      %341 = vmatpush.bf16.msra.mxu0 %v328
      %342 = vmatpush.bf16.msra.mxu0 %v327
      %343 = vmatpush.bf16.msra.mxu0 %v326
      %344 = vmatpush.bf16.msra.mxu0 %v325
      %345 = vmatpush.bf16.msra.mxu0 %v324
      %346 = vmatpush.bf16.msra.mxu0 %v323
      %347 = vmatmul.bf16.gmra.mxu0 %v289
      %v348 = vpop.f32.mrf.mxu0
      %v349 = vadd.f32 0.0, %v348
      %v350 = vpop.f32.mrf.mxu0
      %v351 = vadd.f32 0.0, %v350
      %352 = vdwg.mxu0
      %v353 = vadd.f32 %v265, %v349
      %v354 = vadd.f32 %v266, %v351
      %355 = vst [vmem:[#allocation2] sm:$0xff] %v353
      %356 = vst [vmem:[#allocation2 + $0x8] sm:$0xff] %v354
      // Predicated region
      $region37: #{multiscale_forward.40} parent=31 // pred_check
        %p357 = pneg %p259
      $region38: #{multiscale_forward.40} parent=31 // pred_check_branch
        %359 = sbr.rel (%p357) target = $region40
      $region39: #{multiscale_forward.40} parent=31 // pred_region
        %v360 = vld [vmem:[#allocation2] sm:$0xff]
        %v361 = vld [vmem:[#allocation2 + $0x8] sm:$0xff]
        %v362 = vld [vmem:[%s249] sm:$0x1]
        %v364 = vperm.slane %v362, 0
        %v366 = vadd.f32 %v360, %v364
        %v367 = vadd.f32 %v361, %v364
        %vm368 = vcmp.ge.f32.partialorder %v366, 0.0
        %vm369 = vcmp.ge.f32.partialorder %v367, 0.0
        %v370 = vmul.f32 %v366, 0.2
        %v371 = vmul.f32 %v367, 0.2
        %v372 = vsel %vm368, %v366, %v370
        %v373 = vsel %vm369, %v367, %v371
        %v374 = vpack.c.bf16 %v372, %v372
        %v375 = vpack.c.bf16 %v373, %v373
        %376 = vst [vmem:[%s257] sm:$0xf] %v374
        %377 = vst [vmem:[%s257 + $0x4] sm:$0xf] %v375
      $region40: #{multiscale_forward.40} parent=31 // pred_fallthru
        _
      %s378 = smul.u32 2, %s19
      %p379 = scmp.lt.s32.totalorder %s378, 3
      %s380 = scalar_select %p379, %s378, 3
      %p381 = scmp.lt.s32.totalorder %s20, 0
      %s382 = scalar_select %p381, %s20, 0
      %s383 = sadd.s32 %s382, %s380
      %s384 = smul.addr %s383, 4
      %s385 = scalar_lea.vmem %s3, %s384
      // Predicated region
      $region41: #{multiscale_forward.40} parent=31 // pred_check
        %p386 = pneg %p135
      $region42: #{multiscale_forward.40} parent=31 // pred_check_branch
        %388 = sbr.rel (%p386) target = $region44
      $region43: #{multiscale_forward.40} parent=31 // pred_region
        %s389 = smul.u32 2, %s19
      $region44: #{multiscale_forward.40} parent=31 // pred_fallthru
        _
    $region32: #{multiscale_forward.40} parent=5 // pred_fallthru
      _
    %p390 = scmp.le.s32.totalorder 2, %s9
    // Predicated region
    $region45: #{multiscale_forward.40} parent=5 // pred_check
      %p391 = pneg %p390
    $region46: #{multiscale_forward.40} parent=5 // pred_check_branch
      %393 = sbr.rel (%p391) target = $region48
    $region47: #{multiscale_forward.40} parent=5 // pred_region
      %s394 = ssub.s32 %s9, 2
      // Predicated region
      $region49: #{multiscale_forward.40} parent=47 // pred_check
        %p395 = pneg %p141
      $region50: #{multiscale_forward.40} parent=47 // pred_check_branch
        %397 = sbr.rel (%p395) target = $region52
      $region51: #{multiscale_forward.40} parent=47 // pred_region
        %s398 = smul.u32 2, %s22
        %p399 = scmp.lt.s32.totalorder %s398, 3
        %s400 = scalar_select %p399, %s398, 3
        %p401 = scmp.lt.s32.totalorder %s23, 0
        %s402 = scalar_select %p401, %s23, 0
        %s403 = sadd.s32 %s402, %s400
        %s404 = smul.addr %s403, 4
        %s405 = scalar_lea.vmem %s3, %s404
      $region52: #{multiscale_forward.40} parent=47 // pred_fallthru
        _
    $region48: #{multiscale_forward.40} parent=5 // pred_fallthru
      _
  $region6: #{multiscale_forward.40} parent=0 // loop_footer
    %s13 = sadd.s32 1, %s9
  $region7: #{multiscale_forward.40} parent=0 // loop_footer_branch
    %8 = sbr.rel target = $region3
  $region8: #{multiscale_forward.40} parent=0 // loop_exit
    _

// kernel: multiscale_forward.41
$region0: #{multiscale_forward.41}
  #allocation0 [shape = 'u32[]', space=smem, size = 0x4, offset = 0x4, fixed_abs, tag = 'smem constant byte address 0x4 - core index']
  #allocation1 [shape = 'u32[72,128]{1,0:T(1,128)}', space=vmem, size = 0x9000, scoped, tag = 'internal scratch']
  %s0 = inlined_call_operand.vmem [shape: bf16[16,128], index: 0, kind: input, shape index: {}]
  %s1 = inlined_call_operand.vmem [shape: bf16[128,128], index: 1, kind: input, shape index: {}]
  %s2 = inlined_call_operand.vmem [shape: f32[1,128], index: 2, kind: input, shape index: {}]
  %s3 = inlined_call_operand.vmem [shape: f32[16,128], index: 3, kind: output, shape index: {0}]
  %s4 = inlined_call_operand.vmem [shape: f32[8,128], index: 4, kind: output, shape index: {1}]
  %5 = xla_tuple %s3, %s4
  %s6 = sld [smem:[#allocation0]]
  $region38: #{multiscale_forward.41} parent=0
    _
  %s8 = ssub.s32 1, %s6
  %s9 = scalar_select 0, %s8, %s6
  // Predicated region
  $region2: #{multiscale_forward.41} parent=0 // pred_check
    _
  $region3: #{multiscale_forward.41} parent=0 // pred_check_branch
    %11 = sbr.rel (0) target = $region5
  $region4: #{multiscale_forward.41} parent=0 // pred_region
    _
  $region5: #{multiscale_forward.41} parent=0 // pred_fallthru
    _
  // Predicated region
  $region6: #{multiscale_forward.41} parent=0 // pred_check
    _
  $region7: #{multiscale_forward.41} parent=0 // pred_check_branch
    %13 = sbr.rel (0) target = $region9
  $region8: #{multiscale_forward.41} parent=0 // pred_region
    _
  $region9: #{multiscale_forward.41} parent=0 // pred_fallthru
    _
  // Predicated region
  $region10: #{multiscale_forward.41} parent=0 // pred_check
    _
  $region11: #{multiscale_forward.41} parent=0 // pred_check_branch
    %15 = sbr.rel (0) target = $region13
  $region12: #{multiscale_forward.41} parent=0 // pred_region
    _
  $region13: #{multiscale_forward.41} parent=0 // pred_fallthru
    _
  %s16 = smul.u32 0, 16
  %p17 = scmp.eq.s32.totalorder 0, 0
  // Predicated region
  $region14: #{multiscale_forward.41} parent=0 // pred_check
    %p18 = pneg %p17
  $region15: #{multiscale_forward.41} parent=0 // pred_check_branch
    %20 = sbr.rel (%p18) target = $region17
  $region16: #{multiscale_forward.41} parent=0 // pred_region
    %21 = vst [vmem:[%s3] sm:$0xff] 0.0
    %22 = vst [vmem:[%s3 + $0x8] sm:$0xff] 0.0
  $region17: #{multiscale_forward.41} parent=0 // pred_fallthru
    _
  %v23 = vld [vmem:[%s3] sm:$0xff]
  %v24 = vld [vmem:[%s3 + $0x8] sm:$0xff]
  %v25 = vld [vmem:[%s0] sm:$0xf]
  %v26 = vld [vmem:[%s0 + $0x4] sm:$0xf]
  %v27 = vld [vmem:[%s1] sm:$0xf]
  %v28 = vld [vmem:[%s1 + $0x4] sm:$0xf]
  %v29 = vld [vmem:[%s1 + $0x8] sm:$0xf]
  %v30 = vld [vmem:[%s1 + $0xc] sm:$0xf]
  %v31 = vld [vmem:[%s1 + $0x10] sm:$0xf]
  %v32 = vld [vmem:[%s1 + $0x14] sm:$0xf]
  %v33 = vld [vmem:[%s1 + $0x18] sm:$0xf]
  %v34 = vld [vmem:[%s1 + $0x1c] sm:$0xf]
  %v35 = vld [vmem:[%s1 + $0x20] sm:$0xf]
  %v36 = vld [vmem:[%s1 + $0x24] sm:$0xf]
  %v37 = vld [vmem:[%s1 + $0x28] sm:$0xf]
  %v38 = vld [vmem:[%s1 + $0x2c] sm:$0xf]
  %v39 = vld [vmem:[%s1 + $0x30] sm:$0xf]
  %v40 = vld [vmem:[%s1 + $0x34] sm:$0xf]
  %v41 = vld [vmem:[%s1 + $0x38] sm:$0xf]
  %v42 = vld [vmem:[%s1 + $0x3c] sm:$0xf]
  %v45 = vunpack.c.l.b16 %v25
  %v46 = vunpack.c.l.b16 %v26
  %v47 = vpack.c.b16 %v46, %v45
  %v65 = vunpack.c.l.b16 %v27
  %v66 = vunpack.c.l.b16 %v28
  %v67 = vunpack.c.l.b16 %v29
  %v68 = vunpack.c.l.b16 %v30
  %v69 = vunpack.c.l.b16 %v31
  %v70 = vunpack.c.l.b16 %v32
  %v71 = vunpack.c.l.b16 %v33
  %v72 = vunpack.c.l.b16 %v34
  %v73 = vunpack.c.l.b16 %v35
  %v74 = vunpack.c.l.b16 %v36
  %v75 = vunpack.c.l.b16 %v37
  %v76 = vunpack.c.l.b16 %v38
  %v77 = vunpack.c.l.b16 %v39
  %v78 = vunpack.c.l.b16 %v40
  %v79 = vunpack.c.l.b16 %v41
  %v80 = vunpack.c.l.b16 %v42
  %v81 = vpack.c.b16 %v66, %v65
  %v82 = vpack.c.b16 %v68, %v67
  %v83 = vpack.c.b16 %v70, %v69
  %v84 = vpack.c.b16 %v72, %v71
  %v85 = vpack.c.b16 %v74, %v73
  %v86 = vpack.c.b16 %v76, %v75
  %v87 = vpack.c.b16 %v78, %v77
  %v88 = vpack.c.b16 %v80, %v79
  %97 = vmatpush.bf16.msra.mxu0 %v88
  %98 = vmatpush.bf16.msra.mxu0 %v87
  %99 = vmatpush.bf16.msra.mxu0 %v86
  %100 = vmatpush.bf16.msra.mxu0 %v85
  %101 = vmatpush.bf16.msra.mxu0 %v84
  %102 = vmatpush.bf16.msra.mxu0 %v83
  %103 = vmatpush.bf16.msra.mxu0 %v82
  %104 = vmatpush.bf16.msra.mxu0 %v81
  %105 = vmatmul.bf16.gmra.mxu0 %v47
  %v106 = vpop.f32.mrf.mxu0
  %v107 = vadd.f32 0.0, %v106
  %v108 = vpop.f32.mrf.mxu0
  %v109 = vadd.f32 0.0, %v108
  %110 = vdwg.mxu0
  %v111 = vadd.f32 %v23, %v107
  %v112 = vadd.f32 %v24, %v109
  %113 = vst [vmem:[%s3] sm:$0xff] %v111
  %114 = vst [vmem:[%s3 + $0x8] sm:$0xff] %v112
  // Predicated region
  $region18: #{multiscale_forward.41} parent=0 // pred_check
    %p115 = pneg %p17
  $region19: #{multiscale_forward.41} parent=0 // pred_check_branch
    %117 = sbr.rel (%p115) target = $region21
  $region20: #{multiscale_forward.41} parent=0 // pred_region
    %v118 = vld [vmem:[%s3] sm:$0xff]
    %v119 = vld [vmem:[%s3 + $0x8] sm:$0xff]
    %v120 = vld [vmem:[%s2] sm:$0x1]
    %v122 = vperm.slane %v120, 0
    %v124 = vadd.f32 %v118, %v122
    %v125 = vadd.f32 %v119, %v122
    %126 = vst [vmem:[%s3] sm:$0xff] %v124
    %127 = vst [vmem:[%s3 + $0x8] sm:$0xff] %v125
    %v128 = vlaneseq
    %v129 = vshrl.u32 %v128, 7
    %v130 = vadd.s32 %v129, 8
    %v131 = vstv %s16
    %v132 = vadd.s32 %v129, %v131
    %v133 = vadd.s32 %v130, %v131
    %vm134 = vcmp.lt.s32.totalorder %v132, 8
    %vm135 = vcmp.lt.s32.totalorder %v133, 8
    %v136 = vsel %vm134, 1, 0
    %v137 = vsel %vm135, 1, 0
    %vm138 = vcmp.eq.s32.totalorder %v136, 1
    %vm139 = vcmp.eq.s32.totalorder %v137, 1
    %v140 = vsel %vm138, %v124, 0.0
    %v141 = vsel %vm139, %v125, 0.0
    %v142 = vadd.f32 %v140, %v141
    %v143 = vrot.slane %v142, 4
    %v144 = vadd.f32 %v142, %v143
    %v145 = vrot.slane %v144, 2
    %v146 = vadd.f32 %v144, %v145
    %v147 = vrot.slane %v146, 1
    %v148 = vadd.f32 %v146, %v147
    %v149 = vmul.f32 %v140, %v140
    %v150 = vmul.f32 %v141, %v141
    %v151 = vadd.f32 %v149, %v150
    %v152 = vrot.slane %v151, 4
    %v153 = vadd.f32 %v151, %v152
    %v154 = vrot.slane %v153, 2
    %v155 = vadd.f32 %v153, %v154
    %v156 = vrot.slane %v155, 1
    %v157 = vadd.f32 %v155, %v156
    %vm158 = vcmp.eq.s32.totalorder %v129, 0
    %v159 = vsel %vm158, %v148, 0.0
    %vm160 = vcmp.eq.s32.totalorder %v129, 1
    %v161 = vsel %vm160, %v157, 0.0
    %v162 = vadd.f32 %v159, %v161
    %163 = vst [vmem:[%s4] sm:$0xff] %v162
  $region21: #{multiscale_forward.41} parent=0 // pred_fallthru
    _
  // Predicated region
  $region22: #{multiscale_forward.41} parent=0 // pred_check
    _
  $region23: #{multiscale_forward.41} parent=0 // pred_check_branch
    %165 = sbr.rel (0) target = $region25
  $region24: #{multiscale_forward.41} parent=0 // pred_region
    _
  $region25: #{multiscale_forward.41} parent=0 // pred_fallthru
    _
  // Predicated region
  $region26: #{multiscale_forward.41} parent=0 // pred_check
    _
  $region27: #{multiscale_forward.41} parent=0 // pred_check_branch
    %167 = sbr.rel (0) target = $region29
  $region28: #{multiscale_forward.41} parent=0 // pred_region
    _
  $region29: #{multiscale_forward.41} parent=0 // pred_fallthru
    _
  // Predicated region
  $region30: #{multiscale_forward.41} parent=0 // pred_check
    _
  $region31: #{multiscale_forward.41} parent=0 // pred_check_branch
    %169 = sbr.rel (0) target = $region33
  $region32: #{multiscale_forward.41} parent=0 // pred_region
    _
  $region33: #{multiscale_forward.41} parent=0 // pred_fallthru
    _
  // Predicated region
  $region34: #{multiscale_forward.41} parent=0 // pred_check
    _
  $region35: #{multiscale_forward.41} parent=0 // pred_check_branch
    %171 = sbr.rel (0) target = $region37
  $region36: #{multiscale_forward.41} parent=0 // pred_region
    _
  $region37: #{multiscale_forward.41} parent=0 // pred_fallthru
    _

</llo_original>
